<compile_context>
chip_gen: v7x
topology: tpu7x:2x2x1
jax: 0.10.0
libtpu: 0.0.40
codegen_flags: <defaults>
</compile_context>

<pallas_src>
import jax
import jax.numpy as jnp
from jax.experimental import pallas as pl
from jax.experimental.pallas import tpu as pltpu

IN_DIM = 4096
H1_DIM = 1024
H2_DIM = 256
N_ACT = 8
HEAD_DIM = N_ACT + 1          # action scores (8) + state value (1), fused


def policy_kernel(x_ref, w1q_ref, s1_ref, b1_ref, w2q_ref, s2_ref, b2_ref,
                  wh_ref, bh_ref, out_ref):
    # int8 -> bf16 cast is exact (|q| <= 127); per-column scale is applied to
    # the f32 matmul result instead of to the weight tile (scale commutes out
    # of the contraction), so dequant is one small VPU multiply per layer.
    x = x_ref[...].astype(jnp.bfloat16)

    h1 = jnp.dot(x, w1q_ref[...].astype(jnp.bfloat16),
                 preferred_element_type=jnp.float32)
    h1 = jnp.maximum(h1 * s1_ref[...] + b1_ref[...], 0.0)

    h2 = jnp.dot(h1.astype(jnp.bfloat16), w2q_ref[...].astype(jnp.bfloat16),
                 preferred_element_type=jnp.float32)
    h2 = jnp.maximum(h2 * s2_ref[...] + b2_ref[...], 0.0)

    # Fused action/value head: one small f32 matmul, then split.
    head = jnp.dot(h2, wh_ref[...],
                   preferred_element_type=jnp.float32) + bh_ref[...]
    scores = head[:, :N_ACT]
    value = head[:, N_ACT:]

    # softmax over the action dimension (PyTorch F.softmax on 2-D -> dim=1)
    m = jnp.max(scores, axis=-1, keepdims=True)
    e = jnp.exp(scores - m)
    inv = pl.reciprocal(jnp.sum(e, axis=-1, keepdims=True), approx=True)

    # Single fused (B, 9) output: [probs | value].
    out_ref[:, :N_ACT] = e * inv
    out_ref[:, N_ACT:] = value


def policy_forward(x, params):
    w1q, s1, b1, w2q, s2, b2, wh, bh = params
    B = x.shape[0]
    # Pad batch to a full sublane (multiple of 8) so vregs aren't mostly masked.
    BP = ((B + 7) // 8) * 8
    x_p = jnp.pad(x, ((0, BP - B), (0, 0))) if BP != B else x

    flops = 2 * BP * (IN_DIM * H1_DIM + H1_DIM * H2_DIM + H2_DIM * HEAD_DIM)
    bytes_accessed = int(
        x_p.size * x_p.dtype.itemsize
        + sum(int(p.size) * p.dtype.itemsize for p in params)
        + BP * HEAD_DIM * 4)
    cost = pl.CostEstimate(flops=flops,
                           transcendentals=BP * (N_ACT + 1),
                           bytes_accessed=bytes_accessed)

    # No grid / no BlockSpecs: every operand (x, int8 weights, scales, biases)
    # is DMA'd whole into VMEM once (~4.5 MiB total) and the forward runs in a
    # single step -- the kernel is purely bound on streaming the int8 W1.
    out = pl.pallas_call(
        policy_kernel,
        out_shape=jax.ShapeDtypeStruct((BP, HEAD_DIM), jnp.float32),
        compiler_params=pltpu.CompilerParams(
            # Explicit and well under v7x's 64 MiB physical VMEM; also lifts
            # v5e's 16 MiB scoped default out of the way.
            vmem_limit_bytes=32 * 1024 * 1024,
        ),
        cost_estimate=cost,
    )(x_p, w1q, s1, b1, w2q, s2, b2, wh, bh)

    probs = out[:B, :N_ACT]
    value = out[:B, N_ACT:]
    return probs, value


def _quantize_per_col(w):
    """Symmetric int8 weight-only quantization with per-output-column scale."""
    scale = jnp.maximum(jnp.max(jnp.abs(w), axis=0, keepdims=True), 1e-8) / 127.0
    wq = jnp.clip(jnp.round(w / scale), -127.0, 127.0).astype(jnp.int8)
    return wq, scale.astype(jnp.float32)


def init_params(key):
    """Deterministic synthetic params (shapes match the PyTorch module).

    W1/W2 are stored int8 with per-column f32 scales (HBM-traffic dominant);
    the tiny fused head weight and all biases stay f32.  Action- and value-head
    weights are concatenated into a single (256, 9) matrix / (1, 9) bias.
    """
    ks = jax.random.split(key, 8)

    def lin(kw, kb, fan_in, fan_out):
        bound = 1.0 / jnp.sqrt(fan_in)
        w = jax.random.uniform(kw, (fan_in, fan_out), jnp.float32, -bound, bound)
        b = jax.random.uniform(kb, (1, fan_out), jnp.float32, -bound, bound)
        return w, b

    w1, b1 = lin(ks[0], ks[1], IN_DIM, H1_DIM)
    w2, b2 = lin(ks[2], ks[3], H1_DIM, H2_DIM)
    wa, ba = lin(ks[4], ks[5], H2_DIM, N_ACT)
    wv, bv = lin(ks[6], ks[7], H2_DIM, 1)

    w1q, s1 = _quantize_per_col(w1)                 # (4096, 1024) int8, (1, 1024) f32
    w2q, s2 = _quantize_per_col(w2)                 # (1024, 256)  int8, (1, 256)  f32
    wh = jnp.concatenate([wa, wv], axis=1)          # (256, 9) f32
    bh = jnp.concatenate([ba, bv], axis=1)          # (1, 9)   f32
    return (w1q, s1, b1, w2q, s2, b2, wh, bh)


def reference_forward(x, params):
    """Pure-JAX reference with identical numerics (same int8 weights, bf16
    matmuls, f32 accumulation, scale applied to the matmul result)."""
    w1q, s1, b1, w2q, s2, b2, wh, bh = params
    h1 = jax.nn.relu(
        jnp.dot(x.astype(jnp.bfloat16), w1q.astype(jnp.bfloat16),
                preferred_element_type=jnp.float32) * s1 + b1)
    h2 = jax.nn.relu(
        jnp.dot(h1.astype(jnp.bfloat16), w2q.astype(jnp.bfloat16),
                preferred_element_type=jnp.float32) * s2 + b2)
    head = jnp.dot(h2, wh, preferred_element_type=jnp.float32) + bh
    scores, value = head[:, :N_ACT], head[:, N_ACT:]
    return jax.nn.softmax(scores, axis=-1), value


if __name__ == "__main__":
    key = jax.random.PRNGKey(0)
    k_x, k_p = jax.random.split(key)

    B = 2  # small batch
    x = jax.random.normal(k_x, (B, IN_DIM), dtype=jnp.float32)
    params = init_params(k_p)

    probs, value = policy_forward(x, params)
    probs, value = jax.block_until_ready((probs, value))

    ref_probs, ref_value = reference_forward(x, params)
    assert probs.shape == (B, N_ACT) and value.shape == (B, 1)
    # Approx-reciprocal softmax + MXU-vs-XLA accumulation order -> loose-ish tol.
    assert jnp.allclose(probs, ref_probs, atol=2e-3, rtol=2e-3)
    assert jnp.allclose(value, ref_value, atol=2e-3, rtol=2e-3)
    assert bool(jnp.all(jnp.isfinite(probs))) and bool(jnp.all(jnp.isfinite(value)))

    print("KERNEL_OK")
</pallas_src>

<mosaic_0001>
module attributes {stable_mosaic.version = 11 : i64} {
  func.func @policy_kernel(%arg0: memref<8x4096xf32, #tpu.memory_space<vmem>>, %arg1: memref<4096x1024xi8, #tpu.memory_space<vmem>>, %arg2: memref<1x1024xf32, #tpu.memory_space<vmem>>, %arg3: memref<1x1024xf32, #tpu.memory_space<vmem>>, %arg4: memref<1024x256xi8, #tpu.memory_space<vmem>>, %arg5: memref<1x256xf32, #tpu.memory_space<vmem>>, %arg6: memref<1x256xf32, #tpu.memory_space<vmem>>, %arg7: memref<256x9xf32, #tpu.memory_space<vmem>>, %arg8: memref<1x9xf32, #tpu.memory_space<vmem>>, %arg9: memref<8x9xf32, #tpu.memory_space<vmem>>) attributes {dimension_semantics = [], scalar_prefetch = 0 : i64, scratch_operands = 0 : i64, tpu.core_type = #tpu.core_type<tc>} {
    %c0 = arith.constant 0 : index
    %c0_0 = arith.constant 0 : index
    %0 = vector.load %arg0[%c0, %c0_0] : memref<8x4096xf32, #tpu.memory_space<vmem>>, vector<8x4096xf32>
    %1 = arith.truncf %0 : vector<8x4096xf32> to vector<8x4096xbf16>
    %c0_1 = arith.constant 0 : index
    %c0_2 = arith.constant 0 : index
    %2 = vector.load %arg1[%c0_1, %c0_2] : memref<4096x1024xi8, #tpu.memory_space<vmem>>, vector<4096x1024xi8>
    %3 = arith.sitofp %2 : vector<4096x1024xi8> to vector<4096x1024xbf16>
    %cst = arith.constant dense<0.000000e+00> : vector<8x1024xf32>
    %4 = tpu.matmul %1, %3, %cst {dimension_numbers = #tpu.dot_dimension_numbers<[1], [0], [0], [1], [0, 0, 1, 1], [], []>} : vector<8x4096xbf16>, vector<4096x1024xbf16>, vector<8x1024xf32> -> vector<8x1024xf32>
    %c0_3 = arith.constant 0 : index
    %c0_4 = arith.constant 0 : index
    %5 = vector.load %arg2[%c0_3, %c0_4] : memref<1x1024xf32, #tpu.memory_space<vmem>>, vector<1x1024xf32>
    %6 = vector.broadcast %5 : vector<1x1024xf32> to vector<8x1024xf32>
    %7 = arith.mulf %4, %6 : vector<8x1024xf32>
    %c0_5 = arith.constant 0 : index
    %c0_6 = arith.constant 0 : index
    %8 = vector.load %arg3[%c0_5, %c0_6] : memref<1x1024xf32, #tpu.memory_space<vmem>>, vector<1x1024xf32>
    %9 = vector.broadcast %8 : vector<1x1024xf32> to vector<8x1024xf32>
    %10 = arith.addf %7, %9 : vector<8x1024xf32>
    %cst_7 = arith.constant 0.000000e+00 : f32
    %11 = vector.broadcast %cst_7 : f32 to vector<8x1024xf32>
    %12 = arith.maximumf %10, %11 : vector<8x1024xf32>
    %13 = arith.truncf %12 : vector<8x1024xf32> to vector<8x1024xbf16>
    %c0_8 = arith.constant 0 : index
    %c0_9 = arith.constant 0 : index
    %14 = vector.load %arg4[%c0_8, %c0_9] : memref<1024x256xi8, #tpu.memory_space<vmem>>, vector<1024x256xi8>
    %15 = arith.sitofp %14 : vector<1024x256xi8> to vector<1024x256xbf16>
    %cst_10 = arith.constant dense<0.000000e+00> : vector<8x256xf32>
    %16 = tpu.matmul %13, %15, %cst_10 {dimension_numbers = #tpu.dot_dimension_numbers<[1], [0], [0], [1], [0, 0, 1, 1], [], []>} : vector<8x1024xbf16>, vector<1024x256xbf16>, vector<8x256xf32> -> vector<8x256xf32>
    %c0_11 = arith.constant 0 : index
    %c0_12 = arith.constant 0 : index
    %17 = vector.load %arg5[%c0_11, %c0_12] : memref<1x256xf32, #tpu.memory_space<vmem>>, vector<1x256xf32>
    %18 = vector.broadcast %17 : vector<1x256xf32> to vector<8x256xf32>
    %19 = arith.mulf %16, %18 : vector<8x256xf32>
    %c0_13 = arith.constant 0 : index
    %c0_14 = arith.constant 0 : index
    %20 = vector.load %arg6[%c0_13, %c0_14] : memref<1x256xf32, #tpu.memory_space<vmem>>, vector<1x256xf32>
    %21 = vector.broadcast %20 : vector<1x256xf32> to vector<8x256xf32>
    %22 = arith.addf %19, %21 : vector<8x256xf32>
    %cst_15 = arith.constant 0.000000e+00 : f32
    %23 = vector.broadcast %cst_15 : f32 to vector<8x256xf32>
    %24 = arith.maximumf %22, %23 : vector<8x256xf32>
    %c0_16 = arith.constant 0 : index
    %c0_17 = arith.constant 0 : index
    %25 = vector.load %arg7[%c0_16, %c0_17] : memref<256x9xf32, #tpu.memory_space<vmem>>, vector<256x9xf32>
    %cst_18 = arith.constant dense<0.000000e+00> : vector<8x9xf32>
    %26 = tpu.matmul %24, %25, %cst_18 {dimension_numbers = #tpu.dot_dimension_numbers<[1], [0], [0], [1], [0, 0, 1, 1], [], []>} : vector<8x256xf32>, vector<256x9xf32>, vector<8x9xf32> -> vector<8x9xf32>
    %c0_19 = arith.constant 0 : index
    %c0_20 = arith.constant 0 : index
    %27 = vector.load %arg8[%c0_19, %c0_20] : memref<1x9xf32, #tpu.memory_space<vmem>>, vector<1x9xf32>
    %28 = vector.broadcast %27 : vector<1x9xf32> to vector<8x9xf32>
    %29 = arith.addf %26, %28 : vector<8x9xf32>
    %30 = vector.extract_strided_slice %29 {offsets = [0, 0], sizes = [8, 8], strides = [1, 1]} : vector<8x9xf32> to vector<8x8xf32>
    %31 = vector.extract_strided_slice %29 {offsets = [0, 8], sizes = [8, 1], strides = [1, 1]} : vector<8x9xf32> to vector<8x1xf32>
    %cst_21 = arith.constant dense<0xFF800000> : vector<8xf32>
    %32 = vector.multi_reduction <maximumf>, %30, %cst_21 [1] : vector<8x8xf32> to vector<8xf32>
    %33 = vector.shape_cast %32 : vector<8xf32> to vector<8x1xf32>
    %34 = vector.broadcast %33 : vector<8x1xf32> to vector<8x8xf32>
    %35 = arith.subf %30, %34 : vector<8x8xf32>
    %36 = math.exp %35 : vector<8x8xf32>
    %cst_22 = arith.constant dense<0.000000e+00> : vector<8xf32>
    %37 = vector.multi_reduction <add>, %36, %cst_22 [1] : vector<8x8xf32> to vector<8xf32>
    %38 = vector.shape_cast %37 : vector<8xf32> to vector<8x1xf32>
    %39 = tpu.reciprocal %38 {approx = true} : vector<8x1xf32> -> vector<8x1xf32>
    %40 = vector.broadcast %39 : vector<8x1xf32> to vector<8x8xf32>
    %41 = arith.mulf %36, %40 : vector<8x8xf32>
    %c0_23 = arith.constant 0 : index
    %c0_24 = arith.constant 0 : index
    %42 = vector.load %arg9[%c0_23, %c0_24] : memref<8x9xf32, #tpu.memory_space<vmem>>, vector<8x8xf32>
    tpu.vector_store %arg9[%c0_23, %c0_24], %41 {strides = array<i32>} : memref<8x9xf32, #tpu.memory_space<vmem>>, vector<8x8xf32>,
    %c0_25 = arith.constant 0 : index
    %c8 = arith.constant 8 : index
    %43 = vector.load %arg9[%c0_25, %c8] : memref<8x9xf32, #tpu.memory_space<vmem>>, vector<8x1xf32>
    tpu.vector_store %arg9[%c0_25, %c8], %31 {strides = array<i32>} : memref<8x9xf32, #tpu.memory_space<vmem>>, vector<8x1xf32>,
    return
  }
}

</mosaic_0001>

<llo_original>
// kernel: tpu_custom_call.1
$region0: #{tpu_custom_call.1}
  #allocation0 [shape = 'u32[]', space=smem, size = 0x4, offset = 0x4, fixed_abs, tag = 'smem constant byte address 0x4 - core index']
  #allocation1 [shape = 'u32[144,128]{1,0:T(1,128)}', space=vmem, size = 0x12000, scoped, tag = 'internal scratch']
  %s0 = inlined_call_operand.hbm [shape: f32[8,4096], index: 0, kind: input, shape index: {}]
  %s1 = inlined_call_operand.hbm [shape: s8[4096,1024], index: 1, kind: input, shape index: {}]
  %s2 = inlined_call_operand.hbm [shape: f32[1,1024], index: 2, kind: input, shape index: {}]
  %s3 = inlined_call_operand.hbm [shape: f32[1,1024], index: 3, kind: input, shape index: {}]
  %s4 = inlined_call_operand.hbm [shape: s8[1024,256], index: 4, kind: input, shape index: {}]
  %s5 = inlined_call_operand.hbm [shape: f32[1,256], index: 5, kind: input, shape index: {}]
  %s6 = inlined_call_operand.hbm [shape: f32[1,256], index: 6, kind: input, shape index: {}]
  %s7 = inlined_call_operand.vmem [shape: f32[256,9], index: 7, kind: input, shape index: {}]
  %s8 = inlined_call_operand.hbm [shape: f32[1,9], index: 8, kind: input, shape index: {}]
  %s9 = inlined_call_operand.hbm [shape: f32[8,9], index: 9, kind: output, shape index: {}]
  %s10 = sld [smem:[#allocation0]]
  $region78: #{tpu_custom_call.1} parent=0
    _
  %s12 = ssub.s32 1, %s10
  %s13 = scalar_select 0, %s12, %s10
  $region1: #{tpu_custom_call.1} parent=0
    #allocation2 [shape = 'u8[131072]{0}', space=vmem, size = 0x20000, scoped, tag = 'input window, operand 0, single buffered']
    #allocation3 [shape = 's32[1]{0}', space=sflag, size = 0x4, scoped, tag = 'scoped memory for tpu_custom_call.1']
    #allocation4 [shape = 's32[1]{0}', space=sflag, size = 0x4, scoped, tag = 'scoped memory for tpu_custom_call.1']
    #allocation5 [shape = 'u8[4194304]{0}', space=vmem, size = 0x400000, scoped, tag = 'input window, operand 1, single buffered']
    #allocation6 [shape = 's32[1]{0}', space=sflag, size = 0x4, scoped, tag = 'scoped memory for tpu_custom_call.1']
    #allocation7 [shape = 'u8[4096]{0}', space=vmem, size = 0x1000, scoped, tag = 'input window, operand 2, single buffered']
    #allocation8 [shape = 'u8[4096]{0}', space=vmem, size = 0x1000, scoped, tag = 'input window, operand 3, single buffered']
    #allocation9 [shape = 's32[1]{0}', space=sflag, size = 0x4, scoped, tag = 'scoped memory for tpu_custom_call.1']
    #allocation10 [shape = 'u8[262144]{0}', space=vmem, size = 0x40000, scoped, tag = 'input window, operand 4, single buffered']
    #allocation11 [shape = 'u8[1024]{0}', space=vmem, size = 0x400, scoped, tag = 'input window, operand 5, single buffered']
    #allocation12 [shape = 's32[1]{0}', space=sflag, size = 0x4, scoped, tag = 'scoped memory for tpu_custom_call.1']
    #allocation13 [shape = 'u8[1024]{0}', space=vmem, size = 0x400, scoped, tag = 'input window, operand 6, single buffered']
    #allocation14 [shape = 'u8[512]{0}', space=vmem, size = 0x400, scoped, tag = 'input window, operand 8, single buffered']
    #allocation15 [shape = 's32[1]{0}', space=sflag, size = 0x4, scoped, tag = 'scoped memory for tpu_custom_call.1']
    #allocation16 [shape = 'u8[4096]{0}', space=vmem, size = 0x1000, scoped, tag = 'output window, operand 0, single buffered']
    %14 = vsyncpa [#allocation3], 0
    %15 = vsyncpa [#allocation6], 0
    %16 = vsyncpa [#allocation9], 0
    %17 = vsyncpa [#allocation12], 0
    %18 = vsyncpa [#allocation15], 0
    %19 = vsyncpa [#allocation4], 0
    // Predicated region
    $region2: #{tpu_custom_call.1} parent=1 // pred_check
      _
    $region3: #{tpu_custom_call.1} parent=1 // pred_check_branch
      %21 = sbr.rel (0) target = $region5
    $region4: #{tpu_custom_call.1} parent=1 // pred_region
      %s23 = ssub.s32 4096, 4096
      %24 = vsyncadd [#allocation3], %s23
      %s26 = sshll.u32 [#allocation2], 4
      %s27 = int_to_ptr.vmem [resolvable:$true] %s26
      %29 = dma.hbm_to_vmem [thread:$0]  %s0, 4096, %s27, [#allocation3]
    $region5: #{tpu_custom_call.1} parent=1 // pred_fallthru
      _
    // Predicated region
    $region6: #{tpu_custom_call.1} parent=1 // pred_check
      _
    $region7: #{tpu_custom_call.1} parent=1 // pred_check_branch
      %31 = sbr.rel (0) target = $region9
    $region8: #{tpu_custom_call.1} parent=1 // pred_region
      %s33 = ssub.s32 131072, 131072
      %34 = vsyncadd [#allocation6], %s33
      %s35 = sshll.u32 [#allocation5], 4
      %s36 = int_to_ptr.vmem [resolvable:$true] %s35
      %41 = dma.hbm_to_vmem [thread:$0]  %s1, 131072, %s36, [#allocation6], 1024, 1024, 64
    $region9: #{tpu_custom_call.1} parent=1 // pred_fallthru
      _
    // Predicated region
    $region10: #{tpu_custom_call.1} parent=1 // pred_check
      _
    $region11: #{tpu_custom_call.1} parent=1 // pred_check_branch
      %43 = sbr.rel (0) target = $region13
    $region12: #{tpu_custom_call.1} parent=1 // pred_region
      %s45 = ssub.s32 128, 128
      %46 = vsyncadd [#allocation6], %s45
      %s48 = sshll.u32 [#allocation7], 4
      %s49 = int_to_ptr.vmem [resolvable:$true] %s48
      %51 = dma.hbm_to_vmem [thread:$0]  %s2, 128, %s49, [#allocation6]
    $region13: #{tpu_custom_call.1} parent=1 // pred_fallthru
      _
    // Predicated region
    $region14: #{tpu_custom_call.1} parent=1 // pred_check
      _
    $region15: #{tpu_custom_call.1} parent=1 // pred_check_branch
      %53 = sbr.rel (0) target = $region17
    $region16: #{tpu_custom_call.1} parent=1 // pred_region
      %s55 = ssub.s32 128, 128
      %56 = vsyncadd [#allocation9], %s55
      %s58 = sshll.u32 [#allocation8], 4
      %s59 = int_to_ptr.vmem [resolvable:$true] %s58
      %61 = dma.hbm_to_vmem [thread:$0]  %s3, 128, %s59, [#allocation9]
    $region17: #{tpu_custom_call.1} parent=1 // pred_fallthru
      _
    // Predicated region
    $region18: #{tpu_custom_call.1} parent=1 // pred_check
      _
    $region19: #{tpu_custom_call.1} parent=1 // pred_check_branch
      %63 = sbr.rel (0) target = $region21
    $region20: #{tpu_custom_call.1} parent=1 // pred_region
      %s65 = ssub.s32 8192, 8192
      %66 = vsyncadd [#allocation9], %s65
      %s67 = sshll.u32 [#allocation10], 4
      %s68 = int_to_ptr.vmem [resolvable:$true] %s67
      %73 = dma.hbm_to_vmem [thread:$0]  %s4, 8192, %s68, [#allocation9], 256, 256, 16
    $region21: #{tpu_custom_call.1} parent=1 // pred_fallthru
      _
    // Predicated region
    $region22: #{tpu_custom_call.1} parent=1 // pred_check
      _
    $region23: #{tpu_custom_call.1} parent=1 // pred_check_branch
      %75 = sbr.rel (0) target = $region25
    $region24: #{tpu_custom_call.1} parent=1 // pred_region
      %s77 = ssub.s32 32, 32
      %78 = vsyncadd [#allocation12], %s77
      %s80 = sshll.u32 [#allocation11], 4
      %s81 = int_to_ptr.vmem [resolvable:$true] %s80
      %83 = dma.hbm_to_vmem [thread:$0]  %s5, 32, %s81, [#allocation12]
    $region25: #{tpu_custom_call.1} parent=1 // pred_fallthru
      _
    // Predicated region
    $region26: #{tpu_custom_call.1} parent=1 // pred_check
      _
    $region27: #{tpu_custom_call.1} parent=1 // pred_check_branch
      %85 = sbr.rel (0) target = $region29
    $region28: #{tpu_custom_call.1} parent=1 // pred_region
      %s87 = ssub.s32 32, 32
      %88 = vsyncadd [#allocation12], %s87
      %s90 = sshll.u32 [#allocation13], 4
      %s91 = int_to_ptr.vmem [resolvable:$true] %s90
      %93 = dma.hbm_to_vmem [thread:$0]  %s6, 32, %s91, [#allocation12]
    $region29: #{tpu_custom_call.1} parent=1 // pred_fallthru
      _
    // Predicated region
    $region30: #{tpu_custom_call.1} parent=1 // pred_check
      _
    $region31: #{tpu_custom_call.1} parent=1 // pred_check_branch
      %95 = sbr.rel (0) target = $region33
    $region32: #{tpu_custom_call.1} parent=1 // pred_region
      _
    $region33: #{tpu_custom_call.1} parent=1 // pred_fallthru
      _
    // Predicated region
    $region34: #{tpu_custom_call.1} parent=1 // pred_check
      _
    $region35: #{tpu_custom_call.1} parent=1 // pred_check_branch
      %97 = sbr.rel (0) target = $region37
    $region36: #{tpu_custom_call.1} parent=1 // pred_region
      %s99 = ssub.s32 16, 16
      %100 = vsyncadd [#allocation15], %s99
      %s102 = sshll.u32 [#allocation14], 4
      %s103 = int_to_ptr.vmem [resolvable:$true] %s102
      %105 = dma.hbm_to_vmem [thread:$0]  %s8, 16, %s103, [#allocation15]
    $region37: #{tpu_custom_call.1} parent=1 // pred_fallthru
      _
    // Predicated region
    $region38: #{tpu_custom_call.1} parent=1 // pred_check
      _
    $region39: #{tpu_custom_call.1} parent=1 // pred_check_branch
      %107 = sbr.rel (0) target = $region41
    $region40: #{tpu_custom_call.1} parent=1 // pred_region
      %108 = dma.done [#allocation3], 4096
    $region41: #{tpu_custom_call.1} parent=1 // pred_fallthru
      _
    // Predicated region
    $region42: #{tpu_custom_call.1} parent=1 // pred_check
      _
    $region43: #{tpu_custom_call.1} parent=1 // pred_check_branch
      %110 = sbr.rel (0) target = $region45
    $region44: #{tpu_custom_call.1} parent=1 // pred_region
      %111 = dma.done [#allocation6], 131072
    $region45: #{tpu_custom_call.1} parent=1 // pred_fallthru
      _
    // Predicated region
    $region46: #{tpu_custom_call.1} parent=1 // pred_check
      _
    $region47: #{tpu_custom_call.1} parent=1 // pred_check_branch
      %113 = sbr.rel (0) target = $region49
    $region48: #{tpu_custom_call.1} parent=1 // pred_region
      %114 = dma.done [#allocation6], 128
    $region49: #{tpu_custom_call.1} parent=1 // pred_fallthru
      _
    // Predicated region
    $region50: #{tpu_custom_call.1} parent=1 // pred_check
      _
    $region51: #{tpu_custom_call.1} parent=1 // pred_check_branch
      %116 = sbr.rel (0) target = $region53
    $region52: #{tpu_custom_call.1} parent=1 // pred_region
      %117 = dma.done [#allocation9], 128
    $region53: #{tpu_custom_call.1} parent=1 // pred_fallthru
      _
    // Predicated region
    $region54: #{tpu_custom_call.1} parent=1 // pred_check
      _
    $region55: #{tpu_custom_call.1} parent=1 // pred_check_branch
      %119 = sbr.rel (0) target = $region57
    $region56: #{tpu_custom_call.1} parent=1 // pred_region
      %120 = dma.done [#allocation9], 8192
    $region57: #{tpu_custom_call.1} parent=1 // pred_fallthru
      _
    // Predicated region
    $region58: #{tpu_custom_call.1} parent=1 // pred_check
      _
    $region59: #{tpu_custom_call.1} parent=1 // pred_check_branch
      %122 = sbr.rel (0) target = $region61
    $region60: #{tpu_custom_call.1} parent=1 // pred_region
      %123 = dma.done [#allocation12], 32
    $region61: #{tpu_custom_call.1} parent=1 // pred_fallthru
      _
    // Predicated region
    $region62: #{tpu_custom_call.1} parent=1 // pred_check
      _
    $region63: #{tpu_custom_call.1} parent=1 // pred_check_branch
      %125 = sbr.rel (0) target = $region65
    $region64: #{tpu_custom_call.1} parent=1 // pred_region
      %126 = dma.done [#allocation12], 32
    $region65: #{tpu_custom_call.1} parent=1 // pred_fallthru
      _
    // Predicated region
    $region66: #{tpu_custom_call.1} parent=1 // pred_check
      _
    $region67: #{tpu_custom_call.1} parent=1 // pred_check_branch
      %128 = sbr.rel (0) target = $region69
    $region68: #{tpu_custom_call.1} parent=1 // pred_region
      %129 = dma.done [#allocation15], 16
    $region69: #{tpu_custom_call.1} parent=1 // pred_fallthru
      _
    %v130 = vld [vmem:[#allocation2] sm:$0xff]
    %v131 = vld [vmem:[#allocation2 + $0x8] sm:$0xff]
    %v132 = vld [vmem:[#allocation2 + $0x10] sm:$0xff]
    %v133 = vld [vmem:[#allocation2 + $0x18] sm:$0xff]
    %v134 = vld [vmem:[#allocation2 + $0x20] sm:$0xff]
    %v135 = vld [vmem:[#allocation2 + $0x28] sm:$0xff]
    %v136 = vld [vmem:[#allocation2 + $0x30] sm:$0xff]
    %v137 = vld [vmem:[#allocation2 + $0x38] sm:$0xff]
    %v138 = vld [vmem:[#allocation2 + $0x40] sm:$0xff]
    %v139 = vld [vmem:[#allocation2 + $0x48] sm:$0xff]
    %v140 = vld [vmem:[#allocation2 + $0x50] sm:$0xff]
    %v141 = vld [vmem:[#allocation2 + $0x58] sm:$0xff]
    %v142 = vld [vmem:[#allocation2 + $0x60] sm:$0xff]
    %v143 = vld [vmem:[#allocation2 + $0x68] sm:$0xff]
    %v144 = vld [vmem:[#allocation2 + $0x70] sm:$0xff]
    %v145 = vld [vmem:[#allocation2 + $0x78] sm:$0xff]
    %v146 = vld [vmem:[#allocation2 + $0x80] sm:$0xff]
    %v147 = vld [vmem:[#allocation2 + $0x88] sm:$0xff]
    %v148 = vld [vmem:[#allocation2 + $0x90] sm:$0xff]
    %v149 = vld [vmem:[#allocation2 + $0x98] sm:$0xff]
    %v150 = vld [vmem:[#allocation2 + $0xa0] sm:$0xff]
    %v151 = vld [vmem:[#allocation2 + $0xa8] sm:$0xff]
    %v152 = vld [vmem:[#allocation2 + $0xb0] sm:$0xff]
    %v153 = vld [vmem:[#allocation2 + $0xb8] sm:$0xff]
    %v154 = vld [vmem:[#allocation2 + $0xc0] sm:$0xff]
    %v155 = vld [vmem:[#allocation2 + $0xc8] sm:$0xff]
    %v156 = vld [vmem:[#allocation2 + $0xd0] sm:$0xff]
    %v157 = vld [vmem:[#allocation2 + $0xd8] sm:$0xff]
    %v158 = vld [vmem:[#allocation2 + $0xe0] sm:$0xff]
    %v159 = vld [vmem:[#allocation2 + $0xe8] sm:$0xff]
    %v160 = vld [vmem:[#allocation2 + $0xf0] sm:$0xff]
    %v161 = vld [vmem:[#allocation2 + $0xf8] sm:$0xff]
    %v162 = vpack.c.bf16 %v130, %v130
    %v163 = vpack.c.bf16 %v131, %v131
    %v164 = vpack.c.bf16 %v132, %v132
    %v165 = vpack.c.bf16 %v133, %v133
    %v166 = vpack.c.bf16 %v134, %v134
    %v167 = vpack.c.bf16 %v135, %v135
    %v168 = vpack.c.bf16 %v136, %v136
    %v169 = vpack.c.bf16 %v137, %v137
    %v170 = vpack.c.bf16 %v138, %v138
    %v171 = vpack.c.bf16 %v139, %v139
    %v172 = vpack.c.bf16 %v140, %v140
    %v173 = vpack.c.bf16 %v141, %v141
    %v174 = vpack.c.bf16 %v142, %v142
    %v175 = vpack.c.bf16 %v143, %v143
    %v176 = vpack.c.bf16 %v144, %v144
    %v177 = vpack.c.bf16 %v145, %v145
    %v178 = vpack.c.bf16 %v146, %v146
    %v179 = vpack.c.bf16 %v147, %v147
    %v180 = vpack.c.bf16 %v148, %v148
    %v181 = vpack.c.bf16 %v149, %v149
    %v182 = vpack.c.bf16 %v150, %v150
    %v183 = vpack.c.bf16 %v151, %v151
    %v184 = vpack.c.bf16 %v152, %v152
    %v185 = vpack.c.bf16 %v153, %v153
    %v186 = vpack.c.bf16 %v154, %v154
    %v187 = vpack.c.bf16 %v155, %v155
    %v188 = vpack.c.bf16 %v156, %v156
    %v189 = vpack.c.bf16 %v157, %v157
    %v190 = vpack.c.bf16 %v158, %v158
    %v191 = vpack.c.bf16 %v159, %v159
    %v192 = vpack.c.bf16 %v160, %v160
    %v193 = vpack.c.bf16 %v161, %v161
    %v194 = vld [vmem:[#allocation5] sm:$0xff]
    %v195 = vld [vmem:[#allocation5 + $0x8] sm:$0xff]
    %v196 = vld [vmem:[#allocation5 + $0x10] sm:$0xff]
    %v197 = vld [vmem:[#allocation5 + $0x18] sm:$0xff]
    %v198 = vld [vmem:[#allocation5 + $0x20] sm:$0xff]
    %v199 = vld [vmem:[#allocation5 + $0x28] sm:$0xff]
    %v200 = vld [vmem:[#allocation5 + $0x30] sm:$0xff]
    %v201 = vld [vmem:[#allocation5 + $0x38] sm:$0xff]
    %v202 = vld [vmem:[#allocation5 + $0x40] sm:$0xff]
    %v203 = vld [vmem:[#allocation5 + $0x48] sm:$0xff]
    %v204 = vld [vmem:[#allocation5 + $0x50] sm:$0xff]
    %v205 = vld [vmem:[#allocation5 + $0x58] sm:$0xff]
    %v206 = vld [vmem:[#allocation5 + $0x60] sm:$0xff]
    %v207 = vld [vmem:[#allocation5 + $0x68] sm:$0xff]
    %v208 = vld [vmem:[#allocation5 + $0x70] sm:$0xff]
    %v209 = vld [vmem:[#allocation5 + $0x78] sm:$0xff]
    %v210 = vld [vmem:[#allocation5 + $0x80] sm:$0xff]
    %v211 = vld [vmem:[#allocation5 + $0x88] sm:$0xff]
    %v212 = vld [vmem:[#allocation5 + $0x90] sm:$0xff]
    %v213 = vld [vmem:[#allocation5 + $0x98] sm:$0xff]
    %v214 = vld [vmem:[#allocation5 + $0xa0] sm:$0xff]
    %v215 = vld [vmem:[#allocation5 + $0xa8] sm:$0xff]
    %v216 = vld [vmem:[#allocation5 + $0xb0] sm:$0xff]
    %v217 = vld [vmem:[#allocation5 + $0xb8] sm:$0xff]
    %v218 = vld [vmem:[#allocation5 + $0xc0] sm:$0xff]
    %v219 = vld [vmem:[#allocation5 + $0xc8] sm:$0xff]
    %v220 = vld [vmem:[#allocation5 + $0xd0] sm:$0xff]
    %v221 = vld [vmem:[#allocation5 + $0xd8] sm:$0xff]
    %v222 = vld [vmem:[#allocation5 + $0xe0] sm:$0xff]
    %v223 = vld [vmem:[#allocation5 + $0xe8] sm:$0xff]
    %v224 = vld [vmem:[#allocation5 + $0xf0] sm:$0xff]
    %v225 = vld [vmem:[#allocation5 + $0xf8] sm:$0xff]
    %v226 = vld [vmem:[#allocation5 + $0x100] sm:$0xff]
    %v227 = vld [vmem:[#allocation5 + $0x108] sm:$0xff]
    %v228 = vld [vmem:[#allocation5 + $0x110] sm:$0xff]
    %v229 = vld [vmem:[#allocation5 + $0x118] sm:$0xff]
    %v230 = vld [vmem:[#allocation5 + $0x120] sm:$0xff]
    %v231 = vld [vmem:[#allocation5 + $0x128] sm:$0xff]
    %v232 = vld [vmem:[#allocation5 + $0x130] sm:$0xff]
    %v233 = vld [vmem:[#allocation5 + $0x138] sm:$0xff]
    %v234 = vld [vmem:[#allocation5 + $0x140] sm:$0xff]
    %v235 = vld [vmem:[#allocation5 + $0x148] sm:$0xff]
    %v236 = vld [vmem:[#allocation5 + $0x150] sm:$0xff]
    %v237 = vld [vmem:[#allocation5 + $0x158] sm:$0xff]
    %v238 = vld [vmem:[#allocation5 + $0x160] sm:$0xff]
    %v239 = vld [vmem:[#allocation5 + $0x168] sm:$0xff]
    %v240 = vld [vmem:[#allocation5 + $0x170] sm:$0xff]
    %v241 = vld [vmem:[#allocation5 + $0x178] sm:$0xff]
    %v242 = vld [vmem:[#allocation5 + $0x180] sm:$0xff]
    %v243 = vld [vmem:[#allocation5 + $0x188] sm:$0xff]
    %v244 = vld [vmem:[#allocation5 + $0x190] sm:$0xff]
    %v245 = vld [vmem:[#allocation5 + $0x198] sm:$0xff]
    %v246 = vld [vmem:[#allocation5 + $0x1a0] sm:$0xff]
    %v247 = vld [vmem:[#allocation5 + $0x1a8] sm:$0xff]
    %v248 = vld [vmem:[#allocation5 + $0x1b0] sm:$0xff]
    %v249 = vld [vmem:[#allocation5 + $0x1b8] sm:$0xff]
    %v250 = vld [vmem:[#allocation5 + $0x1c0] sm:$0xff]
    %v251 = vld [vmem:[#allocation5 + $0x1c8] sm:$0xff]
    %v252 = vld [vmem:[#allocation5 + $0x1d0] sm:$0xff]
    %v253 = vld [vmem:[#allocation5 + $0x1d8] sm:$0xff]
    %v254 = vld [vmem:[#allocation5 + $0x1e0] sm:$0xff]
    %v255 = vld [vmem:[#allocation5 + $0x1e8] sm:$0xff]
    %v256 = vld [vmem:[#allocation5 + $0x1f0] sm:$0xff]
    %v257 = vld [vmem:[#allocation5 + $0x1f8] sm:$0xff]
    %v258 = vld [vmem:[#allocation5 + $0x200] sm:$0xff]
    %v259 = vld [vmem:[#allocation5 + $0x208] sm:$0xff]
    %v260 = vld [vmem:[#allocation5 + $0x210] sm:$0xff]
    %v261 = vld [vmem:[#allocation5 + $0x218] sm:$0xff]
    %v262 = vld [vmem:[#allocation5 + $0x220] sm:$0xff]
    %v263 = vld [vmem:[#allocation5 + $0x228] sm:$0xff]
    %v264 = vld [vmem:[#allocation5 + $0x230] sm:$0xff]
    %v265 = vld [vmem:[#allocation5 + $0x238] sm:$0xff]
    %v266 = vld [vmem:[#allocation5 + $0x240] sm:$0xff]
    %v267 = vld [vmem:[#allocation5 + $0x248] sm:$0xff]
    %v268 = vld [vmem:[#allocation5 + $0x250] sm:$0xff]
    %v269 = vld [vmem:[#allocation5 + $0x258] sm:$0xff]
    %v270 = vld [vmem:[#allocation5 + $0x260] sm:$0xff]
    %v271 = vld [vmem:[#allocation5 + $0x268] sm:$0xff]
    %v272 = vld [vmem:[#allocation5 + $0x270] sm:$0xff]
    %v273 = vld [vmem:[#allocation5 + $0x278] sm:$0xff]
    %v274 = vld [vmem:[#allocation5 + $0x280] sm:$0xff]
    %v275 = vld [vmem:[#allocation5 + $0x288] sm:$0xff]
    %v276 = vld [vmem:[#allocation5 + $0x290] sm:$0xff]
    %v277 = vld [vmem:[#allocation5 + $0x298] sm:$0xff]
    %v278 = vld [vmem:[#allocation5 + $0x2a0] sm:$0xff]
    %v279 = vld [vmem:[#allocation5 + $0x2a8] sm:$0xff]
    %v280 = vld [vmem:[#allocation5 + $0x2b0] sm:$0xff]
    %v281 = vld [vmem:[#allocation5 + $0x2b8] sm:$0xff]
    %v282 = vld [vmem:[#allocation5 + $0x2c0] sm:$0xff]
    %v283 = vld [vmem:[#allocation5 + $0x2c8] sm:$0xff]
    %v284 = vld [vmem:[#allocation5 + $0x2d0] sm:$0xff]
    %v285 = vld [vmem:[#allocation5 + $0x2d8] sm:$0xff]
    %v286 = vld [vmem:[#allocation5 + $0x2e0] sm:$0xff]
    %v287 = vld [vmem:[#allocation5 + $0x2e8] sm:$0xff]
    %v288 = vld [vmem:[#allocation5 + $0x2f0] sm:$0xff]
    %v289 = vld [vmem:[#allocation5 + $0x2f8] sm:$0xff]
    %v290 = vld [vmem:[#allocation5 + $0x300] sm:$0xff]
    %v291 = vld [vmem:[#allocation5 + $0x308] sm:$0xff]
    %v292 = vld [vmem:[#allocation5 + $0x310] sm:$0xff]
    %v293 = vld [vmem:[#allocation5 + $0x318] sm:$0xff]
    %v294 = vld [vmem:[#allocation5 + $0x320] sm:$0xff]
    %v295 = vld [vmem:[#allocation5 + $0x328] sm:$0xff]
    %v296 = vld [vmem:[#allocation5 + $0x330] sm:$0xff]
    %v297 = vld [vmem:[#allocation5 + $0x338] sm:$0xff]
    %v298 = vld [vmem:[#allocation5 + $0x340] sm:$0xff]
    %v299 = vld [vmem:[#allocation5 + $0x348] sm:$0xff]
    %v300 = vld [vmem:[#allocation5 + $0x350] sm:$0xff]
    %v301 = vld [vmem:[#allocation5 + $0x358] sm:$0xff]
    %v302 = vld [vmem:[#allocation5 + $0x360] sm:$0xff]
    %v303 = vld [vmem:[#allocation5 + $0x368] sm:$0xff]
    %v304 = vld [vmem:[#allocation5 + $0x370] sm:$0xff]
    %v305 = vld [vmem:[#allocation5 + $0x378] sm:$0xff]
    %v306 = vld [vmem:[#allocation5 + $0x380] sm:$0xff]
    %v307 = vld [vmem:[#allocation5 + $0x388] sm:$0xff]
    %v308 = vld [vmem:[#allocation5 + $0x390] sm:$0xff]
    %v309 = vld [vmem:[#allocation5 + $0x398] sm:$0xff]
    %v310 = vld [vmem:[#allocation5 + $0x3a0] sm:$0xff]
    %v311 = vld [vmem:[#allocation5 + $0x3a8] sm:$0xff]
    %v312 = vld [vmem:[#allocation5 + $0x3b0] sm:$0xff]
    %v313 = vld [vmem:[#allocation5 + $0x3b8] sm:$0xff]
    %v314 = vld [vmem:[#allocation5 + $0x3c0] sm:$0xff]
    %v315 = vld [vmem:[#allocation5 + $0x3c8] sm:$0xff]
    %v316 = vld [vmem:[#allocation5 + $0x3d0] sm:$0xff]
    %v317 = vld [vmem:[#allocation5 + $0x3d8] sm:$0xff]
    %v318 = vld [vmem:[#allocation5 + $0x3e0] sm:$0xff]
    %v319 = vld [vmem:[#allocation5 + $0x3e8] sm:$0xff]
    %v320 = vld [vmem:[#allocation5 + $0x3f0] sm:$0xff]
    %v321 = vld [vmem:[#allocation5 + $0x3f8] sm:$0xff]
    %v322 = vld [vmem:[#allocation5 + $0x400] sm:$0xff]
    %v323 = vld [vmem:[#allocation5 + $0x408] sm:$0xff]
    %v324 = vld [vmem:[#allocation5 + $0x410] sm:$0xff]
    %v325 = vld [vmem:[#allocation5 + $0x418] sm:$0xff]
    %v326 = vld [vmem:[#allocation5 + $0x420] sm:$0xff]
    %v327 = vld [vmem:[#allocation5 + $0x428] sm:$0xff]
    %v328 = vld [vmem:[#allocation5 + $0x430] sm:$0xff]
    %v329 = vld [vmem:[#allocation5 + $0x438] sm:$0xff]
    %v330 = vld [vmem:[#allocation5 + $0x440] sm:$0xff]
    %v331 = vld [vmem:[#allocation5 + $0x448] sm:$0xff]
    %v332 = vld [vmem:[#allocation5 + $0x450] sm:$0xff]
    %v333 = vld [vmem:[#allocation5 + $0x458] sm:$0xff]
    %v334 = vld [vmem:[#allocation5 + $0x460] sm:$0xff]
    %v335 = vld [vmem:[#allocation5 + $0x468] sm:$0xff]
    %v336 = vld [vmem:[#allocation5 + $0x470] sm:$0xff]
    %v337 = vld [vmem:[#allocation5 + $0x478] sm:$0xff]
    %v338 = vld [vmem:[#allocation5 + $0x480] sm:$0xff]
    %v339 = vld [vmem:[#allocation5 + $0x488] sm:$0xff]
    %v340 = vld [vmem:[#allocation5 + $0x490] sm:$0xff]
    %v341 = vld [vmem:[#allocation5 + $0x498] sm:$0xff]
    %v342 = vld [vmem:[#allocation5 + $0x4a0] sm:$0xff]
    %v343 = vld [vmem:[#allocation5 + $0x4a8] sm:$0xff]
    %v344 = vld [vmem:[#allocation5 + $0x4b0] sm:$0xff]
    %v345 = vld [vmem:[#allocation5 + $0x4b8] sm:$0xff]
    %v346 = vld [vmem:[#allocation5 + $0x4c0] sm:$0xff]
    %v347 = vld [vmem:[#allocation5 + $0x4c8] sm:$0xff]
    %v348 = vld [vmem:[#allocation5 + $0x4d0] sm:$0xff]
    %v349 = vld [vmem:[#allocation5 + $0x4d8] sm:$0xff]
    %v350 = vld [vmem:[#allocation5 + $0x4e0] sm:$0xff]
    %v351 = vld [vmem:[#allocation5 + $0x4e8] sm:$0xff]
    %v352 = vld [vmem:[#allocation5 + $0x4f0] sm:$0xff]
    %v353 = vld [vmem:[#allocation5 + $0x4f8] sm:$0xff]
    %v354 = vld [vmem:[#allocation5 + $0x500] sm:$0xff]
    %v355 = vld [vmem:[#allocation5 + $0x508] sm:$0xff]
    %v356 = vld [vmem:[#allocation5 + $0x510] sm:$0xff]
    %v357 = vld [vmem:[#allocation5 + $0x518] sm:$0xff]
    %v358 = vld [vmem:[#allocation5 + $0x520] sm:$0xff]
    %v359 = vld [vmem:[#allocation5 + $0x528] sm:$0xff]
    %v360 = vld [vmem:[#allocation5 + $0x530] sm:$0xff]
    %v361 = vld [vmem:[#allocation5 + $0x538] sm:$0xff]
    %v362 = vld [vmem:[#allocation5 + $0x540] sm:$0xff]
    %v363 = vld [vmem:[#allocation5 + $0x548] sm:$0xff]
    %v364 = vld [vmem:[#allocation5 + $0x550] sm:$0xff]
    %v365 = vld [vmem:[#allocation5 + $0x558] sm:$0xff]
    %v366 = vld [vmem:[#allocation5 + $0x560] sm:$0xff]
    %v367 = vld [vmem:[#allocation5 + $0x568] sm:$0xff]
    %v368 = vld [vmem:[#allocation5 + $0x570] sm:$0xff]
    %v369 = vld [vmem:[#allocation5 + $0x578] sm:$0xff]
    %v370 = vld [vmem:[#allocation5 + $0x580] sm:$0xff]
    %v371 = vld [vmem:[#allocation5 + $0x588] sm:$0xff]
    %v372 = vld [vmem:[#allocation5 + $0x590] sm:$0xff]
    %v373 = vld [vmem:[#allocation5 + $0x598] sm:$0xff]
    %v374 = vld [vmem:[#allocation5 + $0x5a0] sm:$0xff]
    %v375 = vld [vmem:[#allocation5 + $0x5a8] sm:$0xff]
    %v376 = vld [vmem:[#allocation5 + $0x5b0] sm:$0xff]
    %v377 = vld [vmem:[#allocation5 + $0x5b8] sm:$0xff]
    %v378 = vld [vmem:[#allocation5 + $0x5c0] sm:$0xff]
    %v379 = vld [vmem:[#allocation5 + $0x5c8] sm:$0xff]
    %v380 = vld [vmem:[#allocation5 + $0x5d0] sm:$0xff]
    %v381 = vld [vmem:[#allocation5 + $0x5d8] sm:$0xff]
    %v382 = vld [vmem:[#allocation5 + $0x5e0] sm:$0xff]
    %v383 = vld [vmem:[#allocation5 + $0x5e8] sm:$0xff]
    %v384 = vld [vmem:[#allocation5 + $0x5f0] sm:$0xff]
    %v385 = vld [vmem:[#allocation5 + $0x5f8] sm:$0xff]
    %v386 = vld [vmem:[#allocation5 + $0x600] sm:$0xff]
    %v387 = vld [vmem:[#allocation5 + $0x608] sm:$0xff]
    %v388 = vld [vmem:[#allocation5 + $0x610] sm:$0xff]
    %v389 = vld [vmem:[#allocation5 + $0x618] sm:$0xff]
    %v390 = vld [vmem:[#allocation5 + $0x620] sm:$0xff]
    %v391 = vld [vmem:[#allocation5 + $0x628] sm:$0xff]
    %v392 = vld [vmem:[#allocation5 + $0x630] sm:$0xff]
    %v393 = vld [vmem:[#allocation5 + $0x638] sm:$0xff]
    %v394 = vld [vmem:[#allocation5 + $0x640] sm:$0xff]
    %v395 = vld [vmem:[#allocation5 + $0x648] sm:$0xff]
    %v396 = vld [vmem:[#allocation5 + $0x650] sm:$0xff]
    %v397 = vld [vmem:[#allocation5 + $0x658] sm:$0xff]
    %v398 = vld [vmem:[#allocation5 + $0x660] sm:$0xff]
    %v399 = vld [vmem:[#allocation5 + $0x668] sm:$0xff]
    %v400 = vld [vmem:[#allocation5 + $0x670] sm:$0xff]
    %v401 = vld [vmem:[#allocation5 + $0x678] sm:$0xff]
    %v402 = vld [vmem:[#allocation5 + $0x680] sm:$0xff]
    %v403 = vld [vmem:[#allocation5 + $0x688] sm:$0xff]
    %v404 = vld [vmem:[#allocation5 + $0x690] sm:$0xff]
    %v405 = vld [vmem:[#allocation5 + $0x698] sm:$0xff]
    %v406 = vld [vmem:[#allocation5 + $0x6a0] sm:$0xff]
    %v407 = vld [vmem:[#allocation5 + $0x6a8] sm:$0xff]
    %v408 = vld [vmem:[#allocation5 + $0x6b0] sm:$0xff]
    %v409 = vld [vmem:[#allocation5 + $0x6b8] sm:$0xff]
    %v410 = vld [vmem:[#allocation5 + $0x6c0] sm:$0xff]
    %v411 = vld [vmem:[#allocation5 + $0x6c8] sm:$0xff]
    %v412 = vld [vmem:[#allocation5 + $0x6d0] sm:$0xff]
    %v413 = vld [vmem:[#allocation5 + $0x6d8] sm:$0xff]
    %v414 = vld [vmem:[#allocation5 + $0x6e0] sm:$0xff]
    %v415 = vld [vmem:[#allocation5 + $0x6e8] sm:$0xff]
    %v416 = vld [vmem:[#allocation5 + $0x6f0] sm:$0xff]
    %v417 = vld [vmem:[#allocation5 + $0x6f8] sm:$0xff]
    %v418 = vld [vmem:[#allocation5 + $0x700] sm:$0xff]
    %v419 = vld [vmem:[#allocation5 + $0x708] sm:$0xff]
    %v420 = vld [vmem:[#allocation5 + $0x710] sm:$0xff]
    %v421 = vld [vmem:[#allocation5 + $0x718] sm:$0xff]
    %v422 = vld [vmem:[#allocation5 + $0x720] sm:$0xff]
    %v423 = vld [vmem:[#allocation5 + $0x728] sm:$0xff]
    %v424 = vld [vmem:[#allocation5 + $0x730] sm:$0xff]
    %v425 = vld [vmem:[#allocation5 + $0x738] sm:$0xff]
    %v426 = vld [vmem:[#allocation5 + $0x740] sm:$0xff]
    %v427 = vld [vmem:[#allocation5 + $0x748] sm:$0xff]
    %v428 = vld [vmem:[#allocation5 + $0x750] sm:$0xff]
    %v429 = vld [vmem:[#allocation5 + $0x758] sm:$0xff]
    %v430 = vld [vmem:[#allocation5 + $0x760] sm:$0xff]
    %v431 = vld [vmem:[#allocation5 + $0x768] sm:$0xff]
    %v432 = vld [vmem:[#allocation5 + $0x770] sm:$0xff]
    %v433 = vld [vmem:[#allocation5 + $0x778] sm:$0xff]
    %v434 = vld [vmem:[#allocation5 + $0x780] sm:$0xff]
    %v435 = vld [vmem:[#allocation5 + $0x788] sm:$0xff]
    %v436 = vld [vmem:[#allocation5 + $0x790] sm:$0xff]
    %v437 = vld [vmem:[#allocation5 + $0x798] sm:$0xff]
    %v438 = vld [vmem:[#allocation5 + $0x7a0] sm:$0xff]
    %v439 = vld [vmem:[#allocation5 + $0x7a8] sm:$0xff]
    %v440 = vld [vmem:[#allocation5 + $0x7b0] sm:$0xff]
    %v441 = vld [vmem:[#allocation5 + $0x7b8] sm:$0xff]
    %v442 = vld [vmem:[#allocation5 + $0x7c0] sm:$0xff]
    %v443 = vld [vmem:[#allocation5 + $0x7c8] sm:$0xff]
    %v444 = vld [vmem:[#allocation5 + $0x7d0] sm:$0xff]
    %v445 = vld [vmem:[#allocation5 + $0x7d8] sm:$0xff]
    %v446 = vld [vmem:[#allocation5 + $0x7e0] sm:$0xff]
    %v447 = vld [vmem:[#allocation5 + $0x7e8] sm:$0xff]
    %v448 = vld [vmem:[#allocation5 + $0x7f0] sm:$0xff]
    %v449 = vld [vmem:[#allocation5 + $0x7f8] sm:$0xff]
    %v450 = vld [vmem:[#allocation5 + $0x800] sm:$0xff]
    %v451 = vld [vmem:[#allocation5 + $0x808] sm:$0xff]
    %v452 = vld [vmem:[#allocation5 + $0x810] sm:$0xff]
    %v453 = vld [vmem:[#allocation5 + $0x818] sm:$0xff]
    %v454 = vld [vmem:[#allocation5 + $0x820] sm:$0xff]
    %v455 = vld [vmem:[#allocation5 + $0x828] sm:$0xff]
    %v456 = vld [vmem:[#allocation5 + $0x830] sm:$0xff]
    %v457 = vld [vmem:[#allocation5 + $0x838] sm:$0xff]
    %v458 = vld [vmem:[#allocation5 + $0x840] sm:$0xff]
    %v459 = vld [vmem:[#allocation5 + $0x848] sm:$0xff]
    %v460 = vld [vmem:[#allocation5 + $0x850] sm:$0xff]
    %v461 = vld [vmem:[#allocation5 + $0x858] sm:$0xff]
    %v462 = vld [vmem:[#allocation5 + $0x860] sm:$0xff]
    %v463 = vld [vmem:[#allocation5 + $0x868] sm:$0xff]
    %v464 = vld [vmem:[#allocation5 + $0x870] sm:$0xff]
    %v465 = vld [vmem:[#allocation5 + $0x878] sm:$0xff]
    %v466 = vld [vmem:[#allocation5 + $0x880] sm:$0xff]
    %v467 = vld [vmem:[#allocation5 + $0x888] sm:$0xff]
    %v468 = vld [vmem:[#allocation5 + $0x890] sm:$0xff]
    %v469 = vld [vmem:[#allocation5 + $0x898] sm:$0xff]
    %v470 = vld [vmem:[#allocation5 + $0x8a0] sm:$0xff]
    %v471 = vld [vmem:[#allocation5 + $0x8a8] sm:$0xff]
    %v472 = vld [vmem:[#allocation5 + $0x8b0] sm:$0xff]
    %v473 = vld [vmem:[#allocation5 + $0x8b8] sm:$0xff]
    %v474 = vld [vmem:[#allocation5 + $0x8c0] sm:$0xff]
    %v475 = vld [vmem:[#allocation5 + $0x8c8] sm:$0xff]
    %v476 = vld [vmem:[#allocation5 + $0x8d0] sm:$0xff]
    %v477 = vld [vmem:[#allocation5 + $0x8d8] sm:$0xff]
    %v478 = vld [vmem:[#allocation5 + $0x8e0] sm:$0xff]
    %v479 = vld [vmem:[#allocation5 + $0x8e8] sm:$0xff]
    %v480 = vld [vmem:[#allocation5 + $0x8f0] sm:$0xff]
    %v481 = vld [vmem:[#allocation5 + $0x8f8] sm:$0xff]
    %v482 = vld [vmem:[#allocation5 + $0x900] sm:$0xff]
    %v483 = vld [vmem:[#allocation5 + $0x908] sm:$0xff]
    %v484 = vld [vmem:[#allocation5 + $0x910] sm:$0xff]
    %v485 = vld [vmem:[#allocation5 + $0x918] sm:$0xff]
    %v486 = vld [vmem:[#allocation5 + $0x920] sm:$0xff]
    %v487 = vld [vmem:[#allocation5 + $0x928] sm:$0xff]
    %v488 = vld [vmem:[#allocation5 + $0x930] sm:$0xff]
    %v489 = vld [vmem:[#allocation5 + $0x938] sm:$0xff]
    %v490 = vld [vmem:[#allocation5 + $0x940] sm:$0xff]
    %v491 = vld [vmem:[#allocation5 + $0x948] sm:$0xff]
    %v492 = vld [vmem:[#allocation5 + $0x950] sm:$0xff]
    %v493 = vld [vmem:[#allocation5 + $0x958] sm:$0xff]
    %v494 = vld [vmem:[#allocation5 + $0x960] sm:$0xff]
    %v495 = vld [vmem:[#allocation5 + $0x968] sm:$0xff]
    %v496 = vld [vmem:[#allocation5 + $0x970] sm:$0xff]
    %v497 = vld [vmem:[#allocation5 + $0x978] sm:$0xff]
    %v498 = vld [vmem:[#allocation5 + $0x980] sm:$0xff]
    %v499 = vld [vmem:[#allocation5 + $0x988] sm:$0xff]
    %v500 = vld [vmem:[#allocation5 + $0x990] sm:$0xff]
    %v501 = vld [vmem:[#allocation5 + $0x998] sm:$0xff]
    %v502 = vld [vmem:[#allocation5 + $0x9a0] sm:$0xff]
    %v503 = vld [vmem:[#allocation5 + $0x9a8] sm:$0xff]
    %v504 = vld [vmem:[#allocation5 + $0x9b0] sm:$0xff]
    %v505 = vld [vmem:[#allocation5 + $0x9b8] sm:$0xff]
    %v506 = vld [vmem:[#allocation5 + $0x9c0] sm:$0xff]
    %v507 = vld [vmem:[#allocation5 + $0x9c8] sm:$0xff]
    %v508 = vld [vmem:[#allocation5 + $0x9d0] sm:$0xff]
    %v509 = vld [vmem:[#allocation5 + $0x9d8] sm:$0xff]
    %v510 = vld [vmem:[#allocation5 + $0x9e0] sm:$0xff]
    %v511 = vld [vmem:[#allocation5 + $0x9e8] sm:$0xff]
    %v512 = vld [vmem:[#allocation5 + $0x9f0] sm:$0xff]
    %v513 = vld [vmem:[#allocation5 + $0x9f8] sm:$0xff]
    %v514 = vld [vmem:[#allocation5 + $0xa00] sm:$0xff]
    %v515 = vld [vmem:[#allocation5 + $0xa08] sm:$0xff]
    %v516 = vld [vmem:[#allocation5 + $0xa10] sm:$0xff]
    %v517 = vld [vmem:[#allocation5 + $0xa18] sm:$0xff]
    %v518 = vld [vmem:[#allocation5 + $0xa20] sm:$0xff]
    %v519 = vld [vmem:[#allocation5 + $0xa28] sm:$0xff]
    %v520 = vld [vmem:[#allocation5 + $0xa30] sm:$0xff]
    %v521 = vld [vmem:[#allocation5 + $0xa38] sm:$0xff]
    %v522 = vld [vmem:[#allocation5 + $0xa40] sm:$0xff]
    %v523 = vld [vmem:[#allocation5 + $0xa48] sm:$0xff]
    %v524 = vld [vmem:[#allocation5 + $0xa50] sm:$0xff]
    %v525 = vld [vmem:[#allocation5 + $0xa58] sm:$0xff]
    %v526 = vld [vmem:[#allocation5 + $0xa60] sm:$0xff]
    %v527 = vld [vmem:[#allocation5 + $0xa68] sm:$0xff]
    %v528 = vld [vmem:[#allocation5 + $0xa70] sm:$0xff]
    %v529 = vld [vmem:[#allocation5 + $0xa78] sm:$0xff]
    %v530 = vld [vmem:[#allocation5 + $0xa80] sm:$0xff]
    %v531 = vld [vmem:[#allocation5 + $0xa88] sm:$0xff]
    %v532 = vld [vmem:[#allocation5 + $0xa90] sm:$0xff]
    %v533 = vld [vmem:[#allocation5 + $0xa98] sm:$0xff]
    %v534 = vld [vmem:[#allocation5 + $0xaa0] sm:$0xff]
    %v535 = vld [vmem:[#allocation5 + $0xaa8] sm:$0xff]
    %v536 = vld [vmem:[#allocation5 + $0xab0] sm:$0xff]
    %v537 = vld [vmem:[#allocation5 + $0xab8] sm:$0xff]
    %v538 = vld [vmem:[#allocation5 + $0xac0] sm:$0xff]
    %v539 = vld [vmem:[#allocation5 + $0xac8] sm:$0xff]
    %v540 = vld [vmem:[#allocation5 + $0xad0] sm:$0xff]
    %v541 = vld [vmem:[#allocation5 + $0xad8] sm:$0xff]
    %v542 = vld [vmem:[#allocation5 + $0xae0] sm:$0xff]
    %v543 = vld [vmem:[#allocation5 + $0xae8] sm:$0xff]
    %v544 = vld [vmem:[#allocation5 + $0xaf0] sm:$0xff]
    %v545 = vld [vmem:[#allocation5 + $0xaf8] sm:$0xff]
    %v546 = vld [vmem:[#allocation5 + $0xb00] sm:$0xff]
    %v547 = vld [vmem:[#allocation5 + $0xb08] sm:$0xff]
    %v548 = vld [vmem:[#allocation5 + $0xb10] sm:$0xff]
    %v549 = vld [vmem:[#allocation5 + $0xb18] sm:$0xff]
    %v550 = vld [vmem:[#allocation5 + $0xb20] sm:$0xff]
    %v551 = vld [vmem:[#allocation5 + $0xb28] sm:$0xff]
    %v552 = vld [vmem:[#allocation5 + $0xb30] sm:$0xff]
    %v553 = vld [vmem:[#allocation5 + $0xb38] sm:$0xff]
    %v554 = vld [vmem:[#allocation5 + $0xb40] sm:$0xff]
    %v555 = vld [vmem:[#allocation5 + $0xb48] sm:$0xff]
    %v556 = vld [vmem:[#allocation5 + $0xb50] sm:$0xff]
    %v557 = vld [vmem:[#allocation5 + $0xb58] sm:$0xff]
    %v558 = vld [vmem:[#allocation5 + $0xb60] sm:$0xff]
    %v559 = vld [vmem:[#allocation5 + $0xb68] sm:$0xff]
    %v560 = vld [vmem:[#allocation5 + $0xb70] sm:$0xff]
    %v561 = vld [vmem:[#allocation5 + $0xb78] sm:$0xff]
    %v562 = vld [vmem:[#allocation5 + $0xb80] sm:$0xff]
    %v563 = vld [vmem:[#allocation5 + $0xb88] sm:$0xff]
    %v564 = vld [vmem:[#allocation5 + $0xb90] sm:$0xff]
    %v565 = vld [vmem:[#allocation5 + $0xb98] sm:$0xff]
    %v566 = vld [vmem:[#allocation5 + $0xba0] sm:$0xff]
    %v567 = vld [vmem:[#allocation5 + $0xba8] sm:$0xff]
    %v568 = vld [vmem:[#allocation5 + $0xbb0] sm:$0xff]
    %v569 = vld [vmem:[#allocation5 + $0xbb8] sm:$0xff]
    %v570 = vld [vmem:[#allocation5 + $0xbc0] sm:$0xff]
    %v571 = vld [vmem:[#allocation5 + $0xbc8] sm:$0xff]
    %v572 = vld [vmem:[#allocation5 + $0xbd0] sm:$0xff]
    %v573 = vld [vmem:[#allocation5 + $0xbd8] sm:$0xff]
    %v574 = vld [vmem:[#allocation5 + $0xbe0] sm:$0xff]
    %v575 = vld [vmem:[#allocation5 + $0xbe8] sm:$0xff]
    %v576 = vld [vmem:[#allocation5 + $0xbf0] sm:$0xff]
    %v577 = vld [vmem:[#allocation5 + $0xbf8] sm:$0xff]
    %v578 = vld [vmem:[#allocation5 + $0xc00] sm:$0xff]
    %v579 = vld [vmem:[#allocation5 + $0xc08] sm:$0xff]
    %v580 = vld [vmem:[#allocation5 + $0xc10] sm:$0xff]
    %v581 = vld [vmem:[#allocation5 + $0xc18] sm:$0xff]
    %v582 = vld [vmem:[#allocation5 + $0xc20] sm:$0xff]
    %v583 = vld [vmem:[#allocation5 + $0xc28] sm:$0xff]
    %v584 = vld [vmem:[#allocation5 + $0xc30] sm:$0xff]
    %v585 = vld [vmem:[#allocation5 + $0xc38] sm:$0xff]
    %v586 = vld [vmem:[#allocation5 + $0xc40] sm:$0xff]
    %v587 = vld [vmem:[#allocation5 + $0xc48] sm:$0xff]
    %v588 = vld [vmem:[#allocation5 + $0xc50] sm:$0xff]
    %v589 = vld [vmem:[#allocation5 + $0xc58] sm:$0xff]
    %v590 = vld [vmem:[#allocation5 + $0xc60] sm:$0xff]
    %v591 = vld [vmem:[#allocation5 + $0xc68] sm:$0xff]
    %v592 = vld [vmem:[#allocation5 + $0xc70] sm:$0xff]
    %v593 = vld [vmem:[#allocation5 + $0xc78] sm:$0xff]
    %v594 = vld [vmem:[#allocation5 + $0xc80] sm:$0xff]
    %v595 = vld [vmem:[#allocation5 + $0xc88] sm:$0xff]
    %v596 = vld [vmem:[#allocation5 + $0xc90] sm:$0xff]
    %v597 = vld [vmem:[#allocation5 + $0xc98] sm:$0xff]
    %v598 = vld [vmem:[#allocation5 + $0xca0] sm:$0xff]
    %v599 = vld [vmem:[#allocation5 + $0xca8] sm:$0xff]
    %v600 = vld [vmem:[#allocation5 + $0xcb0] sm:$0xff]
    %v601 = vld [vmem:[#allocation5 + $0xcb8] sm:$0xff]
    %v602 = vld [vmem:[#allocation5 + $0xcc0] sm:$0xff]
    %v603 = vld [vmem:[#allocation5 + $0xcc8] sm:$0xff]
    %v604 = vld [vmem:[#allocation5 + $0xcd0] sm:$0xff]
    %v605 = vld [vmem:[#allocation5 + $0xcd8] sm:$0xff]
    %v606 = vld [vmem:[#allocation5 + $0xce0] sm:$0xff]
    %v607 = vld [vmem:[#allocation5 + $0xce8] sm:$0xff]
    %v608 = vld [vmem:[#allocation5 + $0xcf0] sm:$0xff]
    %v609 = vld [vmem:[#allocation5 + $0xcf8] sm:$0xff]
    %v610 = vld [vmem:[#allocation5 + $0xd00] sm:$0xff]
    %v611 = vld [vmem:[#allocation5 + $0xd08] sm:$0xff]
    %v612 = vld [vmem:[#allocation5 + $0xd10] sm:$0xff]
    %v613 = vld [vmem:[#allocation5 + $0xd18] sm:$0xff]
    %v614 = vld [vmem:[#allocation5 + $0xd20] sm:$0xff]
    %v615 = vld [vmem:[#allocation5 + $0xd28] sm:$0xff]
    %v616 = vld [vmem:[#allocation5 + $0xd30] sm:$0xff]
    %v617 = vld [vmem:[#allocation5 + $0xd38] sm:$0xff]
    %v618 = vld [vmem:[#allocation5 + $0xd40] sm:$0xff]
    %v619 = vld [vmem:[#allocation5 + $0xd48] sm:$0xff]
    %v620 = vld [vmem:[#allocation5 + $0xd50] sm:$0xff]
    %v621 = vld [vmem:[#allocation5 + $0xd58] sm:$0xff]
    %v622 = vld [vmem:[#allocation5 + $0xd60] sm:$0xff]
    %v623 = vld [vmem:[#allocation5 + $0xd68] sm:$0xff]
    %v624 = vld [vmem:[#allocation5 + $0xd70] sm:$0xff]
    %v625 = vld [vmem:[#allocation5 + $0xd78] sm:$0xff]
    %v626 = vld [vmem:[#allocation5 + $0xd80] sm:$0xff]
    %v627 = vld [vmem:[#allocation5 + $0xd88] sm:$0xff]
    %v628 = vld [vmem:[#allocation5 + $0xd90] sm:$0xff]
    %v629 = vld [vmem:[#allocation5 + $0xd98] sm:$0xff]
    %v630 = vld [vmem:[#allocation5 + $0xda0] sm:$0xff]
    %v631 = vld [vmem:[#allocation5 + $0xda8] sm:$0xff]
    %v632 = vld [vmem:[#allocation5 + $0xdb0] sm:$0xff]
    %v633 = vld [vmem:[#allocation5 + $0xdb8] sm:$0xff]
    %v634 = vld [vmem:[#allocation5 + $0xdc0] sm:$0xff]
    %v635 = vld [vmem:[#allocation5 + $0xdc8] sm:$0xff]
    %v636 = vld [vmem:[#allocation5 + $0xdd0] sm:$0xff]
    %v637 = vld [vmem:[#allocation5 + $0xdd8] sm:$0xff]
    %v638 = vld [vmem:[#allocation5 + $0xde0] sm:$0xff]
    %v639 = vld [vmem:[#allocation5 + $0xde8] sm:$0xff]
    %v640 = vld [vmem:[#allocation5 + $0xdf0] sm:$0xff]
    %v641 = vld [vmem:[#allocation5 + $0xdf8] sm:$0xff]
    %v642 = vld [vmem:[#allocation5 + $0xe00] sm:$0xff]
    %v643 = vld [vmem:[#allocation5 + $0xe08] sm:$0xff]
    %v644 = vld [vmem:[#allocation5 + $0xe10] sm:$0xff]
    %v645 = vld [vmem:[#allocation5 + $0xe18] sm:$0xff]
    %v646 = vld [vmem:[#allocation5 + $0xe20] sm:$0xff]
    %v647 = vld [vmem:[#allocation5 + $0xe28] sm:$0xff]
    %v648 = vld [vmem:[#allocation5 + $0xe30] sm:$0xff]
    %v649 = vld [vmem:[#allocation5 + $0xe38] sm:$0xff]
    %v650 = vld [vmem:[#allocation5 + $0xe40] sm:$0xff]
    %v651 = vld [vmem:[#allocation5 + $0xe48] sm:$0xff]
    %v652 = vld [vmem:[#allocation5 + $0xe50] sm:$0xff]
    %v653 = vld [vmem:[#allocation5 + $0xe58] sm:$0xff]
    %v654 = vld [vmem:[#allocation5 + $0xe60] sm:$0xff]
    %v655 = vld [vmem:[#allocation5 + $0xe68] sm:$0xff]
    %v656 = vld [vmem:[#allocation5 + $0xe70] sm:$0xff]
    %v657 = vld [vmem:[#allocation5 + $0xe78] sm:$0xff]
    %v658 = vld [vmem:[#allocation5 + $0xe80] sm:$0xff]
    %v659 = vld [vmem:[#allocation5 + $0xe88] sm:$0xff]
    %v660 = vld [vmem:[#allocation5 + $0xe90] sm:$0xff]
    %v661 = vld [vmem:[#allocation5 + $0xe98] sm:$0xff]
    %v662 = vld [vmem:[#allocation5 + $0xea0] sm:$0xff]
    %v663 = vld [vmem:[#allocation5 + $0xea8] sm:$0xff]
    %v664 = vld [vmem:[#allocation5 + $0xeb0] sm:$0xff]
    %v665 = vld [vmem:[#allocation5 + $0xeb8] sm:$0xff]
    %v666 = vld [vmem:[#allocation5 + $0xec0] sm:$0xff]
    %v667 = vld [vmem:[#allocation5 + $0xec8] sm:$0xff]
    %v668 = vld [vmem:[#allocation5 + $0xed0] sm:$0xff]
    %v669 = vld [vmem:[#allocation5 + $0xed8] sm:$0xff]
    %v670 = vld [vmem:[#allocation5 + $0xee0] sm:$0xff]
    %v671 = vld [vmem:[#allocation5 + $0xee8] sm:$0xff]
    %v672 = vld [vmem:[#allocation5 + $0xef0] sm:$0xff]
    %v673 = vld [vmem:[#allocation5 + $0xef8] sm:$0xff]
    %v674 = vld [vmem:[#allocation5 + $0xf00] sm:$0xff]
    %v675 = vld [vmem:[#allocation5 + $0xf08] sm:$0xff]
    %v676 = vld [vmem:[#allocation5 + $0xf10] sm:$0xff]
    %v677 = vld [vmem:[#allocation5 + $0xf18] sm:$0xff]
    %v678 = vld [vmem:[#allocation5 + $0xf20] sm:$0xff]
    %v679 = vld [vmem:[#allocation5 + $0xf28] sm:$0xff]
    %v680 = vld [vmem:[#allocation5 + $0xf30] sm:$0xff]
    %v681 = vld [vmem:[#allocation5 + $0xf38] sm:$0xff]
    %v682 = vld [vmem:[#allocation5 + $0xf40] sm:$0xff]
    %v683 = vld [vmem:[#allocation5 + $0xf48] sm:$0xff]
    %v684 = vld [vmem:[#allocation5 + $0xf50] sm:$0xff]
    %v685 = vld [vmem:[#allocation5 + $0xf58] sm:$0xff]
    %v686 = vld [vmem:[#allocation5 + $0xf60] sm:$0xff]
    %v687 = vld [vmem:[#allocation5 + $0xf68] sm:$0xff]
    %v688 = vld [vmem:[#allocation5 + $0xf70] sm:$0xff]
    %v689 = vld [vmem:[#allocation5 + $0xf78] sm:$0xff]
    %v690 = vld [vmem:[#allocation5 + $0xf80] sm:$0xff]
    %v691 = vld [vmem:[#allocation5 + $0xf88] sm:$0xff]
    %v692 = vld [vmem:[#allocation5 + $0xf90] sm:$0xff]
    %v693 = vld [vmem:[#allocation5 + $0xf98] sm:$0xff]
    %v694 = vld [vmem:[#allocation5 + $0xfa0] sm:$0xff]
    %v695 = vld [vmem:[#allocation5 + $0xfa8] sm:$0xff]
    %v696 = vld [vmem:[#allocation5 + $0xfb0] sm:$0xff]
    %v697 = vld [vmem:[#allocation5 + $0xfb8] sm:$0xff]
    %v698 = vld [vmem:[#allocation5 + $0xfc0] sm:$0xff]
    %v699 = vld [vmem:[#allocation5 + $0xfc8] sm:$0xff]
    %v700 = vld [vmem:[#allocation5 + $0xfd0] sm:$0xff]
    %v701 = vld [vmem:[#allocation5 + $0xfd8] sm:$0xff]
    %v702 = vld [vmem:[#allocation5 + $0xfe0] sm:$0xff]
    %v703 = vld [vmem:[#allocation5 + $0xfe8] sm:$0xff]
    %v704 = vld [vmem:[#allocation5 + $0xff0] sm:$0xff]
    %v705 = vld [vmem:[#allocation5 + $0xff8] sm:$0xff]
    %v706 = vld [vmem:[#allocation5 + $0x1000] sm:$0xff]
    %v707 = vld [vmem:[#allocation5 + $0x1008] sm:$0xff]
    %v708 = vld [vmem:[#allocation5 + $0x1010] sm:$0xff]
    %v709 = vld [vmem:[#allocation5 + $0x1018] sm:$0xff]
    %v710 = vld [vmem:[#allocation5 + $0x1020] sm:$0xff]
    %v711 = vld [vmem:[#allocation5 + $0x1028] sm:$0xff]
    %v712 = vld [vmem:[#allocation5 + $0x1030] sm:$0xff]
    %v713 = vld [vmem:[#allocation5 + $0x1038] sm:$0xff]
    %v714 = vld [vmem:[#allocation5 + $0x1040] sm:$0xff]
    %v715 = vld [vmem:[#allocation5 + $0x1048] sm:$0xff]
    %v716 = vld [vmem:[#allocation5 + $0x1050] sm:$0xff]
    %v717 = vld [vmem:[#allocation5 + $0x1058] sm:$0xff]
    %v718 = vld [vmem:[#allocation5 + $0x1060] sm:$0xff]
    %v719 = vld [vmem:[#allocation5 + $0x1068] sm:$0xff]
    %v720 = vld [vmem:[#allocation5 + $0x1070] sm:$0xff]
    %v721 = vld [vmem:[#allocation5 + $0x1078] sm:$0xff]
    %v722 = vld [vmem:[#allocation5 + $0x1080] sm:$0xff]
    %v723 = vld [vmem:[#allocation5 + $0x1088] sm:$0xff]
    %v724 = vld [vmem:[#allocation5 + $0x1090] sm:$0xff]
    %v725 = vld [vmem:[#allocation5 + $0x1098] sm:$0xff]
    %v726 = vld [vmem:[#allocation5 + $0x10a0] sm:$0xff]
    %v727 = vld [vmem:[#allocation5 + $0x10a8] sm:$0xff]
    %v728 = vld [vmem:[#allocation5 + $0x10b0] sm:$0xff]
    %v729 = vld [vmem:[#allocation5 + $0x10b8] sm:$0xff]
    %v730 = vld [vmem:[#allocation5 + $0x10c0] sm:$0xff]
    %v731 = vld [vmem:[#allocation5 + $0x10c8] sm:$0xff]
    %v732 = vld [vmem:[#allocation5 + $0x10d0] sm:$0xff]
    %v733 = vld [vmem:[#allocation5 + $0x10d8] sm:$0xff]
    %v734 = vld [vmem:[#allocation5 + $0x10e0] sm:$0xff]
    %v735 = vld [vmem:[#allocation5 + $0x10e8] sm:$0xff]
    %v736 = vld [vmem:[#allocation5 + $0x10f0] sm:$0xff]
    %v737 = vld [vmem:[#allocation5 + $0x10f8] sm:$0xff]
    %v738 = vld [vmem:[#allocation5 + $0x1100] sm:$0xff]
    %v739 = vld [vmem:[#allocation5 + $0x1108] sm:$0xff]
    %v740 = vld [vmem:[#allocation5 + $0x1110] sm:$0xff]
    %v741 = vld [vmem:[#allocation5 + $0x1118] sm:$0xff]
    %v742 = vld [vmem:[#allocation5 + $0x1120] sm:$0xff]
    %v743 = vld [vmem:[#allocation5 + $0x1128] sm:$0xff]
    %v744 = vld [vmem:[#allocation5 + $0x1130] sm:$0xff]
    %v745 = vld [vmem:[#allocation5 + $0x1138] sm:$0xff]
    %v746 = vld [vmem:[#allocation5 + $0x1140] sm:$0xff]
    %v747 = vld [vmem:[#allocation5 + $0x1148] sm:$0xff]
    %v748 = vld [vmem:[#allocation5 + $0x1150] sm:$0xff]
    %v749 = vld [vmem:[#allocation5 + $0x1158] sm:$0xff]
    %v750 = vld [vmem:[#allocation5 + $0x1160] sm:$0xff]
    %v751 = vld [vmem:[#allocation5 + $0x1168] sm:$0xff]
    %v752 = vld [vmem:[#allocation5 + $0x1170] sm:$0xff]
    %v753 = vld [vmem:[#allocation5 + $0x1178] sm:$0xff]
    %v754 = vld [vmem:[#allocation5 + $0x1180] sm:$0xff]
    %v755 = vld [vmem:[#allocation5 + $0x1188] sm:$0xff]
    %v756 = vld [vmem:[#allocation5 + $0x1190] sm:$0xff]
    %v757 = vld [vmem:[#allocation5 + $0x1198] sm:$0xff]
    %v758 = vld [vmem:[#allocation5 + $0x11a0] sm:$0xff]
    %v759 = vld [vmem:[#allocation5 + $0x11a8] sm:$0xff]
    %v760 = vld [vmem:[#allocation5 + $0x11b0] sm:$0xff]
    %v761 = vld [vmem:[#allocation5 + $0x11b8] sm:$0xff]
    %v762 = vld [vmem:[#allocation5 + $0x11c0] sm:$0xff]
    %v763 = vld [vmem:[#allocation5 + $0x11c8] sm:$0xff]
    %v764 = vld [vmem:[#allocation5 + $0x11d0] sm:$0xff]
    %v765 = vld [vmem:[#allocation5 + $0x11d8] sm:$0xff]
    %v766 = vld [vmem:[#allocation5 + $0x11e0] sm:$0xff]
    %v767 = vld [vmem:[#allocation5 + $0x11e8] sm:$0xff]
    %v768 = vld [vmem:[#allocation5 + $0x11f0] sm:$0xff]
    %v769 = vld [vmem:[#allocation5 + $0x11f8] sm:$0xff]
    %v770 = vld [vmem:[#allocation5 + $0x1200] sm:$0xff]
    %v771 = vld [vmem:[#allocation5 + $0x1208] sm:$0xff]
    %v772 = vld [vmem:[#allocation5 + $0x1210] sm:$0xff]
    %v773 = vld [vmem:[#allocation5 + $0x1218] sm:$0xff]
    %v774 = vld [vmem:[#allocation5 + $0x1220] sm:$0xff]
    %v775 = vld [vmem:[#allocation5 + $0x1228] sm:$0xff]
    %v776 = vld [vmem:[#allocation5 + $0x1230] sm:$0xff]
    %v777 = vld [vmem:[#allocation5 + $0x1238] sm:$0xff]
    %v778 = vld [vmem:[#allocation5 + $0x1240] sm:$0xff]
    %v779 = vld [vmem:[#allocation5 + $0x1248] sm:$0xff]
    %v780 = vld [vmem:[#allocation5 + $0x1250] sm:$0xff]
    %v781 = vld [vmem:[#allocation5 + $0x1258] sm:$0xff]
    %v782 = vld [vmem:[#allocation5 + $0x1260] sm:$0xff]
    %v783 = vld [vmem:[#allocation5 + $0x1268] sm:$0xff]
    %v784 = vld [vmem:[#allocation5 + $0x1270] sm:$0xff]
    %v785 = vld [vmem:[#allocation5 + $0x1278] sm:$0xff]
    %v786 = vld [vmem:[#allocation5 + $0x1280] sm:$0xff]
    %v787 = vld [vmem:[#allocation5 + $0x1288] sm:$0xff]
    %v788 = vld [vmem:[#allocation5 + $0x1290] sm:$0xff]
    %v789 = vld [vmem:[#allocation5 + $0x1298] sm:$0xff]
    %v790 = vld [vmem:[#allocation5 + $0x12a0] sm:$0xff]
    %v791 = vld [vmem:[#allocation5 + $0x12a8] sm:$0xff]
    %v792 = vld [vmem:[#allocation5 + $0x12b0] sm:$0xff]
    %v793 = vld [vmem:[#allocation5 + $0x12b8] sm:$0xff]
    %v794 = vld [vmem:[#allocation5 + $0x12c0] sm:$0xff]
    %v795 = vld [vmem:[#allocation5 + $0x12c8] sm:$0xff]
    %v796 = vld [vmem:[#allocation5 + $0x12d0] sm:$0xff]
    %v797 = vld [vmem:[#allocation5 + $0x12d8] sm:$0xff]
    %v798 = vld [vmem:[#allocation5 + $0x12e0] sm:$0xff]
    %v799 = vld [vmem:[#allocation5 + $0x12e8] sm:$0xff]
    %v800 = vld [vmem:[#allocation5 + $0x12f0] sm:$0xff]
    %v801 = vld [vmem:[#allocation5 + $0x12f8] sm:$0xff]
    %v802 = vld [vmem:[#allocation5 + $0x1300] sm:$0xff]
    %v803 = vld [vmem:[#allocation5 + $0x1308] sm:$0xff]
    %v804 = vld [vmem:[#allocation5 + $0x1310] sm:$0xff]
    %v805 = vld [vmem:[#allocation5 + $0x1318] sm:$0xff]
    %v806 = vld [vmem:[#allocation5 + $0x1320] sm:$0xff]
    %v807 = vld [vmem:[#allocation5 + $0x1328] sm:$0xff]
    %v808 = vld [vmem:[#allocation5 + $0x1330] sm:$0xff]
    %v809 = vld [vmem:[#allocation5 + $0x1338] sm:$0xff]
    %v810 = vld [vmem:[#allocation5 + $0x1340] sm:$0xff]
    %v811 = vld [vmem:[#allocation5 + $0x1348] sm:$0xff]
    %v812 = vld [vmem:[#allocation5 + $0x1350] sm:$0xff]
    %v813 = vld [vmem:[#allocation5 + $0x1358] sm:$0xff]
    %v814 = vld [vmem:[#allocation5 + $0x1360] sm:$0xff]
    %v815 = vld [vmem:[#allocation5 + $0x1368] sm:$0xff]
    %v816 = vld [vmem:[#allocation5 + $0x1370] sm:$0xff]
    %v817 = vld [vmem:[#allocation5 + $0x1378] sm:$0xff]
    %v818 = vld [vmem:[#allocation5 + $0x1380] sm:$0xff]
    %v819 = vld [vmem:[#allocation5 + $0x1388] sm:$0xff]
    %v820 = vld [vmem:[#allocation5 + $0x1390] sm:$0xff]
    %v821 = vld [vmem:[#allocation5 + $0x1398] sm:$0xff]
    %v822 = vld [vmem:[#allocation5 + $0x13a0] sm:$0xff]
    %v823 = vld [vmem:[#allocation5 + $0x13a8] sm:$0xff]
    %v824 = vld [vmem:[#allocation5 + $0x13b0] sm:$0xff]
    %v825 = vld [vmem:[#allocation5 + $0x13b8] sm:$0xff]
    %v826 = vld [vmem:[#allocation5 + $0x13c0] sm:$0xff]
    %v827 = vld [vmem:[#allocation5 + $0x13c8] sm:$0xff]
    %v828 = vld [vmem:[#allocation5 + $0x13d0] sm:$0xff]
    %v829 = vld [vmem:[#allocation5 + $0x13d8] sm:$0xff]
    %v830 = vld [vmem:[#allocation5 + $0x13e0] sm:$0xff]
    %v831 = vld [vmem:[#allocation5 + $0x13e8] sm:$0xff]
    %v832 = vld [vmem:[#allocation5 + $0x13f0] sm:$0xff]
    %v833 = vld [vmem:[#allocation5 + $0x13f8] sm:$0xff]
    %v834 = vld [vmem:[#allocation5 + $0x1400] sm:$0xff]
    %v835 = vld [vmem:[#allocation5 + $0x1408] sm:$0xff]
    %v836 = vld [vmem:[#allocation5 + $0x1410] sm:$0xff]
    %v837 = vld [vmem:[#allocation5 + $0x1418] sm:$0xff]
    %v838 = vld [vmem:[#allocation5 + $0x1420] sm:$0xff]
    %v839 = vld [vmem:[#allocation5 + $0x1428] sm:$0xff]
    %v840 = vld [vmem:[#allocation5 + $0x1430] sm:$0xff]
    %v841 = vld [vmem:[#allocation5 + $0x1438] sm:$0xff]
    %v842 = vld [vmem:[#allocation5 + $0x1440] sm:$0xff]
    %v843 = vld [vmem:[#allocation5 + $0x1448] sm:$0xff]
    %v844 = vld [vmem:[#allocation5 + $0x1450] sm:$0xff]
    %v845 = vld [vmem:[#allocation5 + $0x1458] sm:$0xff]
    %v846 = vld [vmem:[#allocation5 + $0x1460] sm:$0xff]
    %v847 = vld [vmem:[#allocation5 + $0x1468] sm:$0xff]
    %v848 = vld [vmem:[#allocation5 + $0x1470] sm:$0xff]
    %v849 = vld [vmem:[#allocation5 + $0x1478] sm:$0xff]
    %v850 = vld [vmem:[#allocation5 + $0x1480] sm:$0xff]
    %v851 = vld [vmem:[#allocation5 + $0x1488] sm:$0xff]
    %v852 = vld [vmem:[#allocation5 + $0x1490] sm:$0xff]
    %v853 = vld [vmem:[#allocation5 + $0x1498] sm:$0xff]
    %v854 = vld [vmem:[#allocation5 + $0x14a0] sm:$0xff]
    %v855 = vld [vmem:[#allocation5 + $0x14a8] sm:$0xff]
    %v856 = vld [vmem:[#allocation5 + $0x14b0] sm:$0xff]
    %v857 = vld [vmem:[#allocation5 + $0x14b8] sm:$0xff]
    %v858 = vld [vmem:[#allocation5 + $0x14c0] sm:$0xff]
    %v859 = vld [vmem:[#allocation5 + $0x14c8] sm:$0xff]
    %v860 = vld [vmem:[#allocation5 + $0x14d0] sm:$0xff]
    %v861 = vld [vmem:[#allocation5 + $0x14d8] sm:$0xff]
    %v862 = vld [vmem:[#allocation5 + $0x14e0] sm:$0xff]
    %v863 = vld [vmem:[#allocation5 + $0x14e8] sm:$0xff]
    %v864 = vld [vmem:[#allocation5 + $0x14f0] sm:$0xff]
    %v865 = vld [vmem:[#allocation5 + $0x14f8] sm:$0xff]
    %v866 = vld [vmem:[#allocation5 + $0x1500] sm:$0xff]
    %v867 = vld [vmem:[#allocation5 + $0x1508] sm:$0xff]
    %v868 = vld [vmem:[#allocation5 + $0x1510] sm:$0xff]
    %v869 = vld [vmem:[#allocation5 + $0x1518] sm:$0xff]
    %v870 = vld [vmem:[#allocation5 + $0x1520] sm:$0xff]
    %v871 = vld [vmem:[#allocation5 + $0x1528] sm:$0xff]
    %v872 = vld [vmem:[#allocation5 + $0x1530] sm:$0xff]
    %v873 = vld [vmem:[#allocation5 + $0x1538] sm:$0xff]
    %v874 = vld [vmem:[#allocation5 + $0x1540] sm:$0xff]
    %v875 = vld [vmem:[#allocation5 + $0x1548] sm:$0xff]
    %v876 = vld [vmem:[#allocation5 + $0x1550] sm:$0xff]
    %v877 = vld [vmem:[#allocation5 + $0x1558] sm:$0xff]
    %v878 = vld [vmem:[#allocation5 + $0x1560] sm:$0xff]
    %v879 = vld [vmem:[#allocation5 + $0x1568] sm:$0xff]
    %v880 = vld [vmem:[#allocation5 + $0x1570] sm:$0xff]
    %v881 = vld [vmem:[#allocation5 + $0x1578] sm:$0xff]
    %v882 = vld [vmem:[#allocation5 + $0x1580] sm:$0xff]
    %v883 = vld [vmem:[#allocation5 + $0x1588] sm:$0xff]
    %v884 = vld [vmem:[#allocation5 + $0x1590] sm:$0xff]
    %v885 = vld [vmem:[#allocation5 + $0x1598] sm:$0xff]
    %v886 = vld [vmem:[#allocation5 + $0x15a0] sm:$0xff]
    %v887 = vld [vmem:[#allocation5 + $0x15a8] sm:$0xff]
    %v888 = vld [vmem:[#allocation5 + $0x15b0] sm:$0xff]
    %v889 = vld [vmem:[#allocation5 + $0x15b8] sm:$0xff]
    %v890 = vld [vmem:[#allocation5 + $0x15c0] sm:$0xff]
    %v891 = vld [vmem:[#allocation5 + $0x15c8] sm:$0xff]
    %v892 = vld [vmem:[#allocation5 + $0x15d0] sm:$0xff]
    %v893 = vld [vmem:[#allocation5 + $0x15d8] sm:$0xff]
    %v894 = vld [vmem:[#allocation5 + $0x15e0] sm:$0xff]
    %v895 = vld [vmem:[#allocation5 + $0x15e8] sm:$0xff]
    %v896 = vld [vmem:[#allocation5 + $0x15f0] sm:$0xff]
    %v897 = vld [vmem:[#allocation5 + $0x15f8] sm:$0xff]
    %v898 = vld [vmem:[#allocation5 + $0x1600] sm:$0xff]
    %v899 = vld [vmem:[#allocation5 + $0x1608] sm:$0xff]
    %v900 = vld [vmem:[#allocation5 + $0x1610] sm:$0xff]
    %v901 = vld [vmem:[#allocation5 + $0x1618] sm:$0xff]
    %v902 = vld [vmem:[#allocation5 + $0x1620] sm:$0xff]
    %v903 = vld [vmem:[#allocation5 + $0x1628] sm:$0xff]
    %v904 = vld [vmem:[#allocation5 + $0x1630] sm:$0xff]
    %v905 = vld [vmem:[#allocation5 + $0x1638] sm:$0xff]
    %v906 = vld [vmem:[#allocation5 + $0x1640] sm:$0xff]
    %v907 = vld [vmem:[#allocation5 + $0x1648] sm:$0xff]
    %v908 = vld [vmem:[#allocation5 + $0x1650] sm:$0xff]
    %v909 = vld [vmem:[#allocation5 + $0x1658] sm:$0xff]
    %v910 = vld [vmem:[#allocation5 + $0x1660] sm:$0xff]
    %v911 = vld [vmem:[#allocation5 + $0x1668] sm:$0xff]
    %v912 = vld [vmem:[#allocation5 + $0x1670] sm:$0xff]
    %v913 = vld [vmem:[#allocation5 + $0x1678] sm:$0xff]
    %v914 = vld [vmem:[#allocation5 + $0x1680] sm:$0xff]
    %v915 = vld [vmem:[#allocation5 + $0x1688] sm:$0xff]
    %v916 = vld [vmem:[#allocation5 + $0x1690] sm:$0xff]
    %v917 = vld [vmem:[#allocation5 + $0x1698] sm:$0xff]
    %v918 = vld [vmem:[#allocation5 + $0x16a0] sm:$0xff]
    %v919 = vld [vmem:[#allocation5 + $0x16a8] sm:$0xff]
    %v920 = vld [vmem:[#allocation5 + $0x16b0] sm:$0xff]
    %v921 = vld [vmem:[#allocation5 + $0x16b8] sm:$0xff]
    %v922 = vld [vmem:[#allocation5 + $0x16c0] sm:$0xff]
    %v923 = vld [vmem:[#allocation5 + $0x16c8] sm:$0xff]
    %v924 = vld [vmem:[#allocation5 + $0x16d0] sm:$0xff]
    %v925 = vld [vmem:[#allocation5 + $0x16d8] sm:$0xff]
    %v926 = vld [vmem:[#allocation5 + $0x16e0] sm:$0xff]
    %v927 = vld [vmem:[#allocation5 + $0x16e8] sm:$0xff]
    %v928 = vld [vmem:[#allocation5 + $0x16f0] sm:$0xff]
    %v929 = vld [vmem:[#allocation5 + $0x16f8] sm:$0xff]
    %v930 = vld [vmem:[#allocation5 + $0x1700] sm:$0xff]
    %v931 = vld [vmem:[#allocation5 + $0x1708] sm:$0xff]
    %v932 = vld [vmem:[#allocation5 + $0x1710] sm:$0xff]
    %v933 = vld [vmem:[#allocation5 + $0x1718] sm:$0xff]
    %v934 = vld [vmem:[#allocation5 + $0x1720] sm:$0xff]
    %v935 = vld [vmem:[#allocation5 + $0x1728] sm:$0xff]
    %v936 = vld [vmem:[#allocation5 + $0x1730] sm:$0xff]
    %v937 = vld [vmem:[#allocation5 + $0x1738] sm:$0xff]
    %v938 = vld [vmem:[#allocation5 + $0x1740] sm:$0xff]
    %v939 = vld [vmem:[#allocation5 + $0x1748] sm:$0xff]
    %v940 = vld [vmem:[#allocation5 + $0x1750] sm:$0xff]
    %v941 = vld [vmem:[#allocation5 + $0x1758] sm:$0xff]
    %v942 = vld [vmem:[#allocation5 + $0x1760] sm:$0xff]
    %v943 = vld [vmem:[#allocation5 + $0x1768] sm:$0xff]
    %v944 = vld [vmem:[#allocation5 + $0x1770] sm:$0xff]
    %v945 = vld [vmem:[#allocation5 + $0x1778] sm:$0xff]
    %v946 = vld [vmem:[#allocation5 + $0x1780] sm:$0xff]
    %v947 = vld [vmem:[#allocation5 + $0x1788] sm:$0xff]
    %v948 = vld [vmem:[#allocation5 + $0x1790] sm:$0xff]
    %v949 = vld [vmem:[#allocation5 + $0x1798] sm:$0xff]
    %v950 = vld [vmem:[#allocation5 + $0x17a0] sm:$0xff]
    %v951 = vld [vmem:[#allocation5 + $0x17a8] sm:$0xff]
    %v952 = vld [vmem:[#allocation5 + $0x17b0] sm:$0xff]
    %v953 = vld [vmem:[#allocation5 + $0x17b8] sm:$0xff]
    %v954 = vld [vmem:[#allocation5 + $0x17c0] sm:$0xff]
    %v955 = vld [vmem:[#allocation5 + $0x17c8] sm:$0xff]
    %v956 = vld [vmem:[#allocation5 + $0x17d0] sm:$0xff]
    %v957 = vld [vmem:[#allocation5 + $0x17d8] sm:$0xff]
    %v958 = vld [vmem:[#allocation5 + $0x17e0] sm:$0xff]
    %v959 = vld [vmem:[#allocation5 + $0x17e8] sm:$0xff]
    %v960 = vld [vmem:[#allocation5 + $0x17f0] sm:$0xff]
    %v961 = vld [vmem:[#allocation5 + $0x17f8] sm:$0xff]
    %v962 = vld [vmem:[#allocation5 + $0x1800] sm:$0xff]
    %v963 = vld [vmem:[#allocation5 + $0x1808] sm:$0xff]
    %v964 = vld [vmem:[#allocation5 + $0x1810] sm:$0xff]
    %v965 = vld [vmem:[#allocation5 + $0x1818] sm:$0xff]
    %v966 = vld [vmem:[#allocation5 + $0x1820] sm:$0xff]
    %v967 = vld [vmem:[#allocation5 + $0x1828] sm:$0xff]
    %v968 = vld [vmem:[#allocation5 + $0x1830] sm:$0xff]
    %v969 = vld [vmem:[#allocation5 + $0x1838] sm:$0xff]
    %v970 = vld [vmem:[#allocation5 + $0x1840] sm:$0xff]
    %v971 = vld [vmem:[#allocation5 + $0x1848] sm:$0xff]
    %v972 = vld [vmem:[#allocation5 + $0x1850] sm:$0xff]
    %v973 = vld [vmem:[#allocation5 + $0x1858] sm:$0xff]
    %v974 = vld [vmem:[#allocation5 + $0x1860] sm:$0xff]
    %v975 = vld [vmem:[#allocation5 + $0x1868] sm:$0xff]
    %v976 = vld [vmem:[#allocation5 + $0x1870] sm:$0xff]
    %v977 = vld [vmem:[#allocation5 + $0x1878] sm:$0xff]
    %v978 = vld [vmem:[#allocation5 + $0x1880] sm:$0xff]
    %v979 = vld [vmem:[#allocation5 + $0x1888] sm:$0xff]
    %v980 = vld [vmem:[#allocation5 + $0x1890] sm:$0xff]
    %v981 = vld [vmem:[#allocation5 + $0x1898] sm:$0xff]
    %v982 = vld [vmem:[#allocation5 + $0x18a0] sm:$0xff]
    %v983 = vld [vmem:[#allocation5 + $0x18a8] sm:$0xff]
    %v984 = vld [vmem:[#allocation5 + $0x18b0] sm:$0xff]
    %v985 = vld [vmem:[#allocation5 + $0x18b8] sm:$0xff]
    %v986 = vld [vmem:[#allocation5 + $0x18c0] sm:$0xff]
    %v987 = vld [vmem:[#allocation5 + $0x18c8] sm:$0xff]
    %v988 = vld [vmem:[#allocation5 + $0x18d0] sm:$0xff]
    %v989 = vld [vmem:[#allocation5 + $0x18d8] sm:$0xff]
    %v990 = vld [vmem:[#allocation5 + $0x18e0] sm:$0xff]
    %v991 = vld [vmem:[#allocation5 + $0x18e8] sm:$0xff]
    %v992 = vld [vmem:[#allocation5 + $0x18f0] sm:$0xff]
    %v993 = vld [vmem:[#allocation5 + $0x18f8] sm:$0xff]
    %v994 = vld [vmem:[#allocation5 + $0x1900] sm:$0xff]
    %v995 = vld [vmem:[#allocation5 + $0x1908] sm:$0xff]
    %v996 = vld [vmem:[#allocation5 + $0x1910] sm:$0xff]
    %v997 = vld [vmem:[#allocation5 + $0x1918] sm:$0xff]
    %v998 = vld [vmem:[#allocation5 + $0x1920] sm:$0xff]
    %v999 = vld [vmem:[#allocation5 + $0x1928] sm:$0xff]
    %v1000 = vld [vmem:[#allocation5 + $0x1930] sm:$0xff]
    %v1001 = vld [vmem:[#allocation5 + $0x1938] sm:$0xff]
    %v1002 = vld [vmem:[#allocation5 + $0x1940] sm:$0xff]
    %v1003 = vld [vmem:[#allocation5 + $0x1948] sm:$0xff]
    %v1004 = vld [vmem:[#allocation5 + $0x1950] sm:$0xff]
    %v1005 = vld [vmem:[#allocation5 + $0x1958] sm:$0xff]
    %v1006 = vld [vmem:[#allocation5 + $0x1960] sm:$0xff]
    %v1007 = vld [vmem:[#allocation5 + $0x1968] sm:$0xff]
    %v1008 = vld [vmem:[#allocation5 + $0x1970] sm:$0xff]
    %v1009 = vld [vmem:[#allocation5 + $0x1978] sm:$0xff]
    %v1010 = vld [vmem:[#allocation5 + $0x1980] sm:$0xff]
    %v1011 = vld [vmem:[#allocation5 + $0x1988] sm:$0xff]
    %v1012 = vld [vmem:[#allocation5 + $0x1990] sm:$0xff]
    %v1013 = vld [vmem:[#allocation5 + $0x1998] sm:$0xff]
    %v1014 = vld [vmem:[#allocation5 + $0x19a0] sm:$0xff]
    %v1015 = vld [vmem:[#allocation5 + $0x19a8] sm:$0xff]
    %v1016 = vld [vmem:[#allocation5 + $0x19b0] sm:$0xff]
    %v1017 = vld [vmem:[#allocation5 + $0x19b8] sm:$0xff]
    %v1018 = vld [vmem:[#allocation5 + $0x19c0] sm:$0xff]
    %v1019 = vld [vmem:[#allocation5 + $0x19c8] sm:$0xff]
    %v1020 = vld [vmem:[#allocation5 + $0x19d0] sm:$0xff]
    %v1021 = vld [vmem:[#allocation5 + $0x19d8] sm:$0xff]
    %v1022 = vld [vmem:[#allocation5 + $0x19e0] sm:$0xff]
    %v1023 = vld [vmem:[#allocation5 + $0x19e8] sm:$0xff]
    %v1024 = vld [vmem:[#allocation5 + $0x19f0] sm:$0xff]
    %v1025 = vld [vmem:[#allocation5 + $0x19f8] sm:$0xff]
    %v1026 = vld [vmem:[#allocation5 + $0x1a00] sm:$0xff]
    %v1027 = vld [vmem:[#allocation5 + $0x1a08] sm:$0xff]
    %v1028 = vld [vmem:[#allocation5 + $0x1a10] sm:$0xff]
    %v1029 = vld [vmem:[#allocation5 + $0x1a18] sm:$0xff]
    %v1030 = vld [vmem:[#allocation5 + $0x1a20] sm:$0xff]
    %v1031 = vld [vmem:[#allocation5 + $0x1a28] sm:$0xff]
    %v1032 = vld [vmem:[#allocation5 + $0x1a30] sm:$0xff]
    %v1033 = vld [vmem:[#allocation5 + $0x1a38] sm:$0xff]
    %v1034 = vld [vmem:[#allocation5 + $0x1a40] sm:$0xff]
    %v1035 = vld [vmem:[#allocation5 + $0x1a48] sm:$0xff]
    %v1036 = vld [vmem:[#allocation5 + $0x1a50] sm:$0xff]
    %v1037 = vld [vmem:[#allocation5 + $0x1a58] sm:$0xff]
    %v1038 = vld [vmem:[#allocation5 + $0x1a60] sm:$0xff]
    %v1039 = vld [vmem:[#allocation5 + $0x1a68] sm:$0xff]
    %v1040 = vld [vmem:[#allocation5 + $0x1a70] sm:$0xff]
    %v1041 = vld [vmem:[#allocation5 + $0x1a78] sm:$0xff]
    %v1042 = vld [vmem:[#allocation5 + $0x1a80] sm:$0xff]
    %v1043 = vld [vmem:[#allocation5 + $0x1a88] sm:$0xff]
    %v1044 = vld [vmem:[#allocation5 + $0x1a90] sm:$0xff]
    %v1045 = vld [vmem:[#allocation5 + $0x1a98] sm:$0xff]
    %v1046 = vld [vmem:[#allocation5 + $0x1aa0] sm:$0xff]
    %v1047 = vld [vmem:[#allocation5 + $0x1aa8] sm:$0xff]
    %v1048 = vld [vmem:[#allocation5 + $0x1ab0] sm:$0xff]
    %v1049 = vld [vmem:[#allocation5 + $0x1ab8] sm:$0xff]
    %v1050 = vld [vmem:[#allocation5 + $0x1ac0] sm:$0xff]
    %v1051 = vld [vmem:[#allocation5 + $0x1ac8] sm:$0xff]
    %v1052 = vld [vmem:[#allocation5 + $0x1ad0] sm:$0xff]
    %v1053 = vld [vmem:[#allocation5 + $0x1ad8] sm:$0xff]
    %v1054 = vld [vmem:[#allocation5 + $0x1ae0] sm:$0xff]
    %v1055 = vld [vmem:[#allocation5 + $0x1ae8] sm:$0xff]
    %v1056 = vld [vmem:[#allocation5 + $0x1af0] sm:$0xff]
    %v1057 = vld [vmem:[#allocation5 + $0x1af8] sm:$0xff]
    %v1058 = vld [vmem:[#allocation5 + $0x1b00] sm:$0xff]
    %v1059 = vld [vmem:[#allocation5 + $0x1b08] sm:$0xff]
    %v1060 = vld [vmem:[#allocation5 + $0x1b10] sm:$0xff]
    %v1061 = vld [vmem:[#allocation5 + $0x1b18] sm:$0xff]
    %v1062 = vld [vmem:[#allocation5 + $0x1b20] sm:$0xff]
    %v1063 = vld [vmem:[#allocation5 + $0x1b28] sm:$0xff]
    %v1064 = vld [vmem:[#allocation5 + $0x1b30] sm:$0xff]
    %v1065 = vld [vmem:[#allocation5 + $0x1b38] sm:$0xff]
    %v1066 = vld [vmem:[#allocation5 + $0x1b40] sm:$0xff]
    %v1067 = vld [vmem:[#allocation5 + $0x1b48] sm:$0xff]
    %v1068 = vld [vmem:[#allocation5 + $0x1b50] sm:$0xff]
    %v1069 = vld [vmem:[#allocation5 + $0x1b58] sm:$0xff]
    %v1070 = vld [vmem:[#allocation5 + $0x1b60] sm:$0xff]
    %v1071 = vld [vmem:[#allocation5 + $0x1b68] sm:$0xff]
    %v1072 = vld [vmem:[#allocation5 + $0x1b70] sm:$0xff]
    %v1073 = vld [vmem:[#allocation5 + $0x1b78] sm:$0xff]
    %v1074 = vld [vmem:[#allocation5 + $0x1b80] sm:$0xff]
    %v1075 = vld [vmem:[#allocation5 + $0x1b88] sm:$0xff]
    %v1076 = vld [vmem:[#allocation5 + $0x1b90] sm:$0xff]
    %v1077 = vld [vmem:[#allocation5 + $0x1b98] sm:$0xff]
    %v1078 = vld [vmem:[#allocation5 + $0x1ba0] sm:$0xff]
    %v1079 = vld [vmem:[#allocation5 + $0x1ba8] sm:$0xff]
    %v1080 = vld [vmem:[#allocation5 + $0x1bb0] sm:$0xff]
    %v1081 = vld [vmem:[#allocation5 + $0x1bb8] sm:$0xff]
    %v1082 = vld [vmem:[#allocation5 + $0x1bc0] sm:$0xff]
    %v1083 = vld [vmem:[#allocation5 + $0x1bc8] sm:$0xff]
    %v1084 = vld [vmem:[#allocation5 + $0x1bd0] sm:$0xff]
    %v1085 = vld [vmem:[#allocation5 + $0x1bd8] sm:$0xff]
    %v1086 = vld [vmem:[#allocation5 + $0x1be0] sm:$0xff]
    %v1087 = vld [vmem:[#allocation5 + $0x1be8] sm:$0xff]
    %v1088 = vld [vmem:[#allocation5 + $0x1bf0] sm:$0xff]
    %v1089 = vld [vmem:[#allocation5 + $0x1bf8] sm:$0xff]
    %v1090 = vld [vmem:[#allocation5 + $0x1c00] sm:$0xff]
    %v1091 = vld [vmem:[#allocation5 + $0x1c08] sm:$0xff]
    %v1092 = vld [vmem:[#allocation5 + $0x1c10] sm:$0xff]
    %v1093 = vld [vmem:[#allocation5 + $0x1c18] sm:$0xff]
    %v1094 = vld [vmem:[#allocation5 + $0x1c20] sm:$0xff]
    %v1095 = vld [vmem:[#allocation5 + $0x1c28] sm:$0xff]
    %v1096 = vld [vmem:[#allocation5 + $0x1c30] sm:$0xff]
    %v1097 = vld [vmem:[#allocation5 + $0x1c38] sm:$0xff]
    %v1098 = vld [vmem:[#allocation5 + $0x1c40] sm:$0xff]
    %v1099 = vld [vmem:[#allocation5 + $0x1c48] sm:$0xff]
    %v1100 = vld [vmem:[#allocation5 + $0x1c50] sm:$0xff]
    %v1101 = vld [vmem:[#allocation5 + $0x1c58] sm:$0xff]
    %v1102 = vld [vmem:[#allocation5 + $0x1c60] sm:$0xff]
    %v1103 = vld [vmem:[#allocation5 + $0x1c68] sm:$0xff]
    %v1104 = vld [vmem:[#allocation5 + $0x1c70] sm:$0xff]
    %v1105 = vld [vmem:[#allocation5 + $0x1c78] sm:$0xff]
    %v1106 = vld [vmem:[#allocation5 + $0x1c80] sm:$0xff]
    %v1107 = vld [vmem:[#allocation5 + $0x1c88] sm:$0xff]
    %v1108 = vld [vmem:[#allocation5 + $0x1c90] sm:$0xff]
    %v1109 = vld [vmem:[#allocation5 + $0x1c98] sm:$0xff]
    %v1110 = vld [vmem:[#allocation5 + $0x1ca0] sm:$0xff]
    %v1111 = vld [vmem:[#allocation5 + $0x1ca8] sm:$0xff]
    %v1112 = vld [vmem:[#allocation5 + $0x1cb0] sm:$0xff]
    %v1113 = vld [vmem:[#allocation5 + $0x1cb8] sm:$0xff]
    %v1114 = vld [vmem:[#allocation5 + $0x1cc0] sm:$0xff]
    %v1115 = vld [vmem:[#allocation5 + $0x1cc8] sm:$0xff]
    %v1116 = vld [vmem:[#allocation5 + $0x1cd0] sm:$0xff]
    %v1117 = vld [vmem:[#allocation5 + $0x1cd8] sm:$0xff]
    %v1118 = vld [vmem:[#allocation5 + $0x1ce0] sm:$0xff]
    %v1119 = vld [vmem:[#allocation5 + $0x1ce8] sm:$0xff]
    %v1120 = vld [vmem:[#allocation5 + $0x1cf0] sm:$0xff]
    %v1121 = vld [vmem:[#allocation5 + $0x1cf8] sm:$0xff]
    %v1122 = vld [vmem:[#allocation5 + $0x1d00] sm:$0xff]
    %v1123 = vld [vmem:[#allocation5 + $0x1d08] sm:$0xff]
    %v1124 = vld [vmem:[#allocation5 + $0x1d10] sm:$0xff]
    %v1125 = vld [vmem:[#allocation5 + $0x1d18] sm:$0xff]
    %v1126 = vld [vmem:[#allocation5 + $0x1d20] sm:$0xff]
    %v1127 = vld [vmem:[#allocation5 + $0x1d28] sm:$0xff]
    %v1128 = vld [vmem:[#allocation5 + $0x1d30] sm:$0xff]
    %v1129 = vld [vmem:[#allocation5 + $0x1d38] sm:$0xff]
    %v1130 = vld [vmem:[#allocation5 + $0x1d40] sm:$0xff]
    %v1131 = vld [vmem:[#allocation5 + $0x1d48] sm:$0xff]
    %v1132 = vld [vmem:[#allocation5 + $0x1d50] sm:$0xff]
    %v1133 = vld [vmem:[#allocation5 + $0x1d58] sm:$0xff]
    %v1134 = vld [vmem:[#allocation5 + $0x1d60] sm:$0xff]
    %v1135 = vld [vmem:[#allocation5 + $0x1d68] sm:$0xff]
    %v1136 = vld [vmem:[#allocation5 + $0x1d70] sm:$0xff]
    %v1137 = vld [vmem:[#allocation5 + $0x1d78] sm:$0xff]
    %v1138 = vld [vmem:[#allocation5 + $0x1d80] sm:$0xff]
    %v1139 = vld [vmem:[#allocation5 + $0x1d88] sm:$0xff]
    %v1140 = vld [vmem:[#allocation5 + $0x1d90] sm:$0xff]
    %v1141 = vld [vmem:[#allocation5 + $0x1d98] sm:$0xff]
    %v1142 = vld [vmem:[#allocation5 + $0x1da0] sm:$0xff]
    %v1143 = vld [vmem:[#allocation5 + $0x1da8] sm:$0xff]
    %v1144 = vld [vmem:[#allocation5 + $0x1db0] sm:$0xff]
    %v1145 = vld [vmem:[#allocation5 + $0x1db8] sm:$0xff]
    %v1146 = vld [vmem:[#allocation5 + $0x1dc0] sm:$0xff]
    %v1147 = vld [vmem:[#allocation5 + $0x1dc8] sm:$0xff]
    %v1148 = vld [vmem:[#allocation5 + $0x1dd0] sm:$0xff]
    %v1149 = vld [vmem:[#allocation5 + $0x1dd8] sm:$0xff]
    %v1150 = vld [vmem:[#allocation5 + $0x1de0] sm:$0xff]
    %v1151 = vld [vmem:[#allocation5 + $0x1de8] sm:$0xff]
    %v1152 = vld [vmem:[#allocation5 + $0x1df0] sm:$0xff]
    %v1153 = vld [vmem:[#allocation5 + $0x1df8] sm:$0xff]
    %v1154 = vld [vmem:[#allocation5 + $0x1e00] sm:$0xff]
    %v1155 = vld [vmem:[#allocation5 + $0x1e08] sm:$0xff]
    %v1156 = vld [vmem:[#allocation5 + $0x1e10] sm:$0xff]
    %v1157 = vld [vmem:[#allocation5 + $0x1e18] sm:$0xff]
    %v1158 = vld [vmem:[#allocation5 + $0x1e20] sm:$0xff]
    %v1159 = vld [vmem:[#allocation5 + $0x1e28] sm:$0xff]
    %v1160 = vld [vmem:[#allocation5 + $0x1e30] sm:$0xff]
    %v1161 = vld [vmem:[#allocation5 + $0x1e38] sm:$0xff]
    %v1162 = vld [vmem:[#allocation5 + $0x1e40] sm:$0xff]
    %v1163 = vld [vmem:[#allocation5 + $0x1e48] sm:$0xff]
    %v1164 = vld [vmem:[#allocation5 + $0x1e50] sm:$0xff]
    %v1165 = vld [vmem:[#allocation5 + $0x1e58] sm:$0xff]
    %v1166 = vld [vmem:[#allocation5 + $0x1e60] sm:$0xff]
    %v1167 = vld [vmem:[#allocation5 + $0x1e68] sm:$0xff]
    %v1168 = vld [vmem:[#allocation5 + $0x1e70] sm:$0xff]
    %v1169 = vld [vmem:[#allocation5 + $0x1e78] sm:$0xff]
    %v1170 = vld [vmem:[#allocation5 + $0x1e80] sm:$0xff]
    %v1171 = vld [vmem:[#allocation5 + $0x1e88] sm:$0xff]
    %v1172 = vld [vmem:[#allocation5 + $0x1e90] sm:$0xff]
    %v1173 = vld [vmem:[#allocation5 + $0x1e98] sm:$0xff]
    %v1174 = vld [vmem:[#allocation5 + $0x1ea0] sm:$0xff]
    %v1175 = vld [vmem:[#allocation5 + $0x1ea8] sm:$0xff]
    %v1176 = vld [vmem:[#allocation5 + $0x1eb0] sm:$0xff]
    %v1177 = vld [vmem:[#allocation5 + $0x1eb8] sm:$0xff]
    %v1178 = vld [vmem:[#allocation5 + $0x1ec0] sm:$0xff]
    %v1179 = vld [vmem:[#allocation5 + $0x1ec8] sm:$0xff]
    %v1180 = vld [vmem:[#allocation5 + $0x1ed0] sm:$0xff]
    %v1181 = vld [vmem:[#allocation5 + $0x1ed8] sm:$0xff]
    %v1182 = vld [vmem:[#allocation5 + $0x1ee0] sm:$0xff]
    %v1183 = vld [vmem:[#allocation5 + $0x1ee8] sm:$0xff]
    %v1184 = vld [vmem:[#allocation5 + $0x1ef0] sm:$0xff]
    %v1185 = vld [vmem:[#allocation5 + $0x1ef8] sm:$0xff]
    %v1186 = vld [vmem:[#allocation5 + $0x1f00] sm:$0xff]
    %v1187 = vld [vmem:[#allocation5 + $0x1f08] sm:$0xff]
    %v1188 = vld [vmem:[#allocation5 + $0x1f10] sm:$0xff]
    %v1189 = vld [vmem:[#allocation5 + $0x1f18] sm:$0xff]
    %v1190 = vld [vmem:[#allocation5 + $0x1f20] sm:$0xff]
    %v1191 = vld [vmem:[#allocation5 + $0x1f28] sm:$0xff]
    %v1192 = vld [vmem:[#allocation5 + $0x1f30] sm:$0xff]
    %v1193 = vld [vmem:[#allocation5 + $0x1f38] sm:$0xff]
    %v1194 = vld [vmem:[#allocation5 + $0x1f40] sm:$0xff]
    %v1195 = vld [vmem:[#allocation5 + $0x1f48] sm:$0xff]
    %v1196 = vld [vmem:[#allocation5 + $0x1f50] sm:$0xff]
    %v1197 = vld [vmem:[#allocation5 + $0x1f58] sm:$0xff]
    %v1198 = vld [vmem:[#allocation5 + $0x1f60] sm:$0xff]
    %v1199 = vld [vmem:[#allocation5 + $0x1f68] sm:$0xff]
    %v1200 = vld [vmem:[#allocation5 + $0x1f70] sm:$0xff]
    %v1201 = vld [vmem:[#allocation5 + $0x1f78] sm:$0xff]
    %v1202 = vld [vmem:[#allocation5 + $0x1f80] sm:$0xff]
    %v1203 = vld [vmem:[#allocation5 + $0x1f88] sm:$0xff]
    %v1204 = vld [vmem:[#allocation5 + $0x1f90] sm:$0xff]
    %v1205 = vld [vmem:[#allocation5 + $0x1f98] sm:$0xff]
    %v1206 = vld [vmem:[#allocation5 + $0x1fa0] sm:$0xff]
    %v1207 = vld [vmem:[#allocation5 + $0x1fa8] sm:$0xff]
    %v1208 = vld [vmem:[#allocation5 + $0x1fb0] sm:$0xff]
    %v1209 = vld [vmem:[#allocation5 + $0x1fb8] sm:$0xff]
    %v1210 = vld [vmem:[#allocation5 + $0x1fc0] sm:$0xff]
    %v1211 = vld [vmem:[#allocation5 + $0x1fc8] sm:$0xff]
    %v1212 = vld [vmem:[#allocation5 + $0x1fd0] sm:$0xff]
    %v1213 = vld [vmem:[#allocation5 + $0x1fd8] sm:$0xff]
    %v1214 = vld [vmem:[#allocation5 + $0x1fe0] sm:$0xff]
    %v1215 = vld [vmem:[#allocation5 + $0x1fe8] sm:$0xff]
    %v1216 = vld [vmem:[#allocation5 + $0x1ff0] sm:$0xff]
    %v1217 = vld [vmem:[#allocation5 + $0x1ff8] sm:$0xff]
    %v1218 = vunpack.c.l.s8.bf16 %v194
    %v1219 = vunpack.c.l.s8.bf16 %v195
    %v1220 = vunpack.c.l.s8.bf16 %v196
    %v1221 = vunpack.c.l.s8.bf16 %v197
    %v1222 = vunpack.c.l.s8.bf16 %v198
    %v1223 = vunpack.c.l.s8.bf16 %v199
    %v1224 = vunpack.c.l.s8.bf16 %v200
    %v1225 = vunpack.c.l.s8.bf16 %v201
    %v1226 = vunpack.c.h.s8.bf16 %v194
    %v1227 = vunpack.c.h.s8.bf16 %v195
    %v1228 = vunpack.c.h.s8.bf16 %v196
    %v1229 = vunpack.c.h.s8.bf16 %v197
    %v1230 = vunpack.c.h.s8.bf16 %v198
    %v1231 = vunpack.c.h.s8.bf16 %v199
    %v1232 = vunpack.c.h.s8.bf16 %v200
    %v1233 = vunpack.c.h.s8.bf16 %v201
    %v1234 = vunpack.c.l.s8.bf16 %v202
    %v1235 = vunpack.c.l.s8.bf16 %v203
    %v1236 = vunpack.c.l.s8.bf16 %v204
    %v1237 = vunpack.c.l.s8.bf16 %v205
    %v1238 = vunpack.c.l.s8.bf16 %v206
    %v1239 = vunpack.c.l.s8.bf16 %v207
    %v1240 = vunpack.c.l.s8.bf16 %v208
    %v1241 = vunpack.c.l.s8.bf16 %v209
    %v1242 = vunpack.c.h.s8.bf16 %v202
    %v1243 = vunpack.c.h.s8.bf16 %v203
    %v1244 = vunpack.c.h.s8.bf16 %v204
    %v1245 = vunpack.c.h.s8.bf16 %v205
    %v1246 = vunpack.c.h.s8.bf16 %v206
    %v1247 = vunpack.c.h.s8.bf16 %v207
    %v1248 = vunpack.c.h.s8.bf16 %v208
    %v1249 = vunpack.c.h.s8.bf16 %v209
    %v1250 = vunpack.c.l.s8.bf16 %v210
    %v1251 = vunpack.c.l.s8.bf16 %v211
    %v1252 = vunpack.c.l.s8.bf16 %v212
    %v1253 = vunpack.c.l.s8.bf16 %v213
    %v1254 = vunpack.c.l.s8.bf16 %v214
    %v1255 = vunpack.c.l.s8.bf16 %v215
    %v1256 = vunpack.c.l.s8.bf16 %v216
    %v1257 = vunpack.c.l.s8.bf16 %v217
    %v1258 = vunpack.c.h.s8.bf16 %v210
    %v1259 = vunpack.c.h.s8.bf16 %v211
    %v1260 = vunpack.c.h.s8.bf16 %v212
    %v1261 = vunpack.c.h.s8.bf16 %v213
    %v1262 = vunpack.c.h.s8.bf16 %v214
    %v1263 = vunpack.c.h.s8.bf16 %v215
    %v1264 = vunpack.c.h.s8.bf16 %v216
    %v1265 = vunpack.c.h.s8.bf16 %v217
    %v1266 = vunpack.c.l.s8.bf16 %v218
    %v1267 = vunpack.c.l.s8.bf16 %v219
    %v1268 = vunpack.c.l.s8.bf16 %v220
    %v1269 = vunpack.c.l.s8.bf16 %v221
    %v1270 = vunpack.c.l.s8.bf16 %v222
    %v1271 = vunpack.c.l.s8.bf16 %v223
    %v1272 = vunpack.c.l.s8.bf16 %v224
    %v1273 = vunpack.c.l.s8.bf16 %v225
    %v1274 = vunpack.c.h.s8.bf16 %v218
    %v1275 = vunpack.c.h.s8.bf16 %v219
    %v1276 = vunpack.c.h.s8.bf16 %v220
    %v1277 = vunpack.c.h.s8.bf16 %v221
    %v1278 = vunpack.c.h.s8.bf16 %v222
    %v1279 = vunpack.c.h.s8.bf16 %v223
    %v1280 = vunpack.c.h.s8.bf16 %v224
    %v1281 = vunpack.c.h.s8.bf16 %v225
    %v1282 = vunpack.c.l.s8.bf16 %v226
    %v1283 = vunpack.c.l.s8.bf16 %v227
    %v1284 = vunpack.c.l.s8.bf16 %v228
    %v1285 = vunpack.c.l.s8.bf16 %v229
    %v1286 = vunpack.c.l.s8.bf16 %v230
    %v1287 = vunpack.c.l.s8.bf16 %v231
    %v1288 = vunpack.c.l.s8.bf16 %v232
    %v1289 = vunpack.c.l.s8.bf16 %v233
    %v1290 = vunpack.c.h.s8.bf16 %v226
    %v1291 = vunpack.c.h.s8.bf16 %v227
    %v1292 = vunpack.c.h.s8.bf16 %v228
    %v1293 = vunpack.c.h.s8.bf16 %v229
    %v1294 = vunpack.c.h.s8.bf16 %v230
    %v1295 = vunpack.c.h.s8.bf16 %v231
    %v1296 = vunpack.c.h.s8.bf16 %v232
    %v1297 = vunpack.c.h.s8.bf16 %v233
    %v1298 = vunpack.c.l.s8.bf16 %v234
    %v1299 = vunpack.c.l.s8.bf16 %v235
    %v1300 = vunpack.c.l.s8.bf16 %v236
    %v1301 = vunpack.c.l.s8.bf16 %v237
    %v1302 = vunpack.c.l.s8.bf16 %v238
    %v1303 = vunpack.c.l.s8.bf16 %v239
    %v1304 = vunpack.c.l.s8.bf16 %v240
    %v1305 = vunpack.c.l.s8.bf16 %v241
    %v1306 = vunpack.c.h.s8.bf16 %v234
    %v1307 = vunpack.c.h.s8.bf16 %v235
    %v1308 = vunpack.c.h.s8.bf16 %v236
    %v1309 = vunpack.c.h.s8.bf16 %v237
    %v1310 = vunpack.c.h.s8.bf16 %v238
    %v1311 = vunpack.c.h.s8.bf16 %v239
    %v1312 = vunpack.c.h.s8.bf16 %v240
    %v1313 = vunpack.c.h.s8.bf16 %v241
    %v1314 = vunpack.c.l.s8.bf16 %v242
    %v1315 = vunpack.c.l.s8.bf16 %v243
    %v1316 = vunpack.c.l.s8.bf16 %v244
    %v1317 = vunpack.c.l.s8.bf16 %v245
    %v1318 = vunpack.c.l.s8.bf16 %v246
    %v1319 = vunpack.c.l.s8.bf16 %v247
    %v1320 = vunpack.c.l.s8.bf16 %v248
    %v1321 = vunpack.c.l.s8.bf16 %v249
    %v1322 = vunpack.c.h.s8.bf16 %v242
    %v1323 = vunpack.c.h.s8.bf16 %v243
    %v1324 = vunpack.c.h.s8.bf16 %v244
    %v1325 = vunpack.c.h.s8.bf16 %v245
    %v1326 = vunpack.c.h.s8.bf16 %v246
    %v1327 = vunpack.c.h.s8.bf16 %v247
    %v1328 = vunpack.c.h.s8.bf16 %v248
    %v1329 = vunpack.c.h.s8.bf16 %v249
    %v1330 = vunpack.c.l.s8.bf16 %v250
    %v1331 = vunpack.c.l.s8.bf16 %v251
    %v1332 = vunpack.c.l.s8.bf16 %v252
    %v1333 = vunpack.c.l.s8.bf16 %v253
    %v1334 = vunpack.c.l.s8.bf16 %v254
    %v1335 = vunpack.c.l.s8.bf16 %v255
    %v1336 = vunpack.c.l.s8.bf16 %v256
    %v1337 = vunpack.c.l.s8.bf16 %v257
    %v1338 = vunpack.c.h.s8.bf16 %v250
    %v1339 = vunpack.c.h.s8.bf16 %v251
    %v1340 = vunpack.c.h.s8.bf16 %v252
    %v1341 = vunpack.c.h.s8.bf16 %v253
    %v1342 = vunpack.c.h.s8.bf16 %v254
    %v1343 = vunpack.c.h.s8.bf16 %v255
    %v1344 = vunpack.c.h.s8.bf16 %v256
    %v1345 = vunpack.c.h.s8.bf16 %v257
    %v1346 = vunpack.c.l.s8.bf16 %v258
    %v1347 = vunpack.c.l.s8.bf16 %v259
    %v1348 = vunpack.c.l.s8.bf16 %v260
    %v1349 = vunpack.c.l.s8.bf16 %v261
    %v1350 = vunpack.c.l.s8.bf16 %v262
    %v1351 = vunpack.c.l.s8.bf16 %v263
    %v1352 = vunpack.c.l.s8.bf16 %v264
    %v1353 = vunpack.c.l.s8.bf16 %v265
    %v1354 = vunpack.c.h.s8.bf16 %v258
    %v1355 = vunpack.c.h.s8.bf16 %v259
    %v1356 = vunpack.c.h.s8.bf16 %v260
    %v1357 = vunpack.c.h.s8.bf16 %v261
    %v1358 = vunpack.c.h.s8.bf16 %v262
    %v1359 = vunpack.c.h.s8.bf16 %v263
    %v1360 = vunpack.c.h.s8.bf16 %v264
    %v1361 = vunpack.c.h.s8.bf16 %v265
    %v1362 = vunpack.c.l.s8.bf16 %v266
    %v1363 = vunpack.c.l.s8.bf16 %v267
    %v1364 = vunpack.c.l.s8.bf16 %v268
    %v1365 = vunpack.c.l.s8.bf16 %v269
    %v1366 = vunpack.c.l.s8.bf16 %v270
    %v1367 = vunpack.c.l.s8.bf16 %v271
    %v1368 = vunpack.c.l.s8.bf16 %v272
    %v1369 = vunpack.c.l.s8.bf16 %v273
    %v1370 = vunpack.c.h.s8.bf16 %v266
    %v1371 = vunpack.c.h.s8.bf16 %v267
    %v1372 = vunpack.c.h.s8.bf16 %v268
    %v1373 = vunpack.c.h.s8.bf16 %v269
    %v1374 = vunpack.c.h.s8.bf16 %v270
    %v1375 = vunpack.c.h.s8.bf16 %v271
    %v1376 = vunpack.c.h.s8.bf16 %v272
    %v1377 = vunpack.c.h.s8.bf16 %v273
    %v1378 = vunpack.c.l.s8.bf16 %v274
    %v1379 = vunpack.c.l.s8.bf16 %v275
    %v1380 = vunpack.c.l.s8.bf16 %v276
    %v1381 = vunpack.c.l.s8.bf16 %v277
    %v1382 = vunpack.c.l.s8.bf16 %v278
    %v1383 = vunpack.c.l.s8.bf16 %v279
    %v1384 = vunpack.c.l.s8.bf16 %v280
    %v1385 = vunpack.c.l.s8.bf16 %v281
    %v1386 = vunpack.c.h.s8.bf16 %v274
    %v1387 = vunpack.c.h.s8.bf16 %v275
    %v1388 = vunpack.c.h.s8.bf16 %v276
    %v1389 = vunpack.c.h.s8.bf16 %v277
    %v1390 = vunpack.c.h.s8.bf16 %v278
    %v1391 = vunpack.c.h.s8.bf16 %v279
    %v1392 = vunpack.c.h.s8.bf16 %v280
    %v1393 = vunpack.c.h.s8.bf16 %v281
    %v1394 = vunpack.c.l.s8.bf16 %v282
    %v1395 = vunpack.c.l.s8.bf16 %v283
    %v1396 = vunpack.c.l.s8.bf16 %v284
    %v1397 = vunpack.c.l.s8.bf16 %v285
    %v1398 = vunpack.c.l.s8.bf16 %v286
    %v1399 = vunpack.c.l.s8.bf16 %v287
    %v1400 = vunpack.c.l.s8.bf16 %v288
    %v1401 = vunpack.c.l.s8.bf16 %v289
    %v1402 = vunpack.c.h.s8.bf16 %v282
    %v1403 = vunpack.c.h.s8.bf16 %v283
    %v1404 = vunpack.c.h.s8.bf16 %v284
    %v1405 = vunpack.c.h.s8.bf16 %v285
    %v1406 = vunpack.c.h.s8.bf16 %v286
    %v1407 = vunpack.c.h.s8.bf16 %v287
    %v1408 = vunpack.c.h.s8.bf16 %v288
    %v1409 = vunpack.c.h.s8.bf16 %v289
    %v1410 = vunpack.c.l.s8.bf16 %v290
    %v1411 = vunpack.c.l.s8.bf16 %v291
    %v1412 = vunpack.c.l.s8.bf16 %v292
    %v1413 = vunpack.c.l.s8.bf16 %v293
    %v1414 = vunpack.c.l.s8.bf16 %v294
    %v1415 = vunpack.c.l.s8.bf16 %v295
    %v1416 = vunpack.c.l.s8.bf16 %v296
    %v1417 = vunpack.c.l.s8.bf16 %v297
    %v1418 = vunpack.c.h.s8.bf16 %v290
    %v1419 = vunpack.c.h.s8.bf16 %v291
    %v1420 = vunpack.c.h.s8.bf16 %v292
    %v1421 = vunpack.c.h.s8.bf16 %v293
    %v1422 = vunpack.c.h.s8.bf16 %v294
    %v1423 = vunpack.c.h.s8.bf16 %v295
    %v1424 = vunpack.c.h.s8.bf16 %v296
    %v1425 = vunpack.c.h.s8.bf16 %v297
    %v1426 = vunpack.c.l.s8.bf16 %v298
    %v1427 = vunpack.c.l.s8.bf16 %v299
    %v1428 = vunpack.c.l.s8.bf16 %v300
    %v1429 = vunpack.c.l.s8.bf16 %v301
    %v1430 = vunpack.c.l.s8.bf16 %v302
    %v1431 = vunpack.c.l.s8.bf16 %v303
    %v1432 = vunpack.c.l.s8.bf16 %v304
    %v1433 = vunpack.c.l.s8.bf16 %v305
    %v1434 = vunpack.c.h.s8.bf16 %v298
    %v1435 = vunpack.c.h.s8.bf16 %v299
    %v1436 = vunpack.c.h.s8.bf16 %v300
    %v1437 = vunpack.c.h.s8.bf16 %v301
    %v1438 = vunpack.c.h.s8.bf16 %v302
    %v1439 = vunpack.c.h.s8.bf16 %v303
    %v1440 = vunpack.c.h.s8.bf16 %v304
    %v1441 = vunpack.c.h.s8.bf16 %v305
    %v1442 = vunpack.c.l.s8.bf16 %v306
    %v1443 = vunpack.c.l.s8.bf16 %v307
    %v1444 = vunpack.c.l.s8.bf16 %v308
    %v1445 = vunpack.c.l.s8.bf16 %v309
    %v1446 = vunpack.c.l.s8.bf16 %v310
    %v1447 = vunpack.c.l.s8.bf16 %v311
    %v1448 = vunpack.c.l.s8.bf16 %v312
    %v1449 = vunpack.c.l.s8.bf16 %v313
    %v1450 = vunpack.c.h.s8.bf16 %v306
    %v1451 = vunpack.c.h.s8.bf16 %v307
    %v1452 = vunpack.c.h.s8.bf16 %v308
    %v1453 = vunpack.c.h.s8.bf16 %v309
    %v1454 = vunpack.c.h.s8.bf16 %v310
    %v1455 = vunpack.c.h.s8.bf16 %v311
    %v1456 = vunpack.c.h.s8.bf16 %v312
    %v1457 = vunpack.c.h.s8.bf16 %v313
    %v1458 = vunpack.c.l.s8.bf16 %v314
    %v1459 = vunpack.c.l.s8.bf16 %v315
    %v1460 = vunpack.c.l.s8.bf16 %v316
    %v1461 = vunpack.c.l.s8.bf16 %v317
    %v1462 = vunpack.c.l.s8.bf16 %v318
    %v1463 = vunpack.c.l.s8.bf16 %v319
    %v1464 = vunpack.c.l.s8.bf16 %v320
    %v1465 = vunpack.c.l.s8.bf16 %v321
    %v1466 = vunpack.c.h.s8.bf16 %v314
    %v1467 = vunpack.c.h.s8.bf16 %v315
    %v1468 = vunpack.c.h.s8.bf16 %v316
    %v1469 = vunpack.c.h.s8.bf16 %v317
    %v1470 = vunpack.c.h.s8.bf16 %v318
    %v1471 = vunpack.c.h.s8.bf16 %v319
    %v1472 = vunpack.c.h.s8.bf16 %v320
    %v1473 = vunpack.c.h.s8.bf16 %v321
    %v1474 = vunpack.c.l.s8.bf16 %v322
    %v1475 = vunpack.c.l.s8.bf16 %v323
    %v1476 = vunpack.c.l.s8.bf16 %v324
    %v1477 = vunpack.c.l.s8.bf16 %v325
    %v1478 = vunpack.c.l.s8.bf16 %v326
    %v1479 = vunpack.c.l.s8.bf16 %v327
    %v1480 = vunpack.c.l.s8.bf16 %v328
    %v1481 = vunpack.c.l.s8.bf16 %v329
    %v1482 = vunpack.c.h.s8.bf16 %v322
    %v1483 = vunpack.c.h.s8.bf16 %v323
    %v1484 = vunpack.c.h.s8.bf16 %v324
    %v1485 = vunpack.c.h.s8.bf16 %v325
    %v1486 = vunpack.c.h.s8.bf16 %v326
    %v1487 = vunpack.c.h.s8.bf16 %v327
    %v1488 = vunpack.c.h.s8.bf16 %v328
    %v1489 = vunpack.c.h.s8.bf16 %v329
    %v1490 = vunpack.c.l.s8.bf16 %v330
    %v1491 = vunpack.c.l.s8.bf16 %v331
    %v1492 = vunpack.c.l.s8.bf16 %v332
    %v1493 = vunpack.c.l.s8.bf16 %v333
    %v1494 = vunpack.c.l.s8.bf16 %v334
    %v1495 = vunpack.c.l.s8.bf16 %v335
    %v1496 = vunpack.c.l.s8.bf16 %v336
    %v1497 = vunpack.c.l.s8.bf16 %v337
    %v1498 = vunpack.c.h.s8.bf16 %v330
    %v1499 = vunpack.c.h.s8.bf16 %v331
    %v1500 = vunpack.c.h.s8.bf16 %v332
    %v1501 = vunpack.c.h.s8.bf16 %v333
    %v1502 = vunpack.c.h.s8.bf16 %v334
    %v1503 = vunpack.c.h.s8.bf16 %v335
    %v1504 = vunpack.c.h.s8.bf16 %v336
    %v1505 = vunpack.c.h.s8.bf16 %v337
    %v1506 = vunpack.c.l.s8.bf16 %v338
    %v1507 = vunpack.c.l.s8.bf16 %v339
    %v1508 = vunpack.c.l.s8.bf16 %v340
    %v1509 = vunpack.c.l.s8.bf16 %v341
    %v1510 = vunpack.c.l.s8.bf16 %v342
    %v1511 = vunpack.c.l.s8.bf16 %v343
    %v1512 = vunpack.c.l.s8.bf16 %v344
    %v1513 = vunpack.c.l.s8.bf16 %v345
    %v1514 = vunpack.c.h.s8.bf16 %v338
    %v1515 = vunpack.c.h.s8.bf16 %v339
    %v1516 = vunpack.c.h.s8.bf16 %v340
    %v1517 = vunpack.c.h.s8.bf16 %v341
    %v1518 = vunpack.c.h.s8.bf16 %v342
    %v1519 = vunpack.c.h.s8.bf16 %v343
    %v1520 = vunpack.c.h.s8.bf16 %v344
    %v1521 = vunpack.c.h.s8.bf16 %v345
    %v1522 = vunpack.c.l.s8.bf16 %v346
    %v1523 = vunpack.c.l.s8.bf16 %v347
    %v1524 = vunpack.c.l.s8.bf16 %v348
    %v1525 = vunpack.c.l.s8.bf16 %v349
    %v1526 = vunpack.c.l.s8.bf16 %v350
    %v1527 = vunpack.c.l.s8.bf16 %v351
    %v1528 = vunpack.c.l.s8.bf16 %v352
    %v1529 = vunpack.c.l.s8.bf16 %v353
    %v1530 = vunpack.c.h.s8.bf16 %v346
    %v1531 = vunpack.c.h.s8.bf16 %v347
    %v1532 = vunpack.c.h.s8.bf16 %v348
    %v1533 = vunpack.c.h.s8.bf16 %v349
    %v1534 = vunpack.c.h.s8.bf16 %v350
    %v1535 = vunpack.c.h.s8.bf16 %v351
    %v1536 = vunpack.c.h.s8.bf16 %v352
    %v1537 = vunpack.c.h.s8.bf16 %v353
    %v1538 = vunpack.c.l.s8.bf16 %v354
    %v1539 = vunpack.c.l.s8.bf16 %v355
    %v1540 = vunpack.c.l.s8.bf16 %v356
    %v1541 = vunpack.c.l.s8.bf16 %v357
    %v1542 = vunpack.c.l.s8.bf16 %v358
    %v1543 = vunpack.c.l.s8.bf16 %v359
    %v1544 = vunpack.c.l.s8.bf16 %v360
    %v1545 = vunpack.c.l.s8.bf16 %v361
    %v1546 = vunpack.c.h.s8.bf16 %v354
    %v1547 = vunpack.c.h.s8.bf16 %v355
    %v1548 = vunpack.c.h.s8.bf16 %v356
    %v1549 = vunpack.c.h.s8.bf16 %v357
    %v1550 = vunpack.c.h.s8.bf16 %v358
    %v1551 = vunpack.c.h.s8.bf16 %v359
    %v1552 = vunpack.c.h.s8.bf16 %v360
    %v1553 = vunpack.c.h.s8.bf16 %v361
    %v1554 = vunpack.c.l.s8.bf16 %v362
    %v1555 = vunpack.c.l.s8.bf16 %v363
    %v1556 = vunpack.c.l.s8.bf16 %v364
    %v1557 = vunpack.c.l.s8.bf16 %v365
    %v1558 = vunpack.c.l.s8.bf16 %v366
    %v1559 = vunpack.c.l.s8.bf16 %v367
    %v1560 = vunpack.c.l.s8.bf16 %v368
    %v1561 = vunpack.c.l.s8.bf16 %v369
    %v1562 = vunpack.c.h.s8.bf16 %v362
    %v1563 = vunpack.c.h.s8.bf16 %v363
    %v1564 = vunpack.c.h.s8.bf16 %v364
    %v1565 = vunpack.c.h.s8.bf16 %v365
    %v1566 = vunpack.c.h.s8.bf16 %v366
    %v1567 = vunpack.c.h.s8.bf16 %v367
    %v1568 = vunpack.c.h.s8.bf16 %v368
    %v1569 = vunpack.c.h.s8.bf16 %v369
    %v1570 = vunpack.c.l.s8.bf16 %v370
    %v1571 = vunpack.c.l.s8.bf16 %v371
    %v1572 = vunpack.c.l.s8.bf16 %v372
    %v1573 = vunpack.c.l.s8.bf16 %v373
    %v1574 = vunpack.c.l.s8.bf16 %v374
    %v1575 = vunpack.c.l.s8.bf16 %v375
    %v1576 = vunpack.c.l.s8.bf16 %v376
    %v1577 = vunpack.c.l.s8.bf16 %v377
    %v1578 = vunpack.c.h.s8.bf16 %v370
    %v1579 = vunpack.c.h.s8.bf16 %v371
    %v1580 = vunpack.c.h.s8.bf16 %v372
    %v1581 = vunpack.c.h.s8.bf16 %v373
    %v1582 = vunpack.c.h.s8.bf16 %v374
    %v1583 = vunpack.c.h.s8.bf16 %v375
    %v1584 = vunpack.c.h.s8.bf16 %v376
    %v1585 = vunpack.c.h.s8.bf16 %v377
    %v1586 = vunpack.c.l.s8.bf16 %v378
    %v1587 = vunpack.c.l.s8.bf16 %v379
    %v1588 = vunpack.c.l.s8.bf16 %v380
    %v1589 = vunpack.c.l.s8.bf16 %v381
    %v1590 = vunpack.c.l.s8.bf16 %v382
    %v1591 = vunpack.c.l.s8.bf16 %v383
    %v1592 = vunpack.c.l.s8.bf16 %v384
    %v1593 = vunpack.c.l.s8.bf16 %v385
    %v1594 = vunpack.c.h.s8.bf16 %v378
    %v1595 = vunpack.c.h.s8.bf16 %v379
    %v1596 = vunpack.c.h.s8.bf16 %v380
    %v1597 = vunpack.c.h.s8.bf16 %v381
    %v1598 = vunpack.c.h.s8.bf16 %v382
    %v1599 = vunpack.c.h.s8.bf16 %v383
    %v1600 = vunpack.c.h.s8.bf16 %v384
    %v1601 = vunpack.c.h.s8.bf16 %v385
    %v1602 = vunpack.c.l.s8.bf16 %v386
    %v1603 = vunpack.c.l.s8.bf16 %v387
    %v1604 = vunpack.c.l.s8.bf16 %v388
    %v1605 = vunpack.c.l.s8.bf16 %v389
    %v1606 = vunpack.c.l.s8.bf16 %v390
    %v1607 = vunpack.c.l.s8.bf16 %v391
    %v1608 = vunpack.c.l.s8.bf16 %v392
    %v1609 = vunpack.c.l.s8.bf16 %v393
    %v1610 = vunpack.c.h.s8.bf16 %v386
    %v1611 = vunpack.c.h.s8.bf16 %v387
    %v1612 = vunpack.c.h.s8.bf16 %v388
    %v1613 = vunpack.c.h.s8.bf16 %v389
    %v1614 = vunpack.c.h.s8.bf16 %v390
    %v1615 = vunpack.c.h.s8.bf16 %v391
    %v1616 = vunpack.c.h.s8.bf16 %v392
    %v1617 = vunpack.c.h.s8.bf16 %v393
    %v1618 = vunpack.c.l.s8.bf16 %v394
    %v1619 = vunpack.c.l.s8.bf16 %v395
    %v1620 = vunpack.c.l.s8.bf16 %v396
    %v1621 = vunpack.c.l.s8.bf16 %v397
    %v1622 = vunpack.c.l.s8.bf16 %v398
    %v1623 = vunpack.c.l.s8.bf16 %v399
    %v1624 = vunpack.c.l.s8.bf16 %v400
    %v1625 = vunpack.c.l.s8.bf16 %v401
    %v1626 = vunpack.c.h.s8.bf16 %v394
    %v1627 = vunpack.c.h.s8.bf16 %v395
    %v1628 = vunpack.c.h.s8.bf16 %v396
    %v1629 = vunpack.c.h.s8.bf16 %v397
    %v1630 = vunpack.c.h.s8.bf16 %v398
    %v1631 = vunpack.c.h.s8.bf16 %v399
    %v1632 = vunpack.c.h.s8.bf16 %v400
    %v1633 = vunpack.c.h.s8.bf16 %v401
    %v1634 = vunpack.c.l.s8.bf16 %v402
    %v1635 = vunpack.c.l.s8.bf16 %v403
    %v1636 = vunpack.c.l.s8.bf16 %v404
    %v1637 = vunpack.c.l.s8.bf16 %v405
    %v1638 = vunpack.c.l.s8.bf16 %v406
    %v1639 = vunpack.c.l.s8.bf16 %v407
    %v1640 = vunpack.c.l.s8.bf16 %v408
    %v1641 = vunpack.c.l.s8.bf16 %v409
    %v1642 = vunpack.c.h.s8.bf16 %v402
    %v1643 = vunpack.c.h.s8.bf16 %v403
    %v1644 = vunpack.c.h.s8.bf16 %v404
    %v1645 = vunpack.c.h.s8.bf16 %v405
    %v1646 = vunpack.c.h.s8.bf16 %v406
    %v1647 = vunpack.c.h.s8.bf16 %v407
    %v1648 = vunpack.c.h.s8.bf16 %v408
    %v1649 = vunpack.c.h.s8.bf16 %v409
    %v1650 = vunpack.c.l.s8.bf16 %v410
    %v1651 = vunpack.c.l.s8.bf16 %v411
    %v1652 = vunpack.c.l.s8.bf16 %v412
    %v1653 = vunpack.c.l.s8.bf16 %v413
    %v1654 = vunpack.c.l.s8.bf16 %v414
    %v1655 = vunpack.c.l.s8.bf16 %v415
    %v1656 = vunpack.c.l.s8.bf16 %v416
    %v1657 = vunpack.c.l.s8.bf16 %v417
    %v1658 = vunpack.c.h.s8.bf16 %v410
    %v1659 = vunpack.c.h.s8.bf16 %v411
    %v1660 = vunpack.c.h.s8.bf16 %v412
    %v1661 = vunpack.c.h.s8.bf16 %v413
    %v1662 = vunpack.c.h.s8.bf16 %v414
    %v1663 = vunpack.c.h.s8.bf16 %v415
    %v1664 = vunpack.c.h.s8.bf16 %v416
    %v1665 = vunpack.c.h.s8.bf16 %v417
    %v1666 = vunpack.c.l.s8.bf16 %v418
    %v1667 = vunpack.c.l.s8.bf16 %v419
    %v1668 = vunpack.c.l.s8.bf16 %v420
    %v1669 = vunpack.c.l.s8.bf16 %v421
    %v1670 = vunpack.c.l.s8.bf16 %v422
    %v1671 = vunpack.c.l.s8.bf16 %v423
    %v1672 = vunpack.c.l.s8.bf16 %v424
    %v1673 = vunpack.c.l.s8.bf16 %v425
    %v1674 = vunpack.c.h.s8.bf16 %v418
    %v1675 = vunpack.c.h.s8.bf16 %v419
    %v1676 = vunpack.c.h.s8.bf16 %v420
    %v1677 = vunpack.c.h.s8.bf16 %v421
    %v1678 = vunpack.c.h.s8.bf16 %v422
    %v1679 = vunpack.c.h.s8.bf16 %v423
    %v1680 = vunpack.c.h.s8.bf16 %v424
    %v1681 = vunpack.c.h.s8.bf16 %v425
    %v1682 = vunpack.c.l.s8.bf16 %v426
    %v1683 = vunpack.c.l.s8.bf16 %v427
    %v1684 = vunpack.c.l.s8.bf16 %v428
    %v1685 = vunpack.c.l.s8.bf16 %v429
    %v1686 = vunpack.c.l.s8.bf16 %v430
    %v1687 = vunpack.c.l.s8.bf16 %v431
    %v1688 = vunpack.c.l.s8.bf16 %v432
    %v1689 = vunpack.c.l.s8.bf16 %v433
    %v1690 = vunpack.c.h.s8.bf16 %v426
    %v1691 = vunpack.c.h.s8.bf16 %v427
    %v1692 = vunpack.c.h.s8.bf16 %v428
    %v1693 = vunpack.c.h.s8.bf16 %v429
    %v1694 = vunpack.c.h.s8.bf16 %v430
    %v1695 = vunpack.c.h.s8.bf16 %v431
    %v1696 = vunpack.c.h.s8.bf16 %v432
    %v1697 = vunpack.c.h.s8.bf16 %v433
    %v1698 = vunpack.c.l.s8.bf16 %v434
    %v1699 = vunpack.c.l.s8.bf16 %v435
    %v1700 = vunpack.c.l.s8.bf16 %v436
    %v1701 = vunpack.c.l.s8.bf16 %v437
    %v1702 = vunpack.c.l.s8.bf16 %v438
    %v1703 = vunpack.c.l.s8.bf16 %v439
    %v1704 = vunpack.c.l.s8.bf16 %v440
    %v1705 = vunpack.c.l.s8.bf16 %v441
    %v1706 = vunpack.c.h.s8.bf16 %v434
    %v1707 = vunpack.c.h.s8.bf16 %v435
    %v1708 = vunpack.c.h.s8.bf16 %v436
    %v1709 = vunpack.c.h.s8.bf16 %v437
    %v1710 = vunpack.c.h.s8.bf16 %v438
    %v1711 = vunpack.c.h.s8.bf16 %v439
    %v1712 = vunpack.c.h.s8.bf16 %v440
    %v1713 = vunpack.c.h.s8.bf16 %v441
    %v1714 = vunpack.c.l.s8.bf16 %v442
    %v1715 = vunpack.c.l.s8.bf16 %v443
    %v1716 = vunpack.c.l.s8.bf16 %v444
    %v1717 = vunpack.c.l.s8.bf16 %v445
    %v1718 = vunpack.c.l.s8.bf16 %v446
    %v1719 = vunpack.c.l.s8.bf16 %v447
    %v1720 = vunpack.c.l.s8.bf16 %v448
    %v1721 = vunpack.c.l.s8.bf16 %v449
    %v1722 = vunpack.c.h.s8.bf16 %v442
    %v1723 = vunpack.c.h.s8.bf16 %v443
    %v1724 = vunpack.c.h.s8.bf16 %v444
    %v1725 = vunpack.c.h.s8.bf16 %v445
    %v1726 = vunpack.c.h.s8.bf16 %v446
    %v1727 = vunpack.c.h.s8.bf16 %v447
    %v1728 = vunpack.c.h.s8.bf16 %v448
    %v1729 = vunpack.c.h.s8.bf16 %v449
    %v1730 = vunpack.c.l.s8.bf16 %v450
    %v1731 = vunpack.c.l.s8.bf16 %v451
    %v1732 = vunpack.c.l.s8.bf16 %v452
    %v1733 = vunpack.c.l.s8.bf16 %v453
    %v1734 = vunpack.c.l.s8.bf16 %v454
    %v1735 = vunpack.c.l.s8.bf16 %v455
    %v1736 = vunpack.c.l.s8.bf16 %v456
    %v1737 = vunpack.c.l.s8.bf16 %v457
    %v1738 = vunpack.c.h.s8.bf16 %v450
    %v1739 = vunpack.c.h.s8.bf16 %v451
    %v1740 = vunpack.c.h.s8.bf16 %v452
    %v1741 = vunpack.c.h.s8.bf16 %v453
    %v1742 = vunpack.c.h.s8.bf16 %v454
    %v1743 = vunpack.c.h.s8.bf16 %v455
    %v1744 = vunpack.c.h.s8.bf16 %v456
    %v1745 = vunpack.c.h.s8.bf16 %v457
    %v1746 = vunpack.c.l.s8.bf16 %v458
    %v1747 = vunpack.c.l.s8.bf16 %v459
    %v1748 = vunpack.c.l.s8.bf16 %v460
    %v1749 = vunpack.c.l.s8.bf16 %v461
    %v1750 = vunpack.c.l.s8.bf16 %v462
    %v1751 = vunpack.c.l.s8.bf16 %v463
    %v1752 = vunpack.c.l.s8.bf16 %v464
    %v1753 = vunpack.c.l.s8.bf16 %v465
    %v1754 = vunpack.c.h.s8.bf16 %v458
    %v1755 = vunpack.c.h.s8.bf16 %v459
    %v1756 = vunpack.c.h.s8.bf16 %v460
    %v1757 = vunpack.c.h.s8.bf16 %v461
    %v1758 = vunpack.c.h.s8.bf16 %v462
    %v1759 = vunpack.c.h.s8.bf16 %v463
    %v1760 = vunpack.c.h.s8.bf16 %v464
    %v1761 = vunpack.c.h.s8.bf16 %v465
    %v1762 = vunpack.c.l.s8.bf16 %v466
    %v1763 = vunpack.c.l.s8.bf16 %v467
    %v1764 = vunpack.c.l.s8.bf16 %v468
    %v1765 = vunpack.c.l.s8.bf16 %v469
    %v1766 = vunpack.c.l.s8.bf16 %v470
    %v1767 = vunpack.c.l.s8.bf16 %v471
    %v1768 = vunpack.c.l.s8.bf16 %v472
    %v1769 = vunpack.c.l.s8.bf16 %v473
    %v1770 = vunpack.c.h.s8.bf16 %v466
    %v1771 = vunpack.c.h.s8.bf16 %v467
    %v1772 = vunpack.c.h.s8.bf16 %v468
    %v1773 = vunpack.c.h.s8.bf16 %v469
    %v1774 = vunpack.c.h.s8.bf16 %v470
    %v1775 = vunpack.c.h.s8.bf16 %v471
    %v1776 = vunpack.c.h.s8.bf16 %v472
    %v1777 = vunpack.c.h.s8.bf16 %v473
    %v1778 = vunpack.c.l.s8.bf16 %v474
    %v1779 = vunpack.c.l.s8.bf16 %v475
    %v1780 = vunpack.c.l.s8.bf16 %v476
    %v1781 = vunpack.c.l.s8.bf16 %v477
    %v1782 = vunpack.c.l.s8.bf16 %v478
    %v1783 = vunpack.c.l.s8.bf16 %v479
    %v1784 = vunpack.c.l.s8.bf16 %v480
    %v1785 = vunpack.c.l.s8.bf16 %v481
    %v1786 = vunpack.c.h.s8.bf16 %v474
    %v1787 = vunpack.c.h.s8.bf16 %v475
    %v1788 = vunpack.c.h.s8.bf16 %v476
    %v1789 = vunpack.c.h.s8.bf16 %v477
    %v1790 = vunpack.c.h.s8.bf16 %v478
    %v1791 = vunpack.c.h.s8.bf16 %v479
    %v1792 = vunpack.c.h.s8.bf16 %v480
    %v1793 = vunpack.c.h.s8.bf16 %v481
    %v1794 = vunpack.c.l.s8.bf16 %v482
    %v1795 = vunpack.c.l.s8.bf16 %v483
    %v1796 = vunpack.c.l.s8.bf16 %v484
    %v1797 = vunpack.c.l.s8.bf16 %v485
    %v1798 = vunpack.c.l.s8.bf16 %v486
    %v1799 = vunpack.c.l.s8.bf16 %v487
    %v1800 = vunpack.c.l.s8.bf16 %v488
    %v1801 = vunpack.c.l.s8.bf16 %v489
    %v1802 = vunpack.c.h.s8.bf16 %v482
    %v1803 = vunpack.c.h.s8.bf16 %v483
    %v1804 = vunpack.c.h.s8.bf16 %v484
    %v1805 = vunpack.c.h.s8.bf16 %v485
    %v1806 = vunpack.c.h.s8.bf16 %v486
    %v1807 = vunpack.c.h.s8.bf16 %v487
    %v1808 = vunpack.c.h.s8.bf16 %v488
    %v1809 = vunpack.c.h.s8.bf16 %v489
    %v1810 = vunpack.c.l.s8.bf16 %v490
    %v1811 = vunpack.c.l.s8.bf16 %v491
    %v1812 = vunpack.c.l.s8.bf16 %v492
    %v1813 = vunpack.c.l.s8.bf16 %v493
    %v1814 = vunpack.c.l.s8.bf16 %v494
    %v1815 = vunpack.c.l.s8.bf16 %v495
    %v1816 = vunpack.c.l.s8.bf16 %v496
    %v1817 = vunpack.c.l.s8.bf16 %v497
    %v1818 = vunpack.c.h.s8.bf16 %v490
    %v1819 = vunpack.c.h.s8.bf16 %v491
    %v1820 = vunpack.c.h.s8.bf16 %v492
    %v1821 = vunpack.c.h.s8.bf16 %v493
    %v1822 = vunpack.c.h.s8.bf16 %v494
    %v1823 = vunpack.c.h.s8.bf16 %v495
    %v1824 = vunpack.c.h.s8.bf16 %v496
    %v1825 = vunpack.c.h.s8.bf16 %v497
    %v1826 = vunpack.c.l.s8.bf16 %v498
    %v1827 = vunpack.c.l.s8.bf16 %v499
    %v1828 = vunpack.c.l.s8.bf16 %v500
    %v1829 = vunpack.c.l.s8.bf16 %v501
    %v1830 = vunpack.c.l.s8.bf16 %v502
    %v1831 = vunpack.c.l.s8.bf16 %v503
    %v1832 = vunpack.c.l.s8.bf16 %v504
    %v1833 = vunpack.c.l.s8.bf16 %v505
    %v1834 = vunpack.c.h.s8.bf16 %v498
    %v1835 = vunpack.c.h.s8.bf16 %v499
    %v1836 = vunpack.c.h.s8.bf16 %v500
    %v1837 = vunpack.c.h.s8.bf16 %v501
    %v1838 = vunpack.c.h.s8.bf16 %v502
    %v1839 = vunpack.c.h.s8.bf16 %v503
    %v1840 = vunpack.c.h.s8.bf16 %v504
    %v1841 = vunpack.c.h.s8.bf16 %v505
    %v1842 = vunpack.c.l.s8.bf16 %v506
    %v1843 = vunpack.c.l.s8.bf16 %v507
    %v1844 = vunpack.c.l.s8.bf16 %v508
    %v1845 = vunpack.c.l.s8.bf16 %v509
    %v1846 = vunpack.c.l.s8.bf16 %v510
    %v1847 = vunpack.c.l.s8.bf16 %v511
    %v1848 = vunpack.c.l.s8.bf16 %v512
    %v1849 = vunpack.c.l.s8.bf16 %v513
    %v1850 = vunpack.c.h.s8.bf16 %v506
    %v1851 = vunpack.c.h.s8.bf16 %v507
    %v1852 = vunpack.c.h.s8.bf16 %v508
    %v1853 = vunpack.c.h.s8.bf16 %v509
    %v1854 = vunpack.c.h.s8.bf16 %v510
    %v1855 = vunpack.c.h.s8.bf16 %v511
    %v1856 = vunpack.c.h.s8.bf16 %v512
    %v1857 = vunpack.c.h.s8.bf16 %v513
    %v1858 = vunpack.c.l.s8.bf16 %v514
    %v1859 = vunpack.c.l.s8.bf16 %v515
    %v1860 = vunpack.c.l.s8.bf16 %v516
    %v1861 = vunpack.c.l.s8.bf16 %v517
    %v1862 = vunpack.c.l.s8.bf16 %v518
    %v1863 = vunpack.c.l.s8.bf16 %v519
    %v1864 = vunpack.c.l.s8.bf16 %v520
    %v1865 = vunpack.c.l.s8.bf16 %v521
    %v1866 = vunpack.c.h.s8.bf16 %v514
    %v1867 = vunpack.c.h.s8.bf16 %v515
    %v1868 = vunpack.c.h.s8.bf16 %v516
    %v1869 = vunpack.c.h.s8.bf16 %v517
    %v1870 = vunpack.c.h.s8.bf16 %v518
    %v1871 = vunpack.c.h.s8.bf16 %v519
    %v1872 = vunpack.c.h.s8.bf16 %v520
    %v1873 = vunpack.c.h.s8.bf16 %v521
    %v1874 = vunpack.c.l.s8.bf16 %v522
    %v1875 = vunpack.c.l.s8.bf16 %v523
    %v1876 = vunpack.c.l.s8.bf16 %v524
    %v1877 = vunpack.c.l.s8.bf16 %v525
    %v1878 = vunpack.c.l.s8.bf16 %v526
    %v1879 = vunpack.c.l.s8.bf16 %v527
    %v1880 = vunpack.c.l.s8.bf16 %v528
    %v1881 = vunpack.c.l.s8.bf16 %v529
    %v1882 = vunpack.c.h.s8.bf16 %v522
    %v1883 = vunpack.c.h.s8.bf16 %v523
    %v1884 = vunpack.c.h.s8.bf16 %v524
    %v1885 = vunpack.c.h.s8.bf16 %v525
    %v1886 = vunpack.c.h.s8.bf16 %v526
    %v1887 = vunpack.c.h.s8.bf16 %v527
    %v1888 = vunpack.c.h.s8.bf16 %v528
    %v1889 = vunpack.c.h.s8.bf16 %v529
    %v1890 = vunpack.c.l.s8.bf16 %v530
    %v1891 = vunpack.c.l.s8.bf16 %v531
    %v1892 = vunpack.c.l.s8.bf16 %v532
    %v1893 = vunpack.c.l.s8.bf16 %v533
    %v1894 = vunpack.c.l.s8.bf16 %v534
    %v1895 = vunpack.c.l.s8.bf16 %v535
    %v1896 = vunpack.c.l.s8.bf16 %v536
    %v1897 = vunpack.c.l.s8.bf16 %v537
    %v1898 = vunpack.c.h.s8.bf16 %v530
    %v1899 = vunpack.c.h.s8.bf16 %v531
    %v1900 = vunpack.c.h.s8.bf16 %v532
    %v1901 = vunpack.c.h.s8.bf16 %v533
    %v1902 = vunpack.c.h.s8.bf16 %v534
    %v1903 = vunpack.c.h.s8.bf16 %v535
    %v1904 = vunpack.c.h.s8.bf16 %v536
    %v1905 = vunpack.c.h.s8.bf16 %v537
    %v1906 = vunpack.c.l.s8.bf16 %v538
    %v1907 = vunpack.c.l.s8.bf16 %v539
    %v1908 = vunpack.c.l.s8.bf16 %v540
    %v1909 = vunpack.c.l.s8.bf16 %v541
    %v1910 = vunpack.c.l.s8.bf16 %v542
    %v1911 = vunpack.c.l.s8.bf16 %v543
    %v1912 = vunpack.c.l.s8.bf16 %v544
    %v1913 = vunpack.c.l.s8.bf16 %v545
    %v1914 = vunpack.c.h.s8.bf16 %v538
    %v1915 = vunpack.c.h.s8.bf16 %v539
    %v1916 = vunpack.c.h.s8.bf16 %v540
    %v1917 = vunpack.c.h.s8.bf16 %v541
    %v1918 = vunpack.c.h.s8.bf16 %v542
    %v1919 = vunpack.c.h.s8.bf16 %v543
    %v1920 = vunpack.c.h.s8.bf16 %v544
    %v1921 = vunpack.c.h.s8.bf16 %v545
    %v1922 = vunpack.c.l.s8.bf16 %v546
    %v1923 = vunpack.c.l.s8.bf16 %v547
    %v1924 = vunpack.c.l.s8.bf16 %v548
    %v1925 = vunpack.c.l.s8.bf16 %v549
    %v1926 = vunpack.c.l.s8.bf16 %v550
    %v1927 = vunpack.c.l.s8.bf16 %v551
    %v1928 = vunpack.c.l.s8.bf16 %v552
    %v1929 = vunpack.c.l.s8.bf16 %v553
    %v1930 = vunpack.c.h.s8.bf16 %v546
    %v1931 = vunpack.c.h.s8.bf16 %v547
    %v1932 = vunpack.c.h.s8.bf16 %v548
    %v1933 = vunpack.c.h.s8.bf16 %v549
    %v1934 = vunpack.c.h.s8.bf16 %v550
    %v1935 = vunpack.c.h.s8.bf16 %v551
    %v1936 = vunpack.c.h.s8.bf16 %v552
    %v1937 = vunpack.c.h.s8.bf16 %v553
    %v1938 = vunpack.c.l.s8.bf16 %v554
    %v1939 = vunpack.c.l.s8.bf16 %v555
    %v1940 = vunpack.c.l.s8.bf16 %v556
    %v1941 = vunpack.c.l.s8.bf16 %v557
    %v1942 = vunpack.c.l.s8.bf16 %v558
    %v1943 = vunpack.c.l.s8.bf16 %v559
    %v1944 = vunpack.c.l.s8.bf16 %v560
    %v1945 = vunpack.c.l.s8.bf16 %v561
    %v1946 = vunpack.c.h.s8.bf16 %v554
    %v1947 = vunpack.c.h.s8.bf16 %v555
    %v1948 = vunpack.c.h.s8.bf16 %v556
    %v1949 = vunpack.c.h.s8.bf16 %v557
    %v1950 = vunpack.c.h.s8.bf16 %v558
    %v1951 = vunpack.c.h.s8.bf16 %v559
    %v1952 = vunpack.c.h.s8.bf16 %v560
    %v1953 = vunpack.c.h.s8.bf16 %v561
    %v1954 = vunpack.c.l.s8.bf16 %v562
    %v1955 = vunpack.c.l.s8.bf16 %v563
    %v1956 = vunpack.c.l.s8.bf16 %v564
    %v1957 = vunpack.c.l.s8.bf16 %v565
    %v1958 = vunpack.c.l.s8.bf16 %v566
    %v1959 = vunpack.c.l.s8.bf16 %v567
    %v1960 = vunpack.c.l.s8.bf16 %v568
    %v1961 = vunpack.c.l.s8.bf16 %v569
    %v1962 = vunpack.c.h.s8.bf16 %v562
    %v1963 = vunpack.c.h.s8.bf16 %v563
    %v1964 = vunpack.c.h.s8.bf16 %v564
    %v1965 = vunpack.c.h.s8.bf16 %v565
    %v1966 = vunpack.c.h.s8.bf16 %v566
    %v1967 = vunpack.c.h.s8.bf16 %v567
    %v1968 = vunpack.c.h.s8.bf16 %v568
    %v1969 = vunpack.c.h.s8.bf16 %v569
    %v1970 = vunpack.c.l.s8.bf16 %v570
    %v1971 = vunpack.c.l.s8.bf16 %v571
    %v1972 = vunpack.c.l.s8.bf16 %v572
    %v1973 = vunpack.c.l.s8.bf16 %v573
    %v1974 = vunpack.c.l.s8.bf16 %v574
    %v1975 = vunpack.c.l.s8.bf16 %v575
    %v1976 = vunpack.c.l.s8.bf16 %v576
    %v1977 = vunpack.c.l.s8.bf16 %v577
    %v1978 = vunpack.c.h.s8.bf16 %v570
    %v1979 = vunpack.c.h.s8.bf16 %v571
    %v1980 = vunpack.c.h.s8.bf16 %v572
    %v1981 = vunpack.c.h.s8.bf16 %v573
    %v1982 = vunpack.c.h.s8.bf16 %v574
    %v1983 = vunpack.c.h.s8.bf16 %v575
    %v1984 = vunpack.c.h.s8.bf16 %v576
    %v1985 = vunpack.c.h.s8.bf16 %v577
    %v1986 = vunpack.c.l.s8.bf16 %v578
    %v1987 = vunpack.c.l.s8.bf16 %v579
    %v1988 = vunpack.c.l.s8.bf16 %v580
    %v1989 = vunpack.c.l.s8.bf16 %v581
    %v1990 = vunpack.c.l.s8.bf16 %v582
    %v1991 = vunpack.c.l.s8.bf16 %v583
    %v1992 = vunpack.c.l.s8.bf16 %v584
    %v1993 = vunpack.c.l.s8.bf16 %v585
    %v1994 = vunpack.c.h.s8.bf16 %v578
    %v1995 = vunpack.c.h.s8.bf16 %v579
    %v1996 = vunpack.c.h.s8.bf16 %v580
    %v1997 = vunpack.c.h.s8.bf16 %v581
    %v1998 = vunpack.c.h.s8.bf16 %v582
    %v1999 = vunpack.c.h.s8.bf16 %v583
    %v2000 = vunpack.c.h.s8.bf16 %v584
    %v2001 = vunpack.c.h.s8.bf16 %v585
    %v2002 = vunpack.c.l.s8.bf16 %v586
    %v2003 = vunpack.c.l.s8.bf16 %v587
    %v2004 = vunpack.c.l.s8.bf16 %v588
    %v2005 = vunpack.c.l.s8.bf16 %v589
    %v2006 = vunpack.c.l.s8.bf16 %v590
    %v2007 = vunpack.c.l.s8.bf16 %v591
    %v2008 = vunpack.c.l.s8.bf16 %v592
    %v2009 = vunpack.c.l.s8.bf16 %v593
    %v2010 = vunpack.c.h.s8.bf16 %v586
    %v2011 = vunpack.c.h.s8.bf16 %v587
    %v2012 = vunpack.c.h.s8.bf16 %v588
    %v2013 = vunpack.c.h.s8.bf16 %v589
    %v2014 = vunpack.c.h.s8.bf16 %v590
    %v2015 = vunpack.c.h.s8.bf16 %v591
    %v2016 = vunpack.c.h.s8.bf16 %v592
    %v2017 = vunpack.c.h.s8.bf16 %v593
    %v2018 = vunpack.c.l.s8.bf16 %v594
    %v2019 = vunpack.c.l.s8.bf16 %v595
    %v2020 = vunpack.c.l.s8.bf16 %v596
    %v2021 = vunpack.c.l.s8.bf16 %v597
    %v2022 = vunpack.c.l.s8.bf16 %v598
    %v2023 = vunpack.c.l.s8.bf16 %v599
    %v2024 = vunpack.c.l.s8.bf16 %v600
    %v2025 = vunpack.c.l.s8.bf16 %v601
    %v2026 = vunpack.c.h.s8.bf16 %v594
    %v2027 = vunpack.c.h.s8.bf16 %v595
    %v2028 = vunpack.c.h.s8.bf16 %v596
    %v2029 = vunpack.c.h.s8.bf16 %v597
    %v2030 = vunpack.c.h.s8.bf16 %v598
    %v2031 = vunpack.c.h.s8.bf16 %v599
    %v2032 = vunpack.c.h.s8.bf16 %v600
    %v2033 = vunpack.c.h.s8.bf16 %v601
    %v2034 = vunpack.c.l.s8.bf16 %v602
    %v2035 = vunpack.c.l.s8.bf16 %v603
    %v2036 = vunpack.c.l.s8.bf16 %v604
    %v2037 = vunpack.c.l.s8.bf16 %v605
    %v2038 = vunpack.c.l.s8.bf16 %v606
    %v2039 = vunpack.c.l.s8.bf16 %v607
    %v2040 = vunpack.c.l.s8.bf16 %v608
    %v2041 = vunpack.c.l.s8.bf16 %v609
    %v2042 = vunpack.c.h.s8.bf16 %v602
    %v2043 = vunpack.c.h.s8.bf16 %v603
    %v2044 = vunpack.c.h.s8.bf16 %v604
    %v2045 = vunpack.c.h.s8.bf16 %v605
    %v2046 = vunpack.c.h.s8.bf16 %v606
    %v2047 = vunpack.c.h.s8.bf16 %v607
    %v2048 = vunpack.c.h.s8.bf16 %v608
    %v2049 = vunpack.c.h.s8.bf16 %v609
    %v2050 = vunpack.c.l.s8.bf16 %v610
    %v2051 = vunpack.c.l.s8.bf16 %v611
    %v2052 = vunpack.c.l.s8.bf16 %v612
    %v2053 = vunpack.c.l.s8.bf16 %v613
    %v2054 = vunpack.c.l.s8.bf16 %v614
    %v2055 = vunpack.c.l.s8.bf16 %v615
    %v2056 = vunpack.c.l.s8.bf16 %v616
    %v2057 = vunpack.c.l.s8.bf16 %v617
    %v2058 = vunpack.c.h.s8.bf16 %v610
    %v2059 = vunpack.c.h.s8.bf16 %v611
    %v2060 = vunpack.c.h.s8.bf16 %v612
    %v2061 = vunpack.c.h.s8.bf16 %v613
    %v2062 = vunpack.c.h.s8.bf16 %v614
    %v2063 = vunpack.c.h.s8.bf16 %v615
    %v2064 = vunpack.c.h.s8.bf16 %v616
    %v2065 = vunpack.c.h.s8.bf16 %v617
    %v2066 = vunpack.c.l.s8.bf16 %v618
    %v2067 = vunpack.c.l.s8.bf16 %v619
    %v2068 = vunpack.c.l.s8.bf16 %v620
    %v2069 = vunpack.c.l.s8.bf16 %v621
    %v2070 = vunpack.c.l.s8.bf16 %v622
    %v2071 = vunpack.c.l.s8.bf16 %v623
    %v2072 = vunpack.c.l.s8.bf16 %v624
    %v2073 = vunpack.c.l.s8.bf16 %v625
    %v2074 = vunpack.c.h.s8.bf16 %v618
    %v2075 = vunpack.c.h.s8.bf16 %v619
    %v2076 = vunpack.c.h.s8.bf16 %v620
    %v2077 = vunpack.c.h.s8.bf16 %v621
    %v2078 = vunpack.c.h.s8.bf16 %v622
    %v2079 = vunpack.c.h.s8.bf16 %v623
    %v2080 = vunpack.c.h.s8.bf16 %v624
    %v2081 = vunpack.c.h.s8.bf16 %v625
    %v2082 = vunpack.c.l.s8.bf16 %v626
    %v2083 = vunpack.c.l.s8.bf16 %v627
    %v2084 = vunpack.c.l.s8.bf16 %v628
    %v2085 = vunpack.c.l.s8.bf16 %v629
    %v2086 = vunpack.c.l.s8.bf16 %v630
    %v2087 = vunpack.c.l.s8.bf16 %v631
    %v2088 = vunpack.c.l.s8.bf16 %v632
    %v2089 = vunpack.c.l.s8.bf16 %v633
    %v2090 = vunpack.c.h.s8.bf16 %v626
    %v2091 = vunpack.c.h.s8.bf16 %v627
    %v2092 = vunpack.c.h.s8.bf16 %v628
    %v2093 = vunpack.c.h.s8.bf16 %v629
    %v2094 = vunpack.c.h.s8.bf16 %v630
    %v2095 = vunpack.c.h.s8.bf16 %v631
    %v2096 = vunpack.c.h.s8.bf16 %v632
    %v2097 = vunpack.c.h.s8.bf16 %v633
    %v2098 = vunpack.c.l.s8.bf16 %v634
    %v2099 = vunpack.c.l.s8.bf16 %v635
    %v2100 = vunpack.c.l.s8.bf16 %v636
    %v2101 = vunpack.c.l.s8.bf16 %v637
    %v2102 = vunpack.c.l.s8.bf16 %v638
    %v2103 = vunpack.c.l.s8.bf16 %v639
    %v2104 = vunpack.c.l.s8.bf16 %v640
    %v2105 = vunpack.c.l.s8.bf16 %v641
    %v2106 = vunpack.c.h.s8.bf16 %v634
    %v2107 = vunpack.c.h.s8.bf16 %v635
    %v2108 = vunpack.c.h.s8.bf16 %v636
    %v2109 = vunpack.c.h.s8.bf16 %v637
    %v2110 = vunpack.c.h.s8.bf16 %v638
    %v2111 = vunpack.c.h.s8.bf16 %v639
    %v2112 = vunpack.c.h.s8.bf16 %v640
    %v2113 = vunpack.c.h.s8.bf16 %v641
    %v2114 = vunpack.c.l.s8.bf16 %v642
    %v2115 = vunpack.c.l.s8.bf16 %v643
    %v2116 = vunpack.c.l.s8.bf16 %v644
    %v2117 = vunpack.c.l.s8.bf16 %v645
    %v2118 = vunpack.c.l.s8.bf16 %v646
    %v2119 = vunpack.c.l.s8.bf16 %v647
    %v2120 = vunpack.c.l.s8.bf16 %v648
    %v2121 = vunpack.c.l.s8.bf16 %v649
    %v2122 = vunpack.c.h.s8.bf16 %v642
    %v2123 = vunpack.c.h.s8.bf16 %v643
    %v2124 = vunpack.c.h.s8.bf16 %v644
    %v2125 = vunpack.c.h.s8.bf16 %v645
    %v2126 = vunpack.c.h.s8.bf16 %v646
    %v2127 = vunpack.c.h.s8.bf16 %v647
    %v2128 = vunpack.c.h.s8.bf16 %v648
    %v2129 = vunpack.c.h.s8.bf16 %v649
    %v2130 = vunpack.c.l.s8.bf16 %v650
    %v2131 = vunpack.c.l.s8.bf16 %v651
    %v2132 = vunpack.c.l.s8.bf16 %v652
    %v2133 = vunpack.c.l.s8.bf16 %v653
    %v2134 = vunpack.c.l.s8.bf16 %v654
    %v2135 = vunpack.c.l.s8.bf16 %v655
    %v2136 = vunpack.c.l.s8.bf16 %v656
    %v2137 = vunpack.c.l.s8.bf16 %v657
    %v2138 = vunpack.c.h.s8.bf16 %v650
    %v2139 = vunpack.c.h.s8.bf16 %v651
    %v2140 = vunpack.c.h.s8.bf16 %v652
    %v2141 = vunpack.c.h.s8.bf16 %v653
    %v2142 = vunpack.c.h.s8.bf16 %v654
    %v2143 = vunpack.c.h.s8.bf16 %v655
    %v2144 = vunpack.c.h.s8.bf16 %v656
    %v2145 = vunpack.c.h.s8.bf16 %v657
    %v2146 = vunpack.c.l.s8.bf16 %v658
    %v2147 = vunpack.c.l.s8.bf16 %v659
    %v2148 = vunpack.c.l.s8.bf16 %v660
    %v2149 = vunpack.c.l.s8.bf16 %v661
    %v2150 = vunpack.c.l.s8.bf16 %v662
    %v2151 = vunpack.c.l.s8.bf16 %v663
    %v2152 = vunpack.c.l.s8.bf16 %v664
    %v2153 = vunpack.c.l.s8.bf16 %v665
    %v2154 = vunpack.c.h.s8.bf16 %v658
    %v2155 = vunpack.c.h.s8.bf16 %v659
    %v2156 = vunpack.c.h.s8.bf16 %v660
    %v2157 = vunpack.c.h.s8.bf16 %v661
    %v2158 = vunpack.c.h.s8.bf16 %v662
    %v2159 = vunpack.c.h.s8.bf16 %v663
    %v2160 = vunpack.c.h.s8.bf16 %v664
    %v2161 = vunpack.c.h.s8.bf16 %v665
    %v2162 = vunpack.c.l.s8.bf16 %v666
    %v2163 = vunpack.c.l.s8.bf16 %v667
    %v2164 = vunpack.c.l.s8.bf16 %v668
    %v2165 = vunpack.c.l.s8.bf16 %v669
    %v2166 = vunpack.c.l.s8.bf16 %v670
    %v2167 = vunpack.c.l.s8.bf16 %v671
    %v2168 = vunpack.c.l.s8.bf16 %v672
    %v2169 = vunpack.c.l.s8.bf16 %v673
    %v2170 = vunpack.c.h.s8.bf16 %v666
    %v2171 = vunpack.c.h.s8.bf16 %v667
    %v2172 = vunpack.c.h.s8.bf16 %v668
    %v2173 = vunpack.c.h.s8.bf16 %v669
    %v2174 = vunpack.c.h.s8.bf16 %v670
    %v2175 = vunpack.c.h.s8.bf16 %v671
    %v2176 = vunpack.c.h.s8.bf16 %v672
    %v2177 = vunpack.c.h.s8.bf16 %v673
    %v2178 = vunpack.c.l.s8.bf16 %v674
    %v2179 = vunpack.c.l.s8.bf16 %v675
    %v2180 = vunpack.c.l.s8.bf16 %v676
    %v2181 = vunpack.c.l.s8.bf16 %v677
    %v2182 = vunpack.c.l.s8.bf16 %v678
    %v2183 = vunpack.c.l.s8.bf16 %v679
    %v2184 = vunpack.c.l.s8.bf16 %v680
    %v2185 = vunpack.c.l.s8.bf16 %v681
    %v2186 = vunpack.c.h.s8.bf16 %v674
    %v2187 = vunpack.c.h.s8.bf16 %v675
    %v2188 = vunpack.c.h.s8.bf16 %v676
    %v2189 = vunpack.c.h.s8.bf16 %v677
    %v2190 = vunpack.c.h.s8.bf16 %v678
    %v2191 = vunpack.c.h.s8.bf16 %v679
    %v2192 = vunpack.c.h.s8.bf16 %v680
    %v2193 = vunpack.c.h.s8.bf16 %v681
    %v2194 = vunpack.c.l.s8.bf16 %v682
    %v2195 = vunpack.c.l.s8.bf16 %v683
    %v2196 = vunpack.c.l.s8.bf16 %v684
    %v2197 = vunpack.c.l.s8.bf16 %v685
    %v2198 = vunpack.c.l.s8.bf16 %v686
    %v2199 = vunpack.c.l.s8.bf16 %v687
    %v2200 = vunpack.c.l.s8.bf16 %v688
    %v2201 = vunpack.c.l.s8.bf16 %v689
    %v2202 = vunpack.c.h.s8.bf16 %v682
    %v2203 = vunpack.c.h.s8.bf16 %v683
    %v2204 = vunpack.c.h.s8.bf16 %v684
    %v2205 = vunpack.c.h.s8.bf16 %v685
    %v2206 = vunpack.c.h.s8.bf16 %v686
    %v2207 = vunpack.c.h.s8.bf16 %v687
    %v2208 = vunpack.c.h.s8.bf16 %v688
    %v2209 = vunpack.c.h.s8.bf16 %v689
    %v2210 = vunpack.c.l.s8.bf16 %v690
    %v2211 = vunpack.c.l.s8.bf16 %v691
    %v2212 = vunpack.c.l.s8.bf16 %v692
    %v2213 = vunpack.c.l.s8.bf16 %v693
    %v2214 = vunpack.c.l.s8.bf16 %v694
    %v2215 = vunpack.c.l.s8.bf16 %v695
    %v2216 = vunpack.c.l.s8.bf16 %v696
    %v2217 = vunpack.c.l.s8.bf16 %v697
    %v2218 = vunpack.c.h.s8.bf16 %v690
    %v2219 = vunpack.c.h.s8.bf16 %v691
    %v2220 = vunpack.c.h.s8.bf16 %v692
    %v2221 = vunpack.c.h.s8.bf16 %v693
    %v2222 = vunpack.c.h.s8.bf16 %v694
    %v2223 = vunpack.c.h.s8.bf16 %v695
    %v2224 = vunpack.c.h.s8.bf16 %v696
    %v2225 = vunpack.c.h.s8.bf16 %v697
    %v2226 = vunpack.c.l.s8.bf16 %v698
    %v2227 = vunpack.c.l.s8.bf16 %v699
    %v2228 = vunpack.c.l.s8.bf16 %v700
    %v2229 = vunpack.c.l.s8.bf16 %v701
    %v2230 = vunpack.c.l.s8.bf16 %v702
    %v2231 = vunpack.c.l.s8.bf16 %v703
    %v2232 = vunpack.c.l.s8.bf16 %v704
    %v2233 = vunpack.c.l.s8.bf16 %v705
    %v2234 = vunpack.c.h.s8.bf16 %v698
    %v2235 = vunpack.c.h.s8.bf16 %v699
    %v2236 = vunpack.c.h.s8.bf16 %v700
    %v2237 = vunpack.c.h.s8.bf16 %v701
    %v2238 = vunpack.c.h.s8.bf16 %v702
    %v2239 = vunpack.c.h.s8.bf16 %v703
    %v2240 = vunpack.c.h.s8.bf16 %v704
    %v2241 = vunpack.c.h.s8.bf16 %v705
    %v2242 = vunpack.c.l.s8.bf16 %v706
    %v2243 = vunpack.c.l.s8.bf16 %v707
    %v2244 = vunpack.c.l.s8.bf16 %v708
    %v2245 = vunpack.c.l.s8.bf16 %v709
    %v2246 = vunpack.c.l.s8.bf16 %v710
    %v2247 = vunpack.c.l.s8.bf16 %v711
    %v2248 = vunpack.c.l.s8.bf16 %v712
    %v2249 = vunpack.c.l.s8.bf16 %v713
    %v2250 = vunpack.c.h.s8.bf16 %v706
    %v2251 = vunpack.c.h.s8.bf16 %v707
    %v2252 = vunpack.c.h.s8.bf16 %v708
    %v2253 = vunpack.c.h.s8.bf16 %v709
    %v2254 = vunpack.c.h.s8.bf16 %v710
    %v2255 = vunpack.c.h.s8.bf16 %v711
    %v2256 = vunpack.c.h.s8.bf16 %v712
    %v2257 = vunpack.c.h.s8.bf16 %v713
    %v2258 = vunpack.c.l.s8.bf16 %v714
    %v2259 = vunpack.c.l.s8.bf16 %v715
    %v2260 = vunpack.c.l.s8.bf16 %v716
    %v2261 = vunpack.c.l.s8.bf16 %v717
    %v2262 = vunpack.c.l.s8.bf16 %v718
    %v2263 = vunpack.c.l.s8.bf16 %v719
    %v2264 = vunpack.c.l.s8.bf16 %v720
    %v2265 = vunpack.c.l.s8.bf16 %v721
    %v2266 = vunpack.c.h.s8.bf16 %v714
    %v2267 = vunpack.c.h.s8.bf16 %v715
    %v2268 = vunpack.c.h.s8.bf16 %v716
    %v2269 = vunpack.c.h.s8.bf16 %v717
    %v2270 = vunpack.c.h.s8.bf16 %v718
    %v2271 = vunpack.c.h.s8.bf16 %v719
    %v2272 = vunpack.c.h.s8.bf16 %v720
    %v2273 = vunpack.c.h.s8.bf16 %v721
    %v2274 = vunpack.c.l.s8.bf16 %v722
    %v2275 = vunpack.c.l.s8.bf16 %v723
    %v2276 = vunpack.c.l.s8.bf16 %v724
    %v2277 = vunpack.c.l.s8.bf16 %v725
    %v2278 = vunpack.c.l.s8.bf16 %v726
    %v2279 = vunpack.c.l.s8.bf16 %v727
    %v2280 = vunpack.c.l.s8.bf16 %v728
    %v2281 = vunpack.c.l.s8.bf16 %v729
    %v2282 = vunpack.c.h.s8.bf16 %v722
    %v2283 = vunpack.c.h.s8.bf16 %v723
    %v2284 = vunpack.c.h.s8.bf16 %v724
    %v2285 = vunpack.c.h.s8.bf16 %v725
    %v2286 = vunpack.c.h.s8.bf16 %v726
    %v2287 = vunpack.c.h.s8.bf16 %v727
    %v2288 = vunpack.c.h.s8.bf16 %v728
    %v2289 = vunpack.c.h.s8.bf16 %v729
    %v2290 = vunpack.c.l.s8.bf16 %v730
    %v2291 = vunpack.c.l.s8.bf16 %v731
    %v2292 = vunpack.c.l.s8.bf16 %v732
    %v2293 = vunpack.c.l.s8.bf16 %v733
    %v2294 = vunpack.c.l.s8.bf16 %v734
    %v2295 = vunpack.c.l.s8.bf16 %v735
    %v2296 = vunpack.c.l.s8.bf16 %v736
    %v2297 = vunpack.c.l.s8.bf16 %v737
    %v2298 = vunpack.c.h.s8.bf16 %v730
    %v2299 = vunpack.c.h.s8.bf16 %v731
    %v2300 = vunpack.c.h.s8.bf16 %v732
    %v2301 = vunpack.c.h.s8.bf16 %v733
    %v2302 = vunpack.c.h.s8.bf16 %v734
    %v2303 = vunpack.c.h.s8.bf16 %v735
    %v2304 = vunpack.c.h.s8.bf16 %v736
    %v2305 = vunpack.c.h.s8.bf16 %v737
    %v2306 = vunpack.c.l.s8.bf16 %v738
    %v2307 = vunpack.c.l.s8.bf16 %v739
    %v2308 = vunpack.c.l.s8.bf16 %v740
    %v2309 = vunpack.c.l.s8.bf16 %v741
    %v2310 = vunpack.c.l.s8.bf16 %v742
    %v2311 = vunpack.c.l.s8.bf16 %v743
    %v2312 = vunpack.c.l.s8.bf16 %v744
    %v2313 = vunpack.c.l.s8.bf16 %v745
    %v2314 = vunpack.c.h.s8.bf16 %v738
    %v2315 = vunpack.c.h.s8.bf16 %v739
    %v2316 = vunpack.c.h.s8.bf16 %v740
    %v2317 = vunpack.c.h.s8.bf16 %v741
    %v2318 = vunpack.c.h.s8.bf16 %v742
    %v2319 = vunpack.c.h.s8.bf16 %v743
    %v2320 = vunpack.c.h.s8.bf16 %v744
    %v2321 = vunpack.c.h.s8.bf16 %v745
    %v2322 = vunpack.c.l.s8.bf16 %v746
    %v2323 = vunpack.c.l.s8.bf16 %v747
    %v2324 = vunpack.c.l.s8.bf16 %v748
    %v2325 = vunpack.c.l.s8.bf16 %v749
    %v2326 = vunpack.c.l.s8.bf16 %v750
    %v2327 = vunpack.c.l.s8.bf16 %v751
    %v2328 = vunpack.c.l.s8.bf16 %v752
    %v2329 = vunpack.c.l.s8.bf16 %v753
    %v2330 = vunpack.c.h.s8.bf16 %v746
    %v2331 = vunpack.c.h.s8.bf16 %v747
    %v2332 = vunpack.c.h.s8.bf16 %v748
    %v2333 = vunpack.c.h.s8.bf16 %v749
    %v2334 = vunpack.c.h.s8.bf16 %v750
    %v2335 = vunpack.c.h.s8.bf16 %v751
    %v2336 = vunpack.c.h.s8.bf16 %v752
    %v2337 = vunpack.c.h.s8.bf16 %v753
    %v2338 = vunpack.c.l.s8.bf16 %v754
    %v2339 = vunpack.c.l.s8.bf16 %v755
    %v2340 = vunpack.c.l.s8.bf16 %v756
    %v2341 = vunpack.c.l.s8.bf16 %v757
    %v2342 = vunpack.c.l.s8.bf16 %v758
    %v2343 = vunpack.c.l.s8.bf16 %v759
    %v2344 = vunpack.c.l.s8.bf16 %v760
    %v2345 = vunpack.c.l.s8.bf16 %v761
    %v2346 = vunpack.c.h.s8.bf16 %v754
    %v2347 = vunpack.c.h.s8.bf16 %v755
    %v2348 = vunpack.c.h.s8.bf16 %v756
    %v2349 = vunpack.c.h.s8.bf16 %v757
    %v2350 = vunpack.c.h.s8.bf16 %v758
    %v2351 = vunpack.c.h.s8.bf16 %v759
    %v2352 = vunpack.c.h.s8.bf16 %v760
    %v2353 = vunpack.c.h.s8.bf16 %v761
    %v2354 = vunpack.c.l.s8.bf16 %v762
    %v2355 = vunpack.c.l.s8.bf16 %v763
    %v2356 = vunpack.c.l.s8.bf16 %v764
    %v2357 = vunpack.c.l.s8.bf16 %v765
    %v2358 = vunpack.c.l.s8.bf16 %v766
    %v2359 = vunpack.c.l.s8.bf16 %v767
    %v2360 = vunpack.c.l.s8.bf16 %v768
    %v2361 = vunpack.c.l.s8.bf16 %v769
    %v2362 = vunpack.c.h.s8.bf16 %v762
    %v2363 = vunpack.c.h.s8.bf16 %v763
    %v2364 = vunpack.c.h.s8.bf16 %v764
    %v2365 = vunpack.c.h.s8.bf16 %v765
    %v2366 = vunpack.c.h.s8.bf16 %v766
    %v2367 = vunpack.c.h.s8.bf16 %v767
    %v2368 = vunpack.c.h.s8.bf16 %v768
    %v2369 = vunpack.c.h.s8.bf16 %v769
    %v2370 = vunpack.c.l.s8.bf16 %v770
    %v2371 = vunpack.c.l.s8.bf16 %v771
    %v2372 = vunpack.c.l.s8.bf16 %v772
    %v2373 = vunpack.c.l.s8.bf16 %v773
    %v2374 = vunpack.c.l.s8.bf16 %v774
    %v2375 = vunpack.c.l.s8.bf16 %v775
    %v2376 = vunpack.c.l.s8.bf16 %v776
    %v2377 = vunpack.c.l.s8.bf16 %v777
    %v2378 = vunpack.c.h.s8.bf16 %v770
    %v2379 = vunpack.c.h.s8.bf16 %v771
    %v2380 = vunpack.c.h.s8.bf16 %v772
    %v2381 = vunpack.c.h.s8.bf16 %v773
    %v2382 = vunpack.c.h.s8.bf16 %v774
    %v2383 = vunpack.c.h.s8.bf16 %v775
    %v2384 = vunpack.c.h.s8.bf16 %v776
    %v2385 = vunpack.c.h.s8.bf16 %v777
    %v2386 = vunpack.c.l.s8.bf16 %v778
    %v2387 = vunpack.c.l.s8.bf16 %v779
    %v2388 = vunpack.c.l.s8.bf16 %v780
    %v2389 = vunpack.c.l.s8.bf16 %v781
    %v2390 = vunpack.c.l.s8.bf16 %v782
    %v2391 = vunpack.c.l.s8.bf16 %v783
    %v2392 = vunpack.c.l.s8.bf16 %v784
    %v2393 = vunpack.c.l.s8.bf16 %v785
    %v2394 = vunpack.c.h.s8.bf16 %v778
    %v2395 = vunpack.c.h.s8.bf16 %v779
    %v2396 = vunpack.c.h.s8.bf16 %v780
    %v2397 = vunpack.c.h.s8.bf16 %v781
    %v2398 = vunpack.c.h.s8.bf16 %v782
    %v2399 = vunpack.c.h.s8.bf16 %v783
    %v2400 = vunpack.c.h.s8.bf16 %v784
    %v2401 = vunpack.c.h.s8.bf16 %v785
    %v2402 = vunpack.c.l.s8.bf16 %v786
    %v2403 = vunpack.c.l.s8.bf16 %v787
    %v2404 = vunpack.c.l.s8.bf16 %v788
    %v2405 = vunpack.c.l.s8.bf16 %v789
    %v2406 = vunpack.c.l.s8.bf16 %v790
    %v2407 = vunpack.c.l.s8.bf16 %v791
    %v2408 = vunpack.c.l.s8.bf16 %v792
    %v2409 = vunpack.c.l.s8.bf16 %v793
    %v2410 = vunpack.c.h.s8.bf16 %v786
    %v2411 = vunpack.c.h.s8.bf16 %v787
    %v2412 = vunpack.c.h.s8.bf16 %v788
    %v2413 = vunpack.c.h.s8.bf16 %v789
    %v2414 = vunpack.c.h.s8.bf16 %v790
    %v2415 = vunpack.c.h.s8.bf16 %v791
    %v2416 = vunpack.c.h.s8.bf16 %v792
    %v2417 = vunpack.c.h.s8.bf16 %v793
    %v2418 = vunpack.c.l.s8.bf16 %v794
    %v2419 = vunpack.c.l.s8.bf16 %v795
    %v2420 = vunpack.c.l.s8.bf16 %v796
    %v2421 = vunpack.c.l.s8.bf16 %v797
    %v2422 = vunpack.c.l.s8.bf16 %v798
    %v2423 = vunpack.c.l.s8.bf16 %v799
    %v2424 = vunpack.c.l.s8.bf16 %v800
    %v2425 = vunpack.c.l.s8.bf16 %v801
    %v2426 = vunpack.c.h.s8.bf16 %v794
    %v2427 = vunpack.c.h.s8.bf16 %v795
    %v2428 = vunpack.c.h.s8.bf16 %v796
    %v2429 = vunpack.c.h.s8.bf16 %v797
    %v2430 = vunpack.c.h.s8.bf16 %v798
    %v2431 = vunpack.c.h.s8.bf16 %v799
    %v2432 = vunpack.c.h.s8.bf16 %v800
    %v2433 = vunpack.c.h.s8.bf16 %v801
    %v2434 = vunpack.c.l.s8.bf16 %v802
    %v2435 = vunpack.c.l.s8.bf16 %v803
    %v2436 = vunpack.c.l.s8.bf16 %v804
    %v2437 = vunpack.c.l.s8.bf16 %v805
    %v2438 = vunpack.c.l.s8.bf16 %v806
    %v2439 = vunpack.c.l.s8.bf16 %v807
    %v2440 = vunpack.c.l.s8.bf16 %v808
    %v2441 = vunpack.c.l.s8.bf16 %v809
    %v2442 = vunpack.c.h.s8.bf16 %v802
    %v2443 = vunpack.c.h.s8.bf16 %v803
    %v2444 = vunpack.c.h.s8.bf16 %v804
    %v2445 = vunpack.c.h.s8.bf16 %v805
    %v2446 = vunpack.c.h.s8.bf16 %v806
    %v2447 = vunpack.c.h.s8.bf16 %v807
    %v2448 = vunpack.c.h.s8.bf16 %v808
    %v2449 = vunpack.c.h.s8.bf16 %v809
    %v2450 = vunpack.c.l.s8.bf16 %v810
    %v2451 = vunpack.c.l.s8.bf16 %v811
    %v2452 = vunpack.c.l.s8.bf16 %v812
    %v2453 = vunpack.c.l.s8.bf16 %v813
    %v2454 = vunpack.c.l.s8.bf16 %v814
    %v2455 = vunpack.c.l.s8.bf16 %v815
    %v2456 = vunpack.c.l.s8.bf16 %v816
    %v2457 = vunpack.c.l.s8.bf16 %v817
    %v2458 = vunpack.c.h.s8.bf16 %v810
    %v2459 = vunpack.c.h.s8.bf16 %v811
    %v2460 = vunpack.c.h.s8.bf16 %v812
    %v2461 = vunpack.c.h.s8.bf16 %v813
    %v2462 = vunpack.c.h.s8.bf16 %v814
    %v2463 = vunpack.c.h.s8.bf16 %v815
    %v2464 = vunpack.c.h.s8.bf16 %v816
    %v2465 = vunpack.c.h.s8.bf16 %v817
    %v2466 = vunpack.c.l.s8.bf16 %v818
    %v2467 = vunpack.c.l.s8.bf16 %v819
    %v2468 = vunpack.c.l.s8.bf16 %v820
    %v2469 = vunpack.c.l.s8.bf16 %v821
    %v2470 = vunpack.c.l.s8.bf16 %v822
    %v2471 = vunpack.c.l.s8.bf16 %v823
    %v2472 = vunpack.c.l.s8.bf16 %v824
    %v2473 = vunpack.c.l.s8.bf16 %v825
    %v2474 = vunpack.c.h.s8.bf16 %v818
    %v2475 = vunpack.c.h.s8.bf16 %v819
    %v2476 = vunpack.c.h.s8.bf16 %v820
    %v2477 = vunpack.c.h.s8.bf16 %v821
    %v2478 = vunpack.c.h.s8.bf16 %v822
    %v2479 = vunpack.c.h.s8.bf16 %v823
    %v2480 = vunpack.c.h.s8.bf16 %v824
    %v2481 = vunpack.c.h.s8.bf16 %v825
    %v2482 = vunpack.c.l.s8.bf16 %v826
    %v2483 = vunpack.c.l.s8.bf16 %v827
    %v2484 = vunpack.c.l.s8.bf16 %v828
    %v2485 = vunpack.c.l.s8.bf16 %v829
    %v2486 = vunpack.c.l.s8.bf16 %v830
    %v2487 = vunpack.c.l.s8.bf16 %v831
    %v2488 = vunpack.c.l.s8.bf16 %v832
    %v2489 = vunpack.c.l.s8.bf16 %v833
    %v2490 = vunpack.c.h.s8.bf16 %v826
    %v2491 = vunpack.c.h.s8.bf16 %v827
    %v2492 = vunpack.c.h.s8.bf16 %v828
    %v2493 = vunpack.c.h.s8.bf16 %v829
    %v2494 = vunpack.c.h.s8.bf16 %v830
    %v2495 = vunpack.c.h.s8.bf16 %v831
    %v2496 = vunpack.c.h.s8.bf16 %v832
    %v2497 = vunpack.c.h.s8.bf16 %v833
    %v2498 = vunpack.c.l.s8.bf16 %v834
    %v2499 = vunpack.c.l.s8.bf16 %v835
    %v2500 = vunpack.c.l.s8.bf16 %v836
    %v2501 = vunpack.c.l.s8.bf16 %v837
    %v2502 = vunpack.c.l.s8.bf16 %v838
    %v2503 = vunpack.c.l.s8.bf16 %v839
    %v2504 = vunpack.c.l.s8.bf16 %v840
    %v2505 = vunpack.c.l.s8.bf16 %v841
    %v2506 = vunpack.c.h.s8.bf16 %v834
    %v2507 = vunpack.c.h.s8.bf16 %v835
    %v2508 = vunpack.c.h.s8.bf16 %v836
    %v2509 = vunpack.c.h.s8.bf16 %v837
    %v2510 = vunpack.c.h.s8.bf16 %v838
    %v2511 = vunpack.c.h.s8.bf16 %v839
    %v2512 = vunpack.c.h.s8.bf16 %v840
    %v2513 = vunpack.c.h.s8.bf16 %v841
    %v2514 = vunpack.c.l.s8.bf16 %v842
    %v2515 = vunpack.c.l.s8.bf16 %v843
    %v2516 = vunpack.c.l.s8.bf16 %v844
    %v2517 = vunpack.c.l.s8.bf16 %v845
    %v2518 = vunpack.c.l.s8.bf16 %v846
    %v2519 = vunpack.c.l.s8.bf16 %v847
    %v2520 = vunpack.c.l.s8.bf16 %v848
    %v2521 = vunpack.c.l.s8.bf16 %v849
    %v2522 = vunpack.c.h.s8.bf16 %v842
    %v2523 = vunpack.c.h.s8.bf16 %v843
    %v2524 = vunpack.c.h.s8.bf16 %v844
    %v2525 = vunpack.c.h.s8.bf16 %v845
    %v2526 = vunpack.c.h.s8.bf16 %v846
    %v2527 = vunpack.c.h.s8.bf16 %v847
    %v2528 = vunpack.c.h.s8.bf16 %v848
    %v2529 = vunpack.c.h.s8.bf16 %v849
    %v2530 = vunpack.c.l.s8.bf16 %v850
    %v2531 = vunpack.c.l.s8.bf16 %v851
    %v2532 = vunpack.c.l.s8.bf16 %v852
    %v2533 = vunpack.c.l.s8.bf16 %v853
    %v2534 = vunpack.c.l.s8.bf16 %v854
    %v2535 = vunpack.c.l.s8.bf16 %v855
    %v2536 = vunpack.c.l.s8.bf16 %v856
    %v2537 = vunpack.c.l.s8.bf16 %v857
    %v2538 = vunpack.c.h.s8.bf16 %v850
    %v2539 = vunpack.c.h.s8.bf16 %v851
    %v2540 = vunpack.c.h.s8.bf16 %v852
    %v2541 = vunpack.c.h.s8.bf16 %v853
    %v2542 = vunpack.c.h.s8.bf16 %v854
    %v2543 = vunpack.c.h.s8.bf16 %v855
    %v2544 = vunpack.c.h.s8.bf16 %v856
    %v2545 = vunpack.c.h.s8.bf16 %v857
    %v2546 = vunpack.c.l.s8.bf16 %v858
    %v2547 = vunpack.c.l.s8.bf16 %v859
    %v2548 = vunpack.c.l.s8.bf16 %v860
    %v2549 = vunpack.c.l.s8.bf16 %v861
    %v2550 = vunpack.c.l.s8.bf16 %v862
    %v2551 = vunpack.c.l.s8.bf16 %v863
    %v2552 = vunpack.c.l.s8.bf16 %v864
    %v2553 = vunpack.c.l.s8.bf16 %v865
    %v2554 = vunpack.c.h.s8.bf16 %v858
    %v2555 = vunpack.c.h.s8.bf16 %v859
    %v2556 = vunpack.c.h.s8.bf16 %v860
    %v2557 = vunpack.c.h.s8.bf16 %v861
    %v2558 = vunpack.c.h.s8.bf16 %v862
    %v2559 = vunpack.c.h.s8.bf16 %v863
    %v2560 = vunpack.c.h.s8.bf16 %v864
    %v2561 = vunpack.c.h.s8.bf16 %v865
    %v2562 = vunpack.c.l.s8.bf16 %v866
    %v2563 = vunpack.c.l.s8.bf16 %v867
    %v2564 = vunpack.c.l.s8.bf16 %v868
    %v2565 = vunpack.c.l.s8.bf16 %v869
    %v2566 = vunpack.c.l.s8.bf16 %v870
    %v2567 = vunpack.c.l.s8.bf16 %v871
    %v2568 = vunpack.c.l.s8.bf16 %v872
    %v2569 = vunpack.c.l.s8.bf16 %v873
    %v2570 = vunpack.c.h.s8.bf16 %v866
    %v2571 = vunpack.c.h.s8.bf16 %v867
    %v2572 = vunpack.c.h.s8.bf16 %v868
    %v2573 = vunpack.c.h.s8.bf16 %v869
    %v2574 = vunpack.c.h.s8.bf16 %v870
    %v2575 = vunpack.c.h.s8.bf16 %v871
    %v2576 = vunpack.c.h.s8.bf16 %v872
    %v2577 = vunpack.c.h.s8.bf16 %v873
    %v2578 = vunpack.c.l.s8.bf16 %v874
    %v2579 = vunpack.c.l.s8.bf16 %v875
    %v2580 = vunpack.c.l.s8.bf16 %v876
    %v2581 = vunpack.c.l.s8.bf16 %v877
    %v2582 = vunpack.c.l.s8.bf16 %v878
    %v2583 = vunpack.c.l.s8.bf16 %v879
    %v2584 = vunpack.c.l.s8.bf16 %v880
    %v2585 = vunpack.c.l.s8.bf16 %v881
    %v2586 = vunpack.c.h.s8.bf16 %v874
    %v2587 = vunpack.c.h.s8.bf16 %v875
    %v2588 = vunpack.c.h.s8.bf16 %v876
    %v2589 = vunpack.c.h.s8.bf16 %v877
    %v2590 = vunpack.c.h.s8.bf16 %v878
    %v2591 = vunpack.c.h.s8.bf16 %v879
    %v2592 = vunpack.c.h.s8.bf16 %v880
    %v2593 = vunpack.c.h.s8.bf16 %v881
    %v2594 = vunpack.c.l.s8.bf16 %v882
    %v2595 = vunpack.c.l.s8.bf16 %v883
    %v2596 = vunpack.c.l.s8.bf16 %v884
    %v2597 = vunpack.c.l.s8.bf16 %v885
    %v2598 = vunpack.c.l.s8.bf16 %v886
    %v2599 = vunpack.c.l.s8.bf16 %v887
    %v2600 = vunpack.c.l.s8.bf16 %v888
    %v2601 = vunpack.c.l.s8.bf16 %v889
    %v2602 = vunpack.c.h.s8.bf16 %v882
    %v2603 = vunpack.c.h.s8.bf16 %v883
    %v2604 = vunpack.c.h.s8.bf16 %v884
    %v2605 = vunpack.c.h.s8.bf16 %v885
    %v2606 = vunpack.c.h.s8.bf16 %v886
    %v2607 = vunpack.c.h.s8.bf16 %v887
    %v2608 = vunpack.c.h.s8.bf16 %v888
    %v2609 = vunpack.c.h.s8.bf16 %v889
    %v2610 = vunpack.c.l.s8.bf16 %v890
    %v2611 = vunpack.c.l.s8.bf16 %v891
    %v2612 = vunpack.c.l.s8.bf16 %v892
    %v2613 = vunpack.c.l.s8.bf16 %v893
    %v2614 = vunpack.c.l.s8.bf16 %v894
    %v2615 = vunpack.c.l.s8.bf16 %v895
    %v2616 = vunpack.c.l.s8.bf16 %v896
    %v2617 = vunpack.c.l.s8.bf16 %v897
    %v2618 = vunpack.c.h.s8.bf16 %v890
    %v2619 = vunpack.c.h.s8.bf16 %v891
    %v2620 = vunpack.c.h.s8.bf16 %v892
    %v2621 = vunpack.c.h.s8.bf16 %v893
    %v2622 = vunpack.c.h.s8.bf16 %v894
    %v2623 = vunpack.c.h.s8.bf16 %v895
    %v2624 = vunpack.c.h.s8.bf16 %v896
    %v2625 = vunpack.c.h.s8.bf16 %v897
    %v2626 = vunpack.c.l.s8.bf16 %v898
    %v2627 = vunpack.c.l.s8.bf16 %v899
    %v2628 = vunpack.c.l.s8.bf16 %v900
    %v2629 = vunpack.c.l.s8.bf16 %v901
    %v2630 = vunpack.c.l.s8.bf16 %v902
    %v2631 = vunpack.c.l.s8.bf16 %v903
    %v2632 = vunpack.c.l.s8.bf16 %v904
    %v2633 = vunpack.c.l.s8.bf16 %v905
    %v2634 = vunpack.c.h.s8.bf16 %v898
    %v2635 = vunpack.c.h.s8.bf16 %v899
    %v2636 = vunpack.c.h.s8.bf16 %v900
    %v2637 = vunpack.c.h.s8.bf16 %v901
    %v2638 = vunpack.c.h.s8.bf16 %v902
    %v2639 = vunpack.c.h.s8.bf16 %v903
    %v2640 = vunpack.c.h.s8.bf16 %v904
    %v2641 = vunpack.c.h.s8.bf16 %v905
    %v2642 = vunpack.c.l.s8.bf16 %v906
    %v2643 = vunpack.c.l.s8.bf16 %v907
    %v2644 = vunpack.c.l.s8.bf16 %v908
    %v2645 = vunpack.c.l.s8.bf16 %v909
    %v2646 = vunpack.c.l.s8.bf16 %v910
    %v2647 = vunpack.c.l.s8.bf16 %v911
    %v2648 = vunpack.c.l.s8.bf16 %v912
    %v2649 = vunpack.c.l.s8.bf16 %v913
    %v2650 = vunpack.c.h.s8.bf16 %v906
    %v2651 = vunpack.c.h.s8.bf16 %v907
    %v2652 = vunpack.c.h.s8.bf16 %v908
    %v2653 = vunpack.c.h.s8.bf16 %v909
    %v2654 = vunpack.c.h.s8.bf16 %v910
    %v2655 = vunpack.c.h.s8.bf16 %v911
    %v2656 = vunpack.c.h.s8.bf16 %v912
    %v2657 = vunpack.c.h.s8.bf16 %v913
    %v2658 = vunpack.c.l.s8.bf16 %v914
    %v2659 = vunpack.c.l.s8.bf16 %v915
    %v2660 = vunpack.c.l.s8.bf16 %v916
    %v2661 = vunpack.c.l.s8.bf16 %v917
    %v2662 = vunpack.c.l.s8.bf16 %v918
    %v2663 = vunpack.c.l.s8.bf16 %v919
    %v2664 = vunpack.c.l.s8.bf16 %v920
    %v2665 = vunpack.c.l.s8.bf16 %v921
    %v2666 = vunpack.c.h.s8.bf16 %v914
    %v2667 = vunpack.c.h.s8.bf16 %v915
    %v2668 = vunpack.c.h.s8.bf16 %v916
    %v2669 = vunpack.c.h.s8.bf16 %v917
    %v2670 = vunpack.c.h.s8.bf16 %v918
    %v2671 = vunpack.c.h.s8.bf16 %v919
    %v2672 = vunpack.c.h.s8.bf16 %v920
    %v2673 = vunpack.c.h.s8.bf16 %v921
    %v2674 = vunpack.c.l.s8.bf16 %v922
    %v2675 = vunpack.c.l.s8.bf16 %v923
    %v2676 = vunpack.c.l.s8.bf16 %v924
    %v2677 = vunpack.c.l.s8.bf16 %v925
    %v2678 = vunpack.c.l.s8.bf16 %v926
    %v2679 = vunpack.c.l.s8.bf16 %v927
    %v2680 = vunpack.c.l.s8.bf16 %v928
    %v2681 = vunpack.c.l.s8.bf16 %v929
    %v2682 = vunpack.c.h.s8.bf16 %v922
    %v2683 = vunpack.c.h.s8.bf16 %v923
    %v2684 = vunpack.c.h.s8.bf16 %v924
    %v2685 = vunpack.c.h.s8.bf16 %v925
    %v2686 = vunpack.c.h.s8.bf16 %v926
    %v2687 = vunpack.c.h.s8.bf16 %v927
    %v2688 = vunpack.c.h.s8.bf16 %v928
    %v2689 = vunpack.c.h.s8.bf16 %v929
    %v2690 = vunpack.c.l.s8.bf16 %v930
    %v2691 = vunpack.c.l.s8.bf16 %v931
    %v2692 = vunpack.c.l.s8.bf16 %v932
    %v2693 = vunpack.c.l.s8.bf16 %v933
    %v2694 = vunpack.c.l.s8.bf16 %v934
    %v2695 = vunpack.c.l.s8.bf16 %v935
    %v2696 = vunpack.c.l.s8.bf16 %v936
    %v2697 = vunpack.c.l.s8.bf16 %v937
    %v2698 = vunpack.c.h.s8.bf16 %v930
    %v2699 = vunpack.c.h.s8.bf16 %v931
    %v2700 = vunpack.c.h.s8.bf16 %v932
    %v2701 = vunpack.c.h.s8.bf16 %v933
    %v2702 = vunpack.c.h.s8.bf16 %v934
    %v2703 = vunpack.c.h.s8.bf16 %v935
    %v2704 = vunpack.c.h.s8.bf16 %v936
    %v2705 = vunpack.c.h.s8.bf16 %v937
    %v2706 = vunpack.c.l.s8.bf16 %v938
    %v2707 = vunpack.c.l.s8.bf16 %v939
    %v2708 = vunpack.c.l.s8.bf16 %v940
    %v2709 = vunpack.c.l.s8.bf16 %v941
    %v2710 = vunpack.c.l.s8.bf16 %v942
    %v2711 = vunpack.c.l.s8.bf16 %v943
    %v2712 = vunpack.c.l.s8.bf16 %v944
    %v2713 = vunpack.c.l.s8.bf16 %v945
    %v2714 = vunpack.c.h.s8.bf16 %v938
    %v2715 = vunpack.c.h.s8.bf16 %v939
    %v2716 = vunpack.c.h.s8.bf16 %v940
    %v2717 = vunpack.c.h.s8.bf16 %v941
    %v2718 = vunpack.c.h.s8.bf16 %v942
    %v2719 = vunpack.c.h.s8.bf16 %v943
    %v2720 = vunpack.c.h.s8.bf16 %v944
    %v2721 = vunpack.c.h.s8.bf16 %v945
    %v2722 = vunpack.c.l.s8.bf16 %v946
    %v2723 = vunpack.c.l.s8.bf16 %v947
    %v2724 = vunpack.c.l.s8.bf16 %v948
    %v2725 = vunpack.c.l.s8.bf16 %v949
    %v2726 = vunpack.c.l.s8.bf16 %v950
    %v2727 = vunpack.c.l.s8.bf16 %v951
    %v2728 = vunpack.c.l.s8.bf16 %v952
    %v2729 = vunpack.c.l.s8.bf16 %v953
    %v2730 = vunpack.c.h.s8.bf16 %v946
    %v2731 = vunpack.c.h.s8.bf16 %v947
    %v2732 = vunpack.c.h.s8.bf16 %v948
    %v2733 = vunpack.c.h.s8.bf16 %v949
    %v2734 = vunpack.c.h.s8.bf16 %v950
    %v2735 = vunpack.c.h.s8.bf16 %v951
    %v2736 = vunpack.c.h.s8.bf16 %v952
    %v2737 = vunpack.c.h.s8.bf16 %v953
    %v2738 = vunpack.c.l.s8.bf16 %v954
    %v2739 = vunpack.c.l.s8.bf16 %v955
    %v2740 = vunpack.c.l.s8.bf16 %v956
    %v2741 = vunpack.c.l.s8.bf16 %v957
    %v2742 = vunpack.c.l.s8.bf16 %v958
    %v2743 = vunpack.c.l.s8.bf16 %v959
    %v2744 = vunpack.c.l.s8.bf16 %v960
    %v2745 = vunpack.c.l.s8.bf16 %v961
    %v2746 = vunpack.c.h.s8.bf16 %v954
    %v2747 = vunpack.c.h.s8.bf16 %v955
    %v2748 = vunpack.c.h.s8.bf16 %v956
    %v2749 = vunpack.c.h.s8.bf16 %v957
    %v2750 = vunpack.c.h.s8.bf16 %v958
    %v2751 = vunpack.c.h.s8.bf16 %v959
    %v2752 = vunpack.c.h.s8.bf16 %v960
    %v2753 = vunpack.c.h.s8.bf16 %v961
    %v2754 = vunpack.c.l.s8.bf16 %v962
    %v2755 = vunpack.c.l.s8.bf16 %v963
    %v2756 = vunpack.c.l.s8.bf16 %v964
    %v2757 = vunpack.c.l.s8.bf16 %v965
    %v2758 = vunpack.c.l.s8.bf16 %v966
    %v2759 = vunpack.c.l.s8.bf16 %v967
    %v2760 = vunpack.c.l.s8.bf16 %v968
    %v2761 = vunpack.c.l.s8.bf16 %v969
    %v2762 = vunpack.c.h.s8.bf16 %v962
    %v2763 = vunpack.c.h.s8.bf16 %v963
    %v2764 = vunpack.c.h.s8.bf16 %v964
    %v2765 = vunpack.c.h.s8.bf16 %v965
    %v2766 = vunpack.c.h.s8.bf16 %v966
    %v2767 = vunpack.c.h.s8.bf16 %v967
    %v2768 = vunpack.c.h.s8.bf16 %v968
    %v2769 = vunpack.c.h.s8.bf16 %v969
    %v2770 = vunpack.c.l.s8.bf16 %v970
    %v2771 = vunpack.c.l.s8.bf16 %v971
    %v2772 = vunpack.c.l.s8.bf16 %v972
    %v2773 = vunpack.c.l.s8.bf16 %v973
    %v2774 = vunpack.c.l.s8.bf16 %v974
    %v2775 = vunpack.c.l.s8.bf16 %v975
    %v2776 = vunpack.c.l.s8.bf16 %v976
    %v2777 = vunpack.c.l.s8.bf16 %v977
    %v2778 = vunpack.c.h.s8.bf16 %v970
    %v2779 = vunpack.c.h.s8.bf16 %v971
    %v2780 = vunpack.c.h.s8.bf16 %v972
    %v2781 = vunpack.c.h.s8.bf16 %v973
    %v2782 = vunpack.c.h.s8.bf16 %v974
    %v2783 = vunpack.c.h.s8.bf16 %v975
    %v2784 = vunpack.c.h.s8.bf16 %v976
    %v2785 = vunpack.c.h.s8.bf16 %v977
    %v2786 = vunpack.c.l.s8.bf16 %v978
    %v2787 = vunpack.c.l.s8.bf16 %v979
    %v2788 = vunpack.c.l.s8.bf16 %v980
    %v2789 = vunpack.c.l.s8.bf16 %v981
    %v2790 = vunpack.c.l.s8.bf16 %v982
    %v2791 = vunpack.c.l.s8.bf16 %v983
    %v2792 = vunpack.c.l.s8.bf16 %v984
    %v2793 = vunpack.c.l.s8.bf16 %v985
    %v2794 = vunpack.c.h.s8.bf16 %v978
    %v2795 = vunpack.c.h.s8.bf16 %v979
    %v2796 = vunpack.c.h.s8.bf16 %v980
    %v2797 = vunpack.c.h.s8.bf16 %v981
    %v2798 = vunpack.c.h.s8.bf16 %v982
    %v2799 = vunpack.c.h.s8.bf16 %v983
    %v2800 = vunpack.c.h.s8.bf16 %v984
    %v2801 = vunpack.c.h.s8.bf16 %v985
    %v2802 = vunpack.c.l.s8.bf16 %v986
    %v2803 = vunpack.c.l.s8.bf16 %v987
    %v2804 = vunpack.c.l.s8.bf16 %v988
    %v2805 = vunpack.c.l.s8.bf16 %v989
    %v2806 = vunpack.c.l.s8.bf16 %v990
    %v2807 = vunpack.c.l.s8.bf16 %v991
    %v2808 = vunpack.c.l.s8.bf16 %v992
    %v2809 = vunpack.c.l.s8.bf16 %v993
    %v2810 = vunpack.c.h.s8.bf16 %v986
    %v2811 = vunpack.c.h.s8.bf16 %v987
    %v2812 = vunpack.c.h.s8.bf16 %v988
    %v2813 = vunpack.c.h.s8.bf16 %v989
    %v2814 = vunpack.c.h.s8.bf16 %v990
    %v2815 = vunpack.c.h.s8.bf16 %v991
    %v2816 = vunpack.c.h.s8.bf16 %v992
    %v2817 = vunpack.c.h.s8.bf16 %v993
    %v2818 = vunpack.c.l.s8.bf16 %v994
    %v2819 = vunpack.c.l.s8.bf16 %v995
    %v2820 = vunpack.c.l.s8.bf16 %v996
    %v2821 = vunpack.c.l.s8.bf16 %v997
    %v2822 = vunpack.c.l.s8.bf16 %v998
    %v2823 = vunpack.c.l.s8.bf16 %v999
    %v2824 = vunpack.c.l.s8.bf16 %v1000
    %v2825 = vunpack.c.l.s8.bf16 %v1001
    %v2826 = vunpack.c.h.s8.bf16 %v994
    %v2827 = vunpack.c.h.s8.bf16 %v995
    %v2828 = vunpack.c.h.s8.bf16 %v996
    %v2829 = vunpack.c.h.s8.bf16 %v997
    %v2830 = vunpack.c.h.s8.bf16 %v998
    %v2831 = vunpack.c.h.s8.bf16 %v999
    %v2832 = vunpack.c.h.s8.bf16 %v1000
    %v2833 = vunpack.c.h.s8.bf16 %v1001
    %v2834 = vunpack.c.l.s8.bf16 %v1002
    %v2835 = vunpack.c.l.s8.bf16 %v1003
    %v2836 = vunpack.c.l.s8.bf16 %v1004
    %v2837 = vunpack.c.l.s8.bf16 %v1005
    %v2838 = vunpack.c.l.s8.bf16 %v1006
    %v2839 = vunpack.c.l.s8.bf16 %v1007
    %v2840 = vunpack.c.l.s8.bf16 %v1008
    %v2841 = vunpack.c.l.s8.bf16 %v1009
    %v2842 = vunpack.c.h.s8.bf16 %v1002
    %v2843 = vunpack.c.h.s8.bf16 %v1003
    %v2844 = vunpack.c.h.s8.bf16 %v1004
    %v2845 = vunpack.c.h.s8.bf16 %v1005
    %v2846 = vunpack.c.h.s8.bf16 %v1006
    %v2847 = vunpack.c.h.s8.bf16 %v1007
    %v2848 = vunpack.c.h.s8.bf16 %v1008
    %v2849 = vunpack.c.h.s8.bf16 %v1009
    %v2850 = vunpack.c.l.s8.bf16 %v1010
    %v2851 = vunpack.c.l.s8.bf16 %v1011
    %v2852 = vunpack.c.l.s8.bf16 %v1012
    %v2853 = vunpack.c.l.s8.bf16 %v1013
    %v2854 = vunpack.c.l.s8.bf16 %v1014
    %v2855 = vunpack.c.l.s8.bf16 %v1015
    %v2856 = vunpack.c.l.s8.bf16 %v1016
    %v2857 = vunpack.c.l.s8.bf16 %v1017
    %v2858 = vunpack.c.h.s8.bf16 %v1010
    %v2859 = vunpack.c.h.s8.bf16 %v1011
    %v2860 = vunpack.c.h.s8.bf16 %v1012
    %v2861 = vunpack.c.h.s8.bf16 %v1013
    %v2862 = vunpack.c.h.s8.bf16 %v1014
    %v2863 = vunpack.c.h.s8.bf16 %v1015
    %v2864 = vunpack.c.h.s8.bf16 %v1016
    %v2865 = vunpack.c.h.s8.bf16 %v1017
    %v2866 = vunpack.c.l.s8.bf16 %v1018
    %v2867 = vunpack.c.l.s8.bf16 %v1019
    %v2868 = vunpack.c.l.s8.bf16 %v1020
    %v2869 = vunpack.c.l.s8.bf16 %v1021
    %v2870 = vunpack.c.l.s8.bf16 %v1022
    %v2871 = vunpack.c.l.s8.bf16 %v1023
    %v2872 = vunpack.c.l.s8.bf16 %v1024
    %v2873 = vunpack.c.l.s8.bf16 %v1025
    %v2874 = vunpack.c.h.s8.bf16 %v1018
    %v2875 = vunpack.c.h.s8.bf16 %v1019
    %v2876 = vunpack.c.h.s8.bf16 %v1020
    %v2877 = vunpack.c.h.s8.bf16 %v1021
    %v2878 = vunpack.c.h.s8.bf16 %v1022
    %v2879 = vunpack.c.h.s8.bf16 %v1023
    %v2880 = vunpack.c.h.s8.bf16 %v1024
    %v2881 = vunpack.c.h.s8.bf16 %v1025
    %v2882 = vunpack.c.l.s8.bf16 %v1026
    %v2883 = vunpack.c.l.s8.bf16 %v1027
    %v2884 = vunpack.c.l.s8.bf16 %v1028
    %v2885 = vunpack.c.l.s8.bf16 %v1029
    %v2886 = vunpack.c.l.s8.bf16 %v1030
    %v2887 = vunpack.c.l.s8.bf16 %v1031
    %v2888 = vunpack.c.l.s8.bf16 %v1032
    %v2889 = vunpack.c.l.s8.bf16 %v1033
    %v2890 = vunpack.c.h.s8.bf16 %v1026
    %v2891 = vunpack.c.h.s8.bf16 %v1027
    %v2892 = vunpack.c.h.s8.bf16 %v1028
    %v2893 = vunpack.c.h.s8.bf16 %v1029
    %v2894 = vunpack.c.h.s8.bf16 %v1030
    %v2895 = vunpack.c.h.s8.bf16 %v1031
    %v2896 = vunpack.c.h.s8.bf16 %v1032
    %v2897 = vunpack.c.h.s8.bf16 %v1033
    %v2898 = vunpack.c.l.s8.bf16 %v1034
    %v2899 = vunpack.c.l.s8.bf16 %v1035
    %v2900 = vunpack.c.l.s8.bf16 %v1036
    %v2901 = vunpack.c.l.s8.bf16 %v1037
    %v2902 = vunpack.c.l.s8.bf16 %v1038
    %v2903 = vunpack.c.l.s8.bf16 %v1039
    %v2904 = vunpack.c.l.s8.bf16 %v1040
    %v2905 = vunpack.c.l.s8.bf16 %v1041
    %v2906 = vunpack.c.h.s8.bf16 %v1034
    %v2907 = vunpack.c.h.s8.bf16 %v1035
    %v2908 = vunpack.c.h.s8.bf16 %v1036
    %v2909 = vunpack.c.h.s8.bf16 %v1037
    %v2910 = vunpack.c.h.s8.bf16 %v1038
    %v2911 = vunpack.c.h.s8.bf16 %v1039
    %v2912 = vunpack.c.h.s8.bf16 %v1040
    %v2913 = vunpack.c.h.s8.bf16 %v1041
    %v2914 = vunpack.c.l.s8.bf16 %v1042
    %v2915 = vunpack.c.l.s8.bf16 %v1043
    %v2916 = vunpack.c.l.s8.bf16 %v1044
    %v2917 = vunpack.c.l.s8.bf16 %v1045
    %v2918 = vunpack.c.l.s8.bf16 %v1046
    %v2919 = vunpack.c.l.s8.bf16 %v1047
    %v2920 = vunpack.c.l.s8.bf16 %v1048
    %v2921 = vunpack.c.l.s8.bf16 %v1049
    %v2922 = vunpack.c.h.s8.bf16 %v1042
    %v2923 = vunpack.c.h.s8.bf16 %v1043
    %v2924 = vunpack.c.h.s8.bf16 %v1044
    %v2925 = vunpack.c.h.s8.bf16 %v1045
    %v2926 = vunpack.c.h.s8.bf16 %v1046
    %v2927 = vunpack.c.h.s8.bf16 %v1047
    %v2928 = vunpack.c.h.s8.bf16 %v1048
    %v2929 = vunpack.c.h.s8.bf16 %v1049
    %v2930 = vunpack.c.l.s8.bf16 %v1050
    %v2931 = vunpack.c.l.s8.bf16 %v1051
    %v2932 = vunpack.c.l.s8.bf16 %v1052
    %v2933 = vunpack.c.l.s8.bf16 %v1053
    %v2934 = vunpack.c.l.s8.bf16 %v1054
    %v2935 = vunpack.c.l.s8.bf16 %v1055
    %v2936 = vunpack.c.l.s8.bf16 %v1056
    %v2937 = vunpack.c.l.s8.bf16 %v1057
    %v2938 = vunpack.c.h.s8.bf16 %v1050
    %v2939 = vunpack.c.h.s8.bf16 %v1051
    %v2940 = vunpack.c.h.s8.bf16 %v1052
    %v2941 = vunpack.c.h.s8.bf16 %v1053
    %v2942 = vunpack.c.h.s8.bf16 %v1054
    %v2943 = vunpack.c.h.s8.bf16 %v1055
    %v2944 = vunpack.c.h.s8.bf16 %v1056
    %v2945 = vunpack.c.h.s8.bf16 %v1057
    %v2946 = vunpack.c.l.s8.bf16 %v1058
    %v2947 = vunpack.c.l.s8.bf16 %v1059
    %v2948 = vunpack.c.l.s8.bf16 %v1060
    %v2949 = vunpack.c.l.s8.bf16 %v1061
    %v2950 = vunpack.c.l.s8.bf16 %v1062
    %v2951 = vunpack.c.l.s8.bf16 %v1063
    %v2952 = vunpack.c.l.s8.bf16 %v1064
    %v2953 = vunpack.c.l.s8.bf16 %v1065
    %v2954 = vunpack.c.h.s8.bf16 %v1058
    %v2955 = vunpack.c.h.s8.bf16 %v1059
    %v2956 = vunpack.c.h.s8.bf16 %v1060
    %v2957 = vunpack.c.h.s8.bf16 %v1061
    %v2958 = vunpack.c.h.s8.bf16 %v1062
    %v2959 = vunpack.c.h.s8.bf16 %v1063
    %v2960 = vunpack.c.h.s8.bf16 %v1064
    %v2961 = vunpack.c.h.s8.bf16 %v1065
    %v2962 = vunpack.c.l.s8.bf16 %v1066
    %v2963 = vunpack.c.l.s8.bf16 %v1067
    %v2964 = vunpack.c.l.s8.bf16 %v1068
    %v2965 = vunpack.c.l.s8.bf16 %v1069
    %v2966 = vunpack.c.l.s8.bf16 %v1070
    %v2967 = vunpack.c.l.s8.bf16 %v1071
    %v2968 = vunpack.c.l.s8.bf16 %v1072
    %v2969 = vunpack.c.l.s8.bf16 %v1073
    %v2970 = vunpack.c.h.s8.bf16 %v1066
    %v2971 = vunpack.c.h.s8.bf16 %v1067
    %v2972 = vunpack.c.h.s8.bf16 %v1068
    %v2973 = vunpack.c.h.s8.bf16 %v1069
    %v2974 = vunpack.c.h.s8.bf16 %v1070
    %v2975 = vunpack.c.h.s8.bf16 %v1071
    %v2976 = vunpack.c.h.s8.bf16 %v1072
    %v2977 = vunpack.c.h.s8.bf16 %v1073
    %v2978 = vunpack.c.l.s8.bf16 %v1074
    %v2979 = vunpack.c.l.s8.bf16 %v1075
    %v2980 = vunpack.c.l.s8.bf16 %v1076
    %v2981 = vunpack.c.l.s8.bf16 %v1077
    %v2982 = vunpack.c.l.s8.bf16 %v1078
    %v2983 = vunpack.c.l.s8.bf16 %v1079
    %v2984 = vunpack.c.l.s8.bf16 %v1080
    %v2985 = vunpack.c.l.s8.bf16 %v1081
    %v2986 = vunpack.c.h.s8.bf16 %v1074
    %v2987 = vunpack.c.h.s8.bf16 %v1075
    %v2988 = vunpack.c.h.s8.bf16 %v1076
    %v2989 = vunpack.c.h.s8.bf16 %v1077
    %v2990 = vunpack.c.h.s8.bf16 %v1078
    %v2991 = vunpack.c.h.s8.bf16 %v1079
    %v2992 = vunpack.c.h.s8.bf16 %v1080
    %v2993 = vunpack.c.h.s8.bf16 %v1081
    %v2994 = vunpack.c.l.s8.bf16 %v1082
    %v2995 = vunpack.c.l.s8.bf16 %v1083
    %v2996 = vunpack.c.l.s8.bf16 %v1084
    %v2997 = vunpack.c.l.s8.bf16 %v1085
    %v2998 = vunpack.c.l.s8.bf16 %v1086
    %v2999 = vunpack.c.l.s8.bf16 %v1087
    %v3000 = vunpack.c.l.s8.bf16 %v1088
    %v3001 = vunpack.c.l.s8.bf16 %v1089
    %v3002 = vunpack.c.h.s8.bf16 %v1082
    %v3003 = vunpack.c.h.s8.bf16 %v1083
    %v3004 = vunpack.c.h.s8.bf16 %v1084
    %v3005 = vunpack.c.h.s8.bf16 %v1085
    %v3006 = vunpack.c.h.s8.bf16 %v1086
    %v3007 = vunpack.c.h.s8.bf16 %v1087
    %v3008 = vunpack.c.h.s8.bf16 %v1088
    %v3009 = vunpack.c.h.s8.bf16 %v1089
    %v3010 = vunpack.c.l.s8.bf16 %v1090
    %v3011 = vunpack.c.l.s8.bf16 %v1091
    %v3012 = vunpack.c.l.s8.bf16 %v1092
    %v3013 = vunpack.c.l.s8.bf16 %v1093
    %v3014 = vunpack.c.l.s8.bf16 %v1094
    %v3015 = vunpack.c.l.s8.bf16 %v1095
    %v3016 = vunpack.c.l.s8.bf16 %v1096
    %v3017 = vunpack.c.l.s8.bf16 %v1097
    %v3018 = vunpack.c.h.s8.bf16 %v1090
    %v3019 = vunpack.c.h.s8.bf16 %v1091
    %v3020 = vunpack.c.h.s8.bf16 %v1092
    %v3021 = vunpack.c.h.s8.bf16 %v1093
    %v3022 = vunpack.c.h.s8.bf16 %v1094
    %v3023 = vunpack.c.h.s8.bf16 %v1095
    %v3024 = vunpack.c.h.s8.bf16 %v1096
    %v3025 = vunpack.c.h.s8.bf16 %v1097
    %v3026 = vunpack.c.l.s8.bf16 %v1098
    %v3027 = vunpack.c.l.s8.bf16 %v1099
    %v3028 = vunpack.c.l.s8.bf16 %v1100
    %v3029 = vunpack.c.l.s8.bf16 %v1101
    %v3030 = vunpack.c.l.s8.bf16 %v1102
    %v3031 = vunpack.c.l.s8.bf16 %v1103
    %v3032 = vunpack.c.l.s8.bf16 %v1104
    %v3033 = vunpack.c.l.s8.bf16 %v1105
    %v3034 = vunpack.c.h.s8.bf16 %v1098
    %v3035 = vunpack.c.h.s8.bf16 %v1099
    %v3036 = vunpack.c.h.s8.bf16 %v1100
    %v3037 = vunpack.c.h.s8.bf16 %v1101
    %v3038 = vunpack.c.h.s8.bf16 %v1102
    %v3039 = vunpack.c.h.s8.bf16 %v1103
    %v3040 = vunpack.c.h.s8.bf16 %v1104
    %v3041 = vunpack.c.h.s8.bf16 %v1105
    %v3042 = vunpack.c.l.s8.bf16 %v1106
    %v3043 = vunpack.c.l.s8.bf16 %v1107
    %v3044 = vunpack.c.l.s8.bf16 %v1108
    %v3045 = vunpack.c.l.s8.bf16 %v1109
    %v3046 = vunpack.c.l.s8.bf16 %v1110
    %v3047 = vunpack.c.l.s8.bf16 %v1111
    %v3048 = vunpack.c.l.s8.bf16 %v1112
    %v3049 = vunpack.c.l.s8.bf16 %v1113
    %v3050 = vunpack.c.h.s8.bf16 %v1106
    %v3051 = vunpack.c.h.s8.bf16 %v1107
    %v3052 = vunpack.c.h.s8.bf16 %v1108
    %v3053 = vunpack.c.h.s8.bf16 %v1109
    %v3054 = vunpack.c.h.s8.bf16 %v1110
    %v3055 = vunpack.c.h.s8.bf16 %v1111
    %v3056 = vunpack.c.h.s8.bf16 %v1112
    %v3057 = vunpack.c.h.s8.bf16 %v1113
    %v3058 = vunpack.c.l.s8.bf16 %v1114
    %v3059 = vunpack.c.l.s8.bf16 %v1115
    %v3060 = vunpack.c.l.s8.bf16 %v1116
    %v3061 = vunpack.c.l.s8.bf16 %v1117
    %v3062 = vunpack.c.l.s8.bf16 %v1118
    %v3063 = vunpack.c.l.s8.bf16 %v1119
    %v3064 = vunpack.c.l.s8.bf16 %v1120
    %v3065 = vunpack.c.l.s8.bf16 %v1121
    %v3066 = vunpack.c.h.s8.bf16 %v1114
    %v3067 = vunpack.c.h.s8.bf16 %v1115
    %v3068 = vunpack.c.h.s8.bf16 %v1116
    %v3069 = vunpack.c.h.s8.bf16 %v1117
    %v3070 = vunpack.c.h.s8.bf16 %v1118
    %v3071 = vunpack.c.h.s8.bf16 %v1119
    %v3072 = vunpack.c.h.s8.bf16 %v1120
    %v3073 = vunpack.c.h.s8.bf16 %v1121
    %v3074 = vunpack.c.l.s8.bf16 %v1122
    %v3075 = vunpack.c.l.s8.bf16 %v1123
    %v3076 = vunpack.c.l.s8.bf16 %v1124
    %v3077 = vunpack.c.l.s8.bf16 %v1125
    %v3078 = vunpack.c.l.s8.bf16 %v1126
    %v3079 = vunpack.c.l.s8.bf16 %v1127
    %v3080 = vunpack.c.l.s8.bf16 %v1128
    %v3081 = vunpack.c.l.s8.bf16 %v1129
    %v3082 = vunpack.c.h.s8.bf16 %v1122
    %v3083 = vunpack.c.h.s8.bf16 %v1123
    %v3084 = vunpack.c.h.s8.bf16 %v1124
    %v3085 = vunpack.c.h.s8.bf16 %v1125
    %v3086 = vunpack.c.h.s8.bf16 %v1126
    %v3087 = vunpack.c.h.s8.bf16 %v1127
    %v3088 = vunpack.c.h.s8.bf16 %v1128
    %v3089 = vunpack.c.h.s8.bf16 %v1129
    %v3090 = vunpack.c.l.s8.bf16 %v1130
    %v3091 = vunpack.c.l.s8.bf16 %v1131
    %v3092 = vunpack.c.l.s8.bf16 %v1132
    %v3093 = vunpack.c.l.s8.bf16 %v1133
    %v3094 = vunpack.c.l.s8.bf16 %v1134
    %v3095 = vunpack.c.l.s8.bf16 %v1135
    %v3096 = vunpack.c.l.s8.bf16 %v1136
    %v3097 = vunpack.c.l.s8.bf16 %v1137
    %v3098 = vunpack.c.h.s8.bf16 %v1130
    %v3099 = vunpack.c.h.s8.bf16 %v1131
    %v3100 = vunpack.c.h.s8.bf16 %v1132
    %v3101 = vunpack.c.h.s8.bf16 %v1133
    %v3102 = vunpack.c.h.s8.bf16 %v1134
    %v3103 = vunpack.c.h.s8.bf16 %v1135
    %v3104 = vunpack.c.h.s8.bf16 %v1136
    %v3105 = vunpack.c.h.s8.bf16 %v1137
    %v3106 = vunpack.c.l.s8.bf16 %v1138
    %v3107 = vunpack.c.l.s8.bf16 %v1139
    %v3108 = vunpack.c.l.s8.bf16 %v1140
    %v3109 = vunpack.c.l.s8.bf16 %v1141
    %v3110 = vunpack.c.l.s8.bf16 %v1142
    %v3111 = vunpack.c.l.s8.bf16 %v1143
    %v3112 = vunpack.c.l.s8.bf16 %v1144
    %v3113 = vunpack.c.l.s8.bf16 %v1145
    %v3114 = vunpack.c.h.s8.bf16 %v1138
    %v3115 = vunpack.c.h.s8.bf16 %v1139
    %v3116 = vunpack.c.h.s8.bf16 %v1140
    %v3117 = vunpack.c.h.s8.bf16 %v1141
    %v3118 = vunpack.c.h.s8.bf16 %v1142
    %v3119 = vunpack.c.h.s8.bf16 %v1143
    %v3120 = vunpack.c.h.s8.bf16 %v1144
    %v3121 = vunpack.c.h.s8.bf16 %v1145
    %v3122 = vunpack.c.l.s8.bf16 %v1146
    %v3123 = vunpack.c.l.s8.bf16 %v1147
    %v3124 = vunpack.c.l.s8.bf16 %v1148
    %v3125 = vunpack.c.l.s8.bf16 %v1149
    %v3126 = vunpack.c.l.s8.bf16 %v1150
    %v3127 = vunpack.c.l.s8.bf16 %v1151
    %v3128 = vunpack.c.l.s8.bf16 %v1152
    %v3129 = vunpack.c.l.s8.bf16 %v1153
    %v3130 = vunpack.c.h.s8.bf16 %v1146
    %v3131 = vunpack.c.h.s8.bf16 %v1147
    %v3132 = vunpack.c.h.s8.bf16 %v1148
    %v3133 = vunpack.c.h.s8.bf16 %v1149
    %v3134 = vunpack.c.h.s8.bf16 %v1150
    %v3135 = vunpack.c.h.s8.bf16 %v1151
    %v3136 = vunpack.c.h.s8.bf16 %v1152
    %v3137 = vunpack.c.h.s8.bf16 %v1153
    %v3138 = vunpack.c.l.s8.bf16 %v1154
    %v3139 = vunpack.c.l.s8.bf16 %v1155
    %v3140 = vunpack.c.l.s8.bf16 %v1156
    %v3141 = vunpack.c.l.s8.bf16 %v1157
    %v3142 = vunpack.c.l.s8.bf16 %v1158
    %v3143 = vunpack.c.l.s8.bf16 %v1159
    %v3144 = vunpack.c.l.s8.bf16 %v1160
    %v3145 = vunpack.c.l.s8.bf16 %v1161
    %v3146 = vunpack.c.h.s8.bf16 %v1154
    %v3147 = vunpack.c.h.s8.bf16 %v1155
    %v3148 = vunpack.c.h.s8.bf16 %v1156
    %v3149 = vunpack.c.h.s8.bf16 %v1157
    %v3150 = vunpack.c.h.s8.bf16 %v1158
    %v3151 = vunpack.c.h.s8.bf16 %v1159
    %v3152 = vunpack.c.h.s8.bf16 %v1160
    %v3153 = vunpack.c.h.s8.bf16 %v1161
    %v3154 = vunpack.c.l.s8.bf16 %v1162
    %v3155 = vunpack.c.l.s8.bf16 %v1163
    %v3156 = vunpack.c.l.s8.bf16 %v1164
    %v3157 = vunpack.c.l.s8.bf16 %v1165
    %v3158 = vunpack.c.l.s8.bf16 %v1166
    %v3159 = vunpack.c.l.s8.bf16 %v1167
    %v3160 = vunpack.c.l.s8.bf16 %v1168
    %v3161 = vunpack.c.l.s8.bf16 %v1169
    %v3162 = vunpack.c.h.s8.bf16 %v1162
    %v3163 = vunpack.c.h.s8.bf16 %v1163
    %v3164 = vunpack.c.h.s8.bf16 %v1164
    %v3165 = vunpack.c.h.s8.bf16 %v1165
    %v3166 = vunpack.c.h.s8.bf16 %v1166
    %v3167 = vunpack.c.h.s8.bf16 %v1167
    %v3168 = vunpack.c.h.s8.bf16 %v1168
    %v3169 = vunpack.c.h.s8.bf16 %v1169
    %v3170 = vunpack.c.l.s8.bf16 %v1170
    %v3171 = vunpack.c.l.s8.bf16 %v1171
    %v3172 = vunpack.c.l.s8.bf16 %v1172
    %v3173 = vunpack.c.l.s8.bf16 %v1173
    %v3174 = vunpack.c.l.s8.bf16 %v1174
    %v3175 = vunpack.c.l.s8.bf16 %v1175
    %v3176 = vunpack.c.l.s8.bf16 %v1176
    %v3177 = vunpack.c.l.s8.bf16 %v1177
    %v3178 = vunpack.c.h.s8.bf16 %v1170
    %v3179 = vunpack.c.h.s8.bf16 %v1171
    %v3180 = vunpack.c.h.s8.bf16 %v1172
    %v3181 = vunpack.c.h.s8.bf16 %v1173
    %v3182 = vunpack.c.h.s8.bf16 %v1174
    %v3183 = vunpack.c.h.s8.bf16 %v1175
    %v3184 = vunpack.c.h.s8.bf16 %v1176
    %v3185 = vunpack.c.h.s8.bf16 %v1177
    %v3186 = vunpack.c.l.s8.bf16 %v1178
    %v3187 = vunpack.c.l.s8.bf16 %v1179
    %v3188 = vunpack.c.l.s8.bf16 %v1180
    %v3189 = vunpack.c.l.s8.bf16 %v1181
    %v3190 = vunpack.c.l.s8.bf16 %v1182
    %v3191 = vunpack.c.l.s8.bf16 %v1183
    %v3192 = vunpack.c.l.s8.bf16 %v1184
    %v3193 = vunpack.c.l.s8.bf16 %v1185
    %v3194 = vunpack.c.h.s8.bf16 %v1178
    %v3195 = vunpack.c.h.s8.bf16 %v1179
    %v3196 = vunpack.c.h.s8.bf16 %v1180
    %v3197 = vunpack.c.h.s8.bf16 %v1181
    %v3198 = vunpack.c.h.s8.bf16 %v1182
    %v3199 = vunpack.c.h.s8.bf16 %v1183
    %v3200 = vunpack.c.h.s8.bf16 %v1184
    %v3201 = vunpack.c.h.s8.bf16 %v1185
    %v3202 = vunpack.c.l.s8.bf16 %v1186
    %v3203 = vunpack.c.l.s8.bf16 %v1187
    %v3204 = vunpack.c.l.s8.bf16 %v1188
    %v3205 = vunpack.c.l.s8.bf16 %v1189
    %v3206 = vunpack.c.l.s8.bf16 %v1190
    %v3207 = vunpack.c.l.s8.bf16 %v1191
    %v3208 = vunpack.c.l.s8.bf16 %v1192
    %v3209 = vunpack.c.l.s8.bf16 %v1193
    %v3210 = vunpack.c.h.s8.bf16 %v1186
    %v3211 = vunpack.c.h.s8.bf16 %v1187
    %v3212 = vunpack.c.h.s8.bf16 %v1188
    %v3213 = vunpack.c.h.s8.bf16 %v1189
    %v3214 = vunpack.c.h.s8.bf16 %v1190
    %v3215 = vunpack.c.h.s8.bf16 %v1191
    %v3216 = vunpack.c.h.s8.bf16 %v1192
    %v3217 = vunpack.c.h.s8.bf16 %v1193
    %v3218 = vunpack.c.l.s8.bf16 %v1194
    %v3219 = vunpack.c.l.s8.bf16 %v1195
    %v3220 = vunpack.c.l.s8.bf16 %v1196
    %v3221 = vunpack.c.l.s8.bf16 %v1197
    %v3222 = vunpack.c.l.s8.bf16 %v1198
    %v3223 = vunpack.c.l.s8.bf16 %v1199
    %v3224 = vunpack.c.l.s8.bf16 %v1200
    %v3225 = vunpack.c.l.s8.bf16 %v1201
    %v3226 = vunpack.c.h.s8.bf16 %v1194
    %v3227 = vunpack.c.h.s8.bf16 %v1195
    %v3228 = vunpack.c.h.s8.bf16 %v1196
    %v3229 = vunpack.c.h.s8.bf16 %v1197
    %v3230 = vunpack.c.h.s8.bf16 %v1198
    %v3231 = vunpack.c.h.s8.bf16 %v1199
    %v3232 = vunpack.c.h.s8.bf16 %v1200
    %v3233 = vunpack.c.h.s8.bf16 %v1201
    %v3234 = vunpack.c.l.s8.bf16 %v1202
    %v3235 = vunpack.c.l.s8.bf16 %v1203
    %v3236 = vunpack.c.l.s8.bf16 %v1204
    %v3237 = vunpack.c.l.s8.bf16 %v1205
    %v3238 = vunpack.c.l.s8.bf16 %v1206
    %v3239 = vunpack.c.l.s8.bf16 %v1207
    %v3240 = vunpack.c.l.s8.bf16 %v1208
    %v3241 = vunpack.c.l.s8.bf16 %v1209
    %v3242 = vunpack.c.h.s8.bf16 %v1202
    %v3243 = vunpack.c.h.s8.bf16 %v1203
    %v3244 = vunpack.c.h.s8.bf16 %v1204
    %v3245 = vunpack.c.h.s8.bf16 %v1205
    %v3246 = vunpack.c.h.s8.bf16 %v1206
    %v3247 = vunpack.c.h.s8.bf16 %v1207
    %v3248 = vunpack.c.h.s8.bf16 %v1208
    %v3249 = vunpack.c.h.s8.bf16 %v1209
    %v3250 = vunpack.c.l.s8.bf16 %v1210
    %v3251 = vunpack.c.l.s8.bf16 %v1211
    %v3252 = vunpack.c.l.s8.bf16 %v1212
    %v3253 = vunpack.c.l.s8.bf16 %v1213
    %v3254 = vunpack.c.l.s8.bf16 %v1214
    %v3255 = vunpack.c.l.s8.bf16 %v1215
    %v3256 = vunpack.c.l.s8.bf16 %v1216
    %v3257 = vunpack.c.l.s8.bf16 %v1217
    %v3258 = vunpack.c.h.s8.bf16 %v1210
    %v3259 = vunpack.c.h.s8.bf16 %v1211
    %v3260 = vunpack.c.h.s8.bf16 %v1212
    %v3261 = vunpack.c.h.s8.bf16 %v1213
    %v3262 = vunpack.c.h.s8.bf16 %v1214
    %v3263 = vunpack.c.h.s8.bf16 %v1215
    %v3264 = vunpack.c.h.s8.bf16 %v1216
    %v3265 = vunpack.c.h.s8.bf16 %v1217
    %3266 = vmatprep.subr.bf16.mxu0 %v1219
    %3267 = vmatpush1.bf16.msra.mxu0 %v1218
    %3268 = vmatprep.subr.bf16.mxu0 %v1227
    %3269 = vmatpush1.bf16.msra.mxu0 %v1226
    %3270 = vmatprep.subr.bf16.mxu0 %v1235
    %3271 = vmatpush1.bf16.msra.mxu0 %v1234
    %3272 = vmatprep.subr.bf16.mxu0 %v1243
    %3273 = vmatpush1.bf16.msra.mxu0 %v1242
    %3274 = vmatprep.subr.bf16.mxu0 %v1251
    %3275 = vmatpush1.bf16.msra.mxu0 %v1250
    %3276 = vmatprep.subr.bf16.mxu0 %v1259
    %3277 = vmatpush1.bf16.msra.mxu0 %v1258
    %3278 = vmatprep.subr.bf16.mxu0 %v1267
    %3279 = vmatpush1.bf16.msra.mxu0 %v1266
    %3280 = vmatprep.subr.bf16.mxu0 %v1275
    %3281 = vmatpush1.bf16.msra.mxu0 %v1274
    %3282 = vmatprep.subr.bf16.mxu0 %v1283
    %3283 = vmatpush1.bf16.msra.mxu0 %v1282
    %3284 = vmatprep.subr.bf16.mxu0 %v1291
    %3285 = vmatpush1.bf16.msra.mxu0 %v1290
    %3286 = vmatprep.subr.bf16.mxu0 %v1299
    %3287 = vmatpush1.bf16.msra.mxu0 %v1298
    %3288 = vmatprep.subr.bf16.mxu0 %v1307
    %3289 = vmatpush1.bf16.msra.mxu0 %v1306
    %3290 = vmatprep.subr.bf16.mxu0 %v1315
    %3291 = vmatpush1.bf16.msra.mxu0 %v1314
    %3292 = vmatprep.subr.bf16.mxu0 %v1323
    %3293 = vmatpush1.bf16.msra.mxu0 %v1322
    %3294 = vmatprep.subr.bf16.mxu0 %v1331
    %3295 = vmatpush1.bf16.msra.mxu0 %v1330
    %3296 = vmatprep.subr.bf16.mxu0 %v1339
    %3297 = vmatpush1.bf16.msra.mxu0 %v1338
    %3298 = vmatprep.mubr.bf16.mxu0 %v163
    %3299 = vmatmul.mubr.bf16.gmra.mrb[0].mxu0 %v162
    %v3300 = vpop.f32.mrb[0].mxu0
    %v3301 = vadd.f32 0.0, %v3300
    %v3302 = vpop.f32.mrb[0].mxu0
    %v3303 = vadd.f32 0.0, %v3302
    %v3304 = vpop.f32.mrb[0].mxu0
    %v3305 = vpop.f32.mrb[0].mxu0
    %3306 = vdwg.mxu0
    %3307 = vmatprep.subr.bf16.mxu0 %v1347
    %3308 = vmatpush1.bf16.msra.mxu0 %v1346
    %3309 = vmatprep.subr.bf16.mxu0 %v1355
    %3310 = vmatpush1.bf16.msra.mxu0 %v1354
    %3311 = vmatprep.subr.bf16.mxu0 %v1363
    %3312 = vmatpush1.bf16.msra.mxu0 %v1362
    %3313 = vmatprep.subr.bf16.mxu0 %v1371
    %3314 = vmatpush1.bf16.msra.mxu0 %v1370
    %3315 = vmatprep.subr.bf16.mxu0 %v1379
    %3316 = vmatpush1.bf16.msra.mxu0 %v1378
    %3317 = vmatprep.subr.bf16.mxu0 %v1387
    %3318 = vmatpush1.bf16.msra.mxu0 %v1386
    %3319 = vmatprep.subr.bf16.mxu0 %v1395
    %3320 = vmatpush1.bf16.msra.mxu0 %v1394
    %3321 = vmatprep.subr.bf16.mxu0 %v1403
    %3322 = vmatpush1.bf16.msra.mxu0 %v1402
    %3323 = vmatprep.subr.bf16.mxu0 %v1411
    %3324 = vmatpush1.bf16.msra.mxu0 %v1410
    %3325 = vmatprep.subr.bf16.mxu0 %v1419
    %3326 = vmatpush1.bf16.msra.mxu0 %v1418
    %3327 = vmatprep.subr.bf16.mxu0 %v1427
    %3328 = vmatpush1.bf16.msra.mxu0 %v1426
    %3329 = vmatprep.subr.bf16.mxu0 %v1435
    %3330 = vmatpush1.bf16.msra.mxu0 %v1434
    %3331 = vmatprep.subr.bf16.mxu0 %v1443
    %3332 = vmatpush1.bf16.msra.mxu0 %v1442
    %3333 = vmatprep.subr.bf16.mxu0 %v1451
    %3334 = vmatpush1.bf16.msra.mxu0 %v1450
    %3335 = vmatprep.subr.bf16.mxu0 %v1459
    %3336 = vmatpush1.bf16.msra.mxu0 %v1458
    %3337 = vmatprep.subr.bf16.mxu0 %v1467
    %3338 = vmatpush1.bf16.msra.mxu0 %v1466
    %3339 = vmatprep.mubr.bf16.mxu0 %v165
    %3340 = vmatmul.mubr.bf16.gmra.mrb[0].mxu0 %v164
    %v3341 = vpop.f32.mrb[0].mxu0
    %v3342 = vadd.f32 %v3301, %v3341
    %v3343 = vpop.f32.mrb[0].mxu0
    %v3344 = vadd.f32 %v3303, %v3343
    %v3345 = vpop.f32.mrb[0].mxu0
    %v3346 = vpop.f32.mrb[0].mxu0
    %3347 = vdwg.mxu0
    %3348 = vmatprep.subr.bf16.mxu0 %v1475
    %3349 = vmatpush1.bf16.msra.mxu0 %v1474
    %3350 = vmatprep.subr.bf16.mxu0 %v1483
    %3351 = vmatpush1.bf16.msra.mxu0 %v1482
    %3352 = vmatprep.subr.bf16.mxu0 %v1491
    %3353 = vmatpush1.bf16.msra.mxu0 %v1490
    %3354 = vmatprep.subr.bf16.mxu0 %v1499
    %3355 = vmatpush1.bf16.msra.mxu0 %v1498
    %3356 = vmatprep.subr.bf16.mxu0 %v1507
    %3357 = vmatpush1.bf16.msra.mxu0 %v1506
    %3358 = vmatprep.subr.bf16.mxu0 %v1515
    %3359 = vmatpush1.bf16.msra.mxu0 %v1514
    %3360 = vmatprep.subr.bf16.mxu0 %v1523
    %3361 = vmatpush1.bf16.msra.mxu0 %v1522
    %3362 = vmatprep.subr.bf16.mxu0 %v1531
    %3363 = vmatpush1.bf16.msra.mxu0 %v1530
    %3364 = vmatprep.subr.bf16.mxu0 %v1539
    %3365 = vmatpush1.bf16.msra.mxu0 %v1538
    %3366 = vmatprep.subr.bf16.mxu0 %v1547
    %3367 = vmatpush1.bf16.msra.mxu0 %v1546
    %3368 = vmatprep.subr.bf16.mxu0 %v1555
    %3369 = vmatpush1.bf16.msra.mxu0 %v1554
    %3370 = vmatprep.subr.bf16.mxu0 %v1563
    %3371 = vmatpush1.bf16.msra.mxu0 %v1562
    %3372 = vmatprep.subr.bf16.mxu0 %v1571
    %3373 = vmatpush1.bf16.msra.mxu0 %v1570
    %3374 = vmatprep.subr.bf16.mxu0 %v1579
    %3375 = vmatpush1.bf16.msra.mxu0 %v1578
    %3376 = vmatprep.subr.bf16.mxu0 %v1587
    %3377 = vmatpush1.bf16.msra.mxu0 %v1586
    %3378 = vmatprep.subr.bf16.mxu0 %v1595
    %3379 = vmatpush1.bf16.msra.mxu0 %v1594
    %3380 = vmatprep.mubr.bf16.mxu0 %v167
    %3381 = vmatmul.mubr.bf16.gmra.mrb[0].mxu0 %v166
    %v3382 = vpop.f32.mrb[0].mxu0
    %v3383 = vadd.f32 %v3342, %v3382
    %v3384 = vpop.f32.mrb[0].mxu0
    %v3385 = vadd.f32 %v3344, %v3384
    %v3386 = vpop.f32.mrb[0].mxu0
    %v3387 = vpop.f32.mrb[0].mxu0
    %3388 = vdwg.mxu0
    %3389 = vmatprep.subr.bf16.mxu0 %v1603
    %3390 = vmatpush1.bf16.msra.mxu0 %v1602
    %3391 = vmatprep.subr.bf16.mxu0 %v1611
    %3392 = vmatpush1.bf16.msra.mxu0 %v1610
    %3393 = vmatprep.subr.bf16.mxu0 %v1619
    %3394 = vmatpush1.bf16.msra.mxu0 %v1618
    %3395 = vmatprep.subr.bf16.mxu0 %v1627
    %3396 = vmatpush1.bf16.msra.mxu0 %v1626
    %3397 = vmatprep.subr.bf16.mxu0 %v1635
    %3398 = vmatpush1.bf16.msra.mxu0 %v1634
    %3399 = vmatprep.subr.bf16.mxu0 %v1643
    %3400 = vmatpush1.bf16.msra.mxu0 %v1642
    %3401 = vmatprep.subr.bf16.mxu0 %v1651
    %3402 = vmatpush1.bf16.msra.mxu0 %v1650
    %3403 = vmatprep.subr.bf16.mxu0 %v1659
    %3404 = vmatpush1.bf16.msra.mxu0 %v1658
    %3405 = vmatprep.subr.bf16.mxu0 %v1667
    %3406 = vmatpush1.bf16.msra.mxu0 %v1666
    %3407 = vmatprep.subr.bf16.mxu0 %v1675
    %3408 = vmatpush1.bf16.msra.mxu0 %v1674
    %3409 = vmatprep.subr.bf16.mxu0 %v1683
    %3410 = vmatpush1.bf16.msra.mxu0 %v1682
    %3411 = vmatprep.subr.bf16.mxu0 %v1691
    %3412 = vmatpush1.bf16.msra.mxu0 %v1690
    %3413 = vmatprep.subr.bf16.mxu0 %v1699
    %3414 = vmatpush1.bf16.msra.mxu0 %v1698
    %3415 = vmatprep.subr.bf16.mxu0 %v1707
    %3416 = vmatpush1.bf16.msra.mxu0 %v1706
    %3417 = vmatprep.subr.bf16.mxu0 %v1715
    %3418 = vmatpush1.bf16.msra.mxu0 %v1714
    %3419 = vmatprep.subr.bf16.mxu0 %v1723
    %3420 = vmatpush1.bf16.msra.mxu0 %v1722
    %3421 = vmatprep.mubr.bf16.mxu0 %v169
    %3422 = vmatmul.mubr.bf16.gmra.mrb[0].mxu0 %v168
    %v3423 = vpop.f32.mrb[0].mxu0
    %v3424 = vadd.f32 %v3383, %v3423
    %v3425 = vpop.f32.mrb[0].mxu0
    %v3426 = vadd.f32 %v3385, %v3425
    %v3427 = vpop.f32.mrb[0].mxu0
    %v3428 = vpop.f32.mrb[0].mxu0
    %3429 = vdwg.mxu0
    %3430 = vmatprep.subr.bf16.mxu0 %v1731
    %3431 = vmatpush1.bf16.msra.mxu0 %v1730
    %3432 = vmatprep.subr.bf16.mxu0 %v1739
    %3433 = vmatpush1.bf16.msra.mxu0 %v1738
    %3434 = vmatprep.subr.bf16.mxu0 %v1747
    %3435 = vmatpush1.bf16.msra.mxu0 %v1746
    %3436 = vmatprep.subr.bf16.mxu0 %v1755
    %3437 = vmatpush1.bf16.msra.mxu0 %v1754
    %3438 = vmatprep.subr.bf16.mxu0 %v1763
    %3439 = vmatpush1.bf16.msra.mxu0 %v1762
    %3440 = vmatprep.subr.bf16.mxu0 %v1771
    %3441 = vmatpush1.bf16.msra.mxu0 %v1770
    %3442 = vmatprep.subr.bf16.mxu0 %v1779
    %3443 = vmatpush1.bf16.msra.mxu0 %v1778
    %3444 = vmatprep.subr.bf16.mxu0 %v1787
    %3445 = vmatpush1.bf16.msra.mxu0 %v1786
    %3446 = vmatprep.subr.bf16.mxu0 %v1795
    %3447 = vmatpush1.bf16.msra.mxu0 %v1794
    %3448 = vmatprep.subr.bf16.mxu0 %v1803
    %3449 = vmatpush1.bf16.msra.mxu0 %v1802
    %3450 = vmatprep.subr.bf16.mxu0 %v1811
    %3451 = vmatpush1.bf16.msra.mxu0 %v1810
    %3452 = vmatprep.subr.bf16.mxu0 %v1819
    %3453 = vmatpush1.bf16.msra.mxu0 %v1818
    %3454 = vmatprep.subr.bf16.mxu0 %v1827
    %3455 = vmatpush1.bf16.msra.mxu0 %v1826
    %3456 = vmatprep.subr.bf16.mxu0 %v1835
    %3457 = vmatpush1.bf16.msra.mxu0 %v1834
    %3458 = vmatprep.subr.bf16.mxu0 %v1843
    %3459 = vmatpush1.bf16.msra.mxu0 %v1842
    %3460 = vmatprep.subr.bf16.mxu0 %v1851
    %3461 = vmatpush1.bf16.msra.mxu0 %v1850
    %3462 = vmatprep.mubr.bf16.mxu0 %v171
    %3463 = vmatmul.mubr.bf16.gmra.mrb[0].mxu0 %v170
    %v3464 = vpop.f32.mrb[0].mxu0
    %v3465 = vadd.f32 %v3424, %v3464
    %v3466 = vpop.f32.mrb[0].mxu0
    %v3467 = vadd.f32 %v3426, %v3466
    %v3468 = vpop.f32.mrb[0].mxu0
    %v3469 = vpop.f32.mrb[0].mxu0
    %3470 = vdwg.mxu0
    %3471 = vmatprep.subr.bf16.mxu0 %v1859
    %3472 = vmatpush1.bf16.msra.mxu0 %v1858
    %3473 = vmatprep.subr.bf16.mxu0 %v1867
    %3474 = vmatpush1.bf16.msra.mxu0 %v1866
    %3475 = vmatprep.subr.bf16.mxu0 %v1875
    %3476 = vmatpush1.bf16.msra.mxu0 %v1874
    %3477 = vmatprep.subr.bf16.mxu0 %v1883
    %3478 = vmatpush1.bf16.msra.mxu0 %v1882
    %3479 = vmatprep.subr.bf16.mxu0 %v1891
    %3480 = vmatpush1.bf16.msra.mxu0 %v1890
    %3481 = vmatprep.subr.bf16.mxu0 %v1899
    %3482 = vmatpush1.bf16.msra.mxu0 %v1898
    %3483 = vmatprep.subr.bf16.mxu0 %v1907
    %3484 = vmatpush1.bf16.msra.mxu0 %v1906
    %3485 = vmatprep.subr.bf16.mxu0 %v1915
    %3486 = vmatpush1.bf16.msra.mxu0 %v1914
    %3487 = vmatprep.subr.bf16.mxu0 %v1923
    %3488 = vmatpush1.bf16.msra.mxu0 %v1922
    %3489 = vmatprep.subr.bf16.mxu0 %v1931
    %3490 = vmatpush1.bf16.msra.mxu0 %v1930
    %3491 = vmatprep.subr.bf16.mxu0 %v1939
    %3492 = vmatpush1.bf16.msra.mxu0 %v1938
    %3493 = vmatprep.subr.bf16.mxu0 %v1947
    %3494 = vmatpush1.bf16.msra.mxu0 %v1946
    %3495 = vmatprep.subr.bf16.mxu0 %v1955
    %3496 = vmatpush1.bf16.msra.mxu0 %v1954
    %3497 = vmatprep.subr.bf16.mxu0 %v1963
    %3498 = vmatpush1.bf16.msra.mxu0 %v1962
    %3499 = vmatprep.subr.bf16.mxu0 %v1971
    %3500 = vmatpush1.bf16.msra.mxu0 %v1970
    %3501 = vmatprep.subr.bf16.mxu0 %v1979
    %3502 = vmatpush1.bf16.msra.mxu0 %v1978
    %3503 = vmatprep.mubr.bf16.mxu0 %v173
    %3504 = vmatmul.mubr.bf16.gmra.mrb[0].mxu0 %v172
    %v3505 = vpop.f32.mrb[0].mxu0
    %v3506 = vadd.f32 %v3465, %v3505
    %v3507 = vpop.f32.mrb[0].mxu0
    %v3508 = vadd.f32 %v3467, %v3507
    %v3509 = vpop.f32.mrb[0].mxu0
    %v3510 = vpop.f32.mrb[0].mxu0
    %3511 = vdwg.mxu0
    %3512 = vmatprep.subr.bf16.mxu0 %v1987
    %3513 = vmatpush1.bf16.msra.mxu0 %v1986
    %3514 = vmatprep.subr.bf16.mxu0 %v1995
    %3515 = vmatpush1.bf16.msra.mxu0 %v1994
    %3516 = vmatprep.subr.bf16.mxu0 %v2003
    %3517 = vmatpush1.bf16.msra.mxu0 %v2002
    %3518 = vmatprep.subr.bf16.mxu0 %v2011
    %3519 = vmatpush1.bf16.msra.mxu0 %v2010
    %3520 = vmatprep.subr.bf16.mxu0 %v2019
    %3521 = vmatpush1.bf16.msra.mxu0 %v2018
    %3522 = vmatprep.subr.bf16.mxu0 %v2027
    %3523 = vmatpush1.bf16.msra.mxu0 %v2026
    %3524 = vmatprep.subr.bf16.mxu0 %v2035
    %3525 = vmatpush1.bf16.msra.mxu0 %v2034
    %3526 = vmatprep.subr.bf16.mxu0 %v2043
    %3527 = vmatpush1.bf16.msra.mxu0 %v2042
    %3528 = vmatprep.subr.bf16.mxu0 %v2051
    %3529 = vmatpush1.bf16.msra.mxu0 %v2050
    %3530 = vmatprep.subr.bf16.mxu0 %v2059
    %3531 = vmatpush1.bf16.msra.mxu0 %v2058
    %3532 = vmatprep.subr.bf16.mxu0 %v2067
    %3533 = vmatpush1.bf16.msra.mxu0 %v2066
    %3534 = vmatprep.subr.bf16.mxu0 %v2075
    %3535 = vmatpush1.bf16.msra.mxu0 %v2074
    %3536 = vmatprep.subr.bf16.mxu0 %v2083
    %3537 = vmatpush1.bf16.msra.mxu0 %v2082
    %3538 = vmatprep.subr.bf16.mxu0 %v2091
    %3539 = vmatpush1.bf16.msra.mxu0 %v2090
    %3540 = vmatprep.subr.bf16.mxu0 %v2099
    %3541 = vmatpush1.bf16.msra.mxu0 %v2098
    %3542 = vmatprep.subr.bf16.mxu0 %v2107
    %3543 = vmatpush1.bf16.msra.mxu0 %v2106
    %3544 = vmatprep.mubr.bf16.mxu0 %v175
    %3545 = vmatmul.mubr.bf16.gmra.mrb[0].mxu0 %v174
    %v3546 = vpop.f32.mrb[0].mxu0
    %v3547 = vadd.f32 %v3506, %v3546
    %v3548 = vpop.f32.mrb[0].mxu0
    %v3549 = vadd.f32 %v3508, %v3548
    %v3550 = vpop.f32.mrb[0].mxu0
    %v3551 = vpop.f32.mrb[0].mxu0
    %3552 = vdwg.mxu0
    %3553 = vmatprep.subr.bf16.mxu0 %v2115
    %3554 = vmatpush1.bf16.msra.mxu0 %v2114
    %3555 = vmatprep.subr.bf16.mxu0 %v2123
    %3556 = vmatpush1.bf16.msra.mxu0 %v2122
    %3557 = vmatprep.subr.bf16.mxu0 %v2131
    %3558 = vmatpush1.bf16.msra.mxu0 %v2130
    %3559 = vmatprep.subr.bf16.mxu0 %v2139
    %3560 = vmatpush1.bf16.msra.mxu0 %v2138
    %3561 = vmatprep.subr.bf16.mxu0 %v2147
    %3562 = vmatpush1.bf16.msra.mxu0 %v2146
    %3563 = vmatprep.subr.bf16.mxu0 %v2155
    %3564 = vmatpush1.bf16.msra.mxu0 %v2154
    %3565 = vmatprep.subr.bf16.mxu0 %v2163
    %3566 = vmatpush1.bf16.msra.mxu0 %v2162
    %3567 = vmatprep.subr.bf16.mxu0 %v2171
    %3568 = vmatpush1.bf16.msra.mxu0 %v2170
    %3569 = vmatprep.subr.bf16.mxu0 %v2179
    %3570 = vmatpush1.bf16.msra.mxu0 %v2178
    %3571 = vmatprep.subr.bf16.mxu0 %v2187
    %3572 = vmatpush1.bf16.msra.mxu0 %v2186
    %3573 = vmatprep.subr.bf16.mxu0 %v2195
    %3574 = vmatpush1.bf16.msra.mxu0 %v2194
    %3575 = vmatprep.subr.bf16.mxu0 %v2203
    %3576 = vmatpush1.bf16.msra.mxu0 %v2202
    %3577 = vmatprep.subr.bf16.mxu0 %v2211
    %3578 = vmatpush1.bf16.msra.mxu0 %v2210
    %3579 = vmatprep.subr.bf16.mxu0 %v2219
    %3580 = vmatpush1.bf16.msra.mxu0 %v2218
    %3581 = vmatprep.subr.bf16.mxu0 %v2227
    %3582 = vmatpush1.bf16.msra.mxu0 %v2226
    %3583 = vmatprep.subr.bf16.mxu0 %v2235
    %3584 = vmatpush1.bf16.msra.mxu0 %v2234
    %3585 = vmatprep.mubr.bf16.mxu0 %v177
    %3586 = vmatmul.mubr.bf16.gmra.mrb[0].mxu0 %v176
    %v3587 = vpop.f32.mrb[0].mxu0
    %v3588 = vadd.f32 %v3547, %v3587
    %v3589 = vpop.f32.mrb[0].mxu0
    %v3590 = vadd.f32 %v3549, %v3589
    %v3591 = vpop.f32.mrb[0].mxu0
    %v3592 = vpop.f32.mrb[0].mxu0
    %3593 = vdwg.mxu0
    %3594 = vmatprep.subr.bf16.mxu0 %v2243
    %3595 = vmatpush1.bf16.msra.mxu0 %v2242
    %3596 = vmatprep.subr.bf16.mxu0 %v2251
    %3597 = vmatpush1.bf16.msra.mxu0 %v2250
    %3598 = vmatprep.subr.bf16.mxu0 %v2259
    %3599 = vmatpush1.bf16.msra.mxu0 %v2258
    %3600 = vmatprep.subr.bf16.mxu0 %v2267
    %3601 = vmatpush1.bf16.msra.mxu0 %v2266
    %3602 = vmatprep.subr.bf16.mxu0 %v2275
    %3603 = vmatpush1.bf16.msra.mxu0 %v2274
    %3604 = vmatprep.subr.bf16.mxu0 %v2283
    %3605 = vmatpush1.bf16.msra.mxu0 %v2282
    %3606 = vmatprep.subr.bf16.mxu0 %v2291
    %3607 = vmatpush1.bf16.msra.mxu0 %v2290
    %3608 = vmatprep.subr.bf16.mxu0 %v2299
    %3609 = vmatpush1.bf16.msra.mxu0 %v2298
    %3610 = vmatprep.subr.bf16.mxu0 %v2307
    %3611 = vmatpush1.bf16.msra.mxu0 %v2306
    %3612 = vmatprep.subr.bf16.mxu0 %v2315
    %3613 = vmatpush1.bf16.msra.mxu0 %v2314
    %3614 = vmatprep.subr.bf16.mxu0 %v2323
    %3615 = vmatpush1.bf16.msra.mxu0 %v2322
    %3616 = vmatprep.subr.bf16.mxu0 %v2331
    %3617 = vmatpush1.bf16.msra.mxu0 %v2330
    %3618 = vmatprep.subr.bf16.mxu0 %v2339
    %3619 = vmatpush1.bf16.msra.mxu0 %v2338
    %3620 = vmatprep.subr.bf16.mxu0 %v2347
    %3621 = vmatpush1.bf16.msra.mxu0 %v2346
    %3622 = vmatprep.subr.bf16.mxu0 %v2355
    %3623 = vmatpush1.bf16.msra.mxu0 %v2354
    %3624 = vmatprep.subr.bf16.mxu0 %v2363
    %3625 = vmatpush1.bf16.msra.mxu0 %v2362
    %3626 = vmatprep.mubr.bf16.mxu0 %v179
    %3627 = vmatmul.mubr.bf16.gmra.mrb[0].mxu0 %v178
    %v3628 = vpop.f32.mrb[0].mxu0
    %v3629 = vadd.f32 %v3588, %v3628
    %v3630 = vpop.f32.mrb[0].mxu0
    %v3631 = vadd.f32 %v3590, %v3630
    %v3632 = vpop.f32.mrb[0].mxu0
    %v3633 = vpop.f32.mrb[0].mxu0
    %3634 = vdwg.mxu0
    %3635 = vmatprep.subr.bf16.mxu0 %v2371
    %3636 = vmatpush1.bf16.msra.mxu0 %v2370
    %3637 = vmatprep.subr.bf16.mxu0 %v2379
    %3638 = vmatpush1.bf16.msra.mxu0 %v2378
    %3639 = vmatprep.subr.bf16.mxu0 %v2387
    %3640 = vmatpush1.bf16.msra.mxu0 %v2386
    %3641 = vmatprep.subr.bf16.mxu0 %v2395
    %3642 = vmatpush1.bf16.msra.mxu0 %v2394
    %3643 = vmatprep.subr.bf16.mxu0 %v2403
    %3644 = vmatpush1.bf16.msra.mxu0 %v2402
    %3645 = vmatprep.subr.bf16.mxu0 %v2411
    %3646 = vmatpush1.bf16.msra.mxu0 %v2410
    %3647 = vmatprep.subr.bf16.mxu0 %v2419
    %3648 = vmatpush1.bf16.msra.mxu0 %v2418
    %3649 = vmatprep.subr.bf16.mxu0 %v2427
    %3650 = vmatpush1.bf16.msra.mxu0 %v2426
    %3651 = vmatprep.subr.bf16.mxu0 %v2435
    %3652 = vmatpush1.bf16.msra.mxu0 %v2434
    %3653 = vmatprep.subr.bf16.mxu0 %v2443
    %3654 = vmatpush1.bf16.msra.mxu0 %v2442
    %3655 = vmatprep.subr.bf16.mxu0 %v2451
    %3656 = vmatpush1.bf16.msra.mxu0 %v2450
    %3657 = vmatprep.subr.bf16.mxu0 %v2459
    %3658 = vmatpush1.bf16.msra.mxu0 %v2458
    %3659 = vmatprep.subr.bf16.mxu0 %v2467
    %3660 = vmatpush1.bf16.msra.mxu0 %v2466
    %3661 = vmatprep.subr.bf16.mxu0 %v2475
    %3662 = vmatpush1.bf16.msra.mxu0 %v2474
    %3663 = vmatprep.subr.bf16.mxu0 %v2483
    %3664 = vmatpush1.bf16.msra.mxu0 %v2482
    %3665 = vmatprep.subr.bf16.mxu0 %v2491
    %3666 = vmatpush1.bf16.msra.mxu0 %v2490
    %3667 = vmatprep.mubr.bf16.mxu0 %v181
    %3668 = vmatmul.mubr.bf16.gmra.mrb[0].mxu0 %v180
    %v3669 = vpop.f32.mrb[0].mxu0
    %v3670 = vadd.f32 %v3629, %v3669
    %v3671 = vpop.f32.mrb[0].mxu0
    %v3672 = vadd.f32 %v3631, %v3671
    %v3673 = vpop.f32.mrb[0].mxu0
    %v3674 = vpop.f32.mrb[0].mxu0
    %3675 = vdwg.mxu0
    %3676 = vmatprep.subr.bf16.mxu0 %v2499
    %3677 = vmatpush1.bf16.msra.mxu0 %v2498
    %3678 = vmatprep.subr.bf16.mxu0 %v2507
    %3679 = vmatpush1.bf16.msra.mxu0 %v2506
    %3680 = vmatprep.subr.bf16.mxu0 %v2515
    %3681 = vmatpush1.bf16.msra.mxu0 %v2514
    %3682 = vmatprep.subr.bf16.mxu0 %v2523
    %3683 = vmatpush1.bf16.msra.mxu0 %v2522
    %3684 = vmatprep.subr.bf16.mxu0 %v2531
    %3685 = vmatpush1.bf16.msra.mxu0 %v2530
    %3686 = vmatprep.subr.bf16.mxu0 %v2539
    %3687 = vmatpush1.bf16.msra.mxu0 %v2538
    %3688 = vmatprep.subr.bf16.mxu0 %v2547
    %3689 = vmatpush1.bf16.msra.mxu0 %v2546
    %3690 = vmatprep.subr.bf16.mxu0 %v2555
    %3691 = vmatpush1.bf16.msra.mxu0 %v2554
    %3692 = vmatprep.subr.bf16.mxu0 %v2563
    %3693 = vmatpush1.bf16.msra.mxu0 %v2562
    %3694 = vmatprep.subr.bf16.mxu0 %v2571
    %3695 = vmatpush1.bf16.msra.mxu0 %v2570
    %3696 = vmatprep.subr.bf16.mxu0 %v2579
    %3697 = vmatpush1.bf16.msra.mxu0 %v2578
    %3698 = vmatprep.subr.bf16.mxu0 %v2587
    %3699 = vmatpush1.bf16.msra.mxu0 %v2586
    %3700 = vmatprep.subr.bf16.mxu0 %v2595
    %3701 = vmatpush1.bf16.msra.mxu0 %v2594
    %3702 = vmatprep.subr.bf16.mxu0 %v2603
    %3703 = vmatpush1.bf16.msra.mxu0 %v2602
    %3704 = vmatprep.subr.bf16.mxu0 %v2611
    %3705 = vmatpush1.bf16.msra.mxu0 %v2610
    %3706 = vmatprep.subr.bf16.mxu0 %v2619
    %3707 = vmatpush1.bf16.msra.mxu0 %v2618
    %3708 = vmatprep.mubr.bf16.mxu0 %v183
    %3709 = vmatmul.mubr.bf16.gmra.mrb[0].mxu0 %v182
    %v3710 = vpop.f32.mrb[0].mxu0
    %v3711 = vadd.f32 %v3670, %v3710
    %v3712 = vpop.f32.mrb[0].mxu0
    %v3713 = vadd.f32 %v3672, %v3712
    %v3714 = vpop.f32.mrb[0].mxu0
    %v3715 = vpop.f32.mrb[0].mxu0
    %3716 = vdwg.mxu0
    %3717 = vmatprep.subr.bf16.mxu0 %v2627
    %3718 = vmatpush1.bf16.msra.mxu0 %v2626
    %3719 = vmatprep.subr.bf16.mxu0 %v2635
    %3720 = vmatpush1.bf16.msra.mxu0 %v2634
    %3721 = vmatprep.subr.bf16.mxu0 %v2643
    %3722 = vmatpush1.bf16.msra.mxu0 %v2642
    %3723 = vmatprep.subr.bf16.mxu0 %v2651
    %3724 = vmatpush1.bf16.msra.mxu0 %v2650
    %3725 = vmatprep.subr.bf16.mxu0 %v2659
    %3726 = vmatpush1.bf16.msra.mxu0 %v2658
    %3727 = vmatprep.subr.bf16.mxu0 %v2667
    %3728 = vmatpush1.bf16.msra.mxu0 %v2666
    %3729 = vmatprep.subr.bf16.mxu0 %v2675
    %3730 = vmatpush1.bf16.msra.mxu0 %v2674
    %3731 = vmatprep.subr.bf16.mxu0 %v2683
    %3732 = vmatpush1.bf16.msra.mxu0 %v2682
    %3733 = vmatprep.subr.bf16.mxu0 %v2691
    %3734 = vmatpush1.bf16.msra.mxu0 %v2690
    %3735 = vmatprep.subr.bf16.mxu0 %v2699
    %3736 = vmatpush1.bf16.msra.mxu0 %v2698
    %3737 = vmatprep.subr.bf16.mxu0 %v2707
    %3738 = vmatpush1.bf16.msra.mxu0 %v2706
    %3739 = vmatprep.subr.bf16.mxu0 %v2715
    %3740 = vmatpush1.bf16.msra.mxu0 %v2714
    %3741 = vmatprep.subr.bf16.mxu0 %v2723
    %3742 = vmatpush1.bf16.msra.mxu0 %v2722
    %3743 = vmatprep.subr.bf16.mxu0 %v2731
    %3744 = vmatpush1.bf16.msra.mxu0 %v2730
    %3745 = vmatprep.subr.bf16.mxu0 %v2739
    %3746 = vmatpush1.bf16.msra.mxu0 %v2738
    %3747 = vmatprep.subr.bf16.mxu0 %v2747
    %3748 = vmatpush1.bf16.msra.mxu0 %v2746
    %3749 = vmatprep.mubr.bf16.mxu0 %v185
    %3750 = vmatmul.mubr.bf16.gmra.mrb[0].mxu0 %v184
    %v3751 = vpop.f32.mrb[0].mxu0
    %v3752 = vadd.f32 %v3711, %v3751
    %v3753 = vpop.f32.mrb[0].mxu0
    %v3754 = vadd.f32 %v3713, %v3753
    %v3755 = vpop.f32.mrb[0].mxu0
    %v3756 = vpop.f32.mrb[0].mxu0
    %3757 = vdwg.mxu0
    %3758 = vmatprep.subr.bf16.mxu0 %v2755
    %3759 = vmatpush1.bf16.msra.mxu0 %v2754
    %3760 = vmatprep.subr.bf16.mxu0 %v2763
    %3761 = vmatpush1.bf16.msra.mxu0 %v2762
    %3762 = vmatprep.subr.bf16.mxu0 %v2771
    %3763 = vmatpush1.bf16.msra.mxu0 %v2770
    %3764 = vmatprep.subr.bf16.mxu0 %v2779
    %3765 = vmatpush1.bf16.msra.mxu0 %v2778
    %3766 = vmatprep.subr.bf16.mxu0 %v2787
    %3767 = vmatpush1.bf16.msra.mxu0 %v2786
    %3768 = vmatprep.subr.bf16.mxu0 %v2795
    %3769 = vmatpush1.bf16.msra.mxu0 %v2794
    %3770 = vmatprep.subr.bf16.mxu0 %v2803
    %3771 = vmatpush1.bf16.msra.mxu0 %v2802
    %3772 = vmatprep.subr.bf16.mxu0 %v2811
    %3773 = vmatpush1.bf16.msra.mxu0 %v2810
    %3774 = vmatprep.subr.bf16.mxu0 %v2819
    %3775 = vmatpush1.bf16.msra.mxu0 %v2818
    %3776 = vmatprep.subr.bf16.mxu0 %v2827
    %3777 = vmatpush1.bf16.msra.mxu0 %v2826
    %3778 = vmatprep.subr.bf16.mxu0 %v2835
    %3779 = vmatpush1.bf16.msra.mxu0 %v2834
    %3780 = vmatprep.subr.bf16.mxu0 %v2843
    %3781 = vmatpush1.bf16.msra.mxu0 %v2842
    %3782 = vmatprep.subr.bf16.mxu0 %v2851
    %3783 = vmatpush1.bf16.msra.mxu0 %v2850
    %3784 = vmatprep.subr.bf16.mxu0 %v2859
    %3785 = vmatpush1.bf16.msra.mxu0 %v2858
    %3786 = vmatprep.subr.bf16.mxu0 %v2867
    %3787 = vmatpush1.bf16.msra.mxu0 %v2866
    %3788 = vmatprep.subr.bf16.mxu0 %v2875
    %3789 = vmatpush1.bf16.msra.mxu0 %v2874
    %3790 = vmatprep.mubr.bf16.mxu0 %v187
    %3791 = vmatmul.mubr.bf16.gmra.mrb[0].mxu0 %v186
    %v3792 = vpop.f32.mrb[0].mxu0
    %v3793 = vadd.f32 %v3752, %v3792
    %v3794 = vpop.f32.mrb[0].mxu0
    %v3795 = vadd.f32 %v3754, %v3794
    %v3796 = vpop.f32.mrb[0].mxu0
    %v3797 = vpop.f32.mrb[0].mxu0
    %3798 = vdwg.mxu0
    %3799 = vmatprep.subr.bf16.mxu0 %v2883
    %3800 = vmatpush1.bf16.msra.mxu0 %v2882
    %3801 = vmatprep.subr.bf16.mxu0 %v2891
    %3802 = vmatpush1.bf16.msra.mxu0 %v2890
    %3803 = vmatprep.subr.bf16.mxu0 %v2899
    %3804 = vmatpush1.bf16.msra.mxu0 %v2898
    %3805 = vmatprep.subr.bf16.mxu0 %v2907
    %3806 = vmatpush1.bf16.msra.mxu0 %v2906
    %3807 = vmatprep.subr.bf16.mxu0 %v2915
    %3808 = vmatpush1.bf16.msra.mxu0 %v2914
    %3809 = vmatprep.subr.bf16.mxu0 %v2923
    %3810 = vmatpush1.bf16.msra.mxu0 %v2922
    %3811 = vmatprep.subr.bf16.mxu0 %v2931
    %3812 = vmatpush1.bf16.msra.mxu0 %v2930
    %3813 = vmatprep.subr.bf16.mxu0 %v2939
    %3814 = vmatpush1.bf16.msra.mxu0 %v2938
    %3815 = vmatprep.subr.bf16.mxu0 %v2947
    %3816 = vmatpush1.bf16.msra.mxu0 %v2946
    %3817 = vmatprep.subr.bf16.mxu0 %v2955
    %3818 = vmatpush1.bf16.msra.mxu0 %v2954
    %3819 = vmatprep.subr.bf16.mxu0 %v2963
    %3820 = vmatpush1.bf16.msra.mxu0 %v2962
    %3821 = vmatprep.subr.bf16.mxu0 %v2971
    %3822 = vmatpush1.bf16.msra.mxu0 %v2970
    %3823 = vmatprep.subr.bf16.mxu0 %v2979
    %3824 = vmatpush1.bf16.msra.mxu0 %v2978
    %3825 = vmatprep.subr.bf16.mxu0 %v2987
    %3826 = vmatpush1.bf16.msra.mxu0 %v2986
    %3827 = vmatprep.subr.bf16.mxu0 %v2995
    %3828 = vmatpush1.bf16.msra.mxu0 %v2994
    %3829 = vmatprep.subr.bf16.mxu0 %v3003
    %3830 = vmatpush1.bf16.msra.mxu0 %v3002
    %3831 = vmatprep.mubr.bf16.mxu0 %v189
    %3832 = vmatmul.mubr.bf16.gmra.mrb[0].mxu0 %v188
    %v3833 = vpop.f32.mrb[0].mxu0
    %v3834 = vadd.f32 %v3793, %v3833
    %v3835 = vpop.f32.mrb[0].mxu0
    %v3836 = vadd.f32 %v3795, %v3835
    %v3837 = vpop.f32.mrb[0].mxu0
    %v3838 = vpop.f32.mrb[0].mxu0
    %3839 = vdwg.mxu0
    %3840 = vmatprep.subr.bf16.mxu0 %v3011
    %3841 = vmatpush1.bf16.msra.mxu0 %v3010
    %3842 = vmatprep.subr.bf16.mxu0 %v3019
    %3843 = vmatpush1.bf16.msra.mxu0 %v3018
    %3844 = vmatprep.subr.bf16.mxu0 %v3027
    %3845 = vmatpush1.bf16.msra.mxu0 %v3026
    %3846 = vmatprep.subr.bf16.mxu0 %v3035
    %3847 = vmatpush1.bf16.msra.mxu0 %v3034
    %3848 = vmatprep.subr.bf16.mxu0 %v3043
    %3849 = vmatpush1.bf16.msra.mxu0 %v3042
    %3850 = vmatprep.subr.bf16.mxu0 %v3051
    %3851 = vmatpush1.bf16.msra.mxu0 %v3050
    %3852 = vmatprep.subr.bf16.mxu0 %v3059
    %3853 = vmatpush1.bf16.msra.mxu0 %v3058
    %3854 = vmatprep.subr.bf16.mxu0 %v3067
    %3855 = vmatpush1.bf16.msra.mxu0 %v3066
    %3856 = vmatprep.subr.bf16.mxu0 %v3075
    %3857 = vmatpush1.bf16.msra.mxu0 %v3074
    %3858 = vmatprep.subr.bf16.mxu0 %v3083
    %3859 = vmatpush1.bf16.msra.mxu0 %v3082
    %3860 = vmatprep.subr.bf16.mxu0 %v3091
    %3861 = vmatpush1.bf16.msra.mxu0 %v3090
    %3862 = vmatprep.subr.bf16.mxu0 %v3099
    %3863 = vmatpush1.bf16.msra.mxu0 %v3098
    %3864 = vmatprep.subr.bf16.mxu0 %v3107
    %3865 = vmatpush1.bf16.msra.mxu0 %v3106
    %3866 = vmatprep.subr.bf16.mxu0 %v3115
    %3867 = vmatpush1.bf16.msra.mxu0 %v3114
    %3868 = vmatprep.subr.bf16.mxu0 %v3123
    %3869 = vmatpush1.bf16.msra.mxu0 %v3122
    %3870 = vmatprep.subr.bf16.mxu0 %v3131
    %3871 = vmatpush1.bf16.msra.mxu0 %v3130
    %3872 = vmatprep.mubr.bf16.mxu0 %v191
    %3873 = vmatmul.mubr.bf16.gmra.mrb[0].mxu0 %v190
    %v3874 = vpop.f32.mrb[0].mxu0
    %v3875 = vadd.f32 %v3834, %v3874
    %v3876 = vpop.f32.mrb[0].mxu0
    %v3877 = vadd.f32 %v3836, %v3876
    %v3878 = vpop.f32.mrb[0].mxu0
    %v3879 = vpop.f32.mrb[0].mxu0
    %3880 = vdwg.mxu0
    %3881 = vmatprep.subr.bf16.mxu0 %v3139
    %3882 = vmatpush1.bf16.msra.mxu0 %v3138
    %3883 = vmatprep.subr.bf16.mxu0 %v3147
    %3884 = vmatpush1.bf16.msra.mxu0 %v3146
    %3885 = vmatprep.subr.bf16.mxu0 %v3155
    %3886 = vmatpush1.bf16.msra.mxu0 %v3154
    %3887 = vmatprep.subr.bf16.mxu0 %v3163
    %3888 = vmatpush1.bf16.msra.mxu0 %v3162
    %3889 = vmatprep.subr.bf16.mxu0 %v3171
    %3890 = vmatpush1.bf16.msra.mxu0 %v3170
    %3891 = vmatprep.subr.bf16.mxu0 %v3179
    %3892 = vmatpush1.bf16.msra.mxu0 %v3178
    %3893 = vmatprep.subr.bf16.mxu0 %v3187
    %3894 = vmatpush1.bf16.msra.mxu0 %v3186
    %3895 = vmatprep.subr.bf16.mxu0 %v3195
    %3896 = vmatpush1.bf16.msra.mxu0 %v3194
    %3897 = vmatprep.subr.bf16.mxu0 %v3203
    %3898 = vmatpush1.bf16.msra.mxu0 %v3202
    %3899 = vmatprep.subr.bf16.mxu0 %v3211
    %3900 = vmatpush1.bf16.msra.mxu0 %v3210
    %3901 = vmatprep.subr.bf16.mxu0 %v3219
    %3902 = vmatpush1.bf16.msra.mxu0 %v3218
    %3903 = vmatprep.subr.bf16.mxu0 %v3227
    %3904 = vmatpush1.bf16.msra.mxu0 %v3226
    %3905 = vmatprep.subr.bf16.mxu0 %v3235
    %3906 = vmatpush1.bf16.msra.mxu0 %v3234
    %3907 = vmatprep.subr.bf16.mxu0 %v3243
    %3908 = vmatpush1.bf16.msra.mxu0 %v3242
    %3909 = vmatprep.subr.bf16.mxu0 %v3251
    %3910 = vmatpush1.bf16.msra.mxu0 %v3250
    %3911 = vmatprep.subr.bf16.mxu0 %v3259
    %3912 = vmatpush1.bf16.msra.mxu0 %v3258
    %3913 = vmatprep.mubr.bf16.mxu0 %v193
    %3914 = vmatmul.mubr.bf16.gmra.mrb[0].mxu0 %v192
    %v3915 = vpop.f32.mrb[0].mxu0
    %v3916 = vadd.f32 %v3875, %v3915
    %v3917 = vpop.f32.mrb[0].mxu0
    %v3918 = vadd.f32 %v3877, %v3917
    %v3919 = vpop.f32.mrb[0].mxu0
    %v3920 = vpop.f32.mrb[0].mxu0
    %3921 = vdwg.mxu0
    %3922 = vmatprep.subr.bf16.mxu0 %v1221
    %3923 = vmatpush1.bf16.msra.mxu0 %v1220
    %3924 = vmatprep.subr.bf16.mxu0 %v1229
    %3925 = vmatpush1.bf16.msra.mxu0 %v1228
    %3926 = vmatprep.subr.bf16.mxu0 %v1237
    %3927 = vmatpush1.bf16.msra.mxu0 %v1236
    %3928 = vmatprep.subr.bf16.mxu0 %v1245
    %3929 = vmatpush1.bf16.msra.mxu0 %v1244
    %3930 = vmatprep.subr.bf16.mxu0 %v1253
    %3931 = vmatpush1.bf16.msra.mxu0 %v1252
    %3932 = vmatprep.subr.bf16.mxu0 %v1261
    %3933 = vmatpush1.bf16.msra.mxu0 %v1260
    %3934 = vmatprep.subr.bf16.mxu0 %v1269
    %3935 = vmatpush1.bf16.msra.mxu0 %v1268
    %3936 = vmatprep.subr.bf16.mxu0 %v1277
    %3937 = vmatpush1.bf16.msra.mxu0 %v1276
    %3938 = vmatprep.subr.bf16.mxu0 %v1285
    %3939 = vmatpush1.bf16.msra.mxu0 %v1284
    %3940 = vmatprep.subr.bf16.mxu0 %v1293
    %3941 = vmatpush1.bf16.msra.mxu0 %v1292
    %3942 = vmatprep.subr.bf16.mxu0 %v1301
    %3943 = vmatpush1.bf16.msra.mxu0 %v1300
    %3944 = vmatprep.subr.bf16.mxu0 %v1309
    %3945 = vmatpush1.bf16.msra.mxu0 %v1308
    %3946 = vmatprep.subr.bf16.mxu0 %v1317
    %3947 = vmatpush1.bf16.msra.mxu0 %v1316
    %3948 = vmatprep.subr.bf16.mxu0 %v1325
    %3949 = vmatpush1.bf16.msra.mxu0 %v1324
    %3950 = vmatprep.subr.bf16.mxu0 %v1333
    %3951 = vmatpush1.bf16.msra.mxu0 %v1332
    %3952 = vmatprep.subr.bf16.mxu0 %v1341
    %3953 = vmatpush1.bf16.msra.mxu0 %v1340
    %3954 = vmatprep.mubr.bf16.mxu0 %v163
    %3955 = vmatmul.mubr.bf16.gmra.mrb[0].mxu0 %v162
    %v3956 = vpop.f32.mrb[0].mxu0
    %v3957 = vadd.f32 0.0, %v3956
    %v3958 = vpop.f32.mrb[0].mxu0
    %v3959 = vadd.f32 0.0, %v3958
    %v3960 = vpop.f32.mrb[0].mxu0
    %v3961 = vpop.f32.mrb[0].mxu0
    %3962 = vdwg.mxu0
    %3963 = vmatprep.subr.bf16.mxu0 %v1349
    %3964 = vmatpush1.bf16.msra.mxu0 %v1348
    %3965 = vmatprep.subr.bf16.mxu0 %v1357
    %3966 = vmatpush1.bf16.msra.mxu0 %v1356
    %3967 = vmatprep.subr.bf16.mxu0 %v1365
    %3968 = vmatpush1.bf16.msra.mxu0 %v1364
    %3969 = vmatprep.subr.bf16.mxu0 %v1373
    %3970 = vmatpush1.bf16.msra.mxu0 %v1372
    %3971 = vmatprep.subr.bf16.mxu0 %v1381
    %3972 = vmatpush1.bf16.msra.mxu0 %v1380
    %3973 = vmatprep.subr.bf16.mxu0 %v1389
    %3974 = vmatpush1.bf16.msra.mxu0 %v1388
    %3975 = vmatprep.subr.bf16.mxu0 %v1397
    %3976 = vmatpush1.bf16.msra.mxu0 %v1396
    %3977 = vmatprep.subr.bf16.mxu0 %v1405
    %3978 = vmatpush1.bf16.msra.mxu0 %v1404
    %3979 = vmatprep.subr.bf16.mxu0 %v1413
    %3980 = vmatpush1.bf16.msra.mxu0 %v1412
    %3981 = vmatprep.subr.bf16.mxu0 %v1421
    %3982 = vmatpush1.bf16.msra.mxu0 %v1420
    %3983 = vmatprep.subr.bf16.mxu0 %v1429
    %3984 = vmatpush1.bf16.msra.mxu0 %v1428
    %3985 = vmatprep.subr.bf16.mxu0 %v1437
    %3986 = vmatpush1.bf16.msra.mxu0 %v1436
    %3987 = vmatprep.subr.bf16.mxu0 %v1445
    %3988 = vmatpush1.bf16.msra.mxu0 %v1444
    %3989 = vmatprep.subr.bf16.mxu0 %v1453
    %3990 = vmatpush1.bf16.msra.mxu0 %v1452
    %3991 = vmatprep.subr.bf16.mxu0 %v1461
    %3992 = vmatpush1.bf16.msra.mxu0 %v1460
    %3993 = vmatprep.subr.bf16.mxu0 %v1469
    %3994 = vmatpush1.bf16.msra.mxu0 %v1468
    %3995 = vmatprep.mubr.bf16.mxu0 %v165
    %3996 = vmatmul.mubr.bf16.gmra.mrb[0].mxu0 %v164
    %v3997 = vpop.f32.mrb[0].mxu0
    %v3998 = vadd.f32 %v3957, %v3997
    %v3999 = vpop.f32.mrb[0].mxu0
    %v4000 = vadd.f32 %v3959, %v3999
    %v4001 = vpop.f32.mrb[0].mxu0
    %v4002 = vpop.f32.mrb[0].mxu0
    %4003 = vdwg.mxu0
    %4004 = vmatprep.subr.bf16.mxu0 %v1477
    %4005 = vmatpush1.bf16.msra.mxu0 %v1476
    %4006 = vmatprep.subr.bf16.mxu0 %v1485
    %4007 = vmatpush1.bf16.msra.mxu0 %v1484
    %4008 = vmatprep.subr.bf16.mxu0 %v1493
    %4009 = vmatpush1.bf16.msra.mxu0 %v1492
    %4010 = vmatprep.subr.bf16.mxu0 %v1501
    %4011 = vmatpush1.bf16.msra.mxu0 %v1500
    %4012 = vmatprep.subr.bf16.mxu0 %v1509
    %4013 = vmatpush1.bf16.msra.mxu0 %v1508
    %4014 = vmatprep.subr.bf16.mxu0 %v1517
    %4015 = vmatpush1.bf16.msra.mxu0 %v1516
    %4016 = vmatprep.subr.bf16.mxu0 %v1525
    %4017 = vmatpush1.bf16.msra.mxu0 %v1524
    %4018 = vmatprep.subr.bf16.mxu0 %v1533
    %4019 = vmatpush1.bf16.msra.mxu0 %v1532
    %4020 = vmatprep.subr.bf16.mxu0 %v1541
    %4021 = vmatpush1.bf16.msra.mxu0 %v1540
    %4022 = vmatprep.subr.bf16.mxu0 %v1549
    %4023 = vmatpush1.bf16.msra.mxu0 %v1548
    %4024 = vmatprep.subr.bf16.mxu0 %v1557
    %4025 = vmatpush1.bf16.msra.mxu0 %v1556
    %4026 = vmatprep.subr.bf16.mxu0 %v1565
    %4027 = vmatpush1.bf16.msra.mxu0 %v1564
    %4028 = vmatprep.subr.bf16.mxu0 %v1573
    %4029 = vmatpush1.bf16.msra.mxu0 %v1572
    %4030 = vmatprep.subr.bf16.mxu0 %v1581
    %4031 = vmatpush1.bf16.msra.mxu0 %v1580
    %4032 = vmatprep.subr.bf16.mxu0 %v1589
    %4033 = vmatpush1.bf16.msra.mxu0 %v1588
    %4034 = vmatprep.subr.bf16.mxu0 %v1597
    %4035 = vmatpush1.bf16.msra.mxu0 %v1596
    %4036 = vmatprep.mubr.bf16.mxu0 %v167
    %4037 = vmatmul.mubr.bf16.gmra.mrb[0].mxu0 %v166
    %v4038 = vpop.f32.mrb[0].mxu0
    %v4039 = vadd.f32 %v3998, %v4038
    %v4040 = vpop.f32.mrb[0].mxu0
    %v4041 = vadd.f32 %v4000, %v4040
    %v4042 = vpop.f32.mrb[0].mxu0
    %v4043 = vpop.f32.mrb[0].mxu0
    %4044 = vdwg.mxu0
    %4045 = vmatprep.subr.bf16.mxu0 %v1605
    %4046 = vmatpush1.bf16.msra.mxu0 %v1604
    %4047 = vmatprep.subr.bf16.mxu0 %v1613
    %4048 = vmatpush1.bf16.msra.mxu0 %v1612
    %4049 = vmatprep.subr.bf16.mxu0 %v1621
    %4050 = vmatpush1.bf16.msra.mxu0 %v1620
    %4051 = vmatprep.subr.bf16.mxu0 %v1629
    %4052 = vmatpush1.bf16.msra.mxu0 %v1628
    %4053 = vmatprep.subr.bf16.mxu0 %v1637
    %4054 = vmatpush1.bf16.msra.mxu0 %v1636
    %4055 = vmatprep.subr.bf16.mxu0 %v1645
    %4056 = vmatpush1.bf16.msra.mxu0 %v1644
    %4057 = vmatprep.subr.bf16.mxu0 %v1653
    %4058 = vmatpush1.bf16.msra.mxu0 %v1652
    %4059 = vmatprep.subr.bf16.mxu0 %v1661
    %4060 = vmatpush1.bf16.msra.mxu0 %v1660
    %4061 = vmatprep.subr.bf16.mxu0 %v1669
    %4062 = vmatpush1.bf16.msra.mxu0 %v1668
    %4063 = vmatprep.subr.bf16.mxu0 %v1677
    %4064 = vmatpush1.bf16.msra.mxu0 %v1676
    %4065 = vmatprep.subr.bf16.mxu0 %v1685
    %4066 = vmatpush1.bf16.msra.mxu0 %v1684
    %4067 = vmatprep.subr.bf16.mxu0 %v1693
    %4068 = vmatpush1.bf16.msra.mxu0 %v1692
    %4069 = vmatprep.subr.bf16.mxu0 %v1701
    %4070 = vmatpush1.bf16.msra.mxu0 %v1700
    %4071 = vmatprep.subr.bf16.mxu0 %v1709
    %4072 = vmatpush1.bf16.msra.mxu0 %v1708
    %4073 = vmatprep.subr.bf16.mxu0 %v1717
    %4074 = vmatpush1.bf16.msra.mxu0 %v1716
    %4075 = vmatprep.subr.bf16.mxu0 %v1725
    %4076 = vmatpush1.bf16.msra.mxu0 %v1724
    %4077 = vmatprep.mubr.bf16.mxu0 %v169
    %4078 = vmatmul.mubr.bf16.gmra.mrb[0].mxu0 %v168
    %v4079 = vpop.f32.mrb[0].mxu0
    %v4080 = vadd.f32 %v4039, %v4079
    %v4081 = vpop.f32.mrb[0].mxu0
    %v4082 = vadd.f32 %v4041, %v4081
    %v4083 = vpop.f32.mrb[0].mxu0
    %v4084 = vpop.f32.mrb[0].mxu0
    %4085 = vdwg.mxu0
    %4086 = vmatprep.subr.bf16.mxu0 %v1733
    %4087 = vmatpush1.bf16.msra.mxu0 %v1732
    %4088 = vmatprep.subr.bf16.mxu0 %v1741
    %4089 = vmatpush1.bf16.msra.mxu0 %v1740
    %4090 = vmatprep.subr.bf16.mxu0 %v1749
    %4091 = vmatpush1.bf16.msra.mxu0 %v1748
    %4092 = vmatprep.subr.bf16.mxu0 %v1757
    %4093 = vmatpush1.bf16.msra.mxu0 %v1756
    %4094 = vmatprep.subr.bf16.mxu0 %v1765
    %4095 = vmatpush1.bf16.msra.mxu0 %v1764
    %4096 = vmatprep.subr.bf16.mxu0 %v1773
    %4097 = vmatpush1.bf16.msra.mxu0 %v1772
    %4098 = vmatprep.subr.bf16.mxu0 %v1781
    %4099 = vmatpush1.bf16.msra.mxu0 %v1780
    %4100 = vmatprep.subr.bf16.mxu0 %v1789
    %4101 = vmatpush1.bf16.msra.mxu0 %v1788
    %4102 = vmatprep.subr.bf16.mxu0 %v1797
    %4103 = vmatpush1.bf16.msra.mxu0 %v1796
    %4104 = vmatprep.subr.bf16.mxu0 %v1805
    %4105 = vmatpush1.bf16.msra.mxu0 %v1804
    %4106 = vmatprep.subr.bf16.mxu0 %v1813
    %4107 = vmatpush1.bf16.msra.mxu0 %v1812
    %4108 = vmatprep.subr.bf16.mxu0 %v1821
    %4109 = vmatpush1.bf16.msra.mxu0 %v1820
    %4110 = vmatprep.subr.bf16.mxu0 %v1829
    %4111 = vmatpush1.bf16.msra.mxu0 %v1828
    %4112 = vmatprep.subr.bf16.mxu0 %v1837
    %4113 = vmatpush1.bf16.msra.mxu0 %v1836
    %4114 = vmatprep.subr.bf16.mxu0 %v1845
    %4115 = vmatpush1.bf16.msra.mxu0 %v1844
    %4116 = vmatprep.subr.bf16.mxu0 %v1853
    %4117 = vmatpush1.bf16.msra.mxu0 %v1852
    %4118 = vmatprep.mubr.bf16.mxu0 %v171
    %4119 = vmatmul.mubr.bf16.gmra.mrb[0].mxu0 %v170
    %v4120 = vpop.f32.mrb[0].mxu0
    %v4121 = vadd.f32 %v4080, %v4120
    %v4122 = vpop.f32.mrb[0].mxu0
    %v4123 = vadd.f32 %v4082, %v4122
    %v4124 = vpop.f32.mrb[0].mxu0
    %v4125 = vpop.f32.mrb[0].mxu0
    %4126 = vdwg.mxu0
    %4127 = vmatprep.subr.bf16.mxu0 %v1861
    %4128 = vmatpush1.bf16.msra.mxu0 %v1860
    %4129 = vmatprep.subr.bf16.mxu0 %v1869
    %4130 = vmatpush1.bf16.msra.mxu0 %v1868
    %4131 = vmatprep.subr.bf16.mxu0 %v1877
    %4132 = vmatpush1.bf16.msra.mxu0 %v1876
    %4133 = vmatprep.subr.bf16.mxu0 %v1885
    %4134 = vmatpush1.bf16.msra.mxu0 %v1884
    %4135 = vmatprep.subr.bf16.mxu0 %v1893
    %4136 = vmatpush1.bf16.msra.mxu0 %v1892
    %4137 = vmatprep.subr.bf16.mxu0 %v1901
    %4138 = vmatpush1.bf16.msra.mxu0 %v1900
    %4139 = vmatprep.subr.bf16.mxu0 %v1909
    %4140 = vmatpush1.bf16.msra.mxu0 %v1908
    %4141 = vmatprep.subr.bf16.mxu0 %v1917
    %4142 = vmatpush1.bf16.msra.mxu0 %v1916
    %4143 = vmatprep.subr.bf16.mxu0 %v1925
    %4144 = vmatpush1.bf16.msra.mxu0 %v1924
    %4145 = vmatprep.subr.bf16.mxu0 %v1933
    %4146 = vmatpush1.bf16.msra.mxu0 %v1932
    %4147 = vmatprep.subr.bf16.mxu0 %v1941
    %4148 = vmatpush1.bf16.msra.mxu0 %v1940
    %4149 = vmatprep.subr.bf16.mxu0 %v1949
    %4150 = vmatpush1.bf16.msra.mxu0 %v1948
    %4151 = vmatprep.subr.bf16.mxu0 %v1957
    %4152 = vmatpush1.bf16.msra.mxu0 %v1956
    %4153 = vmatprep.subr.bf16.mxu0 %v1965
    %4154 = vmatpush1.bf16.msra.mxu0 %v1964
    %4155 = vmatprep.subr.bf16.mxu0 %v1973
    %4156 = vmatpush1.bf16.msra.mxu0 %v1972
    %4157 = vmatprep.subr.bf16.mxu0 %v1981
    %4158 = vmatpush1.bf16.msra.mxu0 %v1980
    %4159 = vmatprep.mubr.bf16.mxu0 %v173
    %4160 = vmatmul.mubr.bf16.gmra.mrb[0].mxu0 %v172
    %v4161 = vpop.f32.mrb[0].mxu0
    %v4162 = vadd.f32 %v4121, %v4161
    %v4163 = vpop.f32.mrb[0].mxu0
    %v4164 = vadd.f32 %v4123, %v4163
    %v4165 = vpop.f32.mrb[0].mxu0
    %v4166 = vpop.f32.mrb[0].mxu0
    %4167 = vdwg.mxu0
    %4168 = vmatprep.subr.bf16.mxu0 %v1989
    %4169 = vmatpush1.bf16.msra.mxu0 %v1988
    %4170 = vmatprep.subr.bf16.mxu0 %v1997
    %4171 = vmatpush1.bf16.msra.mxu0 %v1996
    %4172 = vmatprep.subr.bf16.mxu0 %v2005
    %4173 = vmatpush1.bf16.msra.mxu0 %v2004
    %4174 = vmatprep.subr.bf16.mxu0 %v2013
    %4175 = vmatpush1.bf16.msra.mxu0 %v2012
    %4176 = vmatprep.subr.bf16.mxu0 %v2021
    %4177 = vmatpush1.bf16.msra.mxu0 %v2020
    %4178 = vmatprep.subr.bf16.mxu0 %v2029
    %4179 = vmatpush1.bf16.msra.mxu0 %v2028
    %4180 = vmatprep.subr.bf16.mxu0 %v2037
    %4181 = vmatpush1.bf16.msra.mxu0 %v2036
    %4182 = vmatprep.subr.bf16.mxu0 %v2045
    %4183 = vmatpush1.bf16.msra.mxu0 %v2044
    %4184 = vmatprep.subr.bf16.mxu0 %v2053
    %4185 = vmatpush1.bf16.msra.mxu0 %v2052
    %4186 = vmatprep.subr.bf16.mxu0 %v2061
    %4187 = vmatpush1.bf16.msra.mxu0 %v2060
    %4188 = vmatprep.subr.bf16.mxu0 %v2069
    %4189 = vmatpush1.bf16.msra.mxu0 %v2068
    %4190 = vmatprep.subr.bf16.mxu0 %v2077
    %4191 = vmatpush1.bf16.msra.mxu0 %v2076
    %4192 = vmatprep.subr.bf16.mxu0 %v2085
    %4193 = vmatpush1.bf16.msra.mxu0 %v2084
    %4194 = vmatprep.subr.bf16.mxu0 %v2093
    %4195 = vmatpush1.bf16.msra.mxu0 %v2092
    %4196 = vmatprep.subr.bf16.mxu0 %v2101
    %4197 = vmatpush1.bf16.msra.mxu0 %v2100
    %4198 = vmatprep.subr.bf16.mxu0 %v2109
    %4199 = vmatpush1.bf16.msra.mxu0 %v2108
    %4200 = vmatprep.mubr.bf16.mxu0 %v175
    %4201 = vmatmul.mubr.bf16.gmra.mrb[0].mxu0 %v174
    %v4202 = vpop.f32.mrb[0].mxu0
    %v4203 = vadd.f32 %v4162, %v4202
    %v4204 = vpop.f32.mrb[0].mxu0
    %v4205 = vadd.f32 %v4164, %v4204
    %v4206 = vpop.f32.mrb[0].mxu0
    %v4207 = vpop.f32.mrb[0].mxu0
    %4208 = vdwg.mxu0
    %4209 = vmatprep.subr.bf16.mxu0 %v2117
    %4210 = vmatpush1.bf16.msra.mxu0 %v2116
    %4211 = vmatprep.subr.bf16.mxu0 %v2125
    %4212 = vmatpush1.bf16.msra.mxu0 %v2124
    %4213 = vmatprep.subr.bf16.mxu0 %v2133
    %4214 = vmatpush1.bf16.msra.mxu0 %v2132
    %4215 = vmatprep.subr.bf16.mxu0 %v2141
    %4216 = vmatpush1.bf16.msra.mxu0 %v2140
    %4217 = vmatprep.subr.bf16.mxu0 %v2149
    %4218 = vmatpush1.bf16.msra.mxu0 %v2148
    %4219 = vmatprep.subr.bf16.mxu0 %v2157
    %4220 = vmatpush1.bf16.msra.mxu0 %v2156
    %4221 = vmatprep.subr.bf16.mxu0 %v2165
    %4222 = vmatpush1.bf16.msra.mxu0 %v2164
    %4223 = vmatprep.subr.bf16.mxu0 %v2173
    %4224 = vmatpush1.bf16.msra.mxu0 %v2172
    %4225 = vmatprep.subr.bf16.mxu0 %v2181
    %4226 = vmatpush1.bf16.msra.mxu0 %v2180
    %4227 = vmatprep.subr.bf16.mxu0 %v2189
    %4228 = vmatpush1.bf16.msra.mxu0 %v2188
    %4229 = vmatprep.subr.bf16.mxu0 %v2197
    %4230 = vmatpush1.bf16.msra.mxu0 %v2196
    %4231 = vmatprep.subr.bf16.mxu0 %v2205
    %4232 = vmatpush1.bf16.msra.mxu0 %v2204
    %4233 = vmatprep.subr.bf16.mxu0 %v2213
    %4234 = vmatpush1.bf16.msra.mxu0 %v2212
    %4235 = vmatprep.subr.bf16.mxu0 %v2221
    %4236 = vmatpush1.bf16.msra.mxu0 %v2220
    %4237 = vmatprep.subr.bf16.mxu0 %v2229
    %4238 = vmatpush1.bf16.msra.mxu0 %v2228
    %4239 = vmatprep.subr.bf16.mxu0 %v2237
    %4240 = vmatpush1.bf16.msra.mxu0 %v2236
    %4241 = vmatprep.mubr.bf16.mxu0 %v177
    %4242 = vmatmul.mubr.bf16.gmra.mrb[0].mxu0 %v176
    %v4243 = vpop.f32.mrb[0].mxu0
    %v4244 = vadd.f32 %v4203, %v4243
    %v4245 = vpop.f32.mrb[0].mxu0
    %v4246 = vadd.f32 %v4205, %v4245
    %v4247 = vpop.f32.mrb[0].mxu0
    %v4248 = vpop.f32.mrb[0].mxu0
    %4249 = vdwg.mxu0
    %4250 = vmatprep.subr.bf16.mxu0 %v2245
    %4251 = vmatpush1.bf16.msra.mxu0 %v2244
    %4252 = vmatprep.subr.bf16.mxu0 %v2253
    %4253 = vmatpush1.bf16.msra.mxu0 %v2252
    %4254 = vmatprep.subr.bf16.mxu0 %v2261
    %4255 = vmatpush1.bf16.msra.mxu0 %v2260
    %4256 = vmatprep.subr.bf16.mxu0 %v2269
    %4257 = vmatpush1.bf16.msra.mxu0 %v2268
    %4258 = vmatprep.subr.bf16.mxu0 %v2277
    %4259 = vmatpush1.bf16.msra.mxu0 %v2276
    %4260 = vmatprep.subr.bf16.mxu0 %v2285
    %4261 = vmatpush1.bf16.msra.mxu0 %v2284
    %4262 = vmatprep.subr.bf16.mxu0 %v2293
    %4263 = vmatpush1.bf16.msra.mxu0 %v2292
    %4264 = vmatprep.subr.bf16.mxu0 %v2301
    %4265 = vmatpush1.bf16.msra.mxu0 %v2300
    %4266 = vmatprep.subr.bf16.mxu0 %v2309
    %4267 = vmatpush1.bf16.msra.mxu0 %v2308
    %4268 = vmatprep.subr.bf16.mxu0 %v2317
    %4269 = vmatpush1.bf16.msra.mxu0 %v2316
    %4270 = vmatprep.subr.bf16.mxu0 %v2325
    %4271 = vmatpush1.bf16.msra.mxu0 %v2324
    %4272 = vmatprep.subr.bf16.mxu0 %v2333
    %4273 = vmatpush1.bf16.msra.mxu0 %v2332
    %4274 = vmatprep.subr.bf16.mxu0 %v2341
    %4275 = vmatpush1.bf16.msra.mxu0 %v2340
    %4276 = vmatprep.subr.bf16.mxu0 %v2349
    %4277 = vmatpush1.bf16.msra.mxu0 %v2348
    %4278 = vmatprep.subr.bf16.mxu0 %v2357
    %4279 = vmatpush1.bf16.msra.mxu0 %v2356
    %4280 = vmatprep.subr.bf16.mxu0 %v2365
    %4281 = vmatpush1.bf16.msra.mxu0 %v2364
    %4282 = vmatprep.mubr.bf16.mxu0 %v179
    %4283 = vmatmul.mubr.bf16.gmra.mrb[0].mxu0 %v178
    %v4284 = vpop.f32.mrb[0].mxu0
    %v4285 = vadd.f32 %v4244, %v4284
    %v4286 = vpop.f32.mrb[0].mxu0
    %v4287 = vadd.f32 %v4246, %v4286
    %v4288 = vpop.f32.mrb[0].mxu0
    %v4289 = vpop.f32.mrb[0].mxu0
    %4290 = vdwg.mxu0
    %4291 = vmatprep.subr.bf16.mxu0 %v2373
    %4292 = vmatpush1.bf16.msra.mxu0 %v2372
    %4293 = vmatprep.subr.bf16.mxu0 %v2381
    %4294 = vmatpush1.bf16.msra.mxu0 %v2380
    %4295 = vmatprep.subr.bf16.mxu0 %v2389
    %4296 = vmatpush1.bf16.msra.mxu0 %v2388
    %4297 = vmatprep.subr.bf16.mxu0 %v2397
    %4298 = vmatpush1.bf16.msra.mxu0 %v2396
    %4299 = vmatprep.subr.bf16.mxu0 %v2405
    %4300 = vmatpush1.bf16.msra.mxu0 %v2404
    %4301 = vmatprep.subr.bf16.mxu0 %v2413
    %4302 = vmatpush1.bf16.msra.mxu0 %v2412
    %4303 = vmatprep.subr.bf16.mxu0 %v2421
    %4304 = vmatpush1.bf16.msra.mxu0 %v2420
    %4305 = vmatprep.subr.bf16.mxu0 %v2429
    %4306 = vmatpush1.bf16.msra.mxu0 %v2428
    %4307 = vmatprep.subr.bf16.mxu0 %v2437
    %4308 = vmatpush1.bf16.msra.mxu0 %v2436
    %4309 = vmatprep.subr.bf16.mxu0 %v2445
    %4310 = vmatpush1.bf16.msra.mxu0 %v2444
    %4311 = vmatprep.subr.bf16.mxu0 %v2453
    %4312 = vmatpush1.bf16.msra.mxu0 %v2452
    %4313 = vmatprep.subr.bf16.mxu0 %v2461
    %4314 = vmatpush1.bf16.msra.mxu0 %v2460
    %4315 = vmatprep.subr.bf16.mxu0 %v2469
    %4316 = vmatpush1.bf16.msra.mxu0 %v2468
    %4317 = vmatprep.subr.bf16.mxu0 %v2477
    %4318 = vmatpush1.bf16.msra.mxu0 %v2476
    %4319 = vmatprep.subr.bf16.mxu0 %v2485
    %4320 = vmatpush1.bf16.msra.mxu0 %v2484
    %4321 = vmatprep.subr.bf16.mxu0 %v2493
    %4322 = vmatpush1.bf16.msra.mxu0 %v2492
    %4323 = vmatprep.mubr.bf16.mxu0 %v181
    %4324 = vmatmul.mubr.bf16.gmra.mrb[0].mxu0 %v180
    %v4325 = vpop.f32.mrb[0].mxu0
    %v4326 = vadd.f32 %v4285, %v4325
    %v4327 = vpop.f32.mrb[0].mxu0
    %v4328 = vadd.f32 %v4287, %v4327
    %v4329 = vpop.f32.mrb[0].mxu0
    %v4330 = vpop.f32.mrb[0].mxu0
    %4331 = vdwg.mxu0
    %4332 = vmatprep.subr.bf16.mxu0 %v2501
    %4333 = vmatpush1.bf16.msra.mxu0 %v2500
    %4334 = vmatprep.subr.bf16.mxu0 %v2509
    %4335 = vmatpush1.bf16.msra.mxu0 %v2508
    %4336 = vmatprep.subr.bf16.mxu0 %v2517
    %4337 = vmatpush1.bf16.msra.mxu0 %v2516
    %4338 = vmatprep.subr.bf16.mxu0 %v2525
    %4339 = vmatpush1.bf16.msra.mxu0 %v2524
    %4340 = vmatprep.subr.bf16.mxu0 %v2533
    %4341 = vmatpush1.bf16.msra.mxu0 %v2532
    %4342 = vmatprep.subr.bf16.mxu0 %v2541
    %4343 = vmatpush1.bf16.msra.mxu0 %v2540
    %4344 = vmatprep.subr.bf16.mxu0 %v2549
    %4345 = vmatpush1.bf16.msra.mxu0 %v2548
    %4346 = vmatprep.subr.bf16.mxu0 %v2557
    %4347 = vmatpush1.bf16.msra.mxu0 %v2556
    %4348 = vmatprep.subr.bf16.mxu0 %v2565
    %4349 = vmatpush1.bf16.msra.mxu0 %v2564
    %4350 = vmatprep.subr.bf16.mxu0 %v2573
    %4351 = vmatpush1.bf16.msra.mxu0 %v2572
    %4352 = vmatprep.subr.bf16.mxu0 %v2581
    %4353 = vmatpush1.bf16.msra.mxu0 %v2580
    %4354 = vmatprep.subr.bf16.mxu0 %v2589
    %4355 = vmatpush1.bf16.msra.mxu0 %v2588
    %4356 = vmatprep.subr.bf16.mxu0 %v2597
    %4357 = vmatpush1.bf16.msra.mxu0 %v2596
    %4358 = vmatprep.subr.bf16.mxu0 %v2605
    %4359 = vmatpush1.bf16.msra.mxu0 %v2604
    %4360 = vmatprep.subr.bf16.mxu0 %v2613
    %4361 = vmatpush1.bf16.msra.mxu0 %v2612
    %4362 = vmatprep.subr.bf16.mxu0 %v2621
    %4363 = vmatpush1.bf16.msra.mxu0 %v2620
    %4364 = vmatprep.mubr.bf16.mxu0 %v183
    %4365 = vmatmul.mubr.bf16.gmra.mrb[0].mxu0 %v182
    %v4366 = vpop.f32.mrb[0].mxu0
    %v4367 = vadd.f32 %v4326, %v4366
    %v4368 = vpop.f32.mrb[0].mxu0
    %v4369 = vadd.f32 %v4328, %v4368
    %v4370 = vpop.f32.mrb[0].mxu0
    %v4371 = vpop.f32.mrb[0].mxu0
    %4372 = vdwg.mxu0
    %4373 = vmatprep.subr.bf16.mxu0 %v2629
    %4374 = vmatpush1.bf16.msra.mxu0 %v2628
    %4375 = vmatprep.subr.bf16.mxu0 %v2637
    %4376 = vmatpush1.bf16.msra.mxu0 %v2636
    %4377 = vmatprep.subr.bf16.mxu0 %v2645
    %4378 = vmatpush1.bf16.msra.mxu0 %v2644
    %4379 = vmatprep.subr.bf16.mxu0 %v2653
    %4380 = vmatpush1.bf16.msra.mxu0 %v2652
    %4381 = vmatprep.subr.bf16.mxu0 %v2661
    %4382 = vmatpush1.bf16.msra.mxu0 %v2660
    %4383 = vmatprep.subr.bf16.mxu0 %v2669
    %4384 = vmatpush1.bf16.msra.mxu0 %v2668
    %4385 = vmatprep.subr.bf16.mxu0 %v2677
    %4386 = vmatpush1.bf16.msra.mxu0 %v2676
    %4387 = vmatprep.subr.bf16.mxu0 %v2685
    %4388 = vmatpush1.bf16.msra.mxu0 %v2684
    %4389 = vmatprep.subr.bf16.mxu0 %v2693
    %4390 = vmatpush1.bf16.msra.mxu0 %v2692
    %4391 = vmatprep.subr.bf16.mxu0 %v2701
    %4392 = vmatpush1.bf16.msra.mxu0 %v2700
    %4393 = vmatprep.subr.bf16.mxu0 %v2709
    %4394 = vmatpush1.bf16.msra.mxu0 %v2708
    %4395 = vmatprep.subr.bf16.mxu0 %v2717
    %4396 = vmatpush1.bf16.msra.mxu0 %v2716
    %4397 = vmatprep.subr.bf16.mxu0 %v2725
    %4398 = vmatpush1.bf16.msra.mxu0 %v2724
    %4399 = vmatprep.subr.bf16.mxu0 %v2733
    %4400 = vmatpush1.bf16.msra.mxu0 %v2732
    %4401 = vmatprep.subr.bf16.mxu0 %v2741
    %4402 = vmatpush1.bf16.msra.mxu0 %v2740
    %4403 = vmatprep.subr.bf16.mxu0 %v2749
    %4404 = vmatpush1.bf16.msra.mxu0 %v2748
    %4405 = vmatprep.mubr.bf16.mxu0 %v185
    %4406 = vmatmul.mubr.bf16.gmra.mrb[0].mxu0 %v184
    %v4407 = vpop.f32.mrb[0].mxu0
    %v4408 = vadd.f32 %v4367, %v4407
    %v4409 = vpop.f32.mrb[0].mxu0
    %v4410 = vadd.f32 %v4369, %v4409
    %v4411 = vpop.f32.mrb[0].mxu0
    %v4412 = vpop.f32.mrb[0].mxu0
    %4413 = vdwg.mxu0
    %4414 = vmatprep.subr.bf16.mxu0 %v2757
    %4415 = vmatpush1.bf16.msra.mxu0 %v2756
    %4416 = vmatprep.subr.bf16.mxu0 %v2765
    %4417 = vmatpush1.bf16.msra.mxu0 %v2764
    %4418 = vmatprep.subr.bf16.mxu0 %v2773
    %4419 = vmatpush1.bf16.msra.mxu0 %v2772
    %4420 = vmatprep.subr.bf16.mxu0 %v2781
    %4421 = vmatpush1.bf16.msra.mxu0 %v2780
    %4422 = vmatprep.subr.bf16.mxu0 %v2789
    %4423 = vmatpush1.bf16.msra.mxu0 %v2788
    %4424 = vmatprep.subr.bf16.mxu0 %v2797
    %4425 = vmatpush1.bf16.msra.mxu0 %v2796
    %4426 = vmatprep.subr.bf16.mxu0 %v2805
    %4427 = vmatpush1.bf16.msra.mxu0 %v2804
    %4428 = vmatprep.subr.bf16.mxu0 %v2813
    %4429 = vmatpush1.bf16.msra.mxu0 %v2812
    %4430 = vmatprep.subr.bf16.mxu0 %v2821
    %4431 = vmatpush1.bf16.msra.mxu0 %v2820
    %4432 = vmatprep.subr.bf16.mxu0 %v2829
    %4433 = vmatpush1.bf16.msra.mxu0 %v2828
    %4434 = vmatprep.subr.bf16.mxu0 %v2837
    %4435 = vmatpush1.bf16.msra.mxu0 %v2836
    %4436 = vmatprep.subr.bf16.mxu0 %v2845
    %4437 = vmatpush1.bf16.msra.mxu0 %v2844
    %4438 = vmatprep.subr.bf16.mxu0 %v2853
    %4439 = vmatpush1.bf16.msra.mxu0 %v2852
    %4440 = vmatprep.subr.bf16.mxu0 %v2861
    %4441 = vmatpush1.bf16.msra.mxu0 %v2860
    %4442 = vmatprep.subr.bf16.mxu0 %v2869
    %4443 = vmatpush1.bf16.msra.mxu0 %v2868
    %4444 = vmatprep.subr.bf16.mxu0 %v2877
    %4445 = vmatpush1.bf16.msra.mxu0 %v2876
    %4446 = vmatprep.mubr.bf16.mxu0 %v187
    %4447 = vmatmul.mubr.bf16.gmra.mrb[0].mxu0 %v186
    %v4448 = vpop.f32.mrb[0].mxu0
    %v4449 = vadd.f32 %v4408, %v4448
    %v4450 = vpop.f32.mrb[0].mxu0
    %v4451 = vadd.f32 %v4410, %v4450
    %v4452 = vpop.f32.mrb[0].mxu0
    %v4453 = vpop.f32.mrb[0].mxu0
    %4454 = vdwg.mxu0
    %4455 = vmatprep.subr.bf16.mxu0 %v2885
    %4456 = vmatpush1.bf16.msra.mxu0 %v2884
    %4457 = vmatprep.subr.bf16.mxu0 %v2893
    %4458 = vmatpush1.bf16.msra.mxu0 %v2892
    %4459 = vmatprep.subr.bf16.mxu0 %v2901
    %4460 = vmatpush1.bf16.msra.mxu0 %v2900
    %4461 = vmatprep.subr.bf16.mxu0 %v2909
    %4462 = vmatpush1.bf16.msra.mxu0 %v2908
    %4463 = vmatprep.subr.bf16.mxu0 %v2917
    %4464 = vmatpush1.bf16.msra.mxu0 %v2916
    %4465 = vmatprep.subr.bf16.mxu0 %v2925
    %4466 = vmatpush1.bf16.msra.mxu0 %v2924
    %4467 = vmatprep.subr.bf16.mxu0 %v2933
    %4468 = vmatpush1.bf16.msra.mxu0 %v2932
    %4469 = vmatprep.subr.bf16.mxu0 %v2941
    %4470 = vmatpush1.bf16.msra.mxu0 %v2940
    %4471 = vmatprep.subr.bf16.mxu0 %v2949
    %4472 = vmatpush1.bf16.msra.mxu0 %v2948
    %4473 = vmatprep.subr.bf16.mxu0 %v2957
    %4474 = vmatpush1.bf16.msra.mxu0 %v2956
    %4475 = vmatprep.subr.bf16.mxu0 %v2965
    %4476 = vmatpush1.bf16.msra.mxu0 %v2964
    %4477 = vmatprep.subr.bf16.mxu0 %v2973
    %4478 = vmatpush1.bf16.msra.mxu0 %v2972
    %4479 = vmatprep.subr.bf16.mxu0 %v2981
    %4480 = vmatpush1.bf16.msra.mxu0 %v2980
    %4481 = vmatprep.subr.bf16.mxu0 %v2989
    %4482 = vmatpush1.bf16.msra.mxu0 %v2988
    %4483 = vmatprep.subr.bf16.mxu0 %v2997
    %4484 = vmatpush1.bf16.msra.mxu0 %v2996
    %4485 = vmatprep.subr.bf16.mxu0 %v3005
    %4486 = vmatpush1.bf16.msra.mxu0 %v3004
    %4487 = vmatprep.mubr.bf16.mxu0 %v189
    %4488 = vmatmul.mubr.bf16.gmra.mrb[0].mxu0 %v188
    %v4489 = vpop.f32.mrb[0].mxu0
    %v4490 = vadd.f32 %v4449, %v4489
    %v4491 = vpop.f32.mrb[0].mxu0
    %v4492 = vadd.f32 %v4451, %v4491
    %v4493 = vpop.f32.mrb[0].mxu0
    %v4494 = vpop.f32.mrb[0].mxu0
    %4495 = vdwg.mxu0
    %4496 = vmatprep.subr.bf16.mxu0 %v3013
    %4497 = vmatpush1.bf16.msra.mxu0 %v3012
    %4498 = vmatprep.subr.bf16.mxu0 %v3021
    %4499 = vmatpush1.bf16.msra.mxu0 %v3020
    %4500 = vmatprep.subr.bf16.mxu0 %v3029
    %4501 = vmatpush1.bf16.msra.mxu0 %v3028
    %4502 = vmatprep.subr.bf16.mxu0 %v3037
    %4503 = vmatpush1.bf16.msra.mxu0 %v3036
    %4504 = vmatprep.subr.bf16.mxu0 %v3045
    %4505 = vmatpush1.bf16.msra.mxu0 %v3044
    %4506 = vmatprep.subr.bf16.mxu0 %v3053
    %4507 = vmatpush1.bf16.msra.mxu0 %v3052
    %4508 = vmatprep.subr.bf16.mxu0 %v3061
    %4509 = vmatpush1.bf16.msra.mxu0 %v3060
    %4510 = vmatprep.subr.bf16.mxu0 %v3069
    %4511 = vmatpush1.bf16.msra.mxu0 %v3068
    %4512 = vmatprep.subr.bf16.mxu0 %v3077
    %4513 = vmatpush1.bf16.msra.mxu0 %v3076
    %4514 = vmatprep.subr.bf16.mxu0 %v3085
    %4515 = vmatpush1.bf16.msra.mxu0 %v3084
    %4516 = vmatprep.subr.bf16.mxu0 %v3093
    %4517 = vmatpush1.bf16.msra.mxu0 %v3092
    %4518 = vmatprep.subr.bf16.mxu0 %v3101
    %4519 = vmatpush1.bf16.msra.mxu0 %v3100
    %4520 = vmatprep.subr.bf16.mxu0 %v3109
    %4521 = vmatpush1.bf16.msra.mxu0 %v3108
    %4522 = vmatprep.subr.bf16.mxu0 %v3117
    %4523 = vmatpush1.bf16.msra.mxu0 %v3116
    %4524 = vmatprep.subr.bf16.mxu0 %v3125
    %4525 = vmatpush1.bf16.msra.mxu0 %v3124
    %4526 = vmatprep.subr.bf16.mxu0 %v3133
    %4527 = vmatpush1.bf16.msra.mxu0 %v3132
    %4528 = vmatprep.mubr.bf16.mxu0 %v191
    %4529 = vmatmul.mubr.bf16.gmra.mrb[0].mxu0 %v190
    %v4530 = vpop.f32.mrb[0].mxu0
    %v4531 = vadd.f32 %v4490, %v4530
    %v4532 = vpop.f32.mrb[0].mxu0
    %v4533 = vadd.f32 %v4492, %v4532
    %v4534 = vpop.f32.mrb[0].mxu0
    %v4535 = vpop.f32.mrb[0].mxu0
    %4536 = vdwg.mxu0
    %4537 = vmatprep.subr.bf16.mxu0 %v3141
    %4538 = vmatpush1.bf16.msra.mxu0 %v3140
    %4539 = vmatprep.subr.bf16.mxu0 %v3149
    %4540 = vmatpush1.bf16.msra.mxu0 %v3148
    %4541 = vmatprep.subr.bf16.mxu0 %v3157
    %4542 = vmatpush1.bf16.msra.mxu0 %v3156
    %4543 = vmatprep.subr.bf16.mxu0 %v3165
    %4544 = vmatpush1.bf16.msra.mxu0 %v3164
    %4545 = vmatprep.subr.bf16.mxu0 %v3173
    %4546 = vmatpush1.bf16.msra.mxu0 %v3172
    %4547 = vmatprep.subr.bf16.mxu0 %v3181
    %4548 = vmatpush1.bf16.msra.mxu0 %v3180
    %4549 = vmatprep.subr.bf16.mxu0 %v3189
    %4550 = vmatpush1.bf16.msra.mxu0 %v3188
    %4551 = vmatprep.subr.bf16.mxu0 %v3197
    %4552 = vmatpush1.bf16.msra.mxu0 %v3196
    %4553 = vmatprep.subr.bf16.mxu0 %v3205
    %4554 = vmatpush1.bf16.msra.mxu0 %v3204
    %4555 = vmatprep.subr.bf16.mxu0 %v3213
    %4556 = vmatpush1.bf16.msra.mxu0 %v3212
    %4557 = vmatprep.subr.bf16.mxu0 %v3221
    %4558 = vmatpush1.bf16.msra.mxu0 %v3220
    %4559 = vmatprep.subr.bf16.mxu0 %v3229
    %4560 = vmatpush1.bf16.msra.mxu0 %v3228
    %4561 = vmatprep.subr.bf16.mxu0 %v3237
    %4562 = vmatpush1.bf16.msra.mxu0 %v3236
    %4563 = vmatprep.subr.bf16.mxu0 %v3245
    %4564 = vmatpush1.bf16.msra.mxu0 %v3244
    %4565 = vmatprep.subr.bf16.mxu0 %v3253
    %4566 = vmatpush1.bf16.msra.mxu0 %v3252
    %4567 = vmatprep.subr.bf16.mxu0 %v3261
    %4568 = vmatpush1.bf16.msra.mxu0 %v3260
    %4569 = vmatprep.mubr.bf16.mxu0 %v193
    %4570 = vmatmul.mubr.bf16.gmra.mrb[0].mxu0 %v192
    %v4571 = vpop.f32.mrb[0].mxu0
    %v4572 = vadd.f32 %v4531, %v4571
    %v4573 = vpop.f32.mrb[0].mxu0
    %v4574 = vadd.f32 %v4533, %v4573
    %v4575 = vpop.f32.mrb[0].mxu0
    %v4576 = vpop.f32.mrb[0].mxu0
    %4577 = vdwg.mxu0
    %4578 = vmatprep.subr.bf16.mxu0 %v1223
    %4579 = vmatpush1.bf16.msra.mxu0 %v1222
    %4580 = vmatprep.subr.bf16.mxu0 %v1231
    %4581 = vmatpush1.bf16.msra.mxu0 %v1230
    %4582 = vmatprep.subr.bf16.mxu0 %v1239
    %4583 = vmatpush1.bf16.msra.mxu0 %v1238
    %4584 = vmatprep.subr.bf16.mxu0 %v1247
    %4585 = vmatpush1.bf16.msra.mxu0 %v1246
    %4586 = vmatprep.subr.bf16.mxu0 %v1255
    %4587 = vmatpush1.bf16.msra.mxu0 %v1254
    %4588 = vmatprep.subr.bf16.mxu0 %v1263
    %4589 = vmatpush1.bf16.msra.mxu0 %v1262
    %4590 = vmatprep.subr.bf16.mxu0 %v1271
    %4591 = vmatpush1.bf16.msra.mxu0 %v1270
    %4592 = vmatprep.subr.bf16.mxu0 %v1279
    %4593 = vmatpush1.bf16.msra.mxu0 %v1278
    %4594 = vmatprep.subr.bf16.mxu0 %v1287
    %4595 = vmatpush1.bf16.msra.mxu0 %v1286
    %4596 = vmatprep.subr.bf16.mxu0 %v1295
    %4597 = vmatpush1.bf16.msra.mxu0 %v1294
    %4598 = vmatprep.subr.bf16.mxu0 %v1303
    %4599 = vmatpush1.bf16.msra.mxu0 %v1302
    %4600 = vmatprep.subr.bf16.mxu0 %v1311
    %4601 = vmatpush1.bf16.msra.mxu0 %v1310
    %4602 = vmatprep.subr.bf16.mxu0 %v1319
    %4603 = vmatpush1.bf16.msra.mxu0 %v1318
    %4604 = vmatprep.subr.bf16.mxu0 %v1327
    %4605 = vmatpush1.bf16.msra.mxu0 %v1326
    %4606 = vmatprep.subr.bf16.mxu0 %v1335
    %4607 = vmatpush1.bf16.msra.mxu0 %v1334
    %4608 = vmatprep.subr.bf16.mxu0 %v1343
    %4609 = vmatpush1.bf16.msra.mxu0 %v1342
    %4610 = vmatprep.mubr.bf16.mxu0 %v163
    %4611 = vmatmul.mubr.bf16.gmra.mrb[0].mxu0 %v162
    %v4612 = vpop.f32.mrb[0].mxu0
    %v4613 = vadd.f32 0.0, %v4612
    %v4614 = vpop.f32.mrb[0].mxu0
    %v4615 = vadd.f32 0.0, %v4614
    %v4616 = vpop.f32.mrb[0].mxu0
    %v4617 = vpop.f32.mrb[0].mxu0
    %4618 = vdwg.mxu0
    %4619 = vmatprep.subr.bf16.mxu0 %v1351
    %4620 = vmatpush1.bf16.msra.mxu0 %v1350
    %4621 = vmatprep.subr.bf16.mxu0 %v1359
    %4622 = vmatpush1.bf16.msra.mxu0 %v1358
    %4623 = vmatprep.subr.bf16.mxu0 %v1367
    %4624 = vmatpush1.bf16.msra.mxu0 %v1366
    %4625 = vmatprep.subr.bf16.mxu0 %v1375
    %4626 = vmatpush1.bf16.msra.mxu0 %v1374
    %4627 = vmatprep.subr.bf16.mxu0 %v1383
    %4628 = vmatpush1.bf16.msra.mxu0 %v1382
    %4629 = vmatprep.subr.bf16.mxu0 %v1391
    %4630 = vmatpush1.bf16.msra.mxu0 %v1390
    %4631 = vmatprep.subr.bf16.mxu0 %v1399
    %4632 = vmatpush1.bf16.msra.mxu0 %v1398
    %4633 = vmatprep.subr.bf16.mxu0 %v1407
    %4634 = vmatpush1.bf16.msra.mxu0 %v1406
    %4635 = vmatprep.subr.bf16.mxu0 %v1415
    %4636 = vmatpush1.bf16.msra.mxu0 %v1414
    %4637 = vmatprep.subr.bf16.mxu0 %v1423
    %4638 = vmatpush1.bf16.msra.mxu0 %v1422
    %4639 = vmatprep.subr.bf16.mxu0 %v1431
    %4640 = vmatpush1.bf16.msra.mxu0 %v1430
    %4641 = vmatprep.subr.bf16.mxu0 %v1439
    %4642 = vmatpush1.bf16.msra.mxu0 %v1438
    %4643 = vmatprep.subr.bf16.mxu0 %v1447
    %4644 = vmatpush1.bf16.msra.mxu0 %v1446
    %4645 = vmatprep.subr.bf16.mxu0 %v1455
    %4646 = vmatpush1.bf16.msra.mxu0 %v1454
    %4647 = vmatprep.subr.bf16.mxu0 %v1463
    %4648 = vmatpush1.bf16.msra.mxu0 %v1462
    %4649 = vmatprep.subr.bf16.mxu0 %v1471
    %4650 = vmatpush1.bf16.msra.mxu0 %v1470
    %4651 = vmatprep.mubr.bf16.mxu0 %v165
    %4652 = vmatmul.mubr.bf16.gmra.mrb[0].mxu0 %v164
    %v4653 = vpop.f32.mrb[0].mxu0
    %v4654 = vadd.f32 %v4613, %v4653
    %v4655 = vpop.f32.mrb[0].mxu0
    %v4656 = vadd.f32 %v4615, %v4655
    %v4657 = vpop.f32.mrb[0].mxu0
    %v4658 = vpop.f32.mrb[0].mxu0
    %4659 = vdwg.mxu0
    %4660 = vmatprep.subr.bf16.mxu0 %v1479
    %4661 = vmatpush1.bf16.msra.mxu0 %v1478
    %4662 = vmatprep.subr.bf16.mxu0 %v1487
    %4663 = vmatpush1.bf16.msra.mxu0 %v1486
    %4664 = vmatprep.subr.bf16.mxu0 %v1495
    %4665 = vmatpush1.bf16.msra.mxu0 %v1494
    %4666 = vmatprep.subr.bf16.mxu0 %v1503
    %4667 = vmatpush1.bf16.msra.mxu0 %v1502
    %4668 = vmatprep.subr.bf16.mxu0 %v1511
    %4669 = vmatpush1.bf16.msra.mxu0 %v1510
    %4670 = vmatprep.subr.bf16.mxu0 %v1519
    %4671 = vmatpush1.bf16.msra.mxu0 %v1518
    %4672 = vmatprep.subr.bf16.mxu0 %v1527
    %4673 = vmatpush1.bf16.msra.mxu0 %v1526
    %4674 = vmatprep.subr.bf16.mxu0 %v1535
    %4675 = vmatpush1.bf16.msra.mxu0 %v1534
    %4676 = vmatprep.subr.bf16.mxu0 %v1543
    %4677 = vmatpush1.bf16.msra.mxu0 %v1542
    %4678 = vmatprep.subr.bf16.mxu0 %v1551
    %4679 = vmatpush1.bf16.msra.mxu0 %v1550
    %4680 = vmatprep.subr.bf16.mxu0 %v1559
    %4681 = vmatpush1.bf16.msra.mxu0 %v1558
    %4682 = vmatprep.subr.bf16.mxu0 %v1567
    %4683 = vmatpush1.bf16.msra.mxu0 %v1566
    %4684 = vmatprep.subr.bf16.mxu0 %v1575
    %4685 = vmatpush1.bf16.msra.mxu0 %v1574
    %4686 = vmatprep.subr.bf16.mxu0 %v1583
    %4687 = vmatpush1.bf16.msra.mxu0 %v1582
    %4688 = vmatprep.subr.bf16.mxu0 %v1591
    %4689 = vmatpush1.bf16.msra.mxu0 %v1590
    %4690 = vmatprep.subr.bf16.mxu0 %v1599
    %4691 = vmatpush1.bf16.msra.mxu0 %v1598
    %4692 = vmatprep.mubr.bf16.mxu0 %v167
    %4693 = vmatmul.mubr.bf16.gmra.mrb[0].mxu0 %v166
    %v4694 = vpop.f32.mrb[0].mxu0
    %v4695 = vadd.f32 %v4654, %v4694
    %v4696 = vpop.f32.mrb[0].mxu0
    %v4697 = vadd.f32 %v4656, %v4696
    %v4698 = vpop.f32.mrb[0].mxu0
    %v4699 = vpop.f32.mrb[0].mxu0
    %4700 = vdwg.mxu0
    %4701 = vmatprep.subr.bf16.mxu0 %v1607
    %4702 = vmatpush1.bf16.msra.mxu0 %v1606
    %4703 = vmatprep.subr.bf16.mxu0 %v1615
    %4704 = vmatpush1.bf16.msra.mxu0 %v1614
    %4705 = vmatprep.subr.bf16.mxu0 %v1623
    %4706 = vmatpush1.bf16.msra.mxu0 %v1622
    %4707 = vmatprep.subr.bf16.mxu0 %v1631
    %4708 = vmatpush1.bf16.msra.mxu0 %v1630
    %4709 = vmatprep.subr.bf16.mxu0 %v1639
    %4710 = vmatpush1.bf16.msra.mxu0 %v1638
    %4711 = vmatprep.subr.bf16.mxu0 %v1647
    %4712 = vmatpush1.bf16.msra.mxu0 %v1646
    %4713 = vmatprep.subr.bf16.mxu0 %v1655
    %4714 = vmatpush1.bf16.msra.mxu0 %v1654
    %4715 = vmatprep.subr.bf16.mxu0 %v1663
    %4716 = vmatpush1.bf16.msra.mxu0 %v1662
    %4717 = vmatprep.subr.bf16.mxu0 %v1671
    %4718 = vmatpush1.bf16.msra.mxu0 %v1670
    %4719 = vmatprep.subr.bf16.mxu0 %v1679
    %4720 = vmatpush1.bf16.msra.mxu0 %v1678
    %4721 = vmatprep.subr.bf16.mxu0 %v1687
    %4722 = vmatpush1.bf16.msra.mxu0 %v1686
    %4723 = vmatprep.subr.bf16.mxu0 %v1695
    %4724 = vmatpush1.bf16.msra.mxu0 %v1694
    %4725 = vmatprep.subr.bf16.mxu0 %v1703
    %4726 = vmatpush1.bf16.msra.mxu0 %v1702
    %4727 = vmatprep.subr.bf16.mxu0 %v1711
    %4728 = vmatpush1.bf16.msra.mxu0 %v1710
    %4729 = vmatprep.subr.bf16.mxu0 %v1719
    %4730 = vmatpush1.bf16.msra.mxu0 %v1718
    %4731 = vmatprep.subr.bf16.mxu0 %v1727
    %4732 = vmatpush1.bf16.msra.mxu0 %v1726
    %4733 = vmatprep.mubr.bf16.mxu0 %v169
    %4734 = vmatmul.mubr.bf16.gmra.mrb[0].mxu0 %v168
    %v4735 = vpop.f32.mrb[0].mxu0
    %v4736 = vadd.f32 %v4695, %v4735
    %v4737 = vpop.f32.mrb[0].mxu0
    %v4738 = vadd.f32 %v4697, %v4737
    %v4739 = vpop.f32.mrb[0].mxu0
    %v4740 = vpop.f32.mrb[0].mxu0
    %4741 = vdwg.mxu0
    %4742 = vmatprep.subr.bf16.mxu0 %v1735
    %4743 = vmatpush1.bf16.msra.mxu0 %v1734
    %4744 = vmatprep.subr.bf16.mxu0 %v1743
    %4745 = vmatpush1.bf16.msra.mxu0 %v1742
    %4746 = vmatprep.subr.bf16.mxu0 %v1751
    %4747 = vmatpush1.bf16.msra.mxu0 %v1750
    %4748 = vmatprep.subr.bf16.mxu0 %v1759
    %4749 = vmatpush1.bf16.msra.mxu0 %v1758
    %4750 = vmatprep.subr.bf16.mxu0 %v1767
    %4751 = vmatpush1.bf16.msra.mxu0 %v1766
    %4752 = vmatprep.subr.bf16.mxu0 %v1775
    %4753 = vmatpush1.bf16.msra.mxu0 %v1774
    %4754 = vmatprep.subr.bf16.mxu0 %v1783
    %4755 = vmatpush1.bf16.msra.mxu0 %v1782
    %4756 = vmatprep.subr.bf16.mxu0 %v1791
    %4757 = vmatpush1.bf16.msra.mxu0 %v1790
    %4758 = vmatprep.subr.bf16.mxu0 %v1799
    %4759 = vmatpush1.bf16.msra.mxu0 %v1798
    %4760 = vmatprep.subr.bf16.mxu0 %v1807
    %4761 = vmatpush1.bf16.msra.mxu0 %v1806
    %4762 = vmatprep.subr.bf16.mxu0 %v1815
    %4763 = vmatpush1.bf16.msra.mxu0 %v1814
    %4764 = vmatprep.subr.bf16.mxu0 %v1823
    %4765 = vmatpush1.bf16.msra.mxu0 %v1822
    %4766 = vmatprep.subr.bf16.mxu0 %v1831
    %4767 = vmatpush1.bf16.msra.mxu0 %v1830
    %4768 = vmatprep.subr.bf16.mxu0 %v1839
    %4769 = vmatpush1.bf16.msra.mxu0 %v1838
    %4770 = vmatprep.subr.bf16.mxu0 %v1847
    %4771 = vmatpush1.bf16.msra.mxu0 %v1846
    %4772 = vmatprep.subr.bf16.mxu0 %v1855
    %4773 = vmatpush1.bf16.msra.mxu0 %v1854
    %4774 = vmatprep.mubr.bf16.mxu0 %v171
    %4775 = vmatmul.mubr.bf16.gmra.mrb[0].mxu0 %v170
    %v4776 = vpop.f32.mrb[0].mxu0
    %v4777 = vadd.f32 %v4736, %v4776
    %v4778 = vpop.f32.mrb[0].mxu0
    %v4779 = vadd.f32 %v4738, %v4778
    %v4780 = vpop.f32.mrb[0].mxu0
    %v4781 = vpop.f32.mrb[0].mxu0
    %4782 = vdwg.mxu0
    %4783 = vmatprep.subr.bf16.mxu0 %v1863
    %4784 = vmatpush1.bf16.msra.mxu0 %v1862
    %4785 = vmatprep.subr.bf16.mxu0 %v1871
    %4786 = vmatpush1.bf16.msra.mxu0 %v1870
    %4787 = vmatprep.subr.bf16.mxu0 %v1879
    %4788 = vmatpush1.bf16.msra.mxu0 %v1878
    %4789 = vmatprep.subr.bf16.mxu0 %v1887
    %4790 = vmatpush1.bf16.msra.mxu0 %v1886
    %4791 = vmatprep.subr.bf16.mxu0 %v1895
    %4792 = vmatpush1.bf16.msra.mxu0 %v1894
    %4793 = vmatprep.subr.bf16.mxu0 %v1903
    %4794 = vmatpush1.bf16.msra.mxu0 %v1902
    %4795 = vmatprep.subr.bf16.mxu0 %v1911
    %4796 = vmatpush1.bf16.msra.mxu0 %v1910
    %4797 = vmatprep.subr.bf16.mxu0 %v1919
    %4798 = vmatpush1.bf16.msra.mxu0 %v1918
    %4799 = vmatprep.subr.bf16.mxu0 %v1927
    %4800 = vmatpush1.bf16.msra.mxu0 %v1926
    %4801 = vmatprep.subr.bf16.mxu0 %v1935
    %4802 = vmatpush1.bf16.msra.mxu0 %v1934
    %4803 = vmatprep.subr.bf16.mxu0 %v1943
    %4804 = vmatpush1.bf16.msra.mxu0 %v1942
    %4805 = vmatprep.subr.bf16.mxu0 %v1951
    %4806 = vmatpush1.bf16.msra.mxu0 %v1950
    %4807 = vmatprep.subr.bf16.mxu0 %v1959
    %4808 = vmatpush1.bf16.msra.mxu0 %v1958
    %4809 = vmatprep.subr.bf16.mxu0 %v1967
    %4810 = vmatpush1.bf16.msra.mxu0 %v1966
    %4811 = vmatprep.subr.bf16.mxu0 %v1975
    %4812 = vmatpush1.bf16.msra.mxu0 %v1974
    %4813 = vmatprep.subr.bf16.mxu0 %v1983
    %4814 = vmatpush1.bf16.msra.mxu0 %v1982
    %4815 = vmatprep.mubr.bf16.mxu0 %v173
    %4816 = vmatmul.mubr.bf16.gmra.mrb[0].mxu0 %v172
    %v4817 = vpop.f32.mrb[0].mxu0
    %v4818 = vadd.f32 %v4777, %v4817
    %v4819 = vpop.f32.mrb[0].mxu0
    %v4820 = vadd.f32 %v4779, %v4819
    %v4821 = vpop.f32.mrb[0].mxu0
    %v4822 = vpop.f32.mrb[0].mxu0
    %4823 = vdwg.mxu0
    %4824 = vmatprep.subr.bf16.mxu0 %v1991
    %4825 = vmatpush1.bf16.msra.mxu0 %v1990
    %4826 = vmatprep.subr.bf16.mxu0 %v1999
    %4827 = vmatpush1.bf16.msra.mxu0 %v1998
    %4828 = vmatprep.subr.bf16.mxu0 %v2007
    %4829 = vmatpush1.bf16.msra.mxu0 %v2006
    %4830 = vmatprep.subr.bf16.mxu0 %v2015
    %4831 = vmatpush1.bf16.msra.mxu0 %v2014
    %4832 = vmatprep.subr.bf16.mxu0 %v2023
    %4833 = vmatpush1.bf16.msra.mxu0 %v2022
    %4834 = vmatprep.subr.bf16.mxu0 %v2031
    %4835 = vmatpush1.bf16.msra.mxu0 %v2030
    %4836 = vmatprep.subr.bf16.mxu0 %v2039
    %4837 = vmatpush1.bf16.msra.mxu0 %v2038
    %4838 = vmatprep.subr.bf16.mxu0 %v2047
    %4839 = vmatpush1.bf16.msra.mxu0 %v2046
    %4840 = vmatprep.subr.bf16.mxu0 %v2055
    %4841 = vmatpush1.bf16.msra.mxu0 %v2054
    %4842 = vmatprep.subr.bf16.mxu0 %v2063
    %4843 = vmatpush1.bf16.msra.mxu0 %v2062
    %4844 = vmatprep.subr.bf16.mxu0 %v2071
    %4845 = vmatpush1.bf16.msra.mxu0 %v2070
    %4846 = vmatprep.subr.bf16.mxu0 %v2079
    %4847 = vmatpush1.bf16.msra.mxu0 %v2078
    %4848 = vmatprep.subr.bf16.mxu0 %v2087
    %4849 = vmatpush1.bf16.msra.mxu0 %v2086
    %4850 = vmatprep.subr.bf16.mxu0 %v2095
    %4851 = vmatpush1.bf16.msra.mxu0 %v2094
    %4852 = vmatprep.subr.bf16.mxu0 %v2103
    %4853 = vmatpush1.bf16.msra.mxu0 %v2102
    %4854 = vmatprep.subr.bf16.mxu0 %v2111
    %4855 = vmatpush1.bf16.msra.mxu0 %v2110
    %4856 = vmatprep.mubr.bf16.mxu0 %v175
    %4857 = vmatmul.mubr.bf16.gmra.mrb[0].mxu0 %v174
    %v4858 = vpop.f32.mrb[0].mxu0
    %v4859 = vadd.f32 %v4818, %v4858
    %v4860 = vpop.f32.mrb[0].mxu0
    %v4861 = vadd.f32 %v4820, %v4860
    %v4862 = vpop.f32.mrb[0].mxu0
    %v4863 = vpop.f32.mrb[0].mxu0
    %4864 = vdwg.mxu0
    %4865 = vmatprep.subr.bf16.mxu0 %v2119
    %4866 = vmatpush1.bf16.msra.mxu0 %v2118
    %4867 = vmatprep.subr.bf16.mxu0 %v2127
    %4868 = vmatpush1.bf16.msra.mxu0 %v2126
    %4869 = vmatprep.subr.bf16.mxu0 %v2135
    %4870 = vmatpush1.bf16.msra.mxu0 %v2134
    %4871 = vmatprep.subr.bf16.mxu0 %v2143
    %4872 = vmatpush1.bf16.msra.mxu0 %v2142
    %4873 = vmatprep.subr.bf16.mxu0 %v2151
    %4874 = vmatpush1.bf16.msra.mxu0 %v2150
    %4875 = vmatprep.subr.bf16.mxu0 %v2159
    %4876 = vmatpush1.bf16.msra.mxu0 %v2158
    %4877 = vmatprep.subr.bf16.mxu0 %v2167
    %4878 = vmatpush1.bf16.msra.mxu0 %v2166
    %4879 = vmatprep.subr.bf16.mxu0 %v2175
    %4880 = vmatpush1.bf16.msra.mxu0 %v2174
    %4881 = vmatprep.subr.bf16.mxu0 %v2183
    %4882 = vmatpush1.bf16.msra.mxu0 %v2182
    %4883 = vmatprep.subr.bf16.mxu0 %v2191
    %4884 = vmatpush1.bf16.msra.mxu0 %v2190
    %4885 = vmatprep.subr.bf16.mxu0 %v2199
    %4886 = vmatpush1.bf16.msra.mxu0 %v2198
    %4887 = vmatprep.subr.bf16.mxu0 %v2207
    %4888 = vmatpush1.bf16.msra.mxu0 %v2206
    %4889 = vmatprep.subr.bf16.mxu0 %v2215
    %4890 = vmatpush1.bf16.msra.mxu0 %v2214
    %4891 = vmatprep.subr.bf16.mxu0 %v2223
    %4892 = vmatpush1.bf16.msra.mxu0 %v2222
    %4893 = vmatprep.subr.bf16.mxu0 %v2231
    %4894 = vmatpush1.bf16.msra.mxu0 %v2230
    %4895 = vmatprep.subr.bf16.mxu0 %v2239
    %4896 = vmatpush1.bf16.msra.mxu0 %v2238
    %4897 = vmatprep.mubr.bf16.mxu0 %v177
    %4898 = vmatmul.mubr.bf16.gmra.mrb[0].mxu0 %v176
    %v4899 = vpop.f32.mrb[0].mxu0
    %v4900 = vadd.f32 %v4859, %v4899
    %v4901 = vpop.f32.mrb[0].mxu0
    %v4902 = vadd.f32 %v4861, %v4901
    %v4903 = vpop.f32.mrb[0].mxu0
    %v4904 = vpop.f32.mrb[0].mxu0
    %4905 = vdwg.mxu0
    %4906 = vmatprep.subr.bf16.mxu0 %v2247
    %4907 = vmatpush1.bf16.msra.mxu0 %v2246
    %4908 = vmatprep.subr.bf16.mxu0 %v2255
    %4909 = vmatpush1.bf16.msra.mxu0 %v2254
    %4910 = vmatprep.subr.bf16.mxu0 %v2263
    %4911 = vmatpush1.bf16.msra.mxu0 %v2262
    %4912 = vmatprep.subr.bf16.mxu0 %v2271
    %4913 = vmatpush1.bf16.msra.mxu0 %v2270
    %4914 = vmatprep.subr.bf16.mxu0 %v2279
    %4915 = vmatpush1.bf16.msra.mxu0 %v2278
    %4916 = vmatprep.subr.bf16.mxu0 %v2287
    %4917 = vmatpush1.bf16.msra.mxu0 %v2286
    %4918 = vmatprep.subr.bf16.mxu0 %v2295
    %4919 = vmatpush1.bf16.msra.mxu0 %v2294
    %4920 = vmatprep.subr.bf16.mxu0 %v2303
    %4921 = vmatpush1.bf16.msra.mxu0 %v2302
    %4922 = vmatprep.subr.bf16.mxu0 %v2311
    %4923 = vmatpush1.bf16.msra.mxu0 %v2310
    %4924 = vmatprep.subr.bf16.mxu0 %v2319
    %4925 = vmatpush1.bf16.msra.mxu0 %v2318
    %4926 = vmatprep.subr.bf16.mxu0 %v2327
    %4927 = vmatpush1.bf16.msra.mxu0 %v2326
    %4928 = vmatprep.subr.bf16.mxu0 %v2335
    %4929 = vmatpush1.bf16.msra.mxu0 %v2334
    %4930 = vmatprep.subr.bf16.mxu0 %v2343
    %4931 = vmatpush1.bf16.msra.mxu0 %v2342
    %4932 = vmatprep.subr.bf16.mxu0 %v2351
    %4933 = vmatpush1.bf16.msra.mxu0 %v2350
    %4934 = vmatprep.subr.bf16.mxu0 %v2359
    %4935 = vmatpush1.bf16.msra.mxu0 %v2358
    %4936 = vmatprep.subr.bf16.mxu0 %v2367
    %4937 = vmatpush1.bf16.msra.mxu0 %v2366
    %4938 = vmatprep.mubr.bf16.mxu0 %v179
    %4939 = vmatmul.mubr.bf16.gmra.mrb[0].mxu0 %v178
    %v4940 = vpop.f32.mrb[0].mxu0
    %v4941 = vadd.f32 %v4900, %v4940
    %v4942 = vpop.f32.mrb[0].mxu0
    %v4943 = vadd.f32 %v4902, %v4942
    %v4944 = vpop.f32.mrb[0].mxu0
    %v4945 = vpop.f32.mrb[0].mxu0
    %4946 = vdwg.mxu0
    %4947 = vmatprep.subr.bf16.mxu0 %v2375
    %4948 = vmatpush1.bf16.msra.mxu0 %v2374
    %4949 = vmatprep.subr.bf16.mxu0 %v2383
    %4950 = vmatpush1.bf16.msra.mxu0 %v2382
    %4951 = vmatprep.subr.bf16.mxu0 %v2391
    %4952 = vmatpush1.bf16.msra.mxu0 %v2390
    %4953 = vmatprep.subr.bf16.mxu0 %v2399
    %4954 = vmatpush1.bf16.msra.mxu0 %v2398
    %4955 = vmatprep.subr.bf16.mxu0 %v2407
    %4956 = vmatpush1.bf16.msra.mxu0 %v2406
    %4957 = vmatprep.subr.bf16.mxu0 %v2415
    %4958 = vmatpush1.bf16.msra.mxu0 %v2414
    %4959 = vmatprep.subr.bf16.mxu0 %v2423
    %4960 = vmatpush1.bf16.msra.mxu0 %v2422
    %4961 = vmatprep.subr.bf16.mxu0 %v2431
    %4962 = vmatpush1.bf16.msra.mxu0 %v2430
    %4963 = vmatprep.subr.bf16.mxu0 %v2439
    %4964 = vmatpush1.bf16.msra.mxu0 %v2438
    %4965 = vmatprep.subr.bf16.mxu0 %v2447
    %4966 = vmatpush1.bf16.msra.mxu0 %v2446
    %4967 = vmatprep.subr.bf16.mxu0 %v2455
    %4968 = vmatpush1.bf16.msra.mxu0 %v2454
    %4969 = vmatprep.subr.bf16.mxu0 %v2463
    %4970 = vmatpush1.bf16.msra.mxu0 %v2462
    %4971 = vmatprep.subr.bf16.mxu0 %v2471
    %4972 = vmatpush1.bf16.msra.mxu0 %v2470
    %4973 = vmatprep.subr.bf16.mxu0 %v2479
    %4974 = vmatpush1.bf16.msra.mxu0 %v2478
    %4975 = vmatprep.subr.bf16.mxu0 %v2487
    %4976 = vmatpush1.bf16.msra.mxu0 %v2486
    %4977 = vmatprep.subr.bf16.mxu0 %v2495
    %4978 = vmatpush1.bf16.msra.mxu0 %v2494
    %4979 = vmatprep.mubr.bf16.mxu0 %v181
    %4980 = vmatmul.mubr.bf16.gmra.mrb[0].mxu0 %v180
    %v4981 = vpop.f32.mrb[0].mxu0
    %v4982 = vadd.f32 %v4941, %v4981
    %v4983 = vpop.f32.mrb[0].mxu0
    %v4984 = vadd.f32 %v4943, %v4983
    %v4985 = vpop.f32.mrb[0].mxu0
    %v4986 = vpop.f32.mrb[0].mxu0
    %4987 = vdwg.mxu0
    %4988 = vmatprep.subr.bf16.mxu0 %v2503
    %4989 = vmatpush1.bf16.msra.mxu0 %v2502
    %4990 = vmatprep.subr.bf16.mxu0 %v2511
    %4991 = vmatpush1.bf16.msra.mxu0 %v2510
    %4992 = vmatprep.subr.bf16.mxu0 %v2519
    %4993 = vmatpush1.bf16.msra.mxu0 %v2518
    %4994 = vmatprep.subr.bf16.mxu0 %v2527
    %4995 = vmatpush1.bf16.msra.mxu0 %v2526
    %4996 = vmatprep.subr.bf16.mxu0 %v2535
    %4997 = vmatpush1.bf16.msra.mxu0 %v2534
    %4998 = vmatprep.subr.bf16.mxu0 %v2543
    %4999 = vmatpush1.bf16.msra.mxu0 %v2542
    %5000 = vmatprep.subr.bf16.mxu0 %v2551
    %5001 = vmatpush1.bf16.msra.mxu0 %v2550
    %5002 = vmatprep.subr.bf16.mxu0 %v2559
    %5003 = vmatpush1.bf16.msra.mxu0 %v2558
    %5004 = vmatprep.subr.bf16.mxu0 %v2567
    %5005 = vmatpush1.bf16.msra.mxu0 %v2566
    %5006 = vmatprep.subr.bf16.mxu0 %v2575
    %5007 = vmatpush1.bf16.msra.mxu0 %v2574
    %5008 = vmatprep.subr.bf16.mxu0 %v2583
    %5009 = vmatpush1.bf16.msra.mxu0 %v2582
    %5010 = vmatprep.subr.bf16.mxu0 %v2591
    %5011 = vmatpush1.bf16.msra.mxu0 %v2590
    %5012 = vmatprep.subr.bf16.mxu0 %v2599
    %5013 = vmatpush1.bf16.msra.mxu0 %v2598
    %5014 = vmatprep.subr.bf16.mxu0 %v2607
    %5015 = vmatpush1.bf16.msra.mxu0 %v2606
    %5016 = vmatprep.subr.bf16.mxu0 %v2615
    %5017 = vmatpush1.bf16.msra.mxu0 %v2614
    %5018 = vmatprep.subr.bf16.mxu0 %v2623
    %5019 = vmatpush1.bf16.msra.mxu0 %v2622
    %5020 = vmatprep.mubr.bf16.mxu0 %v183
    %5021 = vmatmul.mubr.bf16.gmra.mrb[0].mxu0 %v182
    %v5022 = vpop.f32.mrb[0].mxu0
    %v5023 = vadd.f32 %v4982, %v5022
    %v5024 = vpop.f32.mrb[0].mxu0
    %v5025 = vadd.f32 %v4984, %v5024
    %v5026 = vpop.f32.mrb[0].mxu0
    %v5027 = vpop.f32.mrb[0].mxu0
    %5028 = vdwg.mxu0
    %5029 = vmatprep.subr.bf16.mxu0 %v2631
    %5030 = vmatpush1.bf16.msra.mxu0 %v2630
    %5031 = vmatprep.subr.bf16.mxu0 %v2639
    %5032 = vmatpush1.bf16.msra.mxu0 %v2638
    %5033 = vmatprep.subr.bf16.mxu0 %v2647
    %5034 = vmatpush1.bf16.msra.mxu0 %v2646
    %5035 = vmatprep.subr.bf16.mxu0 %v2655
    %5036 = vmatpush1.bf16.msra.mxu0 %v2654
    %5037 = vmatprep.subr.bf16.mxu0 %v2663
    %5038 = vmatpush1.bf16.msra.mxu0 %v2662
    %5039 = vmatprep.subr.bf16.mxu0 %v2671
    %5040 = vmatpush1.bf16.msra.mxu0 %v2670
    %5041 = vmatprep.subr.bf16.mxu0 %v2679
    %5042 = vmatpush1.bf16.msra.mxu0 %v2678
    %5043 = vmatprep.subr.bf16.mxu0 %v2687
    %5044 = vmatpush1.bf16.msra.mxu0 %v2686
    %5045 = vmatprep.subr.bf16.mxu0 %v2695
    %5046 = vmatpush1.bf16.msra.mxu0 %v2694
    %5047 = vmatprep.subr.bf16.mxu0 %v2703
    %5048 = vmatpush1.bf16.msra.mxu0 %v2702
    %5049 = vmatprep.subr.bf16.mxu0 %v2711
    %5050 = vmatpush1.bf16.msra.mxu0 %v2710
    %5051 = vmatprep.subr.bf16.mxu0 %v2719
    %5052 = vmatpush1.bf16.msra.mxu0 %v2718
    %5053 = vmatprep.subr.bf16.mxu0 %v2727
    %5054 = vmatpush1.bf16.msra.mxu0 %v2726
    %5055 = vmatprep.subr.bf16.mxu0 %v2735
    %5056 = vmatpush1.bf16.msra.mxu0 %v2734
    %5057 = vmatprep.subr.bf16.mxu0 %v2743
    %5058 = vmatpush1.bf16.msra.mxu0 %v2742
    %5059 = vmatprep.subr.bf16.mxu0 %v2751
    %5060 = vmatpush1.bf16.msra.mxu0 %v2750
    %5061 = vmatprep.mubr.bf16.mxu0 %v185
    %5062 = vmatmul.mubr.bf16.gmra.mrb[0].mxu0 %v184
    %v5063 = vpop.f32.mrb[0].mxu0
    %v5064 = vadd.f32 %v5023, %v5063
    %v5065 = vpop.f32.mrb[0].mxu0
    %v5066 = vadd.f32 %v5025, %v5065
    %v5067 = vpop.f32.mrb[0].mxu0
    %v5068 = vpop.f32.mrb[0].mxu0
    %5069 = vdwg.mxu0
    %5070 = vmatprep.subr.bf16.mxu0 %v2759
    %5071 = vmatpush1.bf16.msra.mxu0 %v2758
    %5072 = vmatprep.subr.bf16.mxu0 %v2767
    %5073 = vmatpush1.bf16.msra.mxu0 %v2766
    %5074 = vmatprep.subr.bf16.mxu0 %v2775
    %5075 = vmatpush1.bf16.msra.mxu0 %v2774
    %5076 = vmatprep.subr.bf16.mxu0 %v2783
    %5077 = vmatpush1.bf16.msra.mxu0 %v2782
    %5078 = vmatprep.subr.bf16.mxu0 %v2791
    %5079 = vmatpush1.bf16.msra.mxu0 %v2790
    %5080 = vmatprep.subr.bf16.mxu0 %v2799
    %5081 = vmatpush1.bf16.msra.mxu0 %v2798
    %5082 = vmatprep.subr.bf16.mxu0 %v2807
    %5083 = vmatpush1.bf16.msra.mxu0 %v2806
    %5084 = vmatprep.subr.bf16.mxu0 %v2815
    %5085 = vmatpush1.bf16.msra.mxu0 %v2814
    %5086 = vmatprep.subr.bf16.mxu0 %v2823
    %5087 = vmatpush1.bf16.msra.mxu0 %v2822
    %5088 = vmatprep.subr.bf16.mxu0 %v2831
    %5089 = vmatpush1.bf16.msra.mxu0 %v2830
    %5090 = vmatprep.subr.bf16.mxu0 %v2839
    %5091 = vmatpush1.bf16.msra.mxu0 %v2838
    %5092 = vmatprep.subr.bf16.mxu0 %v2847
    %5093 = vmatpush1.bf16.msra.mxu0 %v2846
    %5094 = vmatprep.subr.bf16.mxu0 %v2855
    %5095 = vmatpush1.bf16.msra.mxu0 %v2854
    %5096 = vmatprep.subr.bf16.mxu0 %v2863
    %5097 = vmatpush1.bf16.msra.mxu0 %v2862
    %5098 = vmatprep.subr.bf16.mxu0 %v2871
    %5099 = vmatpush1.bf16.msra.mxu0 %v2870
    %5100 = vmatprep.subr.bf16.mxu0 %v2879
    %5101 = vmatpush1.bf16.msra.mxu0 %v2878
    %5102 = vmatprep.mubr.bf16.mxu0 %v187
    %5103 = vmatmul.mubr.bf16.gmra.mrb[0].mxu0 %v186
    %v5104 = vpop.f32.mrb[0].mxu0
    %v5105 = vadd.f32 %v5064, %v5104
    %v5106 = vpop.f32.mrb[0].mxu0
    %v5107 = vadd.f32 %v5066, %v5106
    %v5108 = vpop.f32.mrb[0].mxu0
    %v5109 = vpop.f32.mrb[0].mxu0
    %5110 = vdwg.mxu0
    %5111 = vmatprep.subr.bf16.mxu0 %v2887
    %5112 = vmatpush1.bf16.msra.mxu0 %v2886
    %5113 = vmatprep.subr.bf16.mxu0 %v2895
    %5114 = vmatpush1.bf16.msra.mxu0 %v2894
    %5115 = vmatprep.subr.bf16.mxu0 %v2903
    %5116 = vmatpush1.bf16.msra.mxu0 %v2902
    %5117 = vmatprep.subr.bf16.mxu0 %v2911
    %5118 = vmatpush1.bf16.msra.mxu0 %v2910
    %5119 = vmatprep.subr.bf16.mxu0 %v2919
    %5120 = vmatpush1.bf16.msra.mxu0 %v2918
    %5121 = vmatprep.subr.bf16.mxu0 %v2927
    %5122 = vmatpush1.bf16.msra.mxu0 %v2926
    %5123 = vmatprep.subr.bf16.mxu0 %v2935
    %5124 = vmatpush1.bf16.msra.mxu0 %v2934
    %5125 = vmatprep.subr.bf16.mxu0 %v2943
    %5126 = vmatpush1.bf16.msra.mxu0 %v2942
    %5127 = vmatprep.subr.bf16.mxu0 %v2951
    %5128 = vmatpush1.bf16.msra.mxu0 %v2950
    %5129 = vmatprep.subr.bf16.mxu0 %v2959
    %5130 = vmatpush1.bf16.msra.mxu0 %v2958
    %5131 = vmatprep.subr.bf16.mxu0 %v2967
    %5132 = vmatpush1.bf16.msra.mxu0 %v2966
    %5133 = vmatprep.subr.bf16.mxu0 %v2975
    %5134 = vmatpush1.bf16.msra.mxu0 %v2974
    %5135 = vmatprep.subr.bf16.mxu0 %v2983
    %5136 = vmatpush1.bf16.msra.mxu0 %v2982
    %5137 = vmatprep.subr.bf16.mxu0 %v2991
    %5138 = vmatpush1.bf16.msra.mxu0 %v2990
    %5139 = vmatprep.subr.bf16.mxu0 %v2999
    %5140 = vmatpush1.bf16.msra.mxu0 %v2998
    %5141 = vmatprep.subr.bf16.mxu0 %v3007
    %5142 = vmatpush1.bf16.msra.mxu0 %v3006
    %5143 = vmatprep.mubr.bf16.mxu0 %v189
    %5144 = vmatmul.mubr.bf16.gmra.mrb[0].mxu0 %v188
    %v5145 = vpop.f32.mrb[0].mxu0
    %v5146 = vadd.f32 %v5105, %v5145
    %v5147 = vpop.f32.mrb[0].mxu0
    %v5148 = vadd.f32 %v5107, %v5147
    %v5149 = vpop.f32.mrb[0].mxu0
    %v5150 = vpop.f32.mrb[0].mxu0
    %5151 = vdwg.mxu0
    %5152 = vmatprep.subr.bf16.mxu0 %v3015
    %5153 = vmatpush1.bf16.msra.mxu0 %v3014
    %5154 = vmatprep.subr.bf16.mxu0 %v3023
    %5155 = vmatpush1.bf16.msra.mxu0 %v3022
    %5156 = vmatprep.subr.bf16.mxu0 %v3031
    %5157 = vmatpush1.bf16.msra.mxu0 %v3030
    %5158 = vmatprep.subr.bf16.mxu0 %v3039
    %5159 = vmatpush1.bf16.msra.mxu0 %v3038
    %5160 = vmatprep.subr.bf16.mxu0 %v3047
    %5161 = vmatpush1.bf16.msra.mxu0 %v3046
    %5162 = vmatprep.subr.bf16.mxu0 %v3055
    %5163 = vmatpush1.bf16.msra.mxu0 %v3054
    %5164 = vmatprep.subr.bf16.mxu0 %v3063
    %5165 = vmatpush1.bf16.msra.mxu0 %v3062
    %5166 = vmatprep.subr.bf16.mxu0 %v3071
    %5167 = vmatpush1.bf16.msra.mxu0 %v3070
    %5168 = vmatprep.subr.bf16.mxu0 %v3079
    %5169 = vmatpush1.bf16.msra.mxu0 %v3078
    %5170 = vmatprep.subr.bf16.mxu0 %v3087
    %5171 = vmatpush1.bf16.msra.mxu0 %v3086
    %5172 = vmatprep.subr.bf16.mxu0 %v3095
    %5173 = vmatpush1.bf16.msra.mxu0 %v3094
    %5174 = vmatprep.subr.bf16.mxu0 %v3103
    %5175 = vmatpush1.bf16.msra.mxu0 %v3102
    %5176 = vmatprep.subr.bf16.mxu0 %v3111
    %5177 = vmatpush1.bf16.msra.mxu0 %v3110
    %5178 = vmatprep.subr.bf16.mxu0 %v3119
    %5179 = vmatpush1.bf16.msra.mxu0 %v3118
    %5180 = vmatprep.subr.bf16.mxu0 %v3127
    %5181 = vmatpush1.bf16.msra.mxu0 %v3126
    %5182 = vmatprep.subr.bf16.mxu0 %v3135
    %5183 = vmatpush1.bf16.msra.mxu0 %v3134
    %5184 = vmatprep.mubr.bf16.mxu0 %v191
    %5185 = vmatmul.mubr.bf16.gmra.mrb[0].mxu0 %v190
    %v5186 = vpop.f32.mrb[0].mxu0
    %v5187 = vadd.f32 %v5146, %v5186
    %v5188 = vpop.f32.mrb[0].mxu0
    %v5189 = vadd.f32 %v5148, %v5188
    %v5190 = vpop.f32.mrb[0].mxu0
    %v5191 = vpop.f32.mrb[0].mxu0
    %5192 = vdwg.mxu0
    %5193 = vmatprep.subr.bf16.mxu0 %v3143
    %5194 = vmatpush1.bf16.msra.mxu0 %v3142
    %5195 = vmatprep.subr.bf16.mxu0 %v3151
    %5196 = vmatpush1.bf16.msra.mxu0 %v3150
    %5197 = vmatprep.subr.bf16.mxu0 %v3159
    %5198 = vmatpush1.bf16.msra.mxu0 %v3158
    %5199 = vmatprep.subr.bf16.mxu0 %v3167
    %5200 = vmatpush1.bf16.msra.mxu0 %v3166
    %5201 = vmatprep.subr.bf16.mxu0 %v3175
    %5202 = vmatpush1.bf16.msra.mxu0 %v3174
    %5203 = vmatprep.subr.bf16.mxu0 %v3183
    %5204 = vmatpush1.bf16.msra.mxu0 %v3182
    %5205 = vmatprep.subr.bf16.mxu0 %v3191
    %5206 = vmatpush1.bf16.msra.mxu0 %v3190
    %5207 = vmatprep.subr.bf16.mxu0 %v3199
    %5208 = vmatpush1.bf16.msra.mxu0 %v3198
    %5209 = vmatprep.subr.bf16.mxu0 %v3207
    %5210 = vmatpush1.bf16.msra.mxu0 %v3206
    %5211 = vmatprep.subr.bf16.mxu0 %v3215
    %5212 = vmatpush1.bf16.msra.mxu0 %v3214
    %5213 = vmatprep.subr.bf16.mxu0 %v3223
    %5214 = vmatpush1.bf16.msra.mxu0 %v3222
    %5215 = vmatprep.subr.bf16.mxu0 %v3231
    %5216 = vmatpush1.bf16.msra.mxu0 %v3230
    %5217 = vmatprep.subr.bf16.mxu0 %v3239
    %5218 = vmatpush1.bf16.msra.mxu0 %v3238
    %5219 = vmatprep.subr.bf16.mxu0 %v3247
    %5220 = vmatpush1.bf16.msra.mxu0 %v3246
    %5221 = vmatprep.subr.bf16.mxu0 %v3255
    %5222 = vmatpush1.bf16.msra.mxu0 %v3254
    %5223 = vmatprep.subr.bf16.mxu0 %v3263
    %5224 = vmatpush1.bf16.msra.mxu0 %v3262
    %5225 = vmatprep.mubr.bf16.mxu0 %v193
    %5226 = vmatmul.mubr.bf16.gmra.mrb[0].mxu0 %v192
    %v5227 = vpop.f32.mrb[0].mxu0
    %v5228 = vadd.f32 %v5187, %v5227
    %v5229 = vpop.f32.mrb[0].mxu0
    %v5230 = vadd.f32 %v5189, %v5229
    %v5231 = vpop.f32.mrb[0].mxu0
    %v5232 = vpop.f32.mrb[0].mxu0
    %5233 = vdwg.mxu0
    %5234 = vmatprep.subr.bf16.mxu0 %v1225
    %5235 = vmatpush1.bf16.msra.mxu0 %v1224
    %5236 = vmatprep.subr.bf16.mxu0 %v1233
    %5237 = vmatpush1.bf16.msra.mxu0 %v1232
    %5238 = vmatprep.subr.bf16.mxu0 %v1241
    %5239 = vmatpush1.bf16.msra.mxu0 %v1240
    %5240 = vmatprep.subr.bf16.mxu0 %v1249
    %5241 = vmatpush1.bf16.msra.mxu0 %v1248
    %5242 = vmatprep.subr.bf16.mxu0 %v1257
    %5243 = vmatpush1.bf16.msra.mxu0 %v1256
    %5244 = vmatprep.subr.bf16.mxu0 %v1265
    %5245 = vmatpush1.bf16.msra.mxu0 %v1264
    %5246 = vmatprep.subr.bf16.mxu0 %v1273
    %5247 = vmatpush1.bf16.msra.mxu0 %v1272
    %5248 = vmatprep.subr.bf16.mxu0 %v1281
    %5249 = vmatpush1.bf16.msra.mxu0 %v1280
    %5250 = vmatprep.subr.bf16.mxu0 %v1289
    %5251 = vmatpush1.bf16.msra.mxu0 %v1288
    %5252 = vmatprep.subr.bf16.mxu0 %v1297
    %5253 = vmatpush1.bf16.msra.mxu0 %v1296
    %5254 = vmatprep.subr.bf16.mxu0 %v1305
    %5255 = vmatpush1.bf16.msra.mxu0 %v1304
    %5256 = vmatprep.subr.bf16.mxu0 %v1313
    %5257 = vmatpush1.bf16.msra.mxu0 %v1312
    %5258 = vmatprep.subr.bf16.mxu0 %v1321
    %5259 = vmatpush1.bf16.msra.mxu0 %v1320
    %5260 = vmatprep.subr.bf16.mxu0 %v1329
    %5261 = vmatpush1.bf16.msra.mxu0 %v1328
    %5262 = vmatprep.subr.bf16.mxu0 %v1337
    %5263 = vmatpush1.bf16.msra.mxu0 %v1336
    %5264 = vmatprep.subr.bf16.mxu0 %v1345
    %5265 = vmatpush1.bf16.msra.mxu0 %v1344
    %5266 = vmatprep.mubr.bf16.mxu0 %v163
    %5267 = vmatmul.mubr.bf16.gmra.mrb[0].mxu0 %v162
    %v5268 = vpop.f32.mrb[0].mxu0
    %v5269 = vadd.f32 0.0, %v5268
    %v5270 = vpop.f32.mrb[0].mxu0
    %v5271 = vadd.f32 0.0, %v5270
    %v5272 = vpop.f32.mrb[0].mxu0
    %v5273 = vpop.f32.mrb[0].mxu0
    %5274 = vdwg.mxu0
    %5275 = vmatprep.subr.bf16.mxu0 %v1353
    %5276 = vmatpush1.bf16.msra.mxu0 %v1352
    %5277 = vmatprep.subr.bf16.mxu0 %v1361
    %5278 = vmatpush1.bf16.msra.mxu0 %v1360
    %5279 = vmatprep.subr.bf16.mxu0 %v1369
    %5280 = vmatpush1.bf16.msra.mxu0 %v1368
    %5281 = vmatprep.subr.bf16.mxu0 %v1377
    %5282 = vmatpush1.bf16.msra.mxu0 %v1376
    %5283 = vmatprep.subr.bf16.mxu0 %v1385
    %5284 = vmatpush1.bf16.msra.mxu0 %v1384
    %5285 = vmatprep.subr.bf16.mxu0 %v1393
    %5286 = vmatpush1.bf16.msra.mxu0 %v1392
    %5287 = vmatprep.subr.bf16.mxu0 %v1401
    %5288 = vmatpush1.bf16.msra.mxu0 %v1400
    %5289 = vmatprep.subr.bf16.mxu0 %v1409
    %5290 = vmatpush1.bf16.msra.mxu0 %v1408
    %5291 = vmatprep.subr.bf16.mxu0 %v1417
    %5292 = vmatpush1.bf16.msra.mxu0 %v1416
    %5293 = vmatprep.subr.bf16.mxu0 %v1425
    %5294 = vmatpush1.bf16.msra.mxu0 %v1424
    %5295 = vmatprep.subr.bf16.mxu0 %v1433
    %5296 = vmatpush1.bf16.msra.mxu0 %v1432
    %5297 = vmatprep.subr.bf16.mxu0 %v1441
    %5298 = vmatpush1.bf16.msra.mxu0 %v1440
    %5299 = vmatprep.subr.bf16.mxu0 %v1449
    %5300 = vmatpush1.bf16.msra.mxu0 %v1448
    %5301 = vmatprep.subr.bf16.mxu0 %v1457
    %5302 = vmatpush1.bf16.msra.mxu0 %v1456
    %5303 = vmatprep.subr.bf16.mxu0 %v1465
    %5304 = vmatpush1.bf16.msra.mxu0 %v1464
    %5305 = vmatprep.subr.bf16.mxu0 %v1473
    %5306 = vmatpush1.bf16.msra.mxu0 %v1472
    %5307 = vmatprep.mubr.bf16.mxu0 %v165
    %5308 = vmatmul.mubr.bf16.gmra.mrb[0].mxu0 %v164
    %v5309 = vpop.f32.mrb[0].mxu0
    %v5310 = vadd.f32 %v5269, %v5309
    %v5311 = vpop.f32.mrb[0].mxu0
    %v5312 = vadd.f32 %v5271, %v5311
    %v5313 = vpop.f32.mrb[0].mxu0
    %v5314 = vpop.f32.mrb[0].mxu0
    %5315 = vdwg.mxu0
    %5316 = vmatprep.subr.bf16.mxu0 %v1481
    %5317 = vmatpush1.bf16.msra.mxu0 %v1480
    %5318 = vmatprep.subr.bf16.mxu0 %v1489
    %5319 = vmatpush1.bf16.msra.mxu0 %v1488
    %5320 = vmatprep.subr.bf16.mxu0 %v1497
    %5321 = vmatpush1.bf16.msra.mxu0 %v1496
    %5322 = vmatprep.subr.bf16.mxu0 %v1505
    %5323 = vmatpush1.bf16.msra.mxu0 %v1504
    %5324 = vmatprep.subr.bf16.mxu0 %v1513
    %5325 = vmatpush1.bf16.msra.mxu0 %v1512
    %5326 = vmatprep.subr.bf16.mxu0 %v1521
    %5327 = vmatpush1.bf16.msra.mxu0 %v1520
    %5328 = vmatprep.subr.bf16.mxu0 %v1529
    %5329 = vmatpush1.bf16.msra.mxu0 %v1528
    %5330 = vmatprep.subr.bf16.mxu0 %v1537
    %5331 = vmatpush1.bf16.msra.mxu0 %v1536
    %5332 = vmatprep.subr.bf16.mxu0 %v1545
    %5333 = vmatpush1.bf16.msra.mxu0 %v1544
    %5334 = vmatprep.subr.bf16.mxu0 %v1553
    %5335 = vmatpush1.bf16.msra.mxu0 %v1552
    %5336 = vmatprep.subr.bf16.mxu0 %v1561
    %5337 = vmatpush1.bf16.msra.mxu0 %v1560
    %5338 = vmatprep.subr.bf16.mxu0 %v1569
    %5339 = vmatpush1.bf16.msra.mxu0 %v1568
    %5340 = vmatprep.subr.bf16.mxu0 %v1577
    %5341 = vmatpush1.bf16.msra.mxu0 %v1576
    %5342 = vmatprep.subr.bf16.mxu0 %v1585
    %5343 = vmatpush1.bf16.msra.mxu0 %v1584
    %5344 = vmatprep.subr.bf16.mxu0 %v1593
    %5345 = vmatpush1.bf16.msra.mxu0 %v1592
    %5346 = vmatprep.subr.bf16.mxu0 %v1601
    %5347 = vmatpush1.bf16.msra.mxu0 %v1600
    %5348 = vmatprep.mubr.bf16.mxu0 %v167
    %5349 = vmatmul.mubr.bf16.gmra.mrb[0].mxu0 %v166
    %v5350 = vpop.f32.mrb[0].mxu0
    %v5351 = vadd.f32 %v5310, %v5350
    %v5352 = vpop.f32.mrb[0].mxu0
    %v5353 = vadd.f32 %v5312, %v5352
    %v5354 = vpop.f32.mrb[0].mxu0
    %v5355 = vpop.f32.mrb[0].mxu0
    %5356 = vdwg.mxu0
    %5357 = vmatprep.subr.bf16.mxu0 %v1609
    %5358 = vmatpush1.bf16.msra.mxu0 %v1608
    %5359 = vmatprep.subr.bf16.mxu0 %v1617
    %5360 = vmatpush1.bf16.msra.mxu0 %v1616
    %5361 = vmatprep.subr.bf16.mxu0 %v1625
    %5362 = vmatpush1.bf16.msra.mxu0 %v1624
    %5363 = vmatprep.subr.bf16.mxu0 %v1633
    %5364 = vmatpush1.bf16.msra.mxu0 %v1632
    %5365 = vmatprep.subr.bf16.mxu0 %v1641
    %5366 = vmatpush1.bf16.msra.mxu0 %v1640
    %5367 = vmatprep.subr.bf16.mxu0 %v1649
    %5368 = vmatpush1.bf16.msra.mxu0 %v1648
    %5369 = vmatprep.subr.bf16.mxu0 %v1657
    %5370 = vmatpush1.bf16.msra.mxu0 %v1656
    %5371 = vmatprep.subr.bf16.mxu0 %v1665
    %5372 = vmatpush1.bf16.msra.mxu0 %v1664
    %5373 = vmatprep.subr.bf16.mxu0 %v1673
    %5374 = vmatpush1.bf16.msra.mxu0 %v1672
    %5375 = vmatprep.subr.bf16.mxu0 %v1681
    %5376 = vmatpush1.bf16.msra.mxu0 %v1680
    %5377 = vmatprep.subr.bf16.mxu0 %v1689
    %5378 = vmatpush1.bf16.msra.mxu0 %v1688
    %5379 = vmatprep.subr.bf16.mxu0 %v1697
    %5380 = vmatpush1.bf16.msra.mxu0 %v1696
    %5381 = vmatprep.subr.bf16.mxu0 %v1705
    %5382 = vmatpush1.bf16.msra.mxu0 %v1704
    %5383 = vmatprep.subr.bf16.mxu0 %v1713
    %5384 = vmatpush1.bf16.msra.mxu0 %v1712
    %5385 = vmatprep.subr.bf16.mxu0 %v1721
    %5386 = vmatpush1.bf16.msra.mxu0 %v1720
    %5387 = vmatprep.subr.bf16.mxu0 %v1729
    %5388 = vmatpush1.bf16.msra.mxu0 %v1728
    %5389 = vmatprep.mubr.bf16.mxu0 %v169
    %5390 = vmatmul.mubr.bf16.gmra.mrb[0].mxu0 %v168
    %v5391 = vpop.f32.mrb[0].mxu0
    %v5392 = vadd.f32 %v5351, %v5391
    %v5393 = vpop.f32.mrb[0].mxu0
    %v5394 = vadd.f32 %v5353, %v5393
    %v5395 = vpop.f32.mrb[0].mxu0
    %v5396 = vpop.f32.mrb[0].mxu0
    %5397 = vdwg.mxu0
    %5398 = vmatprep.subr.bf16.mxu0 %v1737
    %5399 = vmatpush1.bf16.msra.mxu0 %v1736
    %5400 = vmatprep.subr.bf16.mxu0 %v1745
    %5401 = vmatpush1.bf16.msra.mxu0 %v1744
    %5402 = vmatprep.subr.bf16.mxu0 %v1753
    %5403 = vmatpush1.bf16.msra.mxu0 %v1752
    %5404 = vmatprep.subr.bf16.mxu0 %v1761
    %5405 = vmatpush1.bf16.msra.mxu0 %v1760
    %5406 = vmatprep.subr.bf16.mxu0 %v1769
    %5407 = vmatpush1.bf16.msra.mxu0 %v1768
    %5408 = vmatprep.subr.bf16.mxu0 %v1777
    %5409 = vmatpush1.bf16.msra.mxu0 %v1776
    %5410 = vmatprep.subr.bf16.mxu0 %v1785
    %5411 = vmatpush1.bf16.msra.mxu0 %v1784
    %5412 = vmatprep.subr.bf16.mxu0 %v1793
    %5413 = vmatpush1.bf16.msra.mxu0 %v1792
    %5414 = vmatprep.subr.bf16.mxu0 %v1801
    %5415 = vmatpush1.bf16.msra.mxu0 %v1800
    %5416 = vmatprep.subr.bf16.mxu0 %v1809
    %5417 = vmatpush1.bf16.msra.mxu0 %v1808
    %5418 = vmatprep.subr.bf16.mxu0 %v1817
    %5419 = vmatpush1.bf16.msra.mxu0 %v1816
    %5420 = vmatprep.subr.bf16.mxu0 %v1825
    %5421 = vmatpush1.bf16.msra.mxu0 %v1824
    %5422 = vmatprep.subr.bf16.mxu0 %v1833
    %5423 = vmatpush1.bf16.msra.mxu0 %v1832
    %5424 = vmatprep.subr.bf16.mxu0 %v1841
    %5425 = vmatpush1.bf16.msra.mxu0 %v1840
    %5426 = vmatprep.subr.bf16.mxu0 %v1849
    %5427 = vmatpush1.bf16.msra.mxu0 %v1848
    %5428 = vmatprep.subr.bf16.mxu0 %v1857
    %5429 = vmatpush1.bf16.msra.mxu0 %v1856
    %5430 = vmatprep.mubr.bf16.mxu0 %v171
    %5431 = vmatmul.mubr.bf16.gmra.mrb[0].mxu0 %v170
    %v5432 = vpop.f32.mrb[0].mxu0
    %v5433 = vadd.f32 %v5392, %v5432
    %v5434 = vpop.f32.mrb[0].mxu0
    %v5435 = vadd.f32 %v5394, %v5434
    %v5436 = vpop.f32.mrb[0].mxu0
    %v5437 = vpop.f32.mrb[0].mxu0
    %5438 = vdwg.mxu0
    %5439 = vmatprep.subr.bf16.mxu0 %v1865
    %5440 = vmatpush1.bf16.msra.mxu0 %v1864
    %5441 = vmatprep.subr.bf16.mxu0 %v1873
    %5442 = vmatpush1.bf16.msra.mxu0 %v1872
    %5443 = vmatprep.subr.bf16.mxu0 %v1881
    %5444 = vmatpush1.bf16.msra.mxu0 %v1880
    %5445 = vmatprep.subr.bf16.mxu0 %v1889
    %5446 = vmatpush1.bf16.msra.mxu0 %v1888
    %5447 = vmatprep.subr.bf16.mxu0 %v1897
    %5448 = vmatpush1.bf16.msra.mxu0 %v1896
    %5449 = vmatprep.subr.bf16.mxu0 %v1905
    %5450 = vmatpush1.bf16.msra.mxu0 %v1904
    %5451 = vmatprep.subr.bf16.mxu0 %v1913
    %5452 = vmatpush1.bf16.msra.mxu0 %v1912
    %5453 = vmatprep.subr.bf16.mxu0 %v1921
    %5454 = vmatpush1.bf16.msra.mxu0 %v1920
    %5455 = vmatprep.subr.bf16.mxu0 %v1929
    %5456 = vmatpush1.bf16.msra.mxu0 %v1928
    %5457 = vmatprep.subr.bf16.mxu0 %v1937
    %5458 = vmatpush1.bf16.msra.mxu0 %v1936
    %5459 = vmatprep.subr.bf16.mxu0 %v1945
    %5460 = vmatpush1.bf16.msra.mxu0 %v1944
    %5461 = vmatprep.subr.bf16.mxu0 %v1953
    %5462 = vmatpush1.bf16.msra.mxu0 %v1952
    %5463 = vmatprep.subr.bf16.mxu0 %v1961
    %5464 = vmatpush1.bf16.msra.mxu0 %v1960
    %5465 = vmatprep.subr.bf16.mxu0 %v1969
    %5466 = vmatpush1.bf16.msra.mxu0 %v1968
    %5467 = vmatprep.subr.bf16.mxu0 %v1977
    %5468 = vmatpush1.bf16.msra.mxu0 %v1976
    %5469 = vmatprep.subr.bf16.mxu0 %v1985
    %5470 = vmatpush1.bf16.msra.mxu0 %v1984
    %5471 = vmatprep.mubr.bf16.mxu0 %v173
    %5472 = vmatmul.mubr.bf16.gmra.mrb[0].mxu0 %v172
    %v5473 = vpop.f32.mrb[0].mxu0
    %v5474 = vadd.f32 %v5433, %v5473
    %v5475 = vpop.f32.mrb[0].mxu0
    %v5476 = vadd.f32 %v5435, %v5475
    %v5477 = vpop.f32.mrb[0].mxu0
    %v5478 = vpop.f32.mrb[0].mxu0
    %5479 = vdwg.mxu0
    %5480 = vmatprep.subr.bf16.mxu0 %v1993
    %5481 = vmatpush1.bf16.msra.mxu0 %v1992
    %5482 = vmatprep.subr.bf16.mxu0 %v2001
    %5483 = vmatpush1.bf16.msra.mxu0 %v2000
    %5484 = vmatprep.subr.bf16.mxu0 %v2009
    %5485 = vmatpush1.bf16.msra.mxu0 %v2008
    %5486 = vmatprep.subr.bf16.mxu0 %v2017
    %5487 = vmatpush1.bf16.msra.mxu0 %v2016
    %5488 = vmatprep.subr.bf16.mxu0 %v2025
    %5489 = vmatpush1.bf16.msra.mxu0 %v2024
    %5490 = vmatprep.subr.bf16.mxu0 %v2033
    %5491 = vmatpush1.bf16.msra.mxu0 %v2032
    %5492 = vmatprep.subr.bf16.mxu0 %v2041
    %5493 = vmatpush1.bf16.msra.mxu0 %v2040
    %5494 = vmatprep.subr.bf16.mxu0 %v2049
    %5495 = vmatpush1.bf16.msra.mxu0 %v2048
    %5496 = vmatprep.subr.bf16.mxu0 %v2057
    %5497 = vmatpush1.bf16.msra.mxu0 %v2056
    %5498 = vmatprep.subr.bf16.mxu0 %v2065
    %5499 = vmatpush1.bf16.msra.mxu0 %v2064
    %5500 = vmatprep.subr.bf16.mxu0 %v2073
    %5501 = vmatpush1.bf16.msra.mxu0 %v2072
    %5502 = vmatprep.subr.bf16.mxu0 %v2081
    %5503 = vmatpush1.bf16.msra.mxu0 %v2080
    %5504 = vmatprep.subr.bf16.mxu0 %v2089
    %5505 = vmatpush1.bf16.msra.mxu0 %v2088
    %5506 = vmatprep.subr.bf16.mxu0 %v2097
    %5507 = vmatpush1.bf16.msra.mxu0 %v2096
    %5508 = vmatprep.subr.bf16.mxu0 %v2105
    %5509 = vmatpush1.bf16.msra.mxu0 %v2104
    %5510 = vmatprep.subr.bf16.mxu0 %v2113
    %5511 = vmatpush1.bf16.msra.mxu0 %v2112
    %5512 = vmatprep.mubr.bf16.mxu0 %v175
    %5513 = vmatmul.mubr.bf16.gmra.mrb[0].mxu0 %v174
    %v5514 = vpop.f32.mrb[0].mxu0
    %v5515 = vadd.f32 %v5474, %v5514
    %v5516 = vpop.f32.mrb[0].mxu0
    %v5517 = vadd.f32 %v5476, %v5516
    %v5518 = vpop.f32.mrb[0].mxu0
    %v5519 = vpop.f32.mrb[0].mxu0
    %5520 = vdwg.mxu0
    %5521 = vmatprep.subr.bf16.mxu0 %v2121
    %5522 = vmatpush1.bf16.msra.mxu0 %v2120
    %5523 = vmatprep.subr.bf16.mxu0 %v2129
    %5524 = vmatpush1.bf16.msra.mxu0 %v2128
    %5525 = vmatprep.subr.bf16.mxu0 %v2137
    %5526 = vmatpush1.bf16.msra.mxu0 %v2136
    %5527 = vmatprep.subr.bf16.mxu0 %v2145
    %5528 = vmatpush1.bf16.msra.mxu0 %v2144
    %5529 = vmatprep.subr.bf16.mxu0 %v2153
    %5530 = vmatpush1.bf16.msra.mxu0 %v2152
    %5531 = vmatprep.subr.bf16.mxu0 %v2161
    %5532 = vmatpush1.bf16.msra.mxu0 %v2160
    %5533 = vmatprep.subr.bf16.mxu0 %v2169
    %5534 = vmatpush1.bf16.msra.mxu0 %v2168
    %5535 = vmatprep.subr.bf16.mxu0 %v2177
    %5536 = vmatpush1.bf16.msra.mxu0 %v2176
    %5537 = vmatprep.subr.bf16.mxu0 %v2185
    %5538 = vmatpush1.bf16.msra.mxu0 %v2184
    %5539 = vmatprep.subr.bf16.mxu0 %v2193
    %5540 = vmatpush1.bf16.msra.mxu0 %v2192
    %5541 = vmatprep.subr.bf16.mxu0 %v2201
    %5542 = vmatpush1.bf16.msra.mxu0 %v2200
    %5543 = vmatprep.subr.bf16.mxu0 %v2209
    %5544 = vmatpush1.bf16.msra.mxu0 %v2208
    %5545 = vmatprep.subr.bf16.mxu0 %v2217
    %5546 = vmatpush1.bf16.msra.mxu0 %v2216
    %5547 = vmatprep.subr.bf16.mxu0 %v2225
    %5548 = vmatpush1.bf16.msra.mxu0 %v2224
    %5549 = vmatprep.subr.bf16.mxu0 %v2233
    %5550 = vmatpush1.bf16.msra.mxu0 %v2232
    %5551 = vmatprep.subr.bf16.mxu0 %v2241
    %5552 = vmatpush1.bf16.msra.mxu0 %v2240
    %5553 = vmatprep.mubr.bf16.mxu0 %v177
    %5554 = vmatmul.mubr.bf16.gmra.mrb[0].mxu0 %v176
    %v5555 = vpop.f32.mrb[0].mxu0
    %v5556 = vadd.f32 %v5515, %v5555
    %v5557 = vpop.f32.mrb[0].mxu0
    %v5558 = vadd.f32 %v5517, %v5557
    %v5559 = vpop.f32.mrb[0].mxu0
    %v5560 = vpop.f32.mrb[0].mxu0
    %5561 = vdwg.mxu0
    %5562 = vmatprep.subr.bf16.mxu0 %v2249
    %5563 = vmatpush1.bf16.msra.mxu0 %v2248
    %5564 = vmatprep.subr.bf16.mxu0 %v2257
    %5565 = vmatpush1.bf16.msra.mxu0 %v2256
    %5566 = vmatprep.subr.bf16.mxu0 %v2265
    %5567 = vmatpush1.bf16.msra.mxu0 %v2264
    %5568 = vmatprep.subr.bf16.mxu0 %v2273
    %5569 = vmatpush1.bf16.msra.mxu0 %v2272
    %5570 = vmatprep.subr.bf16.mxu0 %v2281
    %5571 = vmatpush1.bf16.msra.mxu0 %v2280
    %5572 = vmatprep.subr.bf16.mxu0 %v2289
    %5573 = vmatpush1.bf16.msra.mxu0 %v2288
    %5574 = vmatprep.subr.bf16.mxu0 %v2297
    %5575 = vmatpush1.bf16.msra.mxu0 %v2296
    %5576 = vmatprep.subr.bf16.mxu0 %v2305
    %5577 = vmatpush1.bf16.msra.mxu0 %v2304
    %5578 = vmatprep.subr.bf16.mxu0 %v2313
    %5579 = vmatpush1.bf16.msra.mxu0 %v2312
    %5580 = vmatprep.subr.bf16.mxu0 %v2321
    %5581 = vmatpush1.bf16.msra.mxu0 %v2320
    %5582 = vmatprep.subr.bf16.mxu0 %v2329
    %5583 = vmatpush1.bf16.msra.mxu0 %v2328
    %5584 = vmatprep.subr.bf16.mxu0 %v2337
    %5585 = vmatpush1.bf16.msra.mxu0 %v2336
    %5586 = vmatprep.subr.bf16.mxu0 %v2345
    %5587 = vmatpush1.bf16.msra.mxu0 %v2344
    %5588 = vmatprep.subr.bf16.mxu0 %v2353
    %5589 = vmatpush1.bf16.msra.mxu0 %v2352
    %5590 = vmatprep.subr.bf16.mxu0 %v2361
    %5591 = vmatpush1.bf16.msra.mxu0 %v2360
    %5592 = vmatprep.subr.bf16.mxu0 %v2369
    %5593 = vmatpush1.bf16.msra.mxu0 %v2368
    %5594 = vmatprep.mubr.bf16.mxu0 %v179
    %5595 = vmatmul.mubr.bf16.gmra.mrb[0].mxu0 %v178
    %v5596 = vpop.f32.mrb[0].mxu0
    %v5597 = vadd.f32 %v5556, %v5596
    %v5598 = vpop.f32.mrb[0].mxu0
    %v5599 = vadd.f32 %v5558, %v5598
    %v5600 = vpop.f32.mrb[0].mxu0
    %v5601 = vpop.f32.mrb[0].mxu0
    %5602 = vdwg.mxu0
    %5603 = vmatprep.subr.bf16.mxu0 %v2377
    %5604 = vmatpush1.bf16.msra.mxu0 %v2376
    %5605 = vmatprep.subr.bf16.mxu0 %v2385
    %5606 = vmatpush1.bf16.msra.mxu0 %v2384
    %5607 = vmatprep.subr.bf16.mxu0 %v2393
    %5608 = vmatpush1.bf16.msra.mxu0 %v2392
    %5609 = vmatprep.subr.bf16.mxu0 %v2401
    %5610 = vmatpush1.bf16.msra.mxu0 %v2400
    %5611 = vmatprep.subr.bf16.mxu0 %v2409
    %5612 = vmatpush1.bf16.msra.mxu0 %v2408
    %5613 = vmatprep.subr.bf16.mxu0 %v2417
    %5614 = vmatpush1.bf16.msra.mxu0 %v2416
    %5615 = vmatprep.subr.bf16.mxu0 %v2425
    %5616 = vmatpush1.bf16.msra.mxu0 %v2424
    %5617 = vmatprep.subr.bf16.mxu0 %v2433
    %5618 = vmatpush1.bf16.msra.mxu0 %v2432
    %5619 = vmatprep.subr.bf16.mxu0 %v2441
    %5620 = vmatpush1.bf16.msra.mxu0 %v2440
    %5621 = vmatprep.subr.bf16.mxu0 %v2449
    %5622 = vmatpush1.bf16.msra.mxu0 %v2448
    %5623 = vmatprep.subr.bf16.mxu0 %v2457
    %5624 = vmatpush1.bf16.msra.mxu0 %v2456
    %5625 = vmatprep.subr.bf16.mxu0 %v2465
    %5626 = vmatpush1.bf16.msra.mxu0 %v2464
    %5627 = vmatprep.subr.bf16.mxu0 %v2473
    %5628 = vmatpush1.bf16.msra.mxu0 %v2472
    %5629 = vmatprep.subr.bf16.mxu0 %v2481
    %5630 = vmatpush1.bf16.msra.mxu0 %v2480
    %5631 = vmatprep.subr.bf16.mxu0 %v2489
    %5632 = vmatpush1.bf16.msra.mxu0 %v2488
    %5633 = vmatprep.subr.bf16.mxu0 %v2497
    %5634 = vmatpush1.bf16.msra.mxu0 %v2496
    %5635 = vmatprep.mubr.bf16.mxu0 %v181
    %5636 = vmatmul.mubr.bf16.gmra.mrb[0].mxu0 %v180
    %v5637 = vpop.f32.mrb[0].mxu0
    %v5638 = vadd.f32 %v5597, %v5637
    %v5639 = vpop.f32.mrb[0].mxu0
    %v5640 = vadd.f32 %v5599, %v5639
    %v5641 = vpop.f32.mrb[0].mxu0
    %v5642 = vpop.f32.mrb[0].mxu0
    %5643 = vdwg.mxu0
    %5644 = vmatprep.subr.bf16.mxu0 %v2505
    %5645 = vmatpush1.bf16.msra.mxu0 %v2504
    %5646 = vmatprep.subr.bf16.mxu0 %v2513
    %5647 = vmatpush1.bf16.msra.mxu0 %v2512
    %5648 = vmatprep.subr.bf16.mxu0 %v2521
    %5649 = vmatpush1.bf16.msra.mxu0 %v2520
    %5650 = vmatprep.subr.bf16.mxu0 %v2529
    %5651 = vmatpush1.bf16.msra.mxu0 %v2528
    %5652 = vmatprep.subr.bf16.mxu0 %v2537
    %5653 = vmatpush1.bf16.msra.mxu0 %v2536
    %5654 = vmatprep.subr.bf16.mxu0 %v2545
    %5655 = vmatpush1.bf16.msra.mxu0 %v2544
    %5656 = vmatprep.subr.bf16.mxu0 %v2553
    %5657 = vmatpush1.bf16.msra.mxu0 %v2552
    %5658 = vmatprep.subr.bf16.mxu0 %v2561
    %5659 = vmatpush1.bf16.msra.mxu0 %v2560
    %5660 = vmatprep.subr.bf16.mxu0 %v2569
    %5661 = vmatpush1.bf16.msra.mxu0 %v2568
    %5662 = vmatprep.subr.bf16.mxu0 %v2577
    %5663 = vmatpush1.bf16.msra.mxu0 %v2576
    %5664 = vmatprep.subr.bf16.mxu0 %v2585
    %5665 = vmatpush1.bf16.msra.mxu0 %v2584
    %5666 = vmatprep.subr.bf16.mxu0 %v2593
    %5667 = vmatpush1.bf16.msra.mxu0 %v2592
    %5668 = vmatprep.subr.bf16.mxu0 %v2601
    %5669 = vmatpush1.bf16.msra.mxu0 %v2600
    %5670 = vmatprep.subr.bf16.mxu0 %v2609
    %5671 = vmatpush1.bf16.msra.mxu0 %v2608
    %5672 = vmatprep.subr.bf16.mxu0 %v2617
    %5673 = vmatpush1.bf16.msra.mxu0 %v2616
    %5674 = vmatprep.subr.bf16.mxu0 %v2625
    %5675 = vmatpush1.bf16.msra.mxu0 %v2624
    %5676 = vmatprep.mubr.bf16.mxu0 %v183
    %5677 = vmatmul.mubr.bf16.gmra.mrb[0].mxu0 %v182
    %v5678 = vpop.f32.mrb[0].mxu0
    %v5679 = vadd.f32 %v5638, %v5678
    %v5680 = vpop.f32.mrb[0].mxu0
    %v5681 = vadd.f32 %v5640, %v5680
    %v5682 = vpop.f32.mrb[0].mxu0
    %v5683 = vpop.f32.mrb[0].mxu0
    %5684 = vdwg.mxu0
    %5685 = vmatprep.subr.bf16.mxu0 %v2633
    %5686 = vmatpush1.bf16.msra.mxu0 %v2632
    %5687 = vmatprep.subr.bf16.mxu0 %v2641
    %5688 = vmatpush1.bf16.msra.mxu0 %v2640
    %5689 = vmatprep.subr.bf16.mxu0 %v2649
    %5690 = vmatpush1.bf16.msra.mxu0 %v2648
    %5691 = vmatprep.subr.bf16.mxu0 %v2657
    %5692 = vmatpush1.bf16.msra.mxu0 %v2656
    %5693 = vmatprep.subr.bf16.mxu0 %v2665
    %5694 = vmatpush1.bf16.msra.mxu0 %v2664
    %5695 = vmatprep.subr.bf16.mxu0 %v2673
    %5696 = vmatpush1.bf16.msra.mxu0 %v2672
    %5697 = vmatprep.subr.bf16.mxu0 %v2681
    %5698 = vmatpush1.bf16.msra.mxu0 %v2680
    %5699 = vmatprep.subr.bf16.mxu0 %v2689
    %5700 = vmatpush1.bf16.msra.mxu0 %v2688
    %5701 = vmatprep.subr.bf16.mxu0 %v2697
    %5702 = vmatpush1.bf16.msra.mxu0 %v2696
    %5703 = vmatprep.subr.bf16.mxu0 %v2705
    %5704 = vmatpush1.bf16.msra.mxu0 %v2704
    %5705 = vmatprep.subr.bf16.mxu0 %v2713
    %5706 = vmatpush1.bf16.msra.mxu0 %v2712
    %5707 = vmatprep.subr.bf16.mxu0 %v2721
    %5708 = vmatpush1.bf16.msra.mxu0 %v2720
    %5709 = vmatprep.subr.bf16.mxu0 %v2729
    %5710 = vmatpush1.bf16.msra.mxu0 %v2728
    %5711 = vmatprep.subr.bf16.mxu0 %v2737
    %5712 = vmatpush1.bf16.msra.mxu0 %v2736
    %5713 = vmatprep.subr.bf16.mxu0 %v2745
    %5714 = vmatpush1.bf16.msra.mxu0 %v2744
    %5715 = vmatprep.subr.bf16.mxu0 %v2753
    %5716 = vmatpush1.bf16.msra.mxu0 %v2752
    %5717 = vmatprep.mubr.bf16.mxu0 %v185
    %5718 = vmatmul.mubr.bf16.gmra.mrb[0].mxu0 %v184
    %v5719 = vpop.f32.mrb[0].mxu0
    %v5720 = vadd.f32 %v5679, %v5719
    %v5721 = vpop.f32.mrb[0].mxu0
    %v5722 = vadd.f32 %v5681, %v5721
    %v5723 = vpop.f32.mrb[0].mxu0
    %v5724 = vpop.f32.mrb[0].mxu0
    %5725 = vdwg.mxu0
    %5726 = vmatprep.subr.bf16.mxu0 %v2761
    %5727 = vmatpush1.bf16.msra.mxu0 %v2760
    %5728 = vmatprep.subr.bf16.mxu0 %v2769
    %5729 = vmatpush1.bf16.msra.mxu0 %v2768
    %5730 = vmatprep.subr.bf16.mxu0 %v2777
    %5731 = vmatpush1.bf16.msra.mxu0 %v2776
    %5732 = vmatprep.subr.bf16.mxu0 %v2785
    %5733 = vmatpush1.bf16.msra.mxu0 %v2784
    %5734 = vmatprep.subr.bf16.mxu0 %v2793
    %5735 = vmatpush1.bf16.msra.mxu0 %v2792
    %5736 = vmatprep.subr.bf16.mxu0 %v2801
    %5737 = vmatpush1.bf16.msra.mxu0 %v2800
    %5738 = vmatprep.subr.bf16.mxu0 %v2809
    %5739 = vmatpush1.bf16.msra.mxu0 %v2808
    %5740 = vmatprep.subr.bf16.mxu0 %v2817
    %5741 = vmatpush1.bf16.msra.mxu0 %v2816
    %5742 = vmatprep.subr.bf16.mxu0 %v2825
    %5743 = vmatpush1.bf16.msra.mxu0 %v2824
    %5744 = vmatprep.subr.bf16.mxu0 %v2833
    %5745 = vmatpush1.bf16.msra.mxu0 %v2832
    %5746 = vmatprep.subr.bf16.mxu0 %v2841
    %5747 = vmatpush1.bf16.msra.mxu0 %v2840
    %5748 = vmatprep.subr.bf16.mxu0 %v2849
    %5749 = vmatpush1.bf16.msra.mxu0 %v2848
    %5750 = vmatprep.subr.bf16.mxu0 %v2857
    %5751 = vmatpush1.bf16.msra.mxu0 %v2856
    %5752 = vmatprep.subr.bf16.mxu0 %v2865
    %5753 = vmatpush1.bf16.msra.mxu0 %v2864
    %5754 = vmatprep.subr.bf16.mxu0 %v2873
    %5755 = vmatpush1.bf16.msra.mxu0 %v2872
    %5756 = vmatprep.subr.bf16.mxu0 %v2881
    %5757 = vmatpush1.bf16.msra.mxu0 %v2880
    %5758 = vmatprep.mubr.bf16.mxu0 %v187
    %5759 = vmatmul.mubr.bf16.gmra.mrb[0].mxu0 %v186
    %v5760 = vpop.f32.mrb[0].mxu0
    %v5761 = vadd.f32 %v5720, %v5760
    %v5762 = vpop.f32.mrb[0].mxu0
    %v5763 = vadd.f32 %v5722, %v5762
    %v5764 = vpop.f32.mrb[0].mxu0
    %v5765 = vpop.f32.mrb[0].mxu0
    %5766 = vdwg.mxu0
    %5767 = vmatprep.subr.bf16.mxu0 %v2889
    %5768 = vmatpush1.bf16.msra.mxu0 %v2888
    %5769 = vmatprep.subr.bf16.mxu0 %v2897
    %5770 = vmatpush1.bf16.msra.mxu0 %v2896
    %5771 = vmatprep.subr.bf16.mxu0 %v2905
    %5772 = vmatpush1.bf16.msra.mxu0 %v2904
    %5773 = vmatprep.subr.bf16.mxu0 %v2913
    %5774 = vmatpush1.bf16.msra.mxu0 %v2912
    %5775 = vmatprep.subr.bf16.mxu0 %v2921
    %5776 = vmatpush1.bf16.msra.mxu0 %v2920
    %5777 = vmatprep.subr.bf16.mxu0 %v2929
    %5778 = vmatpush1.bf16.msra.mxu0 %v2928
    %5779 = vmatprep.subr.bf16.mxu0 %v2937
    %5780 = vmatpush1.bf16.msra.mxu0 %v2936
    %5781 = vmatprep.subr.bf16.mxu0 %v2945
    %5782 = vmatpush1.bf16.msra.mxu0 %v2944
    %5783 = vmatprep.subr.bf16.mxu0 %v2953
    %5784 = vmatpush1.bf16.msra.mxu0 %v2952
    %5785 = vmatprep.subr.bf16.mxu0 %v2961
    %5786 = vmatpush1.bf16.msra.mxu0 %v2960
    %5787 = vmatprep.subr.bf16.mxu0 %v2969
    %5788 = vmatpush1.bf16.msra.mxu0 %v2968
    %5789 = vmatprep.subr.bf16.mxu0 %v2977
    %5790 = vmatpush1.bf16.msra.mxu0 %v2976
    %5791 = vmatprep.subr.bf16.mxu0 %v2985
    %5792 = vmatpush1.bf16.msra.mxu0 %v2984
    %5793 = vmatprep.subr.bf16.mxu0 %v2993
    %5794 = vmatpush1.bf16.msra.mxu0 %v2992
    %5795 = vmatprep.subr.bf16.mxu0 %v3001
    %5796 = vmatpush1.bf16.msra.mxu0 %v3000
    %5797 = vmatprep.subr.bf16.mxu0 %v3009
    %5798 = vmatpush1.bf16.msra.mxu0 %v3008
    %5799 = vmatprep.mubr.bf16.mxu0 %v189
    %5800 = vmatmul.mubr.bf16.gmra.mrb[0].mxu0 %v188
    %v5801 = vpop.f32.mrb[0].mxu0
    %v5802 = vadd.f32 %v5761, %v5801
    %v5803 = vpop.f32.mrb[0].mxu0
    %v5804 = vadd.f32 %v5763, %v5803
    %v5805 = vpop.f32.mrb[0].mxu0
    %v5806 = vpop.f32.mrb[0].mxu0
    %5807 = vdwg.mxu0
    %5808 = vmatprep.subr.bf16.mxu0 %v3017
    %5809 = vmatpush1.bf16.msra.mxu0 %v3016
    %5810 = vmatprep.subr.bf16.mxu0 %v3025
    %5811 = vmatpush1.bf16.msra.mxu0 %v3024
    %5812 = vmatprep.subr.bf16.mxu0 %v3033
    %5813 = vmatpush1.bf16.msra.mxu0 %v3032
    %5814 = vmatprep.subr.bf16.mxu0 %v3041
    %5815 = vmatpush1.bf16.msra.mxu0 %v3040
    %5816 = vmatprep.subr.bf16.mxu0 %v3049
    %5817 = vmatpush1.bf16.msra.mxu0 %v3048
    %5818 = vmatprep.subr.bf16.mxu0 %v3057
    %5819 = vmatpush1.bf16.msra.mxu0 %v3056
    %5820 = vmatprep.subr.bf16.mxu0 %v3065
    %5821 = vmatpush1.bf16.msra.mxu0 %v3064
    %5822 = vmatprep.subr.bf16.mxu0 %v3073
    %5823 = vmatpush1.bf16.msra.mxu0 %v3072
    %5824 = vmatprep.subr.bf16.mxu0 %v3081
    %5825 = vmatpush1.bf16.msra.mxu0 %v3080
    %5826 = vmatprep.subr.bf16.mxu0 %v3089
    %5827 = vmatpush1.bf16.msra.mxu0 %v3088
    %5828 = vmatprep.subr.bf16.mxu0 %v3097
    %5829 = vmatpush1.bf16.msra.mxu0 %v3096
    %5830 = vmatprep.subr.bf16.mxu0 %v3105
    %5831 = vmatpush1.bf16.msra.mxu0 %v3104
    %5832 = vmatprep.subr.bf16.mxu0 %v3113
    %5833 = vmatpush1.bf16.msra.mxu0 %v3112
    %5834 = vmatprep.subr.bf16.mxu0 %v3121
    %5835 = vmatpush1.bf16.msra.mxu0 %v3120
    %5836 = vmatprep.subr.bf16.mxu0 %v3129
    %5837 = vmatpush1.bf16.msra.mxu0 %v3128
    %5838 = vmatprep.subr.bf16.mxu0 %v3137
    %5839 = vmatpush1.bf16.msra.mxu0 %v3136
    %5840 = vmatprep.mubr.bf16.mxu0 %v191
    %5841 = vmatmul.mubr.bf16.gmra.mrb[0].mxu0 %v190
    %v5842 = vpop.f32.mrb[0].mxu0
    %v5843 = vadd.f32 %v5802, %v5842
    %v5844 = vpop.f32.mrb[0].mxu0
    %v5845 = vadd.f32 %v5804, %v5844
    %v5846 = vpop.f32.mrb[0].mxu0
    %v5847 = vpop.f32.mrb[0].mxu0
    %5848 = vdwg.mxu0
    %5849 = vmatprep.subr.bf16.mxu0 %v3145
    %5850 = vmatpush1.bf16.msra.mxu0 %v3144
    %5851 = vmatprep.subr.bf16.mxu0 %v3153
    %5852 = vmatpush1.bf16.msra.mxu0 %v3152
    %5853 = vmatprep.subr.bf16.mxu0 %v3161
    %5854 = vmatpush1.bf16.msra.mxu0 %v3160
    %5855 = vmatprep.subr.bf16.mxu0 %v3169
    %5856 = vmatpush1.bf16.msra.mxu0 %v3168
    %5857 = vmatprep.subr.bf16.mxu0 %v3177
    %5858 = vmatpush1.bf16.msra.mxu0 %v3176
    %5859 = vmatprep.subr.bf16.mxu0 %v3185
    %5860 = vmatpush1.bf16.msra.mxu0 %v3184
    %5861 = vmatprep.subr.bf16.mxu0 %v3193
    %5862 = vmatpush1.bf16.msra.mxu0 %v3192
    %5863 = vmatprep.subr.bf16.mxu0 %v3201
    %5864 = vmatpush1.bf16.msra.mxu0 %v3200
    %5865 = vmatprep.subr.bf16.mxu0 %v3209
    %5866 = vmatpush1.bf16.msra.mxu0 %v3208
    %5867 = vmatprep.subr.bf16.mxu0 %v3217
    %5868 = vmatpush1.bf16.msra.mxu0 %v3216
    %5869 = vmatprep.subr.bf16.mxu0 %v3225
    %5870 = vmatpush1.bf16.msra.mxu0 %v3224
    %5871 = vmatprep.subr.bf16.mxu0 %v3233
    %5872 = vmatpush1.bf16.msra.mxu0 %v3232
    %5873 = vmatprep.subr.bf16.mxu0 %v3241
    %5874 = vmatpush1.bf16.msra.mxu0 %v3240
    %5875 = vmatprep.subr.bf16.mxu0 %v3249
    %5876 = vmatpush1.bf16.msra.mxu0 %v3248
    %5877 = vmatprep.subr.bf16.mxu0 %v3257
    %5878 = vmatpush1.bf16.msra.mxu0 %v3256
    %5879 = vmatprep.subr.bf16.mxu0 %v3265
    %5880 = vmatpush1.bf16.msra.mxu0 %v3264
    %5881 = vmatprep.mubr.bf16.mxu0 %v193
    %5882 = vmatmul.mubr.bf16.gmra.mrb[0].mxu0 %v192
    %v5883 = vpop.f32.mrb[0].mxu0
    %v5884 = vadd.f32 %v5843, %v5883
    %v5885 = vpop.f32.mrb[0].mxu0
    %v5886 = vadd.f32 %v5845, %v5885
    %v5887 = vpop.f32.mrb[0].mxu0
    %v5888 = vpop.f32.mrb[0].mxu0
    %5889 = vdwg.mxu0
    %v5890 = vld [vmem:[#allocation7] sm:$0xff]
    %v5892 = vlaneseq
    %v5893 = vshrl.u32 %v5892, 7
    %v5894 = vsub.s32 0, %v5893
    %v5895 = vrot.slane %v5890, %v5894
    %v5896 = vlaneseq
    %v5897 = vshrl.u32 %v5896, 7
    %v5898 = vsub.s32 1, %v5897
    %v5899 = vrot.slane %v5890, %v5898
    %v5900 = vlaneseq
    %v5901 = vshrl.u32 %v5900, 7
    %v5902 = vsub.s32 2, %v5901
    %v5903 = vrot.slane %v5890, %v5902
    %v5904 = vlaneseq
    %v5905 = vshrl.u32 %v5904, 7
    %v5906 = vsub.s32 3, %v5905
    %v5907 = vrot.slane %v5890, %v5906
    %v5908 = vlaneseq
    %v5909 = vshrl.u32 %v5908, 7
    %v5910 = vsub.s32 4, %v5909
    %v5911 = vrot.slane %v5890, %v5910
    %v5912 = vlaneseq
    %v5913 = vshrl.u32 %v5912, 7
    %v5914 = vsub.s32 5, %v5913
    %v5915 = vrot.slane %v5890, %v5914
    %v5916 = vlaneseq
    %v5917 = vshrl.u32 %v5916, 7
    %v5918 = vsub.s32 6, %v5917
    %v5919 = vrot.slane %v5890, %v5918
    %v5920 = vlaneseq
    %v5921 = vshrl.u32 %v5920, 7
    %v5922 = vsub.s32 7, %v5921
    %v5923 = vrot.slane %v5890, %v5922
    %v5932 = vmul.f32 %v3916, %v5895
    %v5933 = vmul.f32 %v3918, %v5899
    %v5934 = vmul.f32 %v4572, %v5903
    %v5935 = vmul.f32 %v4574, %v5907
    %v5936 = vmul.f32 %v5228, %v5911
    %v5937 = vmul.f32 %v5230, %v5915
    %v5938 = vmul.f32 %v5884, %v5919
    %v5939 = vmul.f32 %v5886, %v5923
    %v5940 = vld [vmem:[#allocation8] sm:$0xff]
    %v5942 = vlaneseq
    %v5943 = vshrl.u32 %v5942, 7
    %v5944 = vsub.s32 0, %v5943
    %v5945 = vrot.slane %v5940, %v5944
    %v5946 = vlaneseq
    %v5947 = vshrl.u32 %v5946, 7
    %v5948 = vsub.s32 1, %v5947
    %v5949 = vrot.slane %v5940, %v5948
    %v5950 = vlaneseq
    %v5951 = vshrl.u32 %v5950, 7
    %v5952 = vsub.s32 2, %v5951
    %v5953 = vrot.slane %v5940, %v5952
    %v5954 = vlaneseq
    %v5955 = vshrl.u32 %v5954, 7
    %v5956 = vsub.s32 3, %v5955
    %v5957 = vrot.slane %v5940, %v5956
    %v5958 = vlaneseq
    %v5959 = vshrl.u32 %v5958, 7
    %v5960 = vsub.s32 4, %v5959
    %v5961 = vrot.slane %v5940, %v5960
    %v5962 = vlaneseq
    %v5963 = vshrl.u32 %v5962, 7
    %v5964 = vsub.s32 5, %v5963
    %v5965 = vrot.slane %v5940, %v5964
    %v5966 = vlaneseq
    %v5967 = vshrl.u32 %v5966, 7
    %v5968 = vsub.s32 6, %v5967
    %v5969 = vrot.slane %v5940, %v5968
    %v5970 = vlaneseq
    %v5971 = vshrl.u32 %v5970, 7
    %v5972 = vsub.s32 7, %v5971
    %v5973 = vrot.slane %v5940, %v5972
    %v5982 = vadd.f32 %v5932, %v5945
    %v5983 = vadd.f32 %v5933, %v5949
    %v5984 = vadd.f32 %v5934, %v5953
    %v5985 = vadd.f32 %v5935, %v5957
    %v5986 = vadd.f32 %v5936, %v5961
    %v5987 = vadd.f32 %v5937, %v5965
    %v5988 = vadd.f32 %v5938, %v5969
    %v5989 = vadd.f32 %v5939, %v5973
    %v5990 = vmax.f32 %v5982, 0.0
    %v5991 = vmax.f32 %v5983, 0.0
    %v5992 = vmax.f32 %v5984, 0.0
    %v5993 = vmax.f32 %v5985, 0.0
    %v5994 = vmax.f32 %v5986, 0.0
    %v5995 = vmax.f32 %v5987, 0.0
    %v5996 = vmax.f32 %v5988, 0.0
    %v5997 = vmax.f32 %v5989, 0.0
    %v5998 = vpack.c.bf16 %v5990, %v5990
    %v5999 = vpack.c.bf16 %v5991, %v5991
    %v6000 = vpack.c.bf16 %v5992, %v5992
    %v6001 = vpack.c.bf16 %v5993, %v5993
    %v6002 = vpack.c.bf16 %v5994, %v5994
    %v6003 = vpack.c.bf16 %v5995, %v5995
    %v6004 = vpack.c.bf16 %v5996, %v5996
    %v6005 = vpack.c.bf16 %v5997, %v5997
    %v6006 = vld [vmem:[#allocation10] sm:$0xff]
    %v6007 = vld [vmem:[#allocation10 + $0x8] sm:$0xff]
    %v6008 = vld [vmem:[#allocation10 + $0x10] sm:$0xff]
    %v6009 = vld [vmem:[#allocation10 + $0x18] sm:$0xff]
    %v6010 = vld [vmem:[#allocation10 + $0x20] sm:$0xff]
    %v6011 = vld [vmem:[#allocation10 + $0x28] sm:$0xff]
    %v6012 = vld [vmem:[#allocation10 + $0x30] sm:$0xff]
    %v6013 = vld [vmem:[#allocation10 + $0x38] sm:$0xff]
    %v6014 = vld [vmem:[#allocation10 + $0x40] sm:$0xff]
    %v6015 = vld [vmem:[#allocation10 + $0x48] sm:$0xff]
    %v6016 = vld [vmem:[#allocation10 + $0x50] sm:$0xff]
    %v6017 = vld [vmem:[#allocation10 + $0x58] sm:$0xff]
    %v6018 = vld [vmem:[#allocation10 + $0x60] sm:$0xff]
    %v6019 = vld [vmem:[#allocation10 + $0x68] sm:$0xff]
    %v6020 = vld [vmem:[#allocation10 + $0x70] sm:$0xff]
    %v6021 = vld [vmem:[#allocation10 + $0x78] sm:$0xff]
    %v6022 = vld [vmem:[#allocation10 + $0x80] sm:$0xff]
    %v6023 = vld [vmem:[#allocation10 + $0x88] sm:$0xff]
    %v6024 = vld [vmem:[#allocation10 + $0x90] sm:$0xff]
    %v6025 = vld [vmem:[#allocation10 + $0x98] sm:$0xff]
    %v6026 = vld [vmem:[#allocation10 + $0xa0] sm:$0xff]
    %v6027 = vld [vmem:[#allocation10 + $0xa8] sm:$0xff]
    %v6028 = vld [vmem:[#allocation10 + $0xb0] sm:$0xff]
    %v6029 = vld [vmem:[#allocation10 + $0xb8] sm:$0xff]
    %v6030 = vld [vmem:[#allocation10 + $0xc0] sm:$0xff]
    %v6031 = vld [vmem:[#allocation10 + $0xc8] sm:$0xff]
    %v6032 = vld [vmem:[#allocation10 + $0xd0] sm:$0xff]
    %v6033 = vld [vmem:[#allocation10 + $0xd8] sm:$0xff]
    %v6034 = vld [vmem:[#allocation10 + $0xe0] sm:$0xff]
    %v6035 = vld [vmem:[#allocation10 + $0xe8] sm:$0xff]
    %v6036 = vld [vmem:[#allocation10 + $0xf0] sm:$0xff]
    %v6037 = vld [vmem:[#allocation10 + $0xf8] sm:$0xff]
    %v6038 = vld [vmem:[#allocation10 + $0x100] sm:$0xff]
    %v6039 = vld [vmem:[#allocation10 + $0x108] sm:$0xff]
    %v6040 = vld [vmem:[#allocation10 + $0x110] sm:$0xff]
    %v6041 = vld [vmem:[#allocation10 + $0x118] sm:$0xff]
    %v6042 = vld [vmem:[#allocation10 + $0x120] sm:$0xff]
    %v6043 = vld [vmem:[#allocation10 + $0x128] sm:$0xff]
    %v6044 = vld [vmem:[#allocation10 + $0x130] sm:$0xff]
    %v6045 = vld [vmem:[#allocation10 + $0x138] sm:$0xff]
    %v6046 = vld [vmem:[#allocation10 + $0x140] sm:$0xff]
    %v6047 = vld [vmem:[#allocation10 + $0x148] sm:$0xff]
    %v6048 = vld [vmem:[#allocation10 + $0x150] sm:$0xff]
    %v6049 = vld [vmem:[#allocation10 + $0x158] sm:$0xff]
    %v6050 = vld [vmem:[#allocation10 + $0x160] sm:$0xff]
    %v6051 = vld [vmem:[#allocation10 + $0x168] sm:$0xff]
    %v6052 = vld [vmem:[#allocation10 + $0x170] sm:$0xff]
    %v6053 = vld [vmem:[#allocation10 + $0x178] sm:$0xff]
    %v6054 = vld [vmem:[#allocation10 + $0x180] sm:$0xff]
    %v6055 = vld [vmem:[#allocation10 + $0x188] sm:$0xff]
    %v6056 = vld [vmem:[#allocation10 + $0x190] sm:$0xff]
    %v6057 = vld [vmem:[#allocation10 + $0x198] sm:$0xff]
    %v6058 = vld [vmem:[#allocation10 + $0x1a0] sm:$0xff]
    %v6059 = vld [vmem:[#allocation10 + $0x1a8] sm:$0xff]
    %v6060 = vld [vmem:[#allocation10 + $0x1b0] sm:$0xff]
    %v6061 = vld [vmem:[#allocation10 + $0x1b8] sm:$0xff]
    %v6062 = vld [vmem:[#allocation10 + $0x1c0] sm:$0xff]
    %v6063 = vld [vmem:[#allocation10 + $0x1c8] sm:$0xff]
    %v6064 = vld [vmem:[#allocation10 + $0x1d0] sm:$0xff]
    %v6065 = vld [vmem:[#allocation10 + $0x1d8] sm:$0xff]
    %v6066 = vld [vmem:[#allocation10 + $0x1e0] sm:$0xff]
    %v6067 = vld [vmem:[#allocation10 + $0x1e8] sm:$0xff]
    %v6068 = vld [vmem:[#allocation10 + $0x1f0] sm:$0xff]
    %v6069 = vld [vmem:[#allocation10 + $0x1f8] sm:$0xff]
    %v6070 = vunpack.c.l.s8.bf16 %v6006
    %v6071 = vunpack.c.l.s8.bf16 %v6007
    %v6072 = vunpack.c.h.s8.bf16 %v6006
    %v6073 = vunpack.c.h.s8.bf16 %v6007
    %v6074 = vunpack.c.l.s8.bf16 %v6008
    %v6075 = vunpack.c.l.s8.bf16 %v6009
    %v6076 = vunpack.c.h.s8.bf16 %v6008
    %v6077 = vunpack.c.h.s8.bf16 %v6009
    %v6078 = vunpack.c.l.s8.bf16 %v6010
    %v6079 = vunpack.c.l.s8.bf16 %v6011
    %v6080 = vunpack.c.h.s8.bf16 %v6010
    %v6081 = vunpack.c.h.s8.bf16 %v6011
    %v6082 = vunpack.c.l.s8.bf16 %v6012
    %v6083 = vunpack.c.l.s8.bf16 %v6013
    %v6084 = vunpack.c.h.s8.bf16 %v6012
    %v6085 = vunpack.c.h.s8.bf16 %v6013
    %v6086 = vunpack.c.l.s8.bf16 %v6014
    %v6087 = vunpack.c.l.s8.bf16 %v6015
    %v6088 = vunpack.c.h.s8.bf16 %v6014
    %v6089 = vunpack.c.h.s8.bf16 %v6015
    %v6090 = vunpack.c.l.s8.bf16 %v6016
    %v6091 = vunpack.c.l.s8.bf16 %v6017
    %v6092 = vunpack.c.h.s8.bf16 %v6016
    %v6093 = vunpack.c.h.s8.bf16 %v6017
    %v6094 = vunpack.c.l.s8.bf16 %v6018
    %v6095 = vunpack.c.l.s8.bf16 %v6019
    %v6096 = vunpack.c.h.s8.bf16 %v6018
    %v6097 = vunpack.c.h.s8.bf16 %v6019
    %v6098 = vunpack.c.l.s8.bf16 %v6020
    %v6099 = vunpack.c.l.s8.bf16 %v6021
    %v6100 = vunpack.c.h.s8.bf16 %v6020
    %v6101 = vunpack.c.h.s8.bf16 %v6021
    %v6102 = vunpack.c.l.s8.bf16 %v6022
    %v6103 = vunpack.c.l.s8.bf16 %v6023
    %v6104 = vunpack.c.h.s8.bf16 %v6022
    %v6105 = vunpack.c.h.s8.bf16 %v6023
    %v6106 = vunpack.c.l.s8.bf16 %v6024
    %v6107 = vunpack.c.l.s8.bf16 %v6025
    %v6108 = vunpack.c.h.s8.bf16 %v6024
    %v6109 = vunpack.c.h.s8.bf16 %v6025
    %v6110 = vunpack.c.l.s8.bf16 %v6026
    %v6111 = vunpack.c.l.s8.bf16 %v6027
    %v6112 = vunpack.c.h.s8.bf16 %v6026
    %v6113 = vunpack.c.h.s8.bf16 %v6027
    %v6114 = vunpack.c.l.s8.bf16 %v6028
    %v6115 = vunpack.c.l.s8.bf16 %v6029
    %v6116 = vunpack.c.h.s8.bf16 %v6028
    %v6117 = vunpack.c.h.s8.bf16 %v6029
    %v6118 = vunpack.c.l.s8.bf16 %v6030
    %v6119 = vunpack.c.l.s8.bf16 %v6031
    %v6120 = vunpack.c.h.s8.bf16 %v6030
    %v6121 = vunpack.c.h.s8.bf16 %v6031
    %v6122 = vunpack.c.l.s8.bf16 %v6032
    %v6123 = vunpack.c.l.s8.bf16 %v6033
    %v6124 = vunpack.c.h.s8.bf16 %v6032
    %v6125 = vunpack.c.h.s8.bf16 %v6033
    %v6126 = vunpack.c.l.s8.bf16 %v6034
    %v6127 = vunpack.c.l.s8.bf16 %v6035
    %v6128 = vunpack.c.h.s8.bf16 %v6034
    %v6129 = vunpack.c.h.s8.bf16 %v6035
    %v6130 = vunpack.c.l.s8.bf16 %v6036
    %v6131 = vunpack.c.l.s8.bf16 %v6037
    %v6132 = vunpack.c.h.s8.bf16 %v6036
    %v6133 = vunpack.c.h.s8.bf16 %v6037
    %v6134 = vunpack.c.l.s8.bf16 %v6038
    %v6135 = vunpack.c.l.s8.bf16 %v6039
    %v6136 = vunpack.c.h.s8.bf16 %v6038
    %v6137 = vunpack.c.h.s8.bf16 %v6039
    %v6138 = vunpack.c.l.s8.bf16 %v6040
    %v6139 = vunpack.c.l.s8.bf16 %v6041
    %v6140 = vunpack.c.h.s8.bf16 %v6040
    %v6141 = vunpack.c.h.s8.bf16 %v6041
    %v6142 = vunpack.c.l.s8.bf16 %v6042
    %v6143 = vunpack.c.l.s8.bf16 %v6043
    %v6144 = vunpack.c.h.s8.bf16 %v6042
    %v6145 = vunpack.c.h.s8.bf16 %v6043
    %v6146 = vunpack.c.l.s8.bf16 %v6044
    %v6147 = vunpack.c.l.s8.bf16 %v6045
    %v6148 = vunpack.c.h.s8.bf16 %v6044
    %v6149 = vunpack.c.h.s8.bf16 %v6045
    %v6150 = vunpack.c.l.s8.bf16 %v6046
    %v6151 = vunpack.c.l.s8.bf16 %v6047
    %v6152 = vunpack.c.h.s8.bf16 %v6046
    %v6153 = vunpack.c.h.s8.bf16 %v6047
    %v6154 = vunpack.c.l.s8.bf16 %v6048
    %v6155 = vunpack.c.l.s8.bf16 %v6049
    %v6156 = vunpack.c.h.s8.bf16 %v6048
    %v6157 = vunpack.c.h.s8.bf16 %v6049
    %v6158 = vunpack.c.l.s8.bf16 %v6050
    %v6159 = vunpack.c.l.s8.bf16 %v6051
    %v6160 = vunpack.c.h.s8.bf16 %v6050
    %v6161 = vunpack.c.h.s8.bf16 %v6051
    %v6162 = vunpack.c.l.s8.bf16 %v6052
    %v6163 = vunpack.c.l.s8.bf16 %v6053
    %v6164 = vunpack.c.h.s8.bf16 %v6052
    %v6165 = vunpack.c.h.s8.bf16 %v6053
    %v6166 = vunpack.c.l.s8.bf16 %v6054
    %v6167 = vunpack.c.l.s8.bf16 %v6055
    %v6168 = vunpack.c.h.s8.bf16 %v6054
    %v6169 = vunpack.c.h.s8.bf16 %v6055
    %v6170 = vunpack.c.l.s8.bf16 %v6056
    %v6171 = vunpack.c.l.s8.bf16 %v6057
    %v6172 = vunpack.c.h.s8.bf16 %v6056
    %v6173 = vunpack.c.h.s8.bf16 %v6057
    %v6174 = vunpack.c.l.s8.bf16 %v6058
    %v6175 = vunpack.c.l.s8.bf16 %v6059
    %v6176 = vunpack.c.h.s8.bf16 %v6058
    %v6177 = vunpack.c.h.s8.bf16 %v6059
    %v6178 = vunpack.c.l.s8.bf16 %v6060
    %v6179 = vunpack.c.l.s8.bf16 %v6061
    %v6180 = vunpack.c.h.s8.bf16 %v6060
    %v6181 = vunpack.c.h.s8.bf16 %v6061
    %v6182 = vunpack.c.l.s8.bf16 %v6062
    %v6183 = vunpack.c.l.s8.bf16 %v6063
    %v6184 = vunpack.c.h.s8.bf16 %v6062
    %v6185 = vunpack.c.h.s8.bf16 %v6063
    %v6186 = vunpack.c.l.s8.bf16 %v6064
    %v6187 = vunpack.c.l.s8.bf16 %v6065
    %v6188 = vunpack.c.h.s8.bf16 %v6064
    %v6189 = vunpack.c.h.s8.bf16 %v6065
    %v6190 = vunpack.c.l.s8.bf16 %v6066
    %v6191 = vunpack.c.l.s8.bf16 %v6067
    %v6192 = vunpack.c.h.s8.bf16 %v6066
    %v6193 = vunpack.c.h.s8.bf16 %v6067
    %v6194 = vunpack.c.l.s8.bf16 %v6068
    %v6195 = vunpack.c.l.s8.bf16 %v6069
    %v6196 = vunpack.c.h.s8.bf16 %v6068
    %v6197 = vunpack.c.h.s8.bf16 %v6069
    %6198 = vmatprep.subr.bf16.mxu0 %v6071
    %6199 = vmatpush1.bf16.msra.mxu0 %v6070
    %6200 = vmatprep.subr.bf16.mxu0 %v6073
    %6201 = vmatpush1.bf16.msra.mxu0 %v6072
    %6202 = vmatprep.subr.bf16.mxu0 %v6075
    %6203 = vmatpush1.bf16.msra.mxu0 %v6074
    %6204 = vmatprep.subr.bf16.mxu0 %v6077
    %6205 = vmatpush1.bf16.msra.mxu0 %v6076
    %6206 = vmatprep.subr.bf16.mxu0 %v6079
    %6207 = vmatpush1.bf16.msra.mxu0 %v6078
    %6208 = vmatprep.subr.bf16.mxu0 %v6081
    %6209 = vmatpush1.bf16.msra.mxu0 %v6080
    %6210 = vmatprep.subr.bf16.mxu0 %v6083
    %6211 = vmatpush1.bf16.msra.mxu0 %v6082
    %6212 = vmatprep.subr.bf16.mxu0 %v6085
    %6213 = vmatpush1.bf16.msra.mxu0 %v6084
    %6214 = vmatprep.subr.bf16.mxu0 %v6087
    %6215 = vmatpush1.bf16.msra.mxu0 %v6086
    %6216 = vmatprep.subr.bf16.mxu0 %v6089
    %6217 = vmatpush1.bf16.msra.mxu0 %v6088
    %6218 = vmatprep.subr.bf16.mxu0 %v6091
    %6219 = vmatpush1.bf16.msra.mxu0 %v6090
    %6220 = vmatprep.subr.bf16.mxu0 %v6093
    %6221 = vmatpush1.bf16.msra.mxu0 %v6092
    %6222 = vmatprep.subr.bf16.mxu0 %v6095
    %6223 = vmatpush1.bf16.msra.mxu0 %v6094
    %6224 = vmatprep.subr.bf16.mxu0 %v6097
    %6225 = vmatpush1.bf16.msra.mxu0 %v6096
    %6226 = vmatprep.subr.bf16.mxu0 %v6099
    %6227 = vmatpush1.bf16.msra.mxu0 %v6098
    %6228 = vmatprep.subr.bf16.mxu0 %v6101
    %6229 = vmatpush1.bf16.msra.mxu0 %v6100
    %6230 = vmatprep.mubr.bf16.mxu0 %v5999
    %6231 = vmatmul.mubr.bf16.gmra.mrb[0].mxu0 %v5998
    %v6232 = vpop.f32.mrb[0].mxu0
    %v6233 = vadd.f32 0.0, %v6232
    %v6234 = vpop.f32.mrb[0].mxu0
    %v6235 = vadd.f32 0.0, %v6234
    %v6236 = vpop.f32.mrb[0].mxu0
    %v6237 = vpop.f32.mrb[0].mxu0
    %6238 = vdwg.mxu0
    %6239 = vmatprep.subr.bf16.mxu0 %v6103
    %6240 = vmatpush1.bf16.msra.mxu0 %v6102
    %6241 = vmatprep.subr.bf16.mxu0 %v6105
    %6242 = vmatpush1.bf16.msra.mxu0 %v6104
    %6243 = vmatprep.subr.bf16.mxu0 %v6107
    %6244 = vmatpush1.bf16.msra.mxu0 %v6106
    %6245 = vmatprep.subr.bf16.mxu0 %v6109
    %6246 = vmatpush1.bf16.msra.mxu0 %v6108
    %6247 = vmatprep.subr.bf16.mxu0 %v6111
    %6248 = vmatpush1.bf16.msra.mxu0 %v6110
    %6249 = vmatprep.subr.bf16.mxu0 %v6113
    %6250 = vmatpush1.bf16.msra.mxu0 %v6112
    %6251 = vmatprep.subr.bf16.mxu0 %v6115
    %6252 = vmatpush1.bf16.msra.mxu0 %v6114
    %6253 = vmatprep.subr.bf16.mxu0 %v6117
    %6254 = vmatpush1.bf16.msra.mxu0 %v6116
    %6255 = vmatprep.subr.bf16.mxu0 %v6119
    %6256 = vmatpush1.bf16.msra.mxu0 %v6118
    %6257 = vmatprep.subr.bf16.mxu0 %v6121
    %6258 = vmatpush1.bf16.msra.mxu0 %v6120
    %6259 = vmatprep.subr.bf16.mxu0 %v6123
    %6260 = vmatpush1.bf16.msra.mxu0 %v6122
    %6261 = vmatprep.subr.bf16.mxu0 %v6125
    %6262 = vmatpush1.bf16.msra.mxu0 %v6124
    %6263 = vmatprep.subr.bf16.mxu0 %v6127
    %6264 = vmatpush1.bf16.msra.mxu0 %v6126
    %6265 = vmatprep.subr.bf16.mxu0 %v6129
    %6266 = vmatpush1.bf16.msra.mxu0 %v6128
    %6267 = vmatprep.subr.bf16.mxu0 %v6131
    %6268 = vmatpush1.bf16.msra.mxu0 %v6130
    %6269 = vmatprep.subr.bf16.mxu0 %v6133
    %6270 = vmatpush1.bf16.msra.mxu0 %v6132
    %6271 = vmatprep.mubr.bf16.mxu0 %v6001
    %6272 = vmatmul.mubr.bf16.gmra.mrb[0].mxu0 %v6000
    %v6273 = vpop.f32.mrb[0].mxu0
    %v6274 = vadd.f32 %v6233, %v6273
    %v6275 = vpop.f32.mrb[0].mxu0
    %v6276 = vadd.f32 %v6235, %v6275
    %v6277 = vpop.f32.mrb[0].mxu0
    %v6278 = vpop.f32.mrb[0].mxu0
    %6279 = vdwg.mxu0
    %6280 = vmatprep.subr.bf16.mxu0 %v6135
    %6281 = vmatpush1.bf16.msra.mxu0 %v6134
    %6282 = vmatprep.subr.bf16.mxu0 %v6137
    %6283 = vmatpush1.bf16.msra.mxu0 %v6136
    %6284 = vmatprep.subr.bf16.mxu0 %v6139
    %6285 = vmatpush1.bf16.msra.mxu0 %v6138
    %6286 = vmatprep.subr.bf16.mxu0 %v6141
    %6287 = vmatpush1.bf16.msra.mxu0 %v6140
    %6288 = vmatprep.subr.bf16.mxu0 %v6143
    %6289 = vmatpush1.bf16.msra.mxu0 %v6142
    %6290 = vmatprep.subr.bf16.mxu0 %v6145
    %6291 = vmatpush1.bf16.msra.mxu0 %v6144
    %6292 = vmatprep.subr.bf16.mxu0 %v6147
    %6293 = vmatpush1.bf16.msra.mxu0 %v6146
    %6294 = vmatprep.subr.bf16.mxu0 %v6149
    %6295 = vmatpush1.bf16.msra.mxu0 %v6148
    %6296 = vmatprep.subr.bf16.mxu0 %v6151
    %6297 = vmatpush1.bf16.msra.mxu0 %v6150
    %6298 = vmatprep.subr.bf16.mxu0 %v6153
    %6299 = vmatpush1.bf16.msra.mxu0 %v6152
    %6300 = vmatprep.subr.bf16.mxu0 %v6155
    %6301 = vmatpush1.bf16.msra.mxu0 %v6154
    %6302 = vmatprep.subr.bf16.mxu0 %v6157
    %6303 = vmatpush1.bf16.msra.mxu0 %v6156
    %6304 = vmatprep.subr.bf16.mxu0 %v6159
    %6305 = vmatpush1.bf16.msra.mxu0 %v6158
    %6306 = vmatprep.subr.bf16.mxu0 %v6161
    %6307 = vmatpush1.bf16.msra.mxu0 %v6160
    %6308 = vmatprep.subr.bf16.mxu0 %v6163
    %6309 = vmatpush1.bf16.msra.mxu0 %v6162
    %6310 = vmatprep.subr.bf16.mxu0 %v6165
    %6311 = vmatpush1.bf16.msra.mxu0 %v6164
    %6312 = vmatprep.mubr.bf16.mxu0 %v6003
    %6313 = vmatmul.mubr.bf16.gmra.mrb[0].mxu0 %v6002
    %v6314 = vpop.f32.mrb[0].mxu0
    %v6315 = vadd.f32 %v6274, %v6314
    %v6316 = vpop.f32.mrb[0].mxu0
    %v6317 = vadd.f32 %v6276, %v6316
    %v6318 = vpop.f32.mrb[0].mxu0
    %v6319 = vpop.f32.mrb[0].mxu0
    %6320 = vdwg.mxu0
    %6321 = vmatprep.subr.bf16.mxu0 %v6167
    %6322 = vmatpush1.bf16.msra.mxu0 %v6166
    %6323 = vmatprep.subr.bf16.mxu0 %v6169
    %6324 = vmatpush1.bf16.msra.mxu0 %v6168
    %6325 = vmatprep.subr.bf16.mxu0 %v6171
    %6326 = vmatpush1.bf16.msra.mxu0 %v6170
    %6327 = vmatprep.subr.bf16.mxu0 %v6173
    %6328 = vmatpush1.bf16.msra.mxu0 %v6172
    %6329 = vmatprep.subr.bf16.mxu0 %v6175
    %6330 = vmatpush1.bf16.msra.mxu0 %v6174
    %6331 = vmatprep.subr.bf16.mxu0 %v6177
    %6332 = vmatpush1.bf16.msra.mxu0 %v6176
    %6333 = vmatprep.subr.bf16.mxu0 %v6179
    %6334 = vmatpush1.bf16.msra.mxu0 %v6178
    %6335 = vmatprep.subr.bf16.mxu0 %v6181
    %6336 = vmatpush1.bf16.msra.mxu0 %v6180
    %6337 = vmatprep.subr.bf16.mxu0 %v6183
    %6338 = vmatpush1.bf16.msra.mxu0 %v6182
    %6339 = vmatprep.subr.bf16.mxu0 %v6185
    %6340 = vmatpush1.bf16.msra.mxu0 %v6184
    %6341 = vmatprep.subr.bf16.mxu0 %v6187
    %6342 = vmatpush1.bf16.msra.mxu0 %v6186
    %6343 = vmatprep.subr.bf16.mxu0 %v6189
    %6344 = vmatpush1.bf16.msra.mxu0 %v6188
    %6345 = vmatprep.subr.bf16.mxu0 %v6191
    %6346 = vmatpush1.bf16.msra.mxu0 %v6190
    %6347 = vmatprep.subr.bf16.mxu0 %v6193
    %6348 = vmatpush1.bf16.msra.mxu0 %v6192
    %6349 = vmatprep.subr.bf16.mxu0 %v6195
    %6350 = vmatpush1.bf16.msra.mxu0 %v6194
    %6351 = vmatprep.subr.bf16.mxu0 %v6197
    %6352 = vmatpush1.bf16.msra.mxu0 %v6196
    %6353 = vmatprep.mubr.bf16.mxu0 %v6005
    %6354 = vmatmul.mubr.bf16.gmra.mrb[0].mxu0 %v6004
    %v6355 = vpop.f32.mrb[0].mxu0
    %v6356 = vadd.f32 %v6315, %v6355
    %v6357 = vpop.f32.mrb[0].mxu0
    %v6358 = vadd.f32 %v6317, %v6357
    %v6359 = vpop.f32.mrb[0].mxu0
    %v6360 = vpop.f32.mrb[0].mxu0
    %6361 = vdwg.mxu0
    %v6362 = vld [vmem:[#allocation11] sm:$0x3]
    %v6364 = vlaneseq
    %v6365 = vshrl.u32 %v6364, 7
    %v6366 = vsub.s32 0, %v6365
    %v6367 = vrot.slane %v6362, %v6366
    %v6368 = vlaneseq
    %v6369 = vshrl.u32 %v6368, 7
    %v6370 = vsub.s32 1, %v6369
    %v6371 = vrot.slane %v6362, %v6370
    %v6374 = vmul.f32 %v6356, %v6367
    %v6375 = vmul.f32 %v6358, %v6371
    %v6376 = vld [vmem:[#allocation13] sm:$0x3]
    %v6378 = vlaneseq
    %v6379 = vshrl.u32 %v6378, 7
    %v6380 = vsub.s32 0, %v6379
    %v6381 = vrot.slane %v6376, %v6380
    %v6382 = vlaneseq
    %v6383 = vshrl.u32 %v6382, 7
    %v6384 = vsub.s32 1, %v6383
    %v6385 = vrot.slane %v6376, %v6384
    %v6388 = vadd.f32 %v6374, %v6381
    %v6389 = vadd.f32 %v6375, %v6385
    %v6390 = vmax.f32 %v6388, 0.0
    %v6391 = vmax.f32 %v6389, 0.0
    %v6392 = vld [vmem:[%s7] sm:$0xff]
    %v6393 = vld [vmem:[%s7 + $0x8] sm:$0xff]
    %v6394 = vld [vmem:[%s7 + $0x10] sm:$0xff]
    %v6395 = vld [vmem:[%s7 + $0x18] sm:$0xff]
    %v6396 = vld [vmem:[%s7 + $0x20] sm:$0xff]
    %v6397 = vld [vmem:[%s7 + $0x28] sm:$0xff]
    %v6398 = vld [vmem:[%s7 + $0x30] sm:$0xff]
    %v6399 = vld [vmem:[%s7 + $0x38] sm:$0xff]
    %v6400 = vld [vmem:[%s7 + $0x40] sm:$0xff]
    %v6401 = vld [vmem:[%s7 + $0x48] sm:$0xff]
    %v6402 = vld [vmem:[%s7 + $0x50] sm:$0xff]
    %v6403 = vld [vmem:[%s7 + $0x58] sm:$0xff]
    %v6404 = vld [vmem:[%s7 + $0x60] sm:$0xff]
    %v6405 = vld [vmem:[%s7 + $0x68] sm:$0xff]
    %v6406 = vld [vmem:[%s7 + $0x70] sm:$0xff]
    %v6407 = vld [vmem:[%s7 + $0x78] sm:$0xff]
    %v6408 = vld [vmem:[%s7 + $0x80] sm:$0xff]
    %v6409 = vld [vmem:[%s7 + $0x88] sm:$0xff]
    %v6410 = vld [vmem:[%s7 + $0x90] sm:$0xff]
    %v6411 = vld [vmem:[%s7 + $0x98] sm:$0xff]
    %v6412 = vld [vmem:[%s7 + $0xa0] sm:$0xff]
    %v6413 = vld [vmem:[%s7 + $0xa8] sm:$0xff]
    %v6414 = vld [vmem:[%s7 + $0xb0] sm:$0xff]
    %v6415 = vld [vmem:[%s7 + $0xb8] sm:$0xff]
    %v6416 = vld [vmem:[%s7 + $0xc0] sm:$0xff]
    %v6417 = vld [vmem:[%s7 + $0xc8] sm:$0xff]
    %v6418 = vld [vmem:[%s7 + $0xd0] sm:$0xff]
    %v6419 = vld [vmem:[%s7 + $0xd8] sm:$0xff]
    %v6420 = vld [vmem:[%s7 + $0xe0] sm:$0xff]
    %v6421 = vld [vmem:[%s7 + $0xe8] sm:$0xff]
    %v6422 = vld [vmem:[%s7 + $0xf0] sm:$0xff]
    %v6423 = vld [vmem:[%s7 + $0xf8] sm:$0xff]
    %v6424 = vld [vmem:[#allocation14] sm:$0x1]
    %v6426 = vlaneseq
    %v6427 = vshrl.u32 %v6426, 7
    %v6428 = vsub.s32 0, %v6427
    %v6429 = vrot.slane %v6424, %v6428
    %6431 = vmatprep.subr.mxu0 0.0
    %6432 = vmatpush1.msra.mxu0 %v6392
    %6433 = vmatprep.subr.mxu0 0.0
    %6434 = vmatpush1.msra.mxu0 %v6393
    %6435 = vmatprep.subr.mxu0 0.0
    %6436 = vmatpush1.msra.mxu0 %v6394
    %6437 = vmatprep.subr.mxu0 0.0
    %6438 = vmatpush1.msra.mxu0 %v6395
    %6439 = vmatprep.subr.mxu0 0.0
    %6440 = vmatpush1.msra.mxu0 %v6396
    %6441 = vmatprep.subr.mxu0 0.0
    %6442 = vmatpush1.msra.mxu0 %v6397
    %6443 = vmatprep.subr.mxu0 0.0
    %6444 = vmatpush1.msra.mxu0 %v6398
    %6445 = vmatprep.subr.mxu0 0.0
    %6446 = vmatpush1.msra.mxu0 %v6399
    %6447 = vmatprep.subr.mxu0 0.0
    %6448 = vmatpush1.msra.mxu0 %v6400
    %6449 = vmatprep.subr.mxu0 0.0
    %6450 = vmatpush1.msra.mxu0 %v6401
    %6451 = vmatprep.subr.mxu0 0.0
    %6452 = vmatpush1.msra.mxu0 %v6402
    %6453 = vmatprep.subr.mxu0 0.0
    %6454 = vmatpush1.msra.mxu0 %v6403
    %6455 = vmatprep.subr.mxu0 0.0
    %6456 = vmatpush1.msra.mxu0 %v6404
    %6457 = vmatprep.subr.mxu0 0.0
    %6458 = vmatpush1.msra.mxu0 %v6405
    %6459 = vmatprep.subr.mxu0 0.0
    %6460 = vmatpush1.msra.mxu0 %v6406
    %6461 = vmatprep.subr.mxu0 0.0
    %6462 = vmatpush1.msra.mxu0 %v6407
    %6463 = vmatprep.subr.mxu0 0.0
    %6464 = vmatpush1.msra.mxu0 %v6408
    %6465 = vmatprep.subr.mxu0 0.0
    %6466 = vmatpush1.msra.mxu0 %v6409
    %6467 = vmatprep.subr.mxu0 0.0
    %6468 = vmatpush1.msra.mxu0 %v6410
    %6469 = vmatprep.subr.mxu0 0.0
    %6470 = vmatpush1.msra.mxu0 %v6411
    %6471 = vmatprep.subr.mxu0 0.0
    %6472 = vmatpush1.msra.mxu0 %v6412
    %6473 = vmatprep.subr.mxu0 0.0
    %6474 = vmatpush1.msra.mxu0 %v6413
    %6475 = vmatprep.subr.mxu0 0.0
    %6476 = vmatpush1.msra.mxu0 %v6414
    %6477 = vmatprep.subr.mxu0 0.0
    %6478 = vmatpush1.msra.mxu0 %v6415
    %6479 = vmatprep.subr.mxu0 0.0
    %6480 = vmatpush1.msra.mxu0 %v6416
    %6481 = vmatprep.subr.mxu0 0.0
    %6482 = vmatpush1.msra.mxu0 %v6417
    %6483 = vmatprep.subr.mxu0 0.0
    %6484 = vmatpush1.msra.mxu0 %v6418
    %6485 = vmatprep.subr.mxu0 0.0
    %6486 = vmatpush1.msra.mxu0 %v6419
    %6487 = vmatprep.subr.mxu0 0.0
    %6488 = vmatpush1.msra.mxu0 %v6420
    %6489 = vmatprep.subr.mxu0 0.0
    %6490 = vmatpush1.msra.mxu0 %v6421
    %6491 = vmatprep.subr.mxu0 0.0
    %6492 = vmatpush1.msra.mxu0 %v6422
    %6493 = vmatprep.subr.mxu0 0.0
    %6494 = vmatpush1.msra.mxu0 %v6423
    %6495 = vmatprep.mubr.f32.mxu0 %v6391
    %6496 = vmatmul.mubr.f32.gmra.mrb[0].mxu0 %v6390
    %v6497 = vpop.f32.mrb[0].mxu0
    %v6498 = vadd.f32 %v6429, %v6497
    %v6499 = vpop.f32.mrb[0].mxu0
    %6500 = vdwg.mxu0
    %vm6501 = vcmask 64512
    %v6502 = vsel %vm6501, %v6498, -inf
    %6503 = vmax.xlane.f32.xlu0 %v6502
    %v6504 = vpop.xlane.xlu0 %6503
    %v6505 = vsub.f32 %v6498, %v6504
    %v6506 = vmul.f32 %v6505, 1.442695
    %v6507 = vpow.pop %v6506
    %v6508 = vsel %vm6501, %v6507, 0.0
    %6509 = vadd.xlane.f32.xlu0 %v6508
    %v6510 = vpop.xlane.xlu0 %6509
    %v6511 = vrcp.pop %v6510
    %v6512 = vmul.f32 %v6507, %v6511
    %6513 = vst.msk [vmem:[#allocation16] sm:$0xff] %vm6501, %v6512
    %vm6514 = vcmask 72768
    %6515 = vst.msk [vmem:[#allocation16] sm:$0xff] %vm6514, %v6498
    // Predicated region
    $region70: #{tpu_custom_call.1} parent=1 // pred_check
      _
    $region71: #{tpu_custom_call.1} parent=1 // pred_check_branch
      %6517 = sbr.rel (0) target = $region73
    $region72: #{tpu_custom_call.1} parent=1 // pred_region
      %s6519 = ssub.s32 128, 128
      %6520 = vsyncadd [#allocation4], %s6519
      %s6522 = sshll.u32 [#allocation16], 4
      %s6523 = int_to_ptr.vmem [resolvable:$true] %s6522
      %6525 = dma.vmem_to_hbm [thread:$0]  %s6523, 128, %s9, [#allocation4]
    $region73: #{tpu_custom_call.1} parent=1 // pred_fallthru
      _
    // Predicated region
    $region74: #{tpu_custom_call.1} parent=1 // pred_check
      _
    $region75: #{tpu_custom_call.1} parent=1 // pred_check_branch
      %6527 = sbr.rel (0) target = $region77
    $region76: #{tpu_custom_call.1} parent=1 // pred_region
      %6528 = dma.done [#allocation4], 128
    $region77: #{tpu_custom_call.1} parent=1 // pred_fallthru
      _
    %6529 = vsyncpa [#allocation3], 1
    %6530 = vsyncpa [#allocation6], 1
    %6531 = vsyncpa [#allocation9], 1
    %6532 = vsyncpa [#allocation12], 1
    %6533 = vsyncpa [#allocation15], 1
    %6534 = vsyncpa [#allocation4], 1

</llo_original>
